<compile_context>
chip_gen: v6e
topology: v6e:2x2x1
jax: 0.10.0
libtpu: 0.0.40
codegen_flags: <defaults>
</compile_context>

<pallas_src>
import jax
import jax.numpy as jnp
from jax.experimental import pallas as pl
from jax.experimental.pallas import tpu as pltpu


# ----------------------------------------------------------------------------
# Generic fused linear (x @ W + b) — encoder / generator stand-ins.
# Grid = (N tiles [parallel], K tiles [reduction, last]).  x is f32 in HBM and
# cast to bf16 in-kernel; W is bf16; accumulation + bias + output are f32.
# ----------------------------------------------------------------------------
def _linear_kernel(x_ref, w_ref, b_ref, o_ref, acc_ref):
    k = pl.program_id(1)

    @pl.when(k == 0)
    def _():
        acc_ref[...] = jnp.zeros_like(acc_ref)

    acc_ref[...] += jnp.dot(x_ref[...].astype(jnp.bfloat16), w_ref[...],
                            preferred_element_type=jnp.float32)

    @pl.when(k == pl.num_programs(1) - 1)
    def _():
        o_ref[...] = (acc_ref[...] + b_ref[...]).astype(o_ref.dtype)


def _pick_tile(dim, cap=1024):
    # Largest "nice" tile <= cap that divides dim; full extent when small.
    if dim <= cap:
        return dim
    for t in (cap, 512, 256, 128):
        if dim % t == 0:
            return t
    return dim  # TODO(synk): masked last block for awkward checkpoint dims.


def pallas_linear(x, w, b):
    M, K = x.shape
    N = w.shape[1]
    tk = _pick_tile(K)
    tn = _pick_tile(N)
    assert K % tk == 0 and N % tn == 0

    cost = pl.CostEstimate(
        flops=2 * M * K * N,
        transcendentals=0,
        bytes_accessed=(x.size * x.dtype.itemsize
                        + w.size * w.dtype.itemsize
                        + b.size * b.dtype.itemsize
                        + M * N * 4),
    )

    return pl.pallas_call(
        _linear_kernel,
        out_shape=jax.ShapeDtypeStruct((M, N), jnp.float32),
        grid=(N // tn, K // tk),
        in_specs=[
            pl.BlockSpec((M, tk), lambda j, k: (0, k)),   # activation K-tile
            pl.BlockSpec((tk, tn), lambda j, k: (k, j)),  # weight tile (bf16)
            pl.BlockSpec((1, tn), lambda j, k: (0, j)),   # bias tile
        ],
        out_specs=pl.BlockSpec((M, tn), lambda j, k: (0, j)),
        scratch_shapes=[pltpu.VMEM((M, tn), jnp.float32)],
        compiler_params=pltpu.CompilerParams(
            dimension_semantics=("parallel", "arbitrary"),
            vmem_limit_bytes=32 * 1024 * 1024,
        ),
        cost_estimate=cost,
    )(x, w, b)


# ----------------------------------------------------------------------------
# GenderModspaceTransform: num_ws independent gender-conditioned 2-layer MLPs.
#     h_i   = LeakyReLU_0.2( ws_i @ W1[i] + gender * W1g[i] + b1[i] )
#     out_i = h_i @ W2[i] + b2[i]
# == Linear(Z+1 -> Z) with the gender scalar concatenated (row Z split off as
# W1g to keep lanes 128-aligned).  Grid of 2 head-halves ("parallel": both
# v7x TCs busy, neutral on v5e/v6e); 4 heads statically unrolled per step.
# ----------------------------------------------------------------------------
def _gender_transform_kernel(ws_ref, gender_ref, w1_ref, w1g_ref, b1_ref,
                             w2_ref, b2_ref, o_ref):
    hpb, Z, _ = w1_ref.shape
    g = gender_ref[...]                                   # (B2, 1) f32

    # Hoisted out of the unrolled loop: gender contribution + first-layer
    # bias for all heads of this block in one broadcast multiply-add.
    gterm = g * w1g_ref[...] + b1_ref[...]                # (B2, hpb*Z) f32

    outs = []
    for i in range(hpb):                                  # static unroll
        lo = i * Z
        x = ws_ref[:, lo:lo + Z].astype(jnp.bfloat16)     # (B2, Z)
        h = jnp.dot(x, w1_ref[i], preferred_element_type=jnp.float32)
        h = h + gterm[:, lo:lo + Z]
        h = jnp.where(h > 0, h, 0.2 * h)                  # LeakyReLU(0.2), f32
        outs.append(jnp.dot(h.astype(jnp.bfloat16), w2_ref[i],
                            preferred_element_type=jnp.float32))

    # One lane-dense (B2, hpb*Z) store instead of hpb masked partial stores.
    o_ref[...] = jnp.concatenate(outs, axis=-1) + b2_ref[...]


def gender_modspace_transform(ws_flat, gender, t_params):
    """ws_flat: [B2, num_ws*Z] f32, gender: [B2] -> [B2, num_ws*Z] f32."""
    W1, W1g, b1, W2, b2 = t_params
    B2, D = ws_flat.shape
    num_ws, Z, _ = W1.shape
    assert D == num_ws * Z

    n_blocks = 2 if num_ws % 2 == 0 else 1
    hpb = num_ws // n_blocks
    bd = hpb * Z

    gender2 = gender.reshape(B2, 1).astype(jnp.float32)

    cost = pl.CostEstimate(
        flops=num_ws * 2 * (2 * B2 * Z * Z),
        transcendentals=0,
        bytes_accessed=(2 * B2 * D * 4                   # ws in + out (f32)
                        + 2 * num_ws * Z * Z * 2         # W1 + W2 (bf16)
                        + 3 * D * 4),                    # W1g, b1, b2 (f32)
    )

    return pl.pallas_call(
        _gender_transform_kernel,
        out_shape=jax.ShapeDtypeStruct((B2, D), jnp.float32),
        grid=(n_blocks,),
        in_specs=[
            pl.BlockSpec((B2, bd), lambda i: (0, i)),        # ws (flat, f32)
            pl.BlockSpec((B2, 1), lambda i: (0, 0)),         # gender
            pl.BlockSpec((hpb, Z, Z), lambda i: (i, 0, 0)),  # W1 (bf16)
            pl.BlockSpec((1, bd), lambda i: (0, i)),         # W1g (flat)
            pl.BlockSpec((1, bd), lambda i: (0, i)),         # b1  (flat)
            pl.BlockSpec((hpb, Z, Z), lambda i: (i, 0, 0)),  # W2 (bf16)
            pl.BlockSpec((1, bd), lambda i: (0, i)),         # b2  (flat)
        ],
        out_specs=pl.BlockSpec((B2, bd), lambda i: (0, i)),
        compiler_params=pltpu.CompilerParams(
            dimension_semantics=("parallel",)
        ),
        cost_estimate=cost,
    )(ws_flat.astype(jnp.float32), gender2, W1, W1g, b1, W2, b2)


# ----------------------------------------------------------------------------
# Encoder / generator stand-ins (frozen, deterministic synthetic weights).
# Weights are bf16 (memory-bound); accumulation and outputs are f32.
# ----------------------------------------------------------------------------
def encode(imgs, e_params):
    """imgs: [B2, C, H, W] NCHW -> flat ws [B2, num_ws*Z] (f32)."""
    We, be = e_params
    B2 = imgs.shape[0]
    x_flat = imgs.reshape(B2, -1)          # stays f32; bf16 cast is in-kernel
    return pallas_linear(x_flat, We, be)


def generate(ws_flat, g_params, img_shape):
    """ws_flat: [B2, num_ws*Z] -> image [B2, C, H, W] NCHW (f32)."""
    Wg, bg = g_params
    B2 = ws_flat.shape[0]
    img_flat = pallas_linear(ws_flat, Wg, bg)
    return img_flat.reshape((B2,) + tuple(img_shape))


# ----------------------------------------------------------------------------
# ModspaceSwap.forward — x/y paths batched so every weight matrix is streamed
# from HBM exactly once.  Images are concatenated in [y; x] order so a single
# transform pass produces [x_ws_pred; y_ws_pred] directly:
#     x_ws_pred = t(y_ws, y_gender),  y_ws_pred = t(x_ws, x_gender).
# ----------------------------------------------------------------------------
def modspace_swap_forward(x_img, x_gender, y_img, y_gender,
                          e_params, g_params, t_params):
    B = x_img.shape[0]
    img_shape = x_img.shape[1:]                               # static (C,H,W)
    imgs = jnp.concatenate([y_img, x_img], axis=0)            # [2B, C, H, W]
    genders = jnp.concatenate([y_gender, x_gender], axis=0)   # [2B]

    ws_flat = encode(imgs, e_params)                          # [y_ws; x_ws]
    ws_pred_flat = gender_modspace_transform(ws_flat, genders, t_params)
    imgs_pred = generate(ws_pred_flat, g_params, img_shape)   # [x_pred; y_pred]

    x_full_pred = imgs_pred[:B]
    y_full_pred = imgs_pred[B:]
    return x_full_pred, y_full_pred


# ----------------------------------------------------------------------------
# Deterministic parameter construction + demo run.  Param tuples contain ONLY
# arrays (shape metadata is derived statically from the inputs).
# ----------------------------------------------------------------------------
def init_params(key, *, C, H, W, num_ws, Z):
    in_dim = C * H * W
    ws_dim = num_ws * Z
    k = jax.random.split(key, 8)

    # encoder stand-in (bf16 weights — memory-bound linear)
    We = (jax.random.normal(k[0], (in_dim, ws_dim), jnp.float32)
          * (in_dim ** -0.5)).astype(jnp.bfloat16)
    be = jnp.zeros((1, ws_dim), jnp.float32)
    e_params = (We, be)

    # generator stand-in (bf16 weights)
    Wg = (jax.random.normal(k[1], (ws_dim, in_dim), jnp.float32)
          * (ws_dim ** -0.5)).astype(jnp.bfloat16)
    bg = jnp.zeros((1, in_dim), jnp.float32)
    g_params = (Wg, bg)

    # GenderModspaceTransform: num_ws independent 2-layer MLPs.
    # Matmul weights bf16 (f32 accumulation); gender weight / biases f32,
    # stored flattened as (1, num_ws*Z) for the hoisted broadcast.
    W1 = (jax.random.normal(k[2], (num_ws, Z, Z), jnp.float32)
          * (Z ** -0.5)).astype(jnp.bfloat16)
    W1g = jax.random.normal(k[3], (1, num_ws * Z), jnp.float32) * 0.1
    b1 = jnp.zeros((1, num_ws * Z), jnp.float32)
    W2 = (jax.random.normal(k[4], (num_ws, Z, Z), jnp.float32)
          * (Z ** -0.5)).astype(jnp.bfloat16)
    b2 = jnp.zeros((1, num_ws * Z), jnp.float32)
    t_params = (W1, W1g, b1, W2, b2)

    return e_params, g_params, t_params


if __name__ == "__main__":
    B, C, H, W = 2, 4, 16, 16
    num_ws, Z = 8, 128

    key = jax.random.PRNGKey(0)
    kx, ky, kp = jax.random.split(key, 3)

    x_img = jax.random.normal(kx, (B, C, H, W), jnp.float32)
    y_img = jax.random.normal(ky, (B, C, H, W), jnp.float32)
    x_gender = jnp.array([0.0, 1.0], jnp.float32)   # per-sample gender label
    y_gender = jnp.array([1.0, 0.0], jnp.float32)

    e_params, g_params, t_params = init_params(
        kp, C=C, H=H, W=W, num_ws=num_ws, Z=Z)

    fwd = jax.jit(modspace_swap_forward)
    x_pred, y_pred = fwd(
        x_img, x_gender, y_img, y_gender, e_params, g_params, t_params)
    jax.block_until_ready((x_pred, y_pred))

    assert x_pred.shape == (B, C, H, W) and y_pred.shape == (B, C, H, W)
    assert x_pred.dtype == jnp.float32 and y_pred.dtype == jnp.float32
    assert bool(jnp.all(jnp.isfinite(x_pred))) and bool(jnp.all(jnp.isfinite(y_pred)))
    print("KERNEL_OK")
</pallas_src>

<mosaic_0001>
module attributes {stable_mosaic.version = 11 : i64} {
  func.func @_linear_kernel(%arg0: i32, %arg1: i32, %arg2: memref<4x1024xf32, #tpu.memory_space<vmem>>, %arg3: memref<1024x1024xbf16, #tpu.memory_space<vmem>>, %arg4: memref<1x1024xf32, #tpu.memory_space<vmem>>, %arg5: memref<4x1024xf32, #tpu.memory_space<vmem>>, %arg6: memref<4x1024xf32, #tpu.memory_space<vmem>>) attributes {dimension_semantics = [#tpu.dimension_semantics<parallel>, #tpu.dimension_semantics<arbitrary>], iteration_bounds = array<i64: 1, 1>, scalar_prefetch = 0 : i64, scratch_operands = 1 : i64, tpu.core_type = #tpu.core_type<tc>, window_params = [{transform_indices = @transform_0, window_bounds = array<i64: 4, 1024>}, {transform_indices = @transform_1, window_bounds = array<i64: 1024, 1024>}, {transform_indices = @transform_2, window_bounds = array<i64: 1, 1024>}, {transform_indices = @transform_3, window_bounds = array<i64: 4, 1024>}]} {
    %c0_i32 = arith.constant 0 : i32
    %0 = arith.cmpi eq, %arg1, %c0_i32 : i32
    %1 = arith.extui %0 : i1 to i32
    %c0_i32_0 = arith.constant 0 : i32
    %2 = arith.cmpi ne, %1, %c0_i32_0 : i32
    scf.if %2 {
      %cst_10 = arith.constant 0.000000e+00 : f32
      %13 = vector.broadcast %cst_10 : f32 to vector<4x1024xf32>
      %c0_11 = arith.constant 0 : index
      %c0_12 = arith.constant 0 : index
      %14 = vector.load %arg6[%c0_11, %c0_12] : memref<4x1024xf32, #tpu.memory_space<vmem>>, vector<4x1024xf32>
      tpu.vector_store %arg6[%c0_11, %c0_12], %13 {strides = array<i32>} : memref<4x1024xf32, #tpu.memory_space<vmem>>, vector<4x1024xf32>,
    } else {
    }
    %c0 = arith.constant 0 : index
    %c0_1 = arith.constant 0 : index
    %3 = vector.load %arg6[%c0, %c0_1] : memref<4x1024xf32, #tpu.memory_space<vmem>>, vector<4x1024xf32>
    %c0_2 = arith.constant 0 : index
    %c0_3 = arith.constant 0 : index
    %4 = vector.load %arg2[%c0_2, %c0_3] : memref<4x1024xf32, #tpu.memory_space<vmem>>, vector<4x1024xf32>
    %5 = arith.truncf %4 : vector<4x1024xf32> to vector<4x1024xbf16>
    %c0_4 = arith.constant 0 : index
    %c0_5 = arith.constant 0 : index
    %6 = vector.load %arg3[%c0_4, %c0_5] : memref<1024x1024xbf16, #tpu.memory_space<vmem>>, vector<1024x1024xbf16>
    %cst = arith.constant dense<0.000000e+00> : vector<4x1024xf32>
    %7 = tpu.matmul %5, %6, %cst {dimension_numbers = #tpu.dot_dimension_numbers<[1], [0], [0], [1], [0, 0, 1, 1], [], []>} : vector<4x1024xbf16>, vector<1024x1024xbf16>, vector<4x1024xf32> -> vector<4x1024xf32>
    %8 = arith.addf %3, %7 : vector<4x1024xf32>
    %c0_6 = arith.constant 0 : index
    %c0_7 = arith.constant 0 : index
    %9 = vector.load %arg6[%c0_6, %c0_7] : memref<4x1024xf32, #tpu.memory_space<vmem>>, vector<4x1024xf32>
    tpu.vector_store %arg6[%c0_6, %c0_7], %8 {strides = array<i32>} : memref<4x1024xf32, #tpu.memory_space<vmem>>, vector<4x1024xf32>,
    %c0_i32_8 = arith.constant 0 : i32
    %10 = arith.cmpi eq, %arg1, %c0_i32_8 : i32
    %11 = arith.extui %10 : i1 to i32
    %c0_i32_9 = arith.constant 0 : i32
    %12 = arith.cmpi ne, %11, %c0_i32_9 : i32
    scf.if %12 {
      %c0_10 = arith.constant 0 : index
      %c0_11 = arith.constant 0 : index
      %13 = vector.load %arg6[%c0_10, %c0_11] : memref<4x1024xf32, #tpu.memory_space<vmem>>, vector<4x1024xf32>
      %c0_12 = arith.constant 0 : index
      %c0_13 = arith.constant 0 : index
      %14 = vector.load %arg4[%c0_12, %c0_13] : memref<1x1024xf32, #tpu.memory_space<vmem>>, vector<1x1024xf32>
      %15 = vector.broadcast %14 : vector<1x1024xf32> to vector<4x1024xf32>
      %16 = arith.addf %13, %15 : vector<4x1024xf32>
      %c0_14 = arith.constant 0 : index
      %c0_15 = arith.constant 0 : index
      %17 = vector.load %arg5[%c0_14, %c0_15] : memref<4x1024xf32, #tpu.memory_space<vmem>>, vector<4x1024xf32>
      tpu.vector_store %arg5[%c0_14, %c0_15], %16 {strides = array<i32>} : memref<4x1024xf32, #tpu.memory_space<vmem>>, vector<4x1024xf32>,
    } else {
    }
    return
  }
  func.func @transform_0(%arg0: i32, %arg1: i32) -> (i32, i32) {
    %c0_i32 = arith.constant 0 : i32
    %c0_i32_0 = arith.constant 0 : i32
    return %c0_i32, %arg1 : i32, i32
  }
  func.func @transform_1(%arg0: i32, %arg1: i32) -> (i32, i32) {
    %c0_i32 = arith.constant 0 : i32
    return %arg1, %arg0 : i32, i32
  }
  func.func @transform_2(%arg0: i32, %arg1: i32) -> (i32, i32) {
    %c0_i32 = arith.constant 0 : i32
    %c0_i32_0 = arith.constant 0 : i32
    return %c0_i32, %arg0 : i32, i32
  }
  func.func @transform_3(%arg0: i32, %arg1: i32) -> (i32, i32) {
    %c0_i32 = arith.constant 0 : i32
    %c0_i32_0 = arith.constant 0 : i32
    return %c0_i32, %arg0 : i32, i32
  }
}

module attributes {stable_mosaic.version = 11 : i64} {
  func.func @_linear_kernel(%arg0: i32, %arg1: i32, %arg2: memref<4x1024xf32, #tpu.memory_space<vmem>>, %arg3: memref<1024x1024xbf16, #tpu.memory_space<vmem>>, %arg4: memref<1x1024xf32, #tpu.memory_space<vmem>>, %arg5: memref<4x1024xf32, #tpu.memory_space<vmem>>, %arg6: memref<4x1024xf32, #tpu.memory_space<vmem>>) attributes {dimension_semantics = [#tpu.dimension_semantics<parallel>, #tpu.dimension_semantics<arbitrary>], iteration_bounds = array<i64: 1, 1>, scalar_prefetch = 0 : i64, scratch_operands = 1 : i64, tpu.core_type = #tpu.core_type<tc>, window_params = [{transform_indices = @transform_0, window_bounds = array<i64: 4, 1024>}, {transform_indices = @transform_1, window_bounds = array<i64: 1024, 1024>}, {transform_indices = @transform_2, window_bounds = array<i64: 1, 1024>}, {transform_indices = @transform_3, window_bounds = array<i64: 4, 1024>}]} {
    %c0_i32 = arith.constant 0 : i32
    %0 = arith.cmpi eq, %arg1, %c0_i32 : i32
    %1 = arith.extui %0 : i1 to i32
    %c0_i32_0 = arith.constant 0 : i32
    %2 = arith.cmpi ne, %1, %c0_i32_0 : i32
    scf.if %2 {
      %cst_10 = arith.constant 0.000000e+00 : f32
      %13 = vector.broadcast %cst_10 : f32 to vector<4x1024xf32>
      %c0_11 = arith.constant 0 : index
      %c0_12 = arith.constant 0 : index
      %14 = vector.load %arg6[%c0_11, %c0_12] : memref<4x1024xf32, #tpu.memory_space<vmem>>, vector<4x1024xf32>
      tpu.vector_store %arg6[%c0_11, %c0_12], %13 {strides = array<i32>} : memref<4x1024xf32, #tpu.memory_space<vmem>>, vector<4x1024xf32>,
    } else {
    }
    %c0 = arith.constant 0 : index
    %c0_1 = arith.constant 0 : index
    %3 = vector.load %arg6[%c0, %c0_1] : memref<4x1024xf32, #tpu.memory_space<vmem>>, vector<4x1024xf32>
    %c0_2 = arith.constant 0 : index
    %c0_3 = arith.constant 0 : index
    %4 = vector.load %arg2[%c0_2, %c0_3] : memref<4x1024xf32, #tpu.memory_space<vmem>>, vector<4x1024xf32>
    %5 = arith.truncf %4 : vector<4x1024xf32> to vector<4x1024xbf16>
    %c0_4 = arith.constant 0 : index
    %c0_5 = arith.constant 0 : index
    %6 = vector.load %arg3[%c0_4, %c0_5] : memref<1024x1024xbf16, #tpu.memory_space<vmem>>, vector<1024x1024xbf16>
    %cst = arith.constant dense<0.000000e+00> : vector<4x1024xf32>
    %7 = tpu.matmul %5, %6, %cst {dimension_numbers = #tpu.dot_dimension_numbers<[1], [0], [0], [1], [0, 0, 1, 1], [], []>} : vector<4x1024xbf16>, vector<1024x1024xbf16>, vector<4x1024xf32> -> vector<4x1024xf32>
    %8 = arith.addf %3, %7 : vector<4x1024xf32>
    %c0_6 = arith.constant 0 : index
    %c0_7 = arith.constant 0 : index
    %9 = vector.load %arg6[%c0_6, %c0_7] : memref<4x1024xf32, #tpu.memory_space<vmem>>, vector<4x1024xf32>
    tpu.vector_store %arg6[%c0_6, %c0_7], %8 {strides = array<i32>} : memref<4x1024xf32, #tpu.memory_space<vmem>>, vector<4x1024xf32>,
    %c0_i32_8 = arith.constant 0 : i32
    %10 = arith.cmpi eq, %arg1, %c0_i32_8 : i32
    %11 = arith.extui %10 : i1 to i32
    %c0_i32_9 = arith.constant 0 : i32
    %12 = arith.cmpi ne, %11, %c0_i32_9 : i32
    scf.if %12 {
      %c0_10 = arith.constant 0 : index
      %c0_11 = arith.constant 0 : index
      %13 = vector.load %arg6[%c0_10, %c0_11] : memref<4x1024xf32, #tpu.memory_space<vmem>>, vector<4x1024xf32>
      %c0_12 = arith.constant 0 : index
      %c0_13 = arith.constant 0 : index
      %14 = vector.load %arg4[%c0_12, %c0_13] : memref<1x1024xf32, #tpu.memory_space<vmem>>, vector<1x1024xf32>
      %15 = vector.broadcast %14 : vector<1x1024xf32> to vector<4x1024xf32>
      %16 = arith.addf %13, %15 : vector<4x1024xf32>
      %c0_14 = arith.constant 0 : index
      %c0_15 = arith.constant 0 : index
      %17 = vector.load %arg5[%c0_14, %c0_15] : memref<4x1024xf32, #tpu.memory_space<vmem>>, vector<4x1024xf32>
      tpu.vector_store %arg5[%c0_14, %c0_15], %16 {strides = array<i32>} : memref<4x1024xf32, #tpu.memory_space<vmem>>, vector<4x1024xf32>,
    } else {
    }
    return
  }
  func.func @transform_0(%arg0: i32, %arg1: i32) -> (i32, i32) {
    %c0_i32 = arith.constant 0 : i32
    %c0_i32_0 = arith.constant 0 : i32
    return %c0_i32, %arg1 : i32, i32
  }
  func.func @transform_1(%arg0: i32, %arg1: i32) -> (i32, i32) {
    %c0_i32 = arith.constant 0 : i32
    return %arg1, %arg0 : i32, i32
  }
  func.func @transform_2(%arg0: i32, %arg1: i32) -> (i32, i32) {
    %c0_i32 = arith.constant 0 : i32
    %c0_i32_0 = arith.constant 0 : i32
    return %c0_i32, %arg0 : i32, i32
  }
  func.func @transform_3(%arg0: i32, %arg1: i32) -> (i32, i32) {
    %c0_i32 = arith.constant 0 : i32
    %c0_i32_0 = arith.constant 0 : i32
    return %c0_i32, %arg0 : i32, i32
  }
}

module attributes {stable_mosaic.version = 11 : i64} {
  func.func @_gender_transform_kernel(%arg0: i32, %arg1: memref<4x512xf32, #tpu.memory_space<vmem>>, %arg2: memref<4x1xf32, #tpu.memory_space<vmem>>, %arg3: memref<4x128x128xbf16, #tpu.memory_space<vmem>>, %arg4: memref<1x512xf32, #tpu.memory_space<vmem>>, %arg5: memref<1x512xf32, #tpu.memory_space<vmem>>, %arg6: memref<4x128x128xbf16, #tpu.memory_space<vmem>>, %arg7: memref<1x512xf32, #tpu.memory_space<vmem>>, %arg8: memref<4x512xf32, #tpu.memory_space<vmem>>) attributes {dimension_semantics = [#tpu.dimension_semantics<parallel>], iteration_bounds = array<i64: 2>, scalar_prefetch = 0 : i64, scratch_operands = 0 : i64, tpu.core_type = #tpu.core_type<tc>, window_params = [{transform_indices = @transform_0, window_bounds = array<i64: 4, 512>}, {pipeline_mode = #tpu.pipeline_mode<synchronous>, transform_indices = @transform_1, window_bounds = array<i64: 4, 1>}, {transform_indices = @transform_2, window_bounds = array<i64: 4, 128, 128>}, {transform_indices = @transform_3, window_bounds = array<i64: 1, 512>}, {transform_indices = @transform_4, window_bounds = array<i64: 1, 512>}, {transform_indices = @transform_5, window_bounds = array<i64: 4, 128, 128>}, {transform_indices = @transform_6, window_bounds = array<i64: 1, 512>}, {transform_indices = @transform_7, window_bounds = array<i64: 4, 512>}]} {
    %c0 = arith.constant 0 : index
    %c0_0 = arith.constant 0 : index
    %0 = vector.load %arg2[%c0, %c0_0] : memref<4x1xf32, #tpu.memory_space<vmem>>, vector<4x1xf32>
    %c0_1 = arith.constant 0 : index
    %c0_2 = arith.constant 0 : index
    %1 = vector.load %arg4[%c0_1, %c0_2] : memref<1x512xf32, #tpu.memory_space<vmem>>, vector<1x512xf32>
    %2 = vector.broadcast %0 : vector<4x1xf32> to vector<4x512xf32>
    %3 = vector.broadcast %1 : vector<1x512xf32> to vector<4x512xf32>
    %4 = arith.mulf %2, %3 : vector<4x512xf32>
    %c0_3 = arith.constant 0 : index
    %c0_4 = arith.constant 0 : index
    %5 = vector.load %arg5[%c0_3, %c0_4] : memref<1x512xf32, #tpu.memory_space<vmem>>, vector<1x512xf32>
    %6 = vector.broadcast %5 : vector<1x512xf32> to vector<4x512xf32>
    %7 = arith.addf %4, %6 : vector<4x512xf32>
    %c0_5 = arith.constant 0 : index
    %c0_6 = arith.constant 0 : index
    %8 = vector.load %arg1[%c0_5, %c0_6] : memref<4x512xf32, #tpu.memory_space<vmem>>, vector<4x128xf32>
    %9 = arith.truncf %8 : vector<4x128xf32> to vector<4x128xbf16>
    %c0_7 = arith.constant 0 : index
    %c0_8 = arith.constant 0 : index
    %c0_9 = arith.constant 0 : index
    %10 = vector.load %arg3[%c0_7, %c0_8, %c0_9] : memref<4x128x128xbf16, #tpu.memory_space<vmem>>, vector<1x128x128xbf16>
    %11 = vector.shape_cast %10 : vector<1x128x128xbf16> to vector<128x128xbf16>
    %cst = arith.constant dense<0.000000e+00> : vector<4x128xf32>
    %12 = tpu.matmul %9, %11, %cst {dimension_numbers = #tpu.dot_dimension_numbers<[1], [0], [0], [1], [0, 0, 1, 1], [], []>} : vector<4x128xbf16>, vector<128x128xbf16>, vector<4x128xf32> -> vector<4x128xf32>
    %13 = vector.extract_strided_slice %7 {offsets = [0, 0], sizes = [4, 128], strides = [1, 1]} : vector<4x512xf32> to vector<4x128xf32>
    %14 = arith.addf %12, %13 : vector<4x128xf32>
    %cst_10 = arith.constant 0.000000e+00 : f32
    %15 = vector.broadcast %cst_10 : f32 to vector<4x128xf32>
    %16 = arith.cmpf ogt, %14, %15 : vector<4x128xf32>
    %cst_11 = arith.constant 2.000000e-01 : f32
    %17 = vector.broadcast %cst_11 : f32 to vector<4x128xf32>
    %18 = arith.mulf %17, %14 : vector<4x128xf32>
    %19 = arith.select %16, %14, %18 : vector<4x128xi1>, vector<4x128xf32>
    %20 = arith.truncf %19 : vector<4x128xf32> to vector<4x128xbf16>
    %c0_12 = arith.constant 0 : index
    %c0_13 = arith.constant 0 : index
    %c0_14 = arith.constant 0 : index
    %21 = vector.load %arg6[%c0_12, %c0_13, %c0_14] : memref<4x128x128xbf16, #tpu.memory_space<vmem>>, vector<1x128x128xbf16>
    %22 = vector.shape_cast %21 : vector<1x128x128xbf16> to vector<128x128xbf16>
    %cst_15 = arith.constant dense<0.000000e+00> : vector<4x128xf32>
    %23 = tpu.matmul %20, %22, %cst_15 {dimension_numbers = #tpu.dot_dimension_numbers<[1], [0], [0], [1], [0, 0, 1, 1], [], []>} : vector<4x128xbf16>, vector<128x128xbf16>, vector<4x128xf32> -> vector<4x128xf32>
    %c0_16 = arith.constant 0 : index
    %c128 = arith.constant 128 : index
    %24 = vector.load %arg1[%c0_16, %c128] : memref<4x512xf32, #tpu.memory_space<vmem>>, vector<4x128xf32>
    %25 = arith.truncf %24 : vector<4x128xf32> to vector<4x128xbf16>
    %c1 = arith.constant 1 : index
    %c0_17 = arith.constant 0 : index
    %c0_18 = arith.constant 0 : index
    %26 = vector.load %arg3[%c1, %c0_17, %c0_18] : memref<4x128x128xbf16, #tpu.memory_space<vmem>>, vector<1x128x128xbf16>
    %27 = vector.shape_cast %26 : vector<1x128x128xbf16> to vector<128x128xbf16>
    %cst_19 = arith.constant dense<0.000000e+00> : vector<4x128xf32>
    %28 = tpu.matmul %25, %27, %cst_19 {dimension_numbers = #tpu.dot_dimension_numbers<[1], [0], [0], [1], [0, 0, 1, 1], [], []>} : vector<4x128xbf16>, vector<128x128xbf16>, vector<4x128xf32> -> vector<4x128xf32>
    %29 = vector.extract_strided_slice %7 {offsets = [0, 128], sizes = [4, 128], strides = [1, 1]} : vector<4x512xf32> to vector<4x128xf32>
    %30 = arith.addf %28, %29 : vector<4x128xf32>
    %cst_20 = arith.constant 0.000000e+00 : f32
    %31 = vector.broadcast %cst_20 : f32 to vector<4x128xf32>
    %32 = arith.cmpf ogt, %30, %31 : vector<4x128xf32>
    %cst_21 = arith.constant 2.000000e-01 : f32
    %33 = vector.broadcast %cst_21 : f32 to vector<4x128xf32>
    %34 = arith.mulf %33, %30 : vector<4x128xf32>
    %35 = arith.select %32, %30, %34 : vector<4x128xi1>, vector<4x128xf32>
    %36 = arith.truncf %35 : vector<4x128xf32> to vector<4x128xbf16>
    %c1_22 = arith.constant 1 : index
    %c0_23 = arith.constant 0 : index
    %c0_24 = arith.constant 0 : index
    %37 = vector.load %arg6[%c1_22, %c0_23, %c0_24] : memref<4x128x128xbf16, #tpu.memory_space<vmem>>, vector<1x128x128xbf16>
    %38 = vector.shape_cast %37 : vector<1x128x128xbf16> to vector<128x128xbf16>
    %cst_25 = arith.constant dense<0.000000e+00> : vector<4x128xf32>
    %39 = tpu.matmul %36, %38, %cst_25 {dimension_numbers = #tpu.dot_dimension_numbers<[1], [0], [0], [1], [0, 0, 1, 1], [], []>} : vector<4x128xbf16>, vector<128x128xbf16>, vector<4x128xf32> -> vector<4x128xf32>
    %c0_26 = arith.constant 0 : index
    %c256 = arith.constant 256 : index
    %40 = vector.load %arg1[%c0_26, %c256] : memref<4x512xf32, #tpu.memory_space<vmem>>, vector<4x128xf32>
    %41 = arith.truncf %40 : vector<4x128xf32> to vector<4x128xbf16>
    %c2 = arith.constant 2 : index
    %c0_27 = arith.constant 0 : index
    %c0_28 = arith.constant 0 : index
    %42 = vector.load %arg3[%c2, %c0_27, %c0_28] : memref<4x128x128xbf16, #tpu.memory_space<vmem>>, vector<1x128x128xbf16>
    %43 = vector.shape_cast %42 : vector<1x128x128xbf16> to vector<128x128xbf16>
    %cst_29 = arith.constant dense<0.000000e+00> : vector<4x128xf32>
    %44 = tpu.matmul %41, %43, %cst_29 {dimension_numbers = #tpu.dot_dimension_numbers<[1], [0], [0], [1], [0, 0, 1, 1], [], []>} : vector<4x128xbf16>, vector<128x128xbf16>, vector<4x128xf32> -> vector<4x128xf32>
    %45 = vector.extract_strided_slice %7 {offsets = [0, 256], sizes = [4, 128], strides = [1, 1]} : vector<4x512xf32> to vector<4x128xf32>
    %46 = arith.addf %44, %45 : vector<4x128xf32>
    %cst_30 = arith.constant 0.000000e+00 : f32
    %47 = vector.broadcast %cst_30 : f32 to vector<4x128xf32>
    %48 = arith.cmpf ogt, %46, %47 : vector<4x128xf32>
    %cst_31 = arith.constant 2.000000e-01 : f32
    %49 = vector.broadcast %cst_31 : f32 to vector<4x128xf32>
    %50 = arith.mulf %49, %46 : vector<4x128xf32>
    %51 = arith.select %48, %46, %50 : vector<4x128xi1>, vector<4x128xf32>
    %52 = arith.truncf %51 : vector<4x128xf32> to vector<4x128xbf16>
    %c2_32 = arith.constant 2 : index
    %c0_33 = arith.constant 0 : index
    %c0_34 = arith.constant 0 : index
    %53 = vector.load %arg6[%c2_32, %c0_33, %c0_34] : memref<4x128x128xbf16, #tpu.memory_space<vmem>>, vector<1x128x128xbf16>
    %54 = vector.shape_cast %53 : vector<1x128x128xbf16> to vector<128x128xbf16>
    %cst_35 = arith.constant dense<0.000000e+00> : vector<4x128xf32>
    %55 = tpu.matmul %52, %54, %cst_35 {dimension_numbers = #tpu.dot_dimension_numbers<[1], [0], [0], [1], [0, 0, 1, 1], [], []>} : vector<4x128xbf16>, vector<128x128xbf16>, vector<4x128xf32> -> vector<4x128xf32>
    %c0_36 = arith.constant 0 : index
    %c384 = arith.constant 384 : index
    %56 = vector.load %arg1[%c0_36, %c384] : memref<4x512xf32, #tpu.memory_space<vmem>>, vector<4x128xf32>
    %57 = arith.truncf %56 : vector<4x128xf32> to vector<4x128xbf16>
    %c3 = arith.constant 3 : index
    %c0_37 = arith.constant 0 : index
    %c0_38 = arith.constant 0 : index
    %58 = vector.load %arg3[%c3, %c0_37, %c0_38] : memref<4x128x128xbf16, #tpu.memory_space<vmem>>, vector<1x128x128xbf16>
    %59 = vector.shape_cast %58 : vector<1x128x128xbf16> to vector<128x128xbf16>
    %cst_39 = arith.constant dense<0.000000e+00> : vector<4x128xf32>
    %60 = tpu.matmul %57, %59, %cst_39 {dimension_numbers = #tpu.dot_dimension_numbers<[1], [0], [0], [1], [0, 0, 1, 1], [], []>} : vector<4x128xbf16>, vector<128x128xbf16>, vector<4x128xf32> -> vector<4x128xf32>
    %61 = vector.extract_strided_slice %7 {offsets = [0, 384], sizes = [4, 128], strides = [1, 1]} : vector<4x512xf32> to vector<4x128xf32>
    %62 = arith.addf %60, %61 : vector<4x128xf32>
    %cst_40 = arith.constant 0.000000e+00 : f32
    %63 = vector.broadcast %cst_40 : f32 to vector<4x128xf32>
    %64 = arith.cmpf ogt, %62, %63 : vector<4x128xf32>
    %cst_41 = arith.constant 2.000000e-01 : f32
    %65 = vector.broadcast %cst_41 : f32 to vector<4x128xf32>
    %66 = arith.mulf %65, %62 : vector<4x128xf32>
    %67 = arith.select %64, %62, %66 : vector<4x128xi1>, vector<4x128xf32>
    %68 = arith.truncf %67 : vector<4x128xf32> to vector<4x128xbf16>
    %c3_42 = arith.constant 3 : index
    %c0_43 = arith.constant 0 : index
    %c0_44 = arith.constant 0 : index
    %69 = vector.load %arg6[%c3_42, %c0_43, %c0_44] : memref<4x128x128xbf16, #tpu.memory_space<vmem>>, vector<1x128x128xbf16>
    %70 = vector.shape_cast %69 : vector<1x128x128xbf16> to vector<128x128xbf16>
    %cst_45 = arith.constant dense<0.000000e+00> : vector<4x128xf32>
    %71 = tpu.matmul %68, %70, %cst_45 {dimension_numbers = #tpu.dot_dimension_numbers<[1], [0], [0], [1], [0, 0, 1, 1], [], []>} : vector<4x128xbf16>, vector<128x128xbf16>, vector<4x128xf32> -> vector<4x128xf32>
    %72 = tpu.concatenate %23, %39, %55, %71 in 1 : vector<4x128xf32>, vector<4x128xf32>, vector<4x128xf32>, vector<4x128xf32> -> vector<4x512xf32>
    %c0_46 = arith.constant 0 : index
    %c0_47 = arith.constant 0 : index
    %73 = vector.load %arg7[%c0_46, %c0_47] : memref<1x512xf32, #tpu.memory_space<vmem>>, vector<1x512xf32>
    %74 = vector.broadcast %73 : vector<1x512xf32> to vector<4x512xf32>
    %75 = arith.addf %72, %74 : vector<4x512xf32>
    %c0_48 = arith.constant 0 : index
    %c0_49 = arith.constant 0 : index
    %76 = vector.load %arg8[%c0_48, %c0_49] : memref<4x512xf32, #tpu.memory_space<vmem>>, vector<4x512xf32>
    tpu.vector_store %arg8[%c0_48, %c0_49], %75 {strides = array<i32>} : memref<4x512xf32, #tpu.memory_space<vmem>>, vector<4x512xf32>,
    return
  }
  func.func @transform_0(%arg0: i32) -> (i32, i32) {
    %c0_i32 = arith.constant 0 : i32
    %c0_i32_0 = arith.constant 0 : i32
    return %c0_i32, %arg0 : i32, i32
  }
  func.func @transform_1(%arg0: i32) -> (i32, i32) {
    %c0_i32 = arith.constant 0 : i32
    %c0_i32_0 = arith.constant 0 : i32
    %c0_i32_1 = arith.constant 0 : i32
    return %c0_i32, %c0_i32_0 : i32, i32
  }
  func.func @transform_2(%arg0: i32) -> (i32, i32, i32) {
    %c0_i32 = arith.constant 0 : i32
    %c0_i32_0 = arith.constant 0 : i32
    %c0_i32_1 = arith.constant 0 : i32
    return %arg0, %c0_i32, %c0_i32_0 : i32, i32, i32
  }
  func.func @transform_3(%arg0: i32) -> (i32, i32) {
    %c0_i32 = arith.constant 0 : i32
    %c0_i32_0 = arith.constant 0 : i32
    return %c0_i32, %arg0 : i32, i32
  }
  func.func @transform_4(%arg0: i32) -> (i32, i32) {
    %c0_i32 = arith.constant 0 : i32
    %c0_i32_0 = arith.constant 0 : i32
    return %c0_i32, %arg0 : i32, i32
  }
  func.func @transform_5(%arg0: i32) -> (i32, i32, i32) {
    %c0_i32 = arith.constant 0 : i32
    %c0_i32_0 = arith.constant 0 : i32
    %c0_i32_1 = arith.constant 0 : i32
    return %arg0, %c0_i32, %c0_i32_0 : i32, i32, i32
  }
  func.func @transform_6(%arg0: i32) -> (i32, i32) {
    %c0_i32 = arith.constant 0 : i32
    %c0_i32_0 = arith.constant 0 : i32
    return %c0_i32, %arg0 : i32, i32
  }
  func.func @transform_7(%arg0: i32) -> (i32, i32) {
    %c0_i32 = arith.constant 0 : i32
    %c0_i32_0 = arith.constant 0 : i32
    return %c0_i32, %arg0 : i32, i32
  }
}

</mosaic_0001>

<llo_original>
// kernel: modspace_swap_forward.4
$region0: #{modspace_swap_forward.4}
  #allocation0 [shape = 'u32[]', space=smem, size = 0x4, offset = 0x4, fixed_abs, tag = 'smem constant byte address 0x4 - core index']
  #allocation1 [shape = 'u32[144,128]{1,0:T(1,128)}', space=vmem, size = 0x12000, scoped, tag = 'internal scratch']
  %s0 = inlined_call_operand.vmem [shape: f32[4,1024], index: 0, kind: input, shape index: {}]
  %s1 = inlined_call_operand.vmem [shape: f32[4,1], index: 1, kind: input, shape index: {}]
  %s2 = inlined_call_operand.vmem [shape: bf16[8,128,128], index: 2, kind: input, shape index: {}]
  %s3 = inlined_call_operand.vmem [shape: f32[1,1024], index: 3, kind: input, shape index: {}]
  %s4 = inlined_call_operand.vmem [shape: f32[1,1024], index: 4, kind: input, shape index: {}]
  %s5 = inlined_call_operand.vmem [shape: bf16[8,128,128], index: 5, kind: input, shape index: {}]
  %s6 = inlined_call_operand.vmem [shape: f32[1,1024], index: 6, kind: input, shape index: {}]
  %s7 = inlined_call_operand.vmem [shape: f32[4,1024], index: 7, kind: output, shape index: {}]
  %s8 = sld [smem:[#allocation0]]
  $region61: #{modspace_swap_forward.4} parent=0
    _
  %s10 = ssub.s32 1, %s8
  %s11 = scalar_select 0, %s10, %s8
  loop: start=0, step=1, limit=4
  $region2: #{modspace_swap_forward.4} parent=0 // loop_pre_header
    _
  $region3: #{modspace_swap_forward.4} parent=0 // loop_header
    %s13 = sphi 0, %s17
    %p14 = scmp.ge.s32.totalorder %s13, 4
    %s23 = sphi 0, %s25
    %s26 = sphi 0, %s23
    %s27 = sphi 0, %s26
    %s43 = sphi 0, %s27
    %s47 = sphi 0, %s47
    %s49 = sphi 0, %s47
    %s50 = sphi 0, %s49
    %s64 = sphi 0, %s50
    %s70 = sphi 0, %s72
    %s73 = sphi 0, %s70
    %s74 = sphi 0, %s73
    %s90 = sphi 0, %s74
    %s96 = sphi 0, %s98
    %s99 = sphi 0, %s96
    %s100 = sphi 0, %s99
    %s116 = sphi 0, %s100
    %s122 = sphi 0, %s124
    %s125 = sphi 0, %s122
    %s126 = sphi 0, %s125
    %s142 = sphi 0, %s126
    %s148 = sphi 0, %s150
    %s151 = sphi 0, %s148
    %s152 = sphi 0, %s151
    %s168 = sphi 0, %s152
    %s174 = sphi 0, %s176
    %s177 = sphi 0, %s174
    %s178 = sphi 0, %s177
    %s194 = sphi 0, %s178
    %s200 = sphi 0, %s202
    %s203 = sphi 0, %s200
    %s204 = sphi 0, %s203
    %s220 = sphi 0, %s204
  $region4: #{modspace_swap_forward.4} parent=0 // loop_header_branch
    %16 = sbr.rel (%p14) target = $region8
  $region5: #{modspace_swap_forward.4} parent=0 // loop_body
    %s18 = ssub.s32 %s13, 1
    %s19 = ssub.s32 %s13, 2
    %s20 = sadd.s32 %s13, 1
    %s21 = ssub.s32 %s13, %s20
    %p22 = scmp.eq.s32.totalorder %s21, 0
    %s24 = sadd.s32 %s23, 1
    %s25 = scalar_select %p22, %s23, %s24
    %p28 = pneg %p22
    %p29 = scmp.eq.s32.totalorder %s13, 1
    %p30 = por %p28, %p29
    %p31 = scmp.ne.s32.totalorder %s23, %s26
    %p32 = scmp.eq.s32.totalorder %s13, 0
    %p33 = por %p31, %p32
    %p34 = scmp.ne.s32.totalorder %s23, %s26
    %p35 = scmp.eq.s32.totalorder %s18, 1
    %p36 = por %p34, %p35
    %p37 = scmp.ne.s32.totalorder %s26, %s27
    %p38 = scmp.eq.s32.totalorder %s18, 0
    %p39 = por %p37, %p38
    %p40 = scmp.ne.s32.totalorder %s26, %s27
    %p41 = scmp.eq.s32.totalorder %s19, 1
    %p42 = por %p40, %p41
    %p44 = scmp.ne.s32.totalorder %s27, %s43
    %p45 = scmp.eq.s32.totalorder %s19, 0
    %p46 = por %p44, %p45
    %s48 = sadd.s32 %s47, 1
    %p51 = scmp.eq.s32.totalorder %s13, 1
    %p52 = scmp.ne.s32.totalorder %s47, %s49
    %p53 = scmp.eq.s32.totalorder %s13, 0
    %p54 = por %p52, %p53
    %p55 = scmp.ne.s32.totalorder %s47, %s49
    %p56 = scmp.eq.s32.totalorder %s18, 1
    %p57 = por %p55, %p56
    %p58 = scmp.ne.s32.totalorder %s49, %s50
    %p59 = scmp.eq.s32.totalorder %s18, 0
    %p60 = por %p58, %p59
    %p61 = scmp.ne.s32.totalorder %s49, %s50
    %p62 = scmp.eq.s32.totalorder %s19, 1
    %p63 = por %p61, %p62
    %p65 = scmp.ne.s32.totalorder %s50, %s64
    %p66 = scmp.eq.s32.totalorder %s19, 0
    %p67 = por %p65, %p66
    %s68 = ssub.s32 %s13, %s20
    %p69 = scmp.eq.s32.totalorder %s68, 0
    %s71 = sadd.s32 %s70, 1
    %s72 = scalar_select %p69, %s70, %s71
    %p75 = pneg %p69
    %p76 = scmp.eq.s32.totalorder %s13, 1
    %p77 = por %p75, %p76
    %p78 = scmp.ne.s32.totalorder %s70, %s73
    %p79 = scmp.eq.s32.totalorder %s13, 0
    %p80 = por %p78, %p79
    %p81 = scmp.ne.s32.totalorder %s70, %s73
    %p82 = scmp.eq.s32.totalorder %s18, 1
    %p83 = por %p81, %p82
    %p84 = scmp.ne.s32.totalorder %s73, %s74
    %p85 = scmp.eq.s32.totalorder %s18, 0
    %p86 = por %p84, %p85
    %p87 = scmp.ne.s32.totalorder %s73, %s74
    %p88 = scmp.eq.s32.totalorder %s19, 1
    %p89 = por %p87, %p88
    %p91 = scmp.ne.s32.totalorder %s74, %s90
    %p92 = scmp.eq.s32.totalorder %s19, 0
    %p93 = por %p91, %p92
    %s94 = ssub.s32 %s13, %s20
    %p95 = scmp.eq.s32.totalorder %s94, 0
    %s97 = sadd.s32 %s96, 1
    %s98 = scalar_select %p95, %s96, %s97
    %p101 = pneg %p95
    %p102 = scmp.eq.s32.totalorder %s13, 1
    %p103 = por %p101, %p102
    %p104 = scmp.ne.s32.totalorder %s96, %s99
    %p105 = scmp.eq.s32.totalorder %s13, 0
    %p106 = por %p104, %p105
    %p107 = scmp.ne.s32.totalorder %s96, %s99
    %p108 = scmp.eq.s32.totalorder %s18, 1
    %p109 = por %p107, %p108
    %p110 = scmp.ne.s32.totalorder %s99, %s100
    %p111 = scmp.eq.s32.totalorder %s18, 0
    %p112 = por %p110, %p111
    %p113 = scmp.ne.s32.totalorder %s99, %s100
    %p114 = scmp.eq.s32.totalorder %s19, 1
    %p115 = por %p113, %p114
    %p117 = scmp.ne.s32.totalorder %s100, %s116
    %p118 = scmp.eq.s32.totalorder %s19, 0
    %p119 = por %p117, %p118
    %s120 = ssub.s32 %s13, %s20
    %p121 = scmp.eq.s32.totalorder %s120, 0
    %s123 = sadd.s32 %s122, 1
    %s124 = scalar_select %p121, %s122, %s123
    %p127 = pneg %p121
    %p128 = scmp.eq.s32.totalorder %s13, 1
    %p129 = por %p127, %p128
    %p130 = scmp.ne.s32.totalorder %s122, %s125
    %p131 = scmp.eq.s32.totalorder %s13, 0
    %p132 = por %p130, %p131
    %p133 = scmp.ne.s32.totalorder %s122, %s125
    %p134 = scmp.eq.s32.totalorder %s18, 1
    %p135 = por %p133, %p134
    %p136 = scmp.ne.s32.totalorder %s125, %s126
    %p137 = scmp.eq.s32.totalorder %s18, 0
    %p138 = por %p136, %p137
    %p139 = scmp.ne.s32.totalorder %s125, %s126
    %p140 = scmp.eq.s32.totalorder %s19, 1
    %p141 = por %p139, %p140
    %p143 = scmp.ne.s32.totalorder %s126, %s142
    %p144 = scmp.eq.s32.totalorder %s19, 0
    %p145 = por %p143, %p144
    %s146 = ssub.s32 %s13, %s20
    %p147 = scmp.eq.s32.totalorder %s146, 0
    %s149 = sadd.s32 %s148, 1
    %s150 = scalar_select %p147, %s148, %s149
    %p153 = pneg %p147
    %p154 = scmp.eq.s32.totalorder %s13, 1
    %p155 = por %p153, %p154
    %p156 = scmp.ne.s32.totalorder %s148, %s151
    %p157 = scmp.eq.s32.totalorder %s13, 0
    %p158 = por %p156, %p157
    %p159 = scmp.ne.s32.totalorder %s148, %s151
    %p160 = scmp.eq.s32.totalorder %s18, 1
    %p161 = por %p159, %p160
    %p162 = scmp.ne.s32.totalorder %s151, %s152
    %p163 = scmp.eq.s32.totalorder %s18, 0
    %p164 = por %p162, %p163
    %p165 = scmp.ne.s32.totalorder %s151, %s152
    %p166 = scmp.eq.s32.totalorder %s19, 1
    %p167 = por %p165, %p166
    %p169 = scmp.ne.s32.totalorder %s152, %s168
    %p170 = scmp.eq.s32.totalorder %s19, 0
    %p171 = por %p169, %p170
    %s172 = ssub.s32 %s13, %s20
    %p173 = scmp.eq.s32.totalorder %s172, 0
    %s175 = sadd.s32 %s174, 1
    %s176 = scalar_select %p173, %s174, %s175
    %p179 = pneg %p173
    %p180 = scmp.eq.s32.totalorder %s13, 1
    %p181 = por %p179, %p180
    %p182 = scmp.ne.s32.totalorder %s174, %s177
    %p183 = scmp.eq.s32.totalorder %s13, 0
    %p184 = por %p182, %p183
    %p185 = scmp.ne.s32.totalorder %s174, %s177
    %p186 = scmp.eq.s32.totalorder %s18, 1
    %p187 = por %p185, %p186
    %p188 = scmp.ne.s32.totalorder %s177, %s178
    %p189 = scmp.eq.s32.totalorder %s18, 0
    %p190 = por %p188, %p189
    %p191 = scmp.ne.s32.totalorder %s177, %s178
    %p192 = scmp.eq.s32.totalorder %s19, 1
    %p193 = por %p191, %p192
    %p195 = scmp.ne.s32.totalorder %s178, %s194
    %p196 = scmp.eq.s32.totalorder %s19, 0
    %p197 = por %p195, %p196
    %s198 = ssub.s32 %s13, %s20
    %p199 = scmp.eq.s32.totalorder %s198, 0
    %s201 = sadd.s32 %s200, 1
    %s202 = scalar_select %p199, %s200, %s201
    %p205 = pneg %p199
    %p206 = scmp.eq.s32.totalorder %s13, 1
    %p207 = por %p205, %p206
    %p208 = scmp.ne.s32.totalorder %s200, %s203
    %p209 = scmp.eq.s32.totalorder %s13, 0
    %p210 = por %p208, %p209
    %p211 = scmp.ne.s32.totalorder %s200, %s203
    %p212 = scmp.eq.s32.totalorder %s18, 1
    %p213 = por %p211, %p212
    %p214 = scmp.ne.s32.totalorder %s203, %s204
    %p215 = scmp.eq.s32.totalorder %s18, 0
    %p216 = por %p214, %p215
    %p217 = scmp.ne.s32.totalorder %s203, %s204
    %p218 = scmp.eq.s32.totalorder %s19, 1
    %p219 = por %p217, %p218
    %p221 = scmp.ne.s32.totalorder %s204, %s220
    %p222 = scmp.eq.s32.totalorder %s19, 0
    %p223 = por %p221, %p222
    %p224 = scmp.le.s32.totalorder 1, %s13
    %p225 = scmp.lt.s32.totalorder %s13, 3
    %p226 = pnand %p224, %p225
    %p227 = pneg %p226
    // Predicated region
    $region9: #{modspace_swap_forward.4} parent=5 // pred_check
      _
    $region10: #{modspace_swap_forward.4} parent=5 // pred_check_branch
      %229 = sbr.rel (%p226) target = $region12
    $region11: #{modspace_swap_forward.4} parent=5 // pred_region
      %s230 = ssub.s32 %s13, 1
      // Predicated region
      $region13: #{modspace_swap_forward.4} parent=11 // pred_check
        %p231 = pneg %p60
      $region14: #{modspace_swap_forward.4} parent=11 // pred_check_branch
        %233 = sbr.rel (%p231) target = $region16
      $region15: #{modspace_swap_forward.4} parent=11 // pred_region
        _
      $region16: #{modspace_swap_forward.4} parent=11 // pred_fallthru
        _
    $region12: #{modspace_swap_forward.4} parent=5 // pred_fallthru
      _
    %p234 = scmp.lt.s32.totalorder %s13, 2
    // Predicated region
    $region17: #{modspace_swap_forward.4} parent=5 // pred_check
      %p235 = pneg %p234
    $region18: #{modspace_swap_forward.4} parent=5 // pred_check_branch
      %237 = sbr.rel (%p235) target = $region20
    $region19: #{modspace_swap_forward.4} parent=5 // pred_region
      // Predicated region
      $region21: #{modspace_swap_forward.4} parent=19 // pred_check
        %p238 = pneg %p33
      $region22: #{modspace_swap_forward.4} parent=19 // pred_check_branch
        %240 = sbr.rel (%p238) target = $region24
      $region23: #{modspace_swap_forward.4} parent=19 // pred_region
        %s241 = smul.u32 4, %s13
        %p242 = scmp.lt.s32.totalorder %s241, 7
        %s243 = scalar_select %p242, %s241, 7
        %s244 = smul.addr %s243, 4
        %s245 = scalar_lea.vmem %s0, %s244
        %s246 = smul.u32 4, %s13
      $region24: #{modspace_swap_forward.4} parent=19 // pred_fallthru
        _
      // Predicated region
      $region25: #{modspace_swap_forward.4} parent=19 // pred_check
        %p247 = pneg %p80
      $region26: #{modspace_swap_forward.4} parent=19 // pred_check_branch
        %249 = sbr.rel (%p247) target = $region28
      $region27: #{modspace_swap_forward.4} parent=19 // pred_region
        %s250 = smul.u32 4, %s13
        %p251 = scmp.lt.s32.totalorder %s250, 7
        %s252 = scalar_select %p251, %s250, 7
        %s253 = smul.addr %s252, 16
        %s254 = smul.addr %s253, 4
        %s255 = scalar_lea.vmem %s2, %s254
        %s256 = smul.u32 4, %s13
      $region28: #{modspace_swap_forward.4} parent=19 // pred_fallthru
        _
      // Predicated region
      $region29: #{modspace_swap_forward.4} parent=19 // pred_check
        %p257 = pneg %p106
      $region30: #{modspace_swap_forward.4} parent=19 // pred_check_branch
        %259 = sbr.rel (%p257) target = $region32
      $region31: #{modspace_swap_forward.4} parent=19 // pred_region
        %s260 = smul.u32 4, %s13
        %p261 = scmp.lt.s32.totalorder %s260, 7
        %s262 = scalar_select %p261, %s260, 7
        %s263 = scalar_lea.vmem %s3, %s262
        %s264 = smul.u32 4, %s13
      $region32: #{modspace_swap_forward.4} parent=19 // pred_fallthru
        _
      // Predicated region
      $region33: #{modspace_swap_forward.4} parent=19 // pred_check
        %p265 = pneg %p132
      $region34: #{modspace_swap_forward.4} parent=19 // pred_check_branch
        %267 = sbr.rel (%p265) target = $region36
      $region35: #{modspace_swap_forward.4} parent=19 // pred_region
        %s268 = smul.u32 4, %s13
        %p269 = scmp.lt.s32.totalorder %s268, 7
        %s270 = scalar_select %p269, %s268, 7
        %s271 = scalar_lea.vmem %s4, %s270
        %s272 = smul.u32 4, %s13
      $region36: #{modspace_swap_forward.4} parent=19 // pred_fallthru
        _
      // Predicated region
      $region37: #{modspace_swap_forward.4} parent=19 // pred_check
        %p273 = pneg %p158
      $region38: #{modspace_swap_forward.4} parent=19 // pred_check_branch
        %275 = sbr.rel (%p273) target = $region40
      $region39: #{modspace_swap_forward.4} parent=19 // pred_region
        %s276 = smul.u32 4, %s13
        %p277 = scmp.lt.s32.totalorder %s276, 7
        %s278 = scalar_select %p277, %s276, 7
        %s279 = smul.addr %s278, 16
        %s280 = smul.addr %s279, 4
        %s281 = scalar_lea.vmem %s5, %s280
        %s282 = smul.u32 4, %s13
      $region40: #{modspace_swap_forward.4} parent=19 // pred_fallthru
        _
      // Predicated region
      $region41: #{modspace_swap_forward.4} parent=19 // pred_check
        %p283 = pneg %p184
      $region42: #{modspace_swap_forward.4} parent=19 // pred_check_branch
        %285 = sbr.rel (%p283) target = $region44
      $region43: #{modspace_swap_forward.4} parent=19 // pred_region
        %s286 = smul.u32 4, %s13
        %p287 = scmp.lt.s32.totalorder %s286, 7
        %s288 = scalar_select %p287, %s286, 7
        %s289 = scalar_lea.vmem %s6, %s288
        %s290 = smul.u32 4, %s13
      $region44: #{modspace_swap_forward.4} parent=19 // pred_fallthru
        _
    $region20: #{modspace_swap_forward.4} parent=5 // pred_fallthru
      _
    %p291 = scmp.le.s32.totalorder 1, %s13
    %p292 = scmp.lt.s32.totalorder %s13, 3
    %p293 = pnand %p291, %p292
    %p294 = pneg %p293
    // Predicated region
    $region45: #{modspace_swap_forward.4} parent=5 // pred_check
      _
    $region46: #{modspace_swap_forward.4} parent=5 // pred_check_branch
      %296 = sbr.rel (%p293) target = $region48
    $region47: #{modspace_swap_forward.4} parent=5 // pred_region
      %s297 = ssub.s32 %s13, 1
      %s298 = smul.u32 4, %s18
      %p299 = scmp.lt.s32.totalorder %s298, 7
      %s300 = scalar_select %p299, %s298, 7
      %s301 = smul.addr %s300, 4
      %s302 = scalar_lea.vmem %s0, %s301
      %p303 = pneg %p39
      %p304 = pneg %p36
      %p305 = pneg %p60
      %p306 = pneg %p57
      %s307 = smul.u32 4, %s18
      %p308 = scmp.lt.s32.totalorder %s307, 7
      %s309 = scalar_select %p308, %s307, 7
      %s310 = smul.addr %s309, 16
      %s311 = smul.addr %s310, 4
      %s312 = scalar_lea.vmem %s2, %s311
      %p313 = pneg %p86
      %p314 = pneg %p83
      %s315 = smul.u32 4, %s18
      %p316 = scmp.lt.s32.totalorder %s315, 7
      %s317 = scalar_select %p316, %s315, 7
      %s318 = scalar_lea.vmem %s3, %s317
      %p319 = pneg %p112
      %p320 = pneg %p109
      %s321 = smul.u32 4, %s18
      %p322 = scmp.lt.s32.totalorder %s321, 7
      %s323 = scalar_select %p322, %s321, 7
      %s324 = scalar_lea.vmem %s4, %s323
      %p325 = pneg %p138
      %p326 = pneg %p135
      %s327 = smul.u32 4, %s18
      %p328 = scmp.lt.s32.totalorder %s327, 7
      %s329 = scalar_select %p328, %s327, 7
      %s330 = smul.addr %s329, 16
      %s331 = smul.addr %s330, 4
      %s332 = scalar_lea.vmem %s5, %s331
      %p333 = pneg %p164
      %p334 = pneg %p161
      %s335 = smul.u32 4, %s18
      %p336 = scmp.lt.s32.totalorder %s335, 7
      %s337 = scalar_select %p336, %s335, 7
      %s338 = scalar_lea.vmem %s6, %s337
      %p339 = pneg %p190
      %p340 = pneg %p187
      %p341 = pneg %p216
      %p342 = pneg %p213
      %s343 = smul.u32 4, %s18
      %p344 = scmp.lt.s32.totalorder %s343, 7
      %s345 = scalar_select %p344, %s343, 7
      %s346 = smul.addr %s345, 4
      %s347 = scalar_lea.vmem %s7, %s346
      %s348 = smul.u32 4, %s18
      %p349 = scmp.lt.s32.totalorder %s348, 7
      %s350 = scalar_select %p349, %s348, 7
      %s351 = smul.addr %s350, 4
      %s352 = scalar_lea.vmem %s0, %s351
      %s353 = smul.u32 4, %s18
      %s354 = smul.u32 4, %s18
      %p355 = scmp.lt.s32.totalorder %s354, 7
      %s356 = scalar_select %p355, %s354, 7
      %s357 = smul.addr %s356, 16
      %s358 = smul.addr %s357, 4
      %s359 = scalar_lea.vmem %s2, %s358
      %s360 = smul.u32 4, %s18
      %s361 = smul.u32 4, %s18
      %p362 = scmp.lt.s32.totalorder %s361, 7
      %s363 = scalar_select %p362, %s361, 7
      %s364 = scalar_lea.vmem %s3, %s363
      %s365 = smul.u32 4, %s18
      %s366 = smul.u32 4, %s18
      %p367 = scmp.lt.s32.totalorder %s366, 7
      %s368 = scalar_select %p367, %s366, 7
      %s369 = scalar_lea.vmem %s4, %s368
      %s370 = smul.u32 4, %s18
      %s371 = smul.u32 4, %s18
      %p372 = scmp.lt.s32.totalorder %s371, 7
      %s373 = scalar_select %p372, %s371, 7
      %s374 = smul.addr %s373, 16
      %s375 = smul.addr %s374, 4
      %s376 = scalar_lea.vmem %s5, %s375
      %s377 = smul.u32 4, %s18
      %s378 = smul.u32 4, %s18
      %p379 = scmp.lt.s32.totalorder %s378, 7
      %s380 = scalar_select %p379, %s378, 7
      %s381 = scalar_lea.vmem %s6, %s380
      %s382 = smul.u32 4, %s18
      %s383 = smul.u32 4, %s18
      %p384 = scmp.lt.s32.totalorder %s383, 7
      %s385 = scalar_select %p384, %s383, 7
      %s386 = smul.addr %s385, 4
      %s387 = scalar_lea.vmem %s7, %s386
      %s388 = smul.u32 4, %s18
      %v390 = vld [vmem:[%s1] sm:$0xf]
      %v391 = vld [vmem:[%s364] sm:$0xf]
      %393 = vset.pattern.permute.xlu0 0
      %394 = vperm.xlu0 %393, %v390
      %v395 = vpop.permute.xlu0 %394
      %v398 = vlaneseq
      %v399 = vshrl.u32 %v398, 7
      %v400 = vsub.s32 0, %v399
      %v401 = vrot.slane %v391, %v400
      %v402 = vlaneseq
      %v403 = vshrl.u32 %v402, 7
      %v404 = vsub.s32 1, %v403
      %v405 = vrot.slane %v391, %v404
      %v406 = vlaneseq
      %v407 = vshrl.u32 %v406, 7
      %v408 = vsub.s32 2, %v407
      %v409 = vrot.slane %v391, %v408
      %v410 = vlaneseq
      %v411 = vshrl.u32 %v410, 7
      %v412 = vsub.s32 3, %v411
      %v413 = vrot.slane %v391, %v412
      %v418 = vmul.f32 %v395, %v401
      %v419 = vmul.f32 %v395, %v405
      %v420 = vmul.f32 %v395, %v409
      %v421 = vmul.f32 %v395, %v413
      %v422 = vld [vmem:[%s369] sm:$0xf]
      %v424 = vlaneseq
      %v425 = vshrl.u32 %v424, 7
      %v426 = vsub.s32 0, %v425
      %v427 = vrot.slane %v422, %v426
      %v428 = vlaneseq
      %v429 = vshrl.u32 %v428, 7
      %v430 = vsub.s32 1, %v429
      %v431 = vrot.slane %v422, %v430
      %v432 = vlaneseq
      %v433 = vshrl.u32 %v432, 7
      %v434 = vsub.s32 2, %v433
      %v435 = vrot.slane %v422, %v434
      %v436 = vlaneseq
      %v437 = vshrl.u32 %v436, 7
      %v438 = vsub.s32 3, %v437
      %v439 = vrot.slane %v422, %v438
      %v444 = vadd.f32 %v418, %v427
      %v445 = vadd.f32 %v419, %v431
      %v446 = vadd.f32 %v420, %v435
      %v447 = vadd.f32 %v421, %v439
      %v448 = vld [vmem:[%s352] sm:$0xf]
      %v449 = vpack.c.bf16 %v448, %v448
      %v450 = vld [vmem:[%s359] sm:$0xf]
      %v451 = vld [vmem:[%s359 + $0x4] sm:$0xf]
      %v452 = vld [vmem:[%s359 + $0x8] sm:$0xf]
      %v453 = vld [vmem:[%s359 + $0xc] sm:$0xf]
      %v454 = vld [vmem:[%s359 + $0x10] sm:$0xf]
      %v455 = vld [vmem:[%s359 + $0x14] sm:$0xf]
      %v456 = vld [vmem:[%s359 + $0x18] sm:$0xf]
      %v457 = vld [vmem:[%s359 + $0x1c] sm:$0xf]
      %v458 = vld [vmem:[%s359 + $0x20] sm:$0xf]
      %v459 = vld [vmem:[%s359 + $0x24] sm:$0xf]
      %v460 = vld [vmem:[%s359 + $0x28] sm:$0xf]
      %v461 = vld [vmem:[%s359 + $0x2c] sm:$0xf]
      %v462 = vld [vmem:[%s359 + $0x30] sm:$0xf]
      %v463 = vld [vmem:[%s359 + $0x34] sm:$0xf]
      %v464 = vld [vmem:[%s359 + $0x38] sm:$0xf]
      %v465 = vld [vmem:[%s359 + $0x3c] sm:$0xf]
      %v482 = vunpack.c.l.b16 %v450
      %v483 = vunpack.c.l.b16 %v451
      %v484 = vunpack.c.l.b16 %v452
      %v485 = vunpack.c.l.b16 %v453
      %v486 = vunpack.c.l.b16 %v454
      %v487 = vunpack.c.l.b16 %v455
      %v488 = vunpack.c.l.b16 %v456
      %v489 = vunpack.c.l.b16 %v457
      %v490 = vunpack.c.l.b16 %v458
      %v491 = vunpack.c.l.b16 %v459
      %v492 = vunpack.c.l.b16 %v460
      %v493 = vunpack.c.l.b16 %v461
      %v494 = vunpack.c.l.b16 %v462
      %v495 = vunpack.c.l.b16 %v463
      %v496 = vunpack.c.l.b16 %v464
      %v497 = vunpack.c.l.b16 %v465
      %v498 = vpack.c.b16 %v483, %v482
      %v499 = vpack.c.b16 %v485, %v484
      %v500 = vpack.c.b16 %v487, %v486
      %v501 = vpack.c.b16 %v489, %v488
      %v502 = vpack.c.b16 %v491, %v490
      %v503 = vpack.c.b16 %v493, %v492
      %v504 = vpack.c.b16 %v495, %v494
      %v505 = vpack.c.b16 %v497, %v496
      %514 = vmatprep.subr.bf16.mxu0 0
      %515 = vmatpush1.bf16.msra.mxu0 %v505
      %516 = vmatprep.subr.bf16.mxu0 0
      %517 = vmatpush1.bf16.msra.mxu0 %v504
      %518 = vmatprep.subr.bf16.mxu0 0
      %519 = vmatpush1.bf16.msra.mxu0 %v503
      %520 = vmatprep.subr.bf16.mxu0 0
      %521 = vmatpush1.bf16.msra.mxu0 %v502
      %522 = vmatprep.subr.bf16.mxu0 0
      %523 = vmatpush1.bf16.msra.mxu0 %v501
      %524 = vmatprep.subr.bf16.mxu0 0
      %525 = vmatpush1.bf16.msra.mxu0 %v500
      %526 = vmatprep.subr.bf16.mxu0 0
      %527 = vmatpush1.bf16.msra.mxu0 %v499
      %528 = vmatprep.subr.bf16.mxu0 0
      %529 = vmatpush1.bf16.msra.mxu0 %v498
      %530 = vmatprep.subr.bf16.mxu0 0
      %531 = vmatpush2.bf16.msra.mxu0 0
      %532 = vmatprep.subr.bf16.mxu0 0
      %533 = vmatpush2.bf16.msra.mxu0 0
      %534 = vmatprep.subr.bf16.mxu0 0
      %535 = vmatpush2.bf16.msra.mxu0 0
      %536 = vmatprep.subr.bf16.mxu0 0
      %537 = vmatpush2.bf16.msra.mxu0 0
      %538 = vmatprep.subr.bf16.mxu0 0
      %539 = vmatpush2.bf16.msra.mxu0 0
      %540 = vmatprep.subr.bf16.mxu0 0
      %541 = vmatpush2.bf16.msra.mxu0 0
      %542 = vmatprep.subr.bf16.mxu0 0
      %543 = vmatpush2.bf16.msra.mxu0 0
      %544 = vmatprep.subr.bf16.mxu0 0
      %545 = vmatpush2.bf16.msra.mxu0 0
      %546 = vmatprep.mubr.bf16.mxu0 0
      %547 = vmatmul.mubr.bf16.gmra.mxu0 %v449
      %v548 = vpop.f32.mrf.mxu0
      %v549 = vadd.f32 %v444, %v548
      %v550 = vpop.f32.mrf.mxu0
      %v551 = vpop.f32.mrf.mxu0
      %v552 = vpop.f32.mrf.mxu0
      %553 = vdwg.mxu0
      %vm554 = vcmp.gt.f32.partialorder %v549, 0.0
      %v555 = vmul.f32 %v549, 0.2
      %v556 = vsel %vm554, %v549, %v555
      %v557 = vpack.c.bf16 %v556, %v556
      %v558 = vld [vmem:[%s376] sm:$0xf]
      %v559 = vld [vmem:[%s376 + $0x4] sm:$0xf]
      %v560 = vld [vmem:[%s376 + $0x8] sm:$0xf]
      %v561 = vld [vmem:[%s376 + $0xc] sm:$0xf]
      %v562 = vld [vmem:[%s376 + $0x10] sm:$0xf]
      %v563 = vld [vmem:[%s376 + $0x14] sm:$0xf]
      %v564 = vld [vmem:[%s376 + $0x18] sm:$0xf]
      %v565 = vld [vmem:[%s376 + $0x1c] sm:$0xf]
      %v566 = vld [vmem:[%s376 + $0x20] sm:$0xf]
      %v567 = vld [vmem:[%s376 + $0x24] sm:$0xf]
      %v568 = vld [vmem:[%s376 + $0x28] sm:$0xf]
      %v569 = vld [vmem:[%s376 + $0x2c] sm:$0xf]
      %v570 = vld [vmem:[%s376 + $0x30] sm:$0xf]
      %v571 = vld [vmem:[%s376 + $0x34] sm:$0xf]
      %v572 = vld [vmem:[%s376 + $0x38] sm:$0xf]
      %v573 = vld [vmem:[%s376 + $0x3c] sm:$0xf]
      %v590 = vunpack.c.l.b16 %v558
      %v591 = vunpack.c.l.b16 %v559
      %v592 = vunpack.c.l.b16 %v560
      %v593 = vunpack.c.l.b16 %v561
      %v594 = vunpack.c.l.b16 %v562
      %v595 = vunpack.c.l.b16 %v563
      %v596 = vunpack.c.l.b16 %v564
      %v597 = vunpack.c.l.b16 %v565
      %v598 = vunpack.c.l.b16 %v566
      %v599 = vunpack.c.l.b16 %v567
      %v600 = vunpack.c.l.b16 %v568
      %v601 = vunpack.c.l.b16 %v569
      %v602 = vunpack.c.l.b16 %v570
      %v603 = vunpack.c.l.b16 %v571
      %v604 = vunpack.c.l.b16 %v572
      %v605 = vunpack.c.l.b16 %v573
      %v606 = vpack.c.b16 %v591, %v590
      %v607 = vpack.c.b16 %v593, %v592
      %v608 = vpack.c.b16 %v595, %v594
      %v609 = vpack.c.b16 %v597, %v596
      %v610 = vpack.c.b16 %v599, %v598
      %v611 = vpack.c.b16 %v601, %v600
      %v612 = vpack.c.b16 %v603, %v602
      %v613 = vpack.c.b16 %v605, %v604
      %622 = vmatprep.subr.bf16.mxu0 0
      %623 = vmatpush1.bf16.msra.mxu0 %v613
      %624 = vmatprep.subr.bf16.mxu0 0
      %625 = vmatpush1.bf16.msra.mxu0 %v612
      %626 = vmatprep.subr.bf16.mxu0 0
      %627 = vmatpush1.bf16.msra.mxu0 %v611
      %628 = vmatprep.subr.bf16.mxu0 0
      %629 = vmatpush1.bf16.msra.mxu0 %v610
      %630 = vmatprep.subr.bf16.mxu0 0
      %631 = vmatpush1.bf16.msra.mxu0 %v609
      %632 = vmatprep.subr.bf16.mxu0 0
      %633 = vmatpush1.bf16.msra.mxu0 %v608
      %634 = vmatprep.subr.bf16.mxu0 0
      %635 = vmatpush1.bf16.msra.mxu0 %v607
      %636 = vmatprep.subr.bf16.mxu0 0
      %637 = vmatpush1.bf16.msra.mxu0 %v606
      %638 = vmatprep.subr.bf16.mxu0 0
      %639 = vmatpush2.bf16.msra.mxu0 0
      %640 = vmatprep.subr.bf16.mxu0 0
      %641 = vmatpush2.bf16.msra.mxu0 0
      %642 = vmatprep.subr.bf16.mxu0 0
      %643 = vmatpush2.bf16.msra.mxu0 0
      %644 = vmatprep.subr.bf16.mxu0 0
      %645 = vmatpush2.bf16.msra.mxu0 0
      %646 = vmatprep.subr.bf16.mxu0 0
      %647 = vmatpush2.bf16.msra.mxu0 0
      %648 = vmatprep.subr.bf16.mxu0 0
      %649 = vmatpush2.bf16.msra.mxu0 0
      %650 = vmatprep.subr.bf16.mxu0 0
      %651 = vmatpush2.bf16.msra.mxu0 0
      %652 = vmatprep.subr.bf16.mxu0 0
      %653 = vmatpush2.bf16.msra.mxu0 0
      %654 = vmatprep.mubr.bf16.mxu0 0
      %655 = vmatmul.mubr.bf16.gmra.mxu0 %v557
      %v656 = vpop.f32.mrf.mxu0
      %v657 = vadd.f32 0.0, %v656
      %v658 = vpop.f32.mrf.mxu0
      %v659 = vpop.f32.mrf.mxu0
      %v660 = vpop.f32.mrf.mxu0
      %661 = vdwg.mxu0
      %v662 = vld [vmem:[%s352 + $0x4] sm:$0xf]
      %v663 = vpack.c.bf16 %v662, %v662
      %s664 = scalar_lea.vmem %s359, 64
      %v665 = vld [vmem:[%s664] sm:$0xf]
      %v666 = vld [vmem:[%s664 + $0x4] sm:$0xf]
      %v667 = vld [vmem:[%s664 + $0x8] sm:$0xf]
      %v668 = vld [vmem:[%s664 + $0xc] sm:$0xf]
      %v669 = vld [vmem:[%s664 + $0x10] sm:$0xf]
      %v670 = vld [vmem:[%s664 + $0x14] sm:$0xf]
      %v671 = vld [vmem:[%s664 + $0x18] sm:$0xf]
      %v672 = vld [vmem:[%s664 + $0x1c] sm:$0xf]
      %v673 = vld [vmem:[%s664 + $0x20] sm:$0xf]
      %v674 = vld [vmem:[%s664 + $0x24] sm:$0xf]
      %v675 = vld [vmem:[%s664 + $0x28] sm:$0xf]
      %v676 = vld [vmem:[%s664 + $0x2c] sm:$0xf]
      %v677 = vld [vmem:[%s664 + $0x30] sm:$0xf]
      %v678 = vld [vmem:[%s664 + $0x34] sm:$0xf]
      %v679 = vld [vmem:[%s664 + $0x38] sm:$0xf]
      %v680 = vld [vmem:[%s664 + $0x3c] sm:$0xf]
      %v697 = vunpack.c.l.b16 %v665
      %v698 = vunpack.c.l.b16 %v666
      %v699 = vunpack.c.l.b16 %v667
      %v700 = vunpack.c.l.b16 %v668
      %v701 = vunpack.c.l.b16 %v669
      %v702 = vunpack.c.l.b16 %v670
      %v703 = vunpack.c.l.b16 %v671
      %v704 = vunpack.c.l.b16 %v672
      %v705 = vunpack.c.l.b16 %v673
      %v706 = vunpack.c.l.b16 %v674
      %v707 = vunpack.c.l.b16 %v675
      %v708 = vunpack.c.l.b16 %v676
      %v709 = vunpack.c.l.b16 %v677
      %v710 = vunpack.c.l.b16 %v678
      %v711 = vunpack.c.l.b16 %v679
      %v712 = vunpack.c.l.b16 %v680
      %v713 = vpack.c.b16 %v698, %v697
      %v714 = vpack.c.b16 %v700, %v699
      %v715 = vpack.c.b16 %v702, %v701
      %v716 = vpack.c.b16 %v704, %v703
      %v717 = vpack.c.b16 %v706, %v705
      %v718 = vpack.c.b16 %v708, %v707
      %v719 = vpack.c.b16 %v710, %v709
      %v720 = vpack.c.b16 %v712, %v711
      %729 = vmatprep.subr.bf16.mxu0 0
      %730 = vmatpush1.bf16.msra.mxu0 %v720
      %731 = vmatprep.subr.bf16.mxu0 0
      %732 = vmatpush1.bf16.msra.mxu0 %v719
      %733 = vmatprep.subr.bf16.mxu0 0
      %734 = vmatpush1.bf16.msra.mxu0 %v718
      %735 = vmatprep.subr.bf16.mxu0 0
      %736 = vmatpush1.bf16.msra.mxu0 %v717
      %737 = vmatprep.subr.bf16.mxu0 0
      %738 = vmatpush1.bf16.msra.mxu0 %v716
      %739 = vmatprep.subr.bf16.mxu0 0
      %740 = vmatpush1.bf16.msra.mxu0 %v715
      %741 = vmatprep.subr.bf16.mxu0 0
      %742 = vmatpush1.bf16.msra.mxu0 %v714
      %743 = vmatprep.subr.bf16.mxu0 0
      %744 = vmatpush1.bf16.msra.mxu0 %v713
      %745 = vmatprep.subr.bf16.mxu0 0
      %746 = vmatpush2.bf16.msra.mxu0 0
      %747 = vmatprep.subr.bf16.mxu0 0
      %748 = vmatpush2.bf16.msra.mxu0 0
      %749 = vmatprep.subr.bf16.mxu0 0
      %750 = vmatpush2.bf16.msra.mxu0 0
      %751 = vmatprep.subr.bf16.mxu0 0
      %752 = vmatpush2.bf16.msra.mxu0 0
      %753 = vmatprep.subr.bf16.mxu0 0
      %754 = vmatpush2.bf16.msra.mxu0 0
      %755 = vmatprep.subr.bf16.mxu0 0
      %756 = vmatpush2.bf16.msra.mxu0 0
      %757 = vmatprep.subr.bf16.mxu0 0
      %758 = vmatpush2.bf16.msra.mxu0 0
      %759 = vmatprep.subr.bf16.mxu0 0
      %760 = vmatpush2.bf16.msra.mxu0 0
      %761 = vmatprep.mubr.bf16.mxu0 0
      %762 = vmatmul.mubr.bf16.gmra.mxu0 %v663
      %v763 = vpop.f32.mrf.mxu0
      %v764 = vadd.f32 %v445, %v763
      %v765 = vpop.f32.mrf.mxu0
      %v766 = vpop.f32.mrf.mxu0
      %v767 = vpop.f32.mrf.mxu0
      %768 = vdwg.mxu0
      %vm769 = vcmp.gt.f32.partialorder %v764, 0.0
      %v770 = vmul.f32 %v764, 0.2
      %v771 = vsel %vm769, %v764, %v770
      %v772 = vpack.c.bf16 %v771, %v771
      %s773 = scalar_lea.vmem %s376, 64
      %v774 = vld [vmem:[%s773] sm:$0xf]
      %v775 = vld [vmem:[%s773 + $0x4] sm:$0xf]
      %v776 = vld [vmem:[%s773 + $0x8] sm:$0xf]
      %v777 = vld [vmem:[%s773 + $0xc] sm:$0xf]
      %v778 = vld [vmem:[%s773 + $0x10] sm:$0xf]
      %v779 = vld [vmem:[%s773 + $0x14] sm:$0xf]
      %v780 = vld [vmem:[%s773 + $0x18] sm:$0xf]
      %v781 = vld [vmem:[%s773 + $0x1c] sm:$0xf]
      %v782 = vld [vmem:[%s773 + $0x20] sm:$0xf]
      %v783 = vld [vmem:[%s773 + $0x24] sm:$0xf]
      %v784 = vld [vmem:[%s773 + $0x28] sm:$0xf]
      %v785 = vld [vmem:[%s773 + $0x2c] sm:$0xf]
      %v786 = vld [vmem:[%s773 + $0x30] sm:$0xf]
      %v787 = vld [vmem:[%s773 + $0x34] sm:$0xf]
      %v788 = vld [vmem:[%s773 + $0x38] sm:$0xf]
      %v789 = vld [vmem:[%s773 + $0x3c] sm:$0xf]
      %v806 = vunpack.c.l.b16 %v774
      %v807 = vunpack.c.l.b16 %v775
      %v808 = vunpack.c.l.b16 %v776
      %v809 = vunpack.c.l.b16 %v777
      %v810 = vunpack.c.l.b16 %v778
      %v811 = vunpack.c.l.b16 %v779
      %v812 = vunpack.c.l.b16 %v780
      %v813 = vunpack.c.l.b16 %v781
      %v814 = vunpack.c.l.b16 %v782
      %v815 = vunpack.c.l.b16 %v783
      %v816 = vunpack.c.l.b16 %v784
      %v817 = vunpack.c.l.b16 %v785
      %v818 = vunpack.c.l.b16 %v786
      %v819 = vunpack.c.l.b16 %v787
      %v820 = vunpack.c.l.b16 %v788
      %v821 = vunpack.c.l.b16 %v789
      %v822 = vpack.c.b16 %v807, %v806
      %v823 = vpack.c.b16 %v809, %v808
      %v824 = vpack.c.b16 %v811, %v810
      %v825 = vpack.c.b16 %v813, %v812
      %v826 = vpack.c.b16 %v815, %v814
      %v827 = vpack.c.b16 %v817, %v816
      %v828 = vpack.c.b16 %v819, %v818
      %v829 = vpack.c.b16 %v821, %v820
      %838 = vmatprep.subr.bf16.mxu0 0
      %839 = vmatpush1.bf16.msra.mxu0 %v829
      %840 = vmatprep.subr.bf16.mxu0 0
      %841 = vmatpush1.bf16.msra.mxu0 %v828
      %842 = vmatprep.subr.bf16.mxu0 0
      %843 = vmatpush1.bf16.msra.mxu0 %v827
      %844 = vmatprep.subr.bf16.mxu0 0
      %845 = vmatpush1.bf16.msra.mxu0 %v826
      %846 = vmatprep.subr.bf16.mxu0 0
      %847 = vmatpush1.bf16.msra.mxu0 %v825
      %848 = vmatprep.subr.bf16.mxu0 0
      %849 = vmatpush1.bf16.msra.mxu0 %v824
      %850 = vmatprep.subr.bf16.mxu0 0
      %851 = vmatpush1.bf16.msra.mxu0 %v823
      %852 = vmatprep.subr.bf16.mxu0 0
      %853 = vmatpush1.bf16.msra.mxu0 %v822
      %854 = vmatprep.subr.bf16.mxu0 0
      %855 = vmatpush2.bf16.msra.mxu0 0
      %856 = vmatprep.subr.bf16.mxu0 0
      %857 = vmatpush2.bf16.msra.mxu0 0
      %858 = vmatprep.subr.bf16.mxu0 0
      %859 = vmatpush2.bf16.msra.mxu0 0
      %860 = vmatprep.subr.bf16.mxu0 0
      %861 = vmatpush2.bf16.msra.mxu0 0
      %862 = vmatprep.subr.bf16.mxu0 0
      %863 = vmatpush2.bf16.msra.mxu0 0
      %864 = vmatprep.subr.bf16.mxu0 0
      %865 = vmatpush2.bf16.msra.mxu0 0
      %866 = vmatprep.subr.bf16.mxu0 0
      %867 = vmatpush2.bf16.msra.mxu0 0
      %868 = vmatprep.subr.bf16.mxu0 0
      %869 = vmatpush2.bf16.msra.mxu0 0
      %870 = vmatprep.mubr.bf16.mxu0 0
      %871 = vmatmul.mubr.bf16.gmra.mxu0 %v772
      %v872 = vpop.f32.mrf.mxu0
      %v873 = vadd.f32 0.0, %v872
      %v874 = vpop.f32.mrf.mxu0
      %v875 = vpop.f32.mrf.mxu0
      %v876 = vpop.f32.mrf.mxu0
      %877 = vdwg.mxu0
      %v878 = vld [vmem:[%s352 + $0x8] sm:$0xf]
      %v879 = vpack.c.bf16 %v878, %v878
      %s880 = scalar_lea.vmem %s359, 128
      %v881 = vld [vmem:[%s880] sm:$0xf]
      %v882 = vld [vmem:[%s880 + $0x4] sm:$0xf]
      %v883 = vld [vmem:[%s880 + $0x8] sm:$0xf]
      %v884 = vld [vmem:[%s880 + $0xc] sm:$0xf]
      %v885 = vld [vmem:[%s880 + $0x10] sm:$0xf]
      %v886 = vld [vmem:[%s880 + $0x14] sm:$0xf]
      %v887 = vld [vmem:[%s880 + $0x18] sm:$0xf]
      %v888 = vld [vmem:[%s880 + $0x1c] sm:$0xf]
      %v889 = vld [vmem:[%s880 + $0x20] sm:$0xf]
      %v890 = vld [vmem:[%s880 + $0x24] sm:$0xf]
      %v891 = vld [vmem:[%s880 + $0x28] sm:$0xf]
      %v892 = vld [vmem:[%s880 + $0x2c] sm:$0xf]
      %v893 = vld [vmem:[%s880 + $0x30] sm:$0xf]
      %v894 = vld [vmem:[%s880 + $0x34] sm:$0xf]
      %v895 = vld [vmem:[%s880 + $0x38] sm:$0xf]
      %v896 = vld [vmem:[%s880 + $0x3c] sm:$0xf]
      %v913 = vunpack.c.l.b16 %v881
      %v914 = vunpack.c.l.b16 %v882
      %v915 = vunpack.c.l.b16 %v883
      %v916 = vunpack.c.l.b16 %v884
      %v917 = vunpack.c.l.b16 %v885
      %v918 = vunpack.c.l.b16 %v886
      %v919 = vunpack.c.l.b16 %v887
      %v920 = vunpack.c.l.b16 %v888
      %v921 = vunpack.c.l.b16 %v889
      %v922 = vunpack.c.l.b16 %v890
      %v923 = vunpack.c.l.b16 %v891
      %v924 = vunpack.c.l.b16 %v892
      %v925 = vunpack.c.l.b16 %v893
      %v926 = vunpack.c.l.b16 %v894
      %v927 = vunpack.c.l.b16 %v895
      %v928 = vunpack.c.l.b16 %v896
      %v929 = vpack.c.b16 %v914, %v913
      %v930 = vpack.c.b16 %v916, %v915
      %v931 = vpack.c.b16 %v918, %v917
      %v932 = vpack.c.b16 %v920, %v919
      %v933 = vpack.c.b16 %v922, %v921
      %v934 = vpack.c.b16 %v924, %v923
      %v935 = vpack.c.b16 %v926, %v925
      %v936 = vpack.c.b16 %v928, %v927
      %945 = vmatprep.subr.bf16.mxu0 0
      %946 = vmatpush1.bf16.msra.mxu0 %v936
      %947 = vmatprep.subr.bf16.mxu0 0
      %948 = vmatpush1.bf16.msra.mxu0 %v935
      %949 = vmatprep.subr.bf16.mxu0 0
      %950 = vmatpush1.bf16.msra.mxu0 %v934
      %951 = vmatprep.subr.bf16.mxu0 0
      %952 = vmatpush1.bf16.msra.mxu0 %v933
      %953 = vmatprep.subr.bf16.mxu0 0
      %954 = vmatpush1.bf16.msra.mxu0 %v932
      %955 = vmatprep.subr.bf16.mxu0 0
      %956 = vmatpush1.bf16.msra.mxu0 %v931
      %957 = vmatprep.subr.bf16.mxu0 0
      %958 = vmatpush1.bf16.msra.mxu0 %v930
      %959 = vmatprep.subr.bf16.mxu0 0
      %960 = vmatpush1.bf16.msra.mxu0 %v929
      %961 = vmatprep.subr.bf16.mxu0 0
      %962 = vmatpush2.bf16.msra.mxu0 0
      %963 = vmatprep.subr.bf16.mxu0 0
      %964 = vmatpush2.bf16.msra.mxu0 0
      %965 = vmatprep.subr.bf16.mxu0 0
      %966 = vmatpush2.bf16.msra.mxu0 0
      %967 = vmatprep.subr.bf16.mxu0 0
      %968 = vmatpush2.bf16.msra.mxu0 0
      %969 = vmatprep.subr.bf16.mxu0 0
      %970 = vmatpush2.bf16.msra.mxu0 0
      %971 = vmatprep.subr.bf16.mxu0 0
      %972 = vmatpush2.bf16.msra.mxu0 0
      %973 = vmatprep.subr.bf16.mxu0 0
      %974 = vmatpush2.bf16.msra.mxu0 0
      %975 = vmatprep.subr.bf16.mxu0 0
      %976 = vmatpush2.bf16.msra.mxu0 0
      %977 = vmatprep.mubr.bf16.mxu0 0
      %978 = vmatmul.mubr.bf16.gmra.mxu0 %v879
      %v979 = vpop.f32.mrf.mxu0
      %v980 = vadd.f32 %v446, %v979
      %v981 = vpop.f32.mrf.mxu0
      %v982 = vpop.f32.mrf.mxu0
      %v983 = vpop.f32.mrf.mxu0
      %984 = vdwg.mxu0
      %vm985 = vcmp.gt.f32.partialorder %v980, 0.0
      %v986 = vmul.f32 %v980, 0.2
      %v987 = vsel %vm985, %v980, %v986
      %v988 = vpack.c.bf16 %v987, %v987
      %s989 = scalar_lea.vmem %s376, 128
      %v990 = vld [vmem:[%s989] sm:$0xf]
      %v991 = vld [vmem:[%s989 + $0x4] sm:$0xf]
      %v992 = vld [vmem:[%s989 + $0x8] sm:$0xf]
      %v993 = vld [vmem:[%s989 + $0xc] sm:$0xf]
      %v994 = vld [vmem:[%s989 + $0x10] sm:$0xf]
      %v995 = vld [vmem:[%s989 + $0x14] sm:$0xf]
      %v996 = vld [vmem:[%s989 + $0x18] sm:$0xf]
      %v997 = vld [vmem:[%s989 + $0x1c] sm:$0xf]
      %v998 = vld [vmem:[%s989 + $0x20] sm:$0xf]
      %v999 = vld [vmem:[%s989 + $0x24] sm:$0xf]
      %v1000 = vld [vmem:[%s989 + $0x28] sm:$0xf]
      %v1001 = vld [vmem:[%s989 + $0x2c] sm:$0xf]
      %v1002 = vld [vmem:[%s989 + $0x30] sm:$0xf]
      %v1003 = vld [vmem:[%s989 + $0x34] sm:$0xf]
      %v1004 = vld [vmem:[%s989 + $0x38] sm:$0xf]
      %v1005 = vld [vmem:[%s989 + $0x3c] sm:$0xf]
      %v1022 = vunpack.c.l.b16 %v990
      %v1023 = vunpack.c.l.b16 %v991
      %v1024 = vunpack.c.l.b16 %v992
      %v1025 = vunpack.c.l.b16 %v993
      %v1026 = vunpack.c.l.b16 %v994
      %v1027 = vunpack.c.l.b16 %v995
      %v1028 = vunpack.c.l.b16 %v996
      %v1029 = vunpack.c.l.b16 %v997
      %v1030 = vunpack.c.l.b16 %v998
      %v1031 = vunpack.c.l.b16 %v999
      %v1032 = vunpack.c.l.b16 %v1000
      %v1033 = vunpack.c.l.b16 %v1001
      %v1034 = vunpack.c.l.b16 %v1002
      %v1035 = vunpack.c.l.b16 %v1003
      %v1036 = vunpack.c.l.b16 %v1004
      %v1037 = vunpack.c.l.b16 %v1005
      %v1038 = vpack.c.b16 %v1023, %v1022
      %v1039 = vpack.c.b16 %v1025, %v1024
      %v1040 = vpack.c.b16 %v1027, %v1026
      %v1041 = vpack.c.b16 %v1029, %v1028
      %v1042 = vpack.c.b16 %v1031, %v1030
      %v1043 = vpack.c.b16 %v1033, %v1032
      %v1044 = vpack.c.b16 %v1035, %v1034
      %v1045 = vpack.c.b16 %v1037, %v1036
      %1054 = vmatprep.subr.bf16.mxu0 0
      %1055 = vmatpush1.bf16.msra.mxu0 %v1045
      %1056 = vmatprep.subr.bf16.mxu0 0
      %1057 = vmatpush1.bf16.msra.mxu0 %v1044
      %1058 = vmatprep.subr.bf16.mxu0 0
      %1059 = vmatpush1.bf16.msra.mxu0 %v1043
      %1060 = vmatprep.subr.bf16.mxu0 0
      %1061 = vmatpush1.bf16.msra.mxu0 %v1042
      %1062 = vmatprep.subr.bf16.mxu0 0
      %1063 = vmatpush1.bf16.msra.mxu0 %v1041
      %1064 = vmatprep.subr.bf16.mxu0 0
      %1065 = vmatpush1.bf16.msra.mxu0 %v1040
      %1066 = vmatprep.subr.bf16.mxu0 0
      %1067 = vmatpush1.bf16.msra.mxu0 %v1039
      %1068 = vmatprep.subr.bf16.mxu0 0
      %1069 = vmatpush1.bf16.msra.mxu0 %v1038
      %1070 = vmatprep.subr.bf16.mxu0 0
      %1071 = vmatpush2.bf16.msra.mxu0 0
      %1072 = vmatprep.subr.bf16.mxu0 0
      %1073 = vmatpush2.bf16.msra.mxu0 0
      %1074 = vmatprep.subr.bf16.mxu0 0
      %1075 = vmatpush2.bf16.msra.mxu0 0
      %1076 = vmatprep.subr.bf16.mxu0 0
      %1077 = vmatpush2.bf16.msra.mxu0 0
      %1078 = vmatprep.subr.bf16.mxu0 0
      %1079 = vmatpush2.bf16.msra.mxu0 0
      %1080 = vmatprep.subr.bf16.mxu0 0
      %1081 = vmatpush2.bf16.msra.mxu0 0
      %1082 = vmatprep.subr.bf16.mxu0 0
      %1083 = vmatpush2.bf16.msra.mxu0 0
      %1084 = vmatprep.subr.bf16.mxu0 0
      %1085 = vmatpush2.bf16.msra.mxu0 0
      %1086 = vmatprep.mubr.bf16.mxu0 0
      %1087 = vmatmul.mubr.bf16.gmra.mxu0 %v988
      %v1088 = vpop.f32.mrf.mxu0
      %v1089 = vadd.f32 0.0, %v1088
      %v1090 = vpop.f32.mrf.mxu0
      %v1091 = vpop.f32.mrf.mxu0
      %v1092 = vpop.f32.mrf.mxu0
      %1093 = vdwg.mxu0
      %v1094 = vld [vmem:[%s352 + $0xc] sm:$0xf]
      %v1095 = vpack.c.bf16 %v1094, %v1094
      %s1096 = scalar_lea.vmem %s359, 192
      %v1097 = vld [vmem:[%s1096] sm:$0xf]
      %v1098 = vld [vmem:[%s1096 + $0x4] sm:$0xf]
      %v1099 = vld [vmem:[%s1096 + $0x8] sm:$0xf]
      %v1100 = vld [vmem:[%s1096 + $0xc] sm:$0xf]
      %v1101 = vld [vmem:[%s1096 + $0x10] sm:$0xf]
      %v1102 = vld [vmem:[%s1096 + $0x14] sm:$0xf]
      %v1103 = vld [vmem:[%s1096 + $0x18] sm:$0xf]
      %v1104 = vld [vmem:[%s1096 + $0x1c] sm:$0xf]
      %v1105 = vld [vmem:[%s1096 + $0x20] sm:$0xf]
      %v1106 = vld [vmem:[%s1096 + $0x24] sm:$0xf]
      %v1107 = vld [vmem:[%s1096 + $0x28] sm:$0xf]
      %v1108 = vld [vmem:[%s1096 + $0x2c] sm:$0xf]
      %v1109 = vld [vmem:[%s1096 + $0x30] sm:$0xf]
      %v1110 = vld [vmem:[%s1096 + $0x34] sm:$0xf]
      %v1111 = vld [vmem:[%s1096 + $0x38] sm:$0xf]
      %v1112 = vld [vmem:[%s1096 + $0x3c] sm:$0xf]
      %v1129 = vunpack.c.l.b16 %v1097
      %v1130 = vunpack.c.l.b16 %v1098
      %v1131 = vunpack.c.l.b16 %v1099
      %v1132 = vunpack.c.l.b16 %v1100
      %v1133 = vunpack.c.l.b16 %v1101
      %v1134 = vunpack.c.l.b16 %v1102
      %v1135 = vunpack.c.l.b16 %v1103
      %v1136 = vunpack.c.l.b16 %v1104
      %v1137 = vunpack.c.l.b16 %v1105
      %v1138 = vunpack.c.l.b16 %v1106
      %v1139 = vunpack.c.l.b16 %v1107
      %v1140 = vunpack.c.l.b16 %v1108
      %v1141 = vunpack.c.l.b16 %v1109
      %v1142 = vunpack.c.l.b16 %v1110
      %v1143 = vunpack.c.l.b16 %v1111
      %v1144 = vunpack.c.l.b16 %v1112
      %v1145 = vpack.c.b16 %v1130, %v1129
      %v1146 = vpack.c.b16 %v1132, %v1131
      %v1147 = vpack.c.b16 %v1134, %v1133
      %v1148 = vpack.c.b16 %v1136, %v1135
      %v1149 = vpack.c.b16 %v1138, %v1137
      %v1150 = vpack.c.b16 %v1140, %v1139
      %v1151 = vpack.c.b16 %v1142, %v1141
      %v1152 = vpack.c.b16 %v1144, %v1143
      %1161 = vmatprep.subr.bf16.mxu0 0
      %1162 = vmatpush1.bf16.msra.mxu0 %v1152
      %1163 = vmatprep.subr.bf16.mxu0 0
      %1164 = vmatpush1.bf16.msra.mxu0 %v1151
      %1165 = vmatprep.subr.bf16.mxu0 0
      %1166 = vmatpush1.bf16.msra.mxu0 %v1150
      %1167 = vmatprep.subr.bf16.mxu0 0
      %1168 = vmatpush1.bf16.msra.mxu0 %v1149
      %1169 = vmatprep.subr.bf16.mxu0 0
      %1170 = vmatpush1.bf16.msra.mxu0 %v1148
      %1171 = vmatprep.subr.bf16.mxu0 0
      %1172 = vmatpush1.bf16.msra.mxu0 %v1147
      %1173 = vmatprep.subr.bf16.mxu0 0
      %1174 = vmatpush1.bf16.msra.mxu0 %v1146
      %1175 = vmatprep.subr.bf16.mxu0 0
      %1176 = vmatpush1.bf16.msra.mxu0 %v1145
      %1177 = vmatprep.subr.bf16.mxu0 0
      %1178 = vmatpush2.bf16.msra.mxu0 0
      %1179 = vmatprep.subr.bf16.mxu0 0
      %1180 = vmatpush2.bf16.msra.mxu0 0
      %1181 = vmatprep.subr.bf16.mxu0 0
      %1182 = vmatpush2.bf16.msra.mxu0 0
      %1183 = vmatprep.subr.bf16.mxu0 0
      %1184 = vmatpush2.bf16.msra.mxu0 0
      %1185 = vmatprep.subr.bf16.mxu0 0
      %1186 = vmatpush2.bf16.msra.mxu0 0
      %1187 = vmatprep.subr.bf16.mxu0 0
      %1188 = vmatpush2.bf16.msra.mxu0 0
      %1189 = vmatprep.subr.bf16.mxu0 0
      %1190 = vmatpush2.bf16.msra.mxu0 0
      %1191 = vmatprep.subr.bf16.mxu0 0
      %1192 = vmatpush2.bf16.msra.mxu0 0
      %1193 = vmatprep.mubr.bf16.mxu0 0
      %1194 = vmatmul.mubr.bf16.gmra.mxu0 %v1095
      %v1195 = vpop.f32.mrf.mxu0
      %v1196 = vadd.f32 %v447, %v1195
      %v1197 = vpop.f32.mrf.mxu0
      %v1198 = vpop.f32.mrf.mxu0
      %v1199 = vpop.f32.mrf.mxu0
      %1200 = vdwg.mxu0
      %vm1201 = vcmp.gt.f32.partialorder %v1196, 0.0
      %v1202 = vmul.f32 %v1196, 0.2
      %v1203 = vsel %vm1201, %v1196, %v1202
      %v1204 = vpack.c.bf16 %v1203, %v1203
      %s1205 = scalar_lea.vmem %s376, 192
      %v1206 = vld [vmem:[%s1205] sm:$0xf]
      %v1207 = vld [vmem:[%s1205 + $0x4] sm:$0xf]
      %v1208 = vld [vmem:[%s1205 + $0x8] sm:$0xf]
      %v1209 = vld [vmem:[%s1205 + $0xc] sm:$0xf]
      %v1210 = vld [vmem:[%s1205 + $0x10] sm:$0xf]
      %v1211 = vld [vmem:[%s1205 + $0x14] sm:$0xf]
      %v1212 = vld [vmem:[%s1205 + $0x18] sm:$0xf]
      %v1213 = vld [vmem:[%s1205 + $0x1c] sm:$0xf]
      %v1214 = vld [vmem:[%s1205 + $0x20] sm:$0xf]
      %v1215 = vld [vmem:[%s1205 + $0x24] sm:$0xf]
      %v1216 = vld [vmem:[%s1205 + $0x28] sm:$0xf]
      %v1217 = vld [vmem:[%s1205 + $0x2c] sm:$0xf]
      %v1218 = vld [vmem:[%s1205 + $0x30] sm:$0xf]
      %v1219 = vld [vmem:[%s1205 + $0x34] sm:$0xf]
      %v1220 = vld [vmem:[%s1205 + $0x38] sm:$0xf]
      %v1221 = vld [vmem:[%s1205 + $0x3c] sm:$0xf]
      %v1238 = vunpack.c.l.b16 %v1206
      %v1239 = vunpack.c.l.b16 %v1207
      %v1240 = vunpack.c.l.b16 %v1208
      %v1241 = vunpack.c.l.b16 %v1209
      %v1242 = vunpack.c.l.b16 %v1210
      %v1243 = vunpack.c.l.b16 %v1211
      %v1244 = vunpack.c.l.b16 %v1212
      %v1245 = vunpack.c.l.b16 %v1213
      %v1246 = vunpack.c.l.b16 %v1214
      %v1247 = vunpack.c.l.b16 %v1215
      %v1248 = vunpack.c.l.b16 %v1216
      %v1249 = vunpack.c.l.b16 %v1217
      %v1250 = vunpack.c.l.b16 %v1218
      %v1251 = vunpack.c.l.b16 %v1219
      %v1252 = vunpack.c.l.b16 %v1220
      %v1253 = vunpack.c.l.b16 %v1221
      %v1254 = vpack.c.b16 %v1239, %v1238
      %v1255 = vpack.c.b16 %v1241, %v1240
      %v1256 = vpack.c.b16 %v1243, %v1242
      %v1257 = vpack.c.b16 %v1245, %v1244
      %v1258 = vpack.c.b16 %v1247, %v1246
      %v1259 = vpack.c.b16 %v1249, %v1248
      %v1260 = vpack.c.b16 %v1251, %v1250
      %v1261 = vpack.c.b16 %v1253, %v1252
      %1270 = vmatprep.subr.bf16.mxu0 0
      %1271 = vmatpush1.bf16.msra.mxu0 %v1261
      %1272 = vmatprep.subr.bf16.mxu0 0
      %1273 = vmatpush1.bf16.msra.mxu0 %v1260
      %1274 = vmatprep.subr.bf16.mxu0 0
      %1275 = vmatpush1.bf16.msra.mxu0 %v1259
      %1276 = vmatprep.subr.bf16.mxu0 0
      %1277 = vmatpush1.bf16.msra.mxu0 %v1258
      %1278 = vmatprep.subr.bf16.mxu0 0
      %1279 = vmatpush1.bf16.msra.mxu0 %v1257
      %1280 = vmatprep.subr.bf16.mxu0 0
      %1281 = vmatpush1.bf16.msra.mxu0 %v1256
      %1282 = vmatprep.subr.bf16.mxu0 0
      %1283 = vmatpush1.bf16.msra.mxu0 %v1255
      %1284 = vmatprep.subr.bf16.mxu0 0
      %1285 = vmatpush1.bf16.msra.mxu0 %v1254
      %1286 = vmatprep.subr.bf16.mxu0 0
      %1287 = vmatpush2.bf16.msra.mxu0 0
      %1288 = vmatprep.subr.bf16.mxu0 0
      %1289 = vmatpush2.bf16.msra.mxu0 0
      %1290 = vmatprep.subr.bf16.mxu0 0
      %1291 = vmatpush2.bf16.msra.mxu0 0
      %1292 = vmatprep.subr.bf16.mxu0 0
      %1293 = vmatpush2.bf16.msra.mxu0 0
      %1294 = vmatprep.subr.bf16.mxu0 0
      %1295 = vmatpush2.bf16.msra.mxu0 0
      %1296 = vmatprep.subr.bf16.mxu0 0
      %1297 = vmatpush2.bf16.msra.mxu0 0
      %1298 = vmatprep.subr.bf16.mxu0 0
      %1299 = vmatpush2.bf16.msra.mxu0 0
      %1300 = vmatprep.subr.bf16.mxu0 0
      %1301 = vmatpush2.bf16.msra.mxu0 0
      %1302 = vmatprep.mubr.bf16.mxu0 0
      %1303 = vmatmul.mubr.bf16.gmra.mxu0 %v1204
      %v1304 = vpop.f32.mrf.mxu0
      %v1305 = vadd.f32 0.0, %v1304
      %v1306 = vpop.f32.mrf.mxu0
      %v1307 = vpop.f32.mrf.mxu0
      %v1308 = vpop.f32.mrf.mxu0
      %1309 = vdwg.mxu0
      %v1310 = vld [vmem:[%s381] sm:$0xf]
      %v1312 = vlaneseq
      %v1313 = vshrl.u32 %v1312, 7
      %v1314 = vsub.s32 0, %v1313
      %v1315 = vrot.slane %v1310, %v1314
      %v1316 = vlaneseq
      %v1317 = vshrl.u32 %v1316, 7
      %v1318 = vsub.s32 1, %v1317
      %v1319 = vrot.slane %v1310, %v1318
      %v1320 = vlaneseq
      %v1321 = vshrl.u32 %v1320, 7
      %v1322 = vsub.s32 2, %v1321
      %v1323 = vrot.slane %v1310, %v1322
      %v1324 = vlaneseq
      %v1325 = vshrl.u32 %v1324, 7
      %v1326 = vsub.s32 3, %v1325
      %v1327 = vrot.slane %v1310, %v1326
      %v1332 = vadd.f32 %v657, %v1315
      %v1333 = vadd.f32 %v873, %v1319
      %v1334 = vadd.f32 %v1089, %v1323
      %v1335 = vadd.f32 %v1305, %v1327
      %v1340 = vcombine.low %v1332, %v1333
      %v1341 = vcombine.low %v1334, %v1335
      %1344 = vst [vmem:[%s387] sm:$0xff] %v1340
      %1345 = vst [vmem:[%s387 + $0x8] sm:$0xff] %v1341
      %s1346 = smul.u32 4, %s18
      %p1347 = scmp.lt.s32.totalorder %s1346, 7
      %s1348 = scalar_select %p1347, %s1346, 7
      %s1349 = smul.addr %s1348, 4
      %s1350 = scalar_lea.vmem %s7, %s1349
      // Predicated region
      $region49: #{modspace_swap_forward.4} parent=47 // pred_check
        %p1351 = pneg %p213
      $region50: #{modspace_swap_forward.4} parent=47 // pred_check_branch
        %1353 = sbr.rel (%p1351) target = $region52
      $region51: #{modspace_swap_forward.4} parent=47 // pred_region
        %s1354 = smul.u32 4, %s18
      $region52: #{modspace_swap_forward.4} parent=47 // pred_fallthru
        _
    $region48: #{modspace_swap_forward.4} parent=5 // pred_fallthru
      _
    %p1355 = scmp.le.s32.totalorder 2, %s13
    // Predicated region
    $region53: #{modspace_swap_forward.4} parent=5 // pred_check
      %p1356 = pneg %p1355
    $region54: #{modspace_swap_forward.4} parent=5 // pred_check_branch
      %1358 = sbr.rel (%p1356) target = $region56
    $region55: #{modspace_swap_forward.4} parent=5 // pred_region
      %s1359 = ssub.s32 %s13, 2
      // Predicated region
      $region57: #{modspace_swap_forward.4} parent=55 // pred_check
        %p1360 = pneg %p219
      $region58: #{modspace_swap_forward.4} parent=55 // pred_check_branch
        %1362 = sbr.rel (%p1360) target = $region60
      $region59: #{modspace_swap_forward.4} parent=55 // pred_region
        %s1363 = smul.u32 4, %s19
        %p1364 = scmp.lt.s32.totalorder %s1363, 7
        %s1365 = scalar_select %p1364, %s1363, 7
        %s1366 = smul.addr %s1365, 4
        %s1367 = scalar_lea.vmem %s7, %s1366
      $region60: #{modspace_swap_forward.4} parent=55 // pred_fallthru
        _
    $region56: #{modspace_swap_forward.4} parent=5 // pred_fallthru
      _
  $region6: #{modspace_swap_forward.4} parent=0 // loop_footer
    %s17 = sadd.s32 1, %s13
  $region7: #{modspace_swap_forward.4} parent=0 // loop_footer_branch
    %12 = sbr.rel target = $region3
  $region8: #{modspace_swap_forward.4} parent=0 // loop_exit
    _

// kernel: modspace_swap_forward.3
$region0: #{modspace_swap_forward.3}
  #allocation0 [shape = 'u32[]', space=smem, size = 0x4, offset = 0x4, fixed_abs, tag = 'smem constant byte address 0x4 - core index']
  #allocation1 [shape = 'u32[144,128]{1,0:T(1,128)}', space=vmem, size = 0x12000, scoped, tag = 'internal scratch']
  #allocation2 [shape = 'f32[4,1024]{1,0:T(4,128)}', space=vmem, size = 0x4000, scoped, tag = 'scratch operand']
  %s0 = inlined_call_operand.vmem [shape: f32[4,1024], index: 0, kind: input, shape index: {}]
  %s1 = inlined_call_operand.hbm [shape: bf16[1024,1024], index: 1, kind: input, shape index: {}]
  %s2 = inlined_call_operand.hbm [shape: f32[1,1024], index: 2, kind: input, shape index: {}]
  %s3 = inlined_call_operand.vmem [shape: f32[4,1024], index: 3, kind: output, shape index: {}]
  %s4 = sld [smem:[#allocation0]]
  $region38: #{modspace_swap_forward.3} parent=0
    _
  %s6 = ssub.s32 1, %s4
  %s7 = scalar_select 0, %s6, %s4
  $region1: #{modspace_swap_forward.3} parent=0
    #allocation3 [shape = 'u8[2097152]{0}', space=vmem, size = 0x200000, scoped, tag = 'input window, operand 1, single buffered']
    #allocation4 [shape = 's32[1]{0}', space=sflag, size = 0x4, scoped, tag = 'scoped memory for modspace_swap_forward.3']
    #allocation5 [shape = 'u8[4096]{0}', space=vmem, size = 0x1000, scoped, tag = 'input window, operand 2, single buffered']
    #allocation6 [shape = 's32[1]{0}', space=sflag, size = 0x4, scoped, tag = 'scoped memory for modspace_swap_forward.3']
    %8 = vsyncpa [#allocation4], 0
    %9 = vsyncpa [#allocation6], 0
    // Predicated region
    $region2: #{modspace_swap_forward.3} parent=1 // pred_check
      _
    $region3: #{modspace_swap_forward.3} parent=1 // pred_check_branch
      %11 = sbr.rel (0) target = $region5
    $region4: #{modspace_swap_forward.3} parent=1 // pred_region
      _
    $region5: #{modspace_swap_forward.3} parent=1 // pred_fallthru
      _
    // Predicated region
    $region6: #{modspace_swap_forward.3} parent=1 // pred_check
      _
    $region7: #{modspace_swap_forward.3} parent=1 // pred_check_branch
      %13 = sbr.rel (0) target = $region9
    $region8: #{modspace_swap_forward.3} parent=1 // pred_region
      %s15 = ssub.s32 65536, 65536
      %16 = vsyncadd [#allocation4], %s15
      %s17 = sshll.u32 [#allocation3], 4
      %s18 = int_to_ptr.vmem [resolvable:$true] %s17
      %23 = dma.hbm_to_vmem [thread:$0]  %s1, 65536, %s18, [#allocation4], 512, 512, 32
    $region9: #{modspace_swap_forward.3} parent=1 // pred_fallthru
      _
    // Predicated region
    $region10: #{modspace_swap_forward.3} parent=1 // pred_check
      _
    $region11: #{modspace_swap_forward.3} parent=1 // pred_check_branch
      %25 = sbr.rel (0) target = $region13
    $region12: #{modspace_swap_forward.3} parent=1 // pred_region
      %s27 = ssub.s32 128, 128
      %28 = vsyncadd [#allocation6], %s27
      %s30 = sshll.u32 [#allocation5], 4
      %s31 = int_to_ptr.vmem [resolvable:$true] %s30
      %33 = dma.hbm_to_vmem [thread:$0]  %s2, 128, %s31, [#allocation6]
    $region13: #{modspace_swap_forward.3} parent=1 // pred_fallthru
      _
    // Predicated region
    $region14: #{modspace_swap_forward.3} parent=1 // pred_check
      _
    $region15: #{modspace_swap_forward.3} parent=1 // pred_check_branch
      %35 = sbr.rel (0) target = $region17
    $region16: #{modspace_swap_forward.3} parent=1 // pred_region
      %36 = dma.done [#allocation4], 65536
    $region17: #{modspace_swap_forward.3} parent=1 // pred_fallthru
      _
    // Predicated region
    $region18: #{modspace_swap_forward.3} parent=1 // pred_check
      _
    $region19: #{modspace_swap_forward.3} parent=1 // pred_check_branch
      %38 = sbr.rel (0) target = $region21
    $region20: #{modspace_swap_forward.3} parent=1 // pred_region
      %39 = dma.done [#allocation6], 128
    $region21: #{modspace_swap_forward.3} parent=1 // pred_fallthru
      _
    %p40 = scmp.eq.s32.totalorder 0, 0
    // Predicated region
    $region22: #{modspace_swap_forward.3} parent=1 // pred_check
      %p41 = pneg %p40
    $region23: #{modspace_swap_forward.3} parent=1 // pred_check_branch
      %43 = sbr.rel (%p41) target = $region25
    $region24: #{modspace_swap_forward.3} parent=1 // pred_region
      %44 = vst [vmem:[#allocation2] sm:$0xff] 0.0
      %45 = vst [vmem:[#allocation2 + $0x8] sm:$0xff] 0.0
      %46 = vst [vmem:[#allocation2 + $0x10] sm:$0xff] 0.0
      %47 = vst [vmem:[#allocation2 + $0x18] sm:$0xff] 0.0
    $region25: #{modspace_swap_forward.3} parent=1 // pred_fallthru
      _
    %v48 = vld [vmem:[#allocation2] sm:$0xff]
    %v49 = vld [vmem:[#allocation2 + $0x8] sm:$0xff]
    %v50 = vld [vmem:[#allocation2 + $0x10] sm:$0xff]
    %v51 = vld [vmem:[#allocation2 + $0x18] sm:$0xff]
    %v52 = vld [vmem:[%s0] sm:$0xff]
    %v53 = vld [vmem:[%s0 + $0x8] sm:$0xff]
    %v54 = vld [vmem:[%s0 + $0x10] sm:$0xff]
    %v55 = vld [vmem:[%s0 + $0x18] sm:$0xff]
    %v60 = vcombine.high %v52, %v52
    %v61 = vcombine.high %v53, %v53
    %v62 = vcombine.high %v54, %v54
    %v63 = vcombine.high %v55, %v55
    %v68 = vpack.c.bf16 %v52, %v52
    %v69 = vpack.c.bf16 %v60, %v60
    %v70 = vpack.c.bf16 %v53, %v53
    %v71 = vpack.c.bf16 %v61, %v61
    %v72 = vpack.c.bf16 %v54, %v54
    %v73 = vpack.c.bf16 %v62, %v62
    %v74 = vpack.c.bf16 %v55, %v55
    %v75 = vpack.c.bf16 %v63, %v63
    %v76 = vld [vmem:[#allocation3] sm:$0xff]
    %v77 = vld [vmem:[#allocation3 + $0x8] sm:$0xff]
    %v78 = vld [vmem:[#allocation3 + $0x10] sm:$0xff]
    %v79 = vld [vmem:[#allocation3 + $0x18] sm:$0xff]
    %v80 = vld [vmem:[#allocation3 + $0x20] sm:$0xff]
    %v81 = vld [vmem:[#allocation3 + $0x28] sm:$0xff]
    %v82 = vld [vmem:[#allocation3 + $0x30] sm:$0xff]
    %v83 = vld [vmem:[#allocation3 + $0x38] sm:$0xff]
    %v84 = vld [vmem:[#allocation3 + $0x40] sm:$0xff]
    %v85 = vld [vmem:[#allocation3 + $0x48] sm:$0xff]
    %v86 = vld [vmem:[#allocation3 + $0x50] sm:$0xff]
    %v87 = vld [vmem:[#allocation3 + $0x58] sm:$0xff]
    %v88 = vld [vmem:[#allocation3 + $0x60] sm:$0xff]
    %v89 = vld [vmem:[#allocation3 + $0x68] sm:$0xff]
    %v90 = vld [vmem:[#allocation3 + $0x70] sm:$0xff]
    %v91 = vld [vmem:[#allocation3 + $0x78] sm:$0xff]
    %v92 = vld [vmem:[#allocation3 + $0x80] sm:$0xff]
    %v93 = vld [vmem:[#allocation3 + $0x88] sm:$0xff]
    %v94 = vld [vmem:[#allocation3 + $0x90] sm:$0xff]
    %v95 = vld [vmem:[#allocation3 + $0x98] sm:$0xff]
    %v96 = vld [vmem:[#allocation3 + $0xa0] sm:$0xff]
    %v97 = vld [vmem:[#allocation3 + $0xa8] sm:$0xff]
    %v98 = vld [vmem:[#allocation3 + $0xb0] sm:$0xff]
    %v99 = vld [vmem:[#allocation3 + $0xb8] sm:$0xff]
    %v100 = vld [vmem:[#allocation3 + $0xc0] sm:$0xff]
    %v101 = vld [vmem:[#allocation3 + $0xc8] sm:$0xff]
    %v102 = vld [vmem:[#allocation3 + $0xd0] sm:$0xff]
    %v103 = vld [vmem:[#allocation3 + $0xd8] sm:$0xff]
    %v104 = vld [vmem:[#allocation3 + $0xe0] sm:$0xff]
    %v105 = vld [vmem:[#allocation3 + $0xe8] sm:$0xff]
    %v106 = vld [vmem:[#allocation3 + $0xf0] sm:$0xff]
    %v107 = vld [vmem:[#allocation3 + $0xf8] sm:$0xff]
    %v108 = vld [vmem:[#allocation3 + $0x100] sm:$0xff]
    %v109 = vld [vmem:[#allocation3 + $0x108] sm:$0xff]
    %v110 = vld [vmem:[#allocation3 + $0x110] sm:$0xff]
    %v111 = vld [vmem:[#allocation3 + $0x118] sm:$0xff]
    %v112 = vld [vmem:[#allocation3 + $0x120] sm:$0xff]
    %v113 = vld [vmem:[#allocation3 + $0x128] sm:$0xff]
    %v114 = vld [vmem:[#allocation3 + $0x130] sm:$0xff]
    %v115 = vld [vmem:[#allocation3 + $0x138] sm:$0xff]
    %v116 = vld [vmem:[#allocation3 + $0x140] sm:$0xff]
    %v117 = vld [vmem:[#allocation3 + $0x148] sm:$0xff]
    %v118 = vld [vmem:[#allocation3 + $0x150] sm:$0xff]
    %v119 = vld [vmem:[#allocation3 + $0x158] sm:$0xff]
    %v120 = vld [vmem:[#allocation3 + $0x160] sm:$0xff]
    %v121 = vld [vmem:[#allocation3 + $0x168] sm:$0xff]
    %v122 = vld [vmem:[#allocation3 + $0x170] sm:$0xff]
    %v123 = vld [vmem:[#allocation3 + $0x178] sm:$0xff]
    %v124 = vld [vmem:[#allocation3 + $0x180] sm:$0xff]
    %v125 = vld [vmem:[#allocation3 + $0x188] sm:$0xff]
    %v126 = vld [vmem:[#allocation3 + $0x190] sm:$0xff]
    %v127 = vld [vmem:[#allocation3 + $0x198] sm:$0xff]
    %v128 = vld [vmem:[#allocation3 + $0x1a0] sm:$0xff]
    %v129 = vld [vmem:[#allocation3 + $0x1a8] sm:$0xff]
    %v130 = vld [vmem:[#allocation3 + $0x1b0] sm:$0xff]
    %v131 = vld [vmem:[#allocation3 + $0x1b8] sm:$0xff]
    %v132 = vld [vmem:[#allocation3 + $0x1c0] sm:$0xff]
    %v133 = vld [vmem:[#allocation3 + $0x1c8] sm:$0xff]
    %v134 = vld [vmem:[#allocation3 + $0x1d0] sm:$0xff]
    %v135 = vld [vmem:[#allocation3 + $0x1d8] sm:$0xff]
    %v136 = vld [vmem:[#allocation3 + $0x1e0] sm:$0xff]
    %v137 = vld [vmem:[#allocation3 + $0x1e8] sm:$0xff]
    %v138 = vld [vmem:[#allocation3 + $0x1f0] sm:$0xff]
    %v139 = vld [vmem:[#allocation3 + $0x1f8] sm:$0xff]
    %v140 = vld [vmem:[#allocation3 + $0x200] sm:$0xff]
    %v141 = vld [vmem:[#allocation3 + $0x208] sm:$0xff]
    %v142 = vld [vmem:[#allocation3 + $0x210] sm:$0xff]
    %v143 = vld [vmem:[#allocation3 + $0x218] sm:$0xff]
    %v144 = vld [vmem:[#allocation3 + $0x220] sm:$0xff]
    %v145 = vld [vmem:[#allocation3 + $0x228] sm:$0xff]
    %v146 = vld [vmem:[#allocation3 + $0x230] sm:$0xff]
    %v147 = vld [vmem:[#allocation3 + $0x238] sm:$0xff]
    %v148 = vld [vmem:[#allocation3 + $0x240] sm:$0xff]
    %v149 = vld [vmem:[#allocation3 + $0x248] sm:$0xff]
    %v150 = vld [vmem:[#allocation3 + $0x250] sm:$0xff]
    %v151 = vld [vmem:[#allocation3 + $0x258] sm:$0xff]
    %v152 = vld [vmem:[#allocation3 + $0x260] sm:$0xff]
    %v153 = vld [vmem:[#allocation3 + $0x268] sm:$0xff]
    %v154 = vld [vmem:[#allocation3 + $0x270] sm:$0xff]
    %v155 = vld [vmem:[#allocation3 + $0x278] sm:$0xff]
    %v156 = vld [vmem:[#allocation3 + $0x280] sm:$0xff]
    %v157 = vld [vmem:[#allocation3 + $0x288] sm:$0xff]
    %v158 = vld [vmem:[#allocation3 + $0x290] sm:$0xff]
    %v159 = vld [vmem:[#allocation3 + $0x298] sm:$0xff]
    %v160 = vld [vmem:[#allocation3 + $0x2a0] sm:$0xff]
    %v161 = vld [vmem:[#allocation3 + $0x2a8] sm:$0xff]
    %v162 = vld [vmem:[#allocation3 + $0x2b0] sm:$0xff]
    %v163 = vld [vmem:[#allocation3 + $0x2b8] sm:$0xff]
    %v164 = vld [vmem:[#allocation3 + $0x2c0] sm:$0xff]
    %v165 = vld [vmem:[#allocation3 + $0x2c8] sm:$0xff]
    %v166 = vld [vmem:[#allocation3 + $0x2d0] sm:$0xff]
    %v167 = vld [vmem:[#allocation3 + $0x2d8] sm:$0xff]
    %v168 = vld [vmem:[#allocation3 + $0x2e0] sm:$0xff]
    %v169 = vld [vmem:[#allocation3 + $0x2e8] sm:$0xff]
    %v170 = vld [vmem:[#allocation3 + $0x2f0] sm:$0xff]
    %v171 = vld [vmem:[#allocation3 + $0x2f8] sm:$0xff]
    %v172 = vld [vmem:[#allocation3 + $0x300] sm:$0xff]
    %v173 = vld [vmem:[#allocation3 + $0x308] sm:$0xff]
    %v174 = vld [vmem:[#allocation3 + $0x310] sm:$0xff]
    %v175 = vld [vmem:[#allocation3 + $0x318] sm:$0xff]
    %v176 = vld [vmem:[#allocation3 + $0x320] sm:$0xff]
    %v177 = vld [vmem:[#allocation3 + $0x328] sm:$0xff]
    %v178 = vld [vmem:[#allocation3 + $0x330] sm:$0xff]
    %v179 = vld [vmem:[#allocation3 + $0x338] sm:$0xff]
    %v180 = vld [vmem:[#allocation3 + $0x340] sm:$0xff]
    %v181 = vld [vmem:[#allocation3 + $0x348] sm:$0xff]
    %v182 = vld [vmem:[#allocation3 + $0x350] sm:$0xff]
    %v183 = vld [vmem:[#allocation3 + $0x358] sm:$0xff]
    %v184 = vld [vmem:[#allocation3 + $0x360] sm:$0xff]
    %v185 = vld [vmem:[#allocation3 + $0x368] sm:$0xff]
    %v186 = vld [vmem:[#allocation3 + $0x370] sm:$0xff]
    %v187 = vld [vmem:[#allocation3 + $0x378] sm:$0xff]
    %v188 = vld [vmem:[#allocation3 + $0x380] sm:$0xff]
    %v189 = vld [vmem:[#allocation3 + $0x388] sm:$0xff]
    %v190 = vld [vmem:[#allocation3 + $0x390] sm:$0xff]
    %v191 = vld [vmem:[#allocation3 + $0x398] sm:$0xff]
    %v192 = vld [vmem:[#allocation3 + $0x3a0] sm:$0xff]
    %v193 = vld [vmem:[#allocation3 + $0x3a8] sm:$0xff]
    %v194 = vld [vmem:[#allocation3 + $0x3b0] sm:$0xff]
    %v195 = vld [vmem:[#allocation3 + $0x3b8] sm:$0xff]
    %v196 = vld [vmem:[#allocation3 + $0x3c0] sm:$0xff]
    %v197 = vld [vmem:[#allocation3 + $0x3c8] sm:$0xff]
    %v198 = vld [vmem:[#allocation3 + $0x3d0] sm:$0xff]
    %v199 = vld [vmem:[#allocation3 + $0x3d8] sm:$0xff]
    %v200 = vld [vmem:[#allocation3 + $0x3e0] sm:$0xff]
    %v201 = vld [vmem:[#allocation3 + $0x3e8] sm:$0xff]
    %v202 = vld [vmem:[#allocation3 + $0x3f0] sm:$0xff]
    %v203 = vld [vmem:[#allocation3 + $0x3f8] sm:$0xff]
    %v204 = vld [vmem:[#allocation3 + $0x400] sm:$0xff]
    %v205 = vld [vmem:[#allocation3 + $0x408] sm:$0xff]
    %v206 = vld [vmem:[#allocation3 + $0x410] sm:$0xff]
    %v207 = vld [vmem:[#allocation3 + $0x418] sm:$0xff]
    %v208 = vld [vmem:[#allocation3 + $0x420] sm:$0xff]
    %v209 = vld [vmem:[#allocation3 + $0x428] sm:$0xff]
    %v210 = vld [vmem:[#allocation3 + $0x430] sm:$0xff]
    %v211 = vld [vmem:[#allocation3 + $0x438] sm:$0xff]
    %v212 = vld [vmem:[#allocation3 + $0x440] sm:$0xff]
    %v213 = vld [vmem:[#allocation3 + $0x448] sm:$0xff]
    %v214 = vld [vmem:[#allocation3 + $0x450] sm:$0xff]
    %v215 = vld [vmem:[#allocation3 + $0x458] sm:$0xff]
    %v216 = vld [vmem:[#allocation3 + $0x460] sm:$0xff]
    %v217 = vld [vmem:[#allocation3 + $0x468] sm:$0xff]
    %v218 = vld [vmem:[#allocation3 + $0x470] sm:$0xff]
    %v219 = vld [vmem:[#allocation3 + $0x478] sm:$0xff]
    %v220 = vld [vmem:[#allocation3 + $0x480] sm:$0xff]
    %v221 = vld [vmem:[#allocation3 + $0x488] sm:$0xff]
    %v222 = vld [vmem:[#allocation3 + $0x490] sm:$0xff]
    %v223 = vld [vmem:[#allocation3 + $0x498] sm:$0xff]
    %v224 = vld [vmem:[#allocation3 + $0x4a0] sm:$0xff]
    %v225 = vld [vmem:[#allocation3 + $0x4a8] sm:$0xff]
    %v226 = vld [vmem:[#allocation3 + $0x4b0] sm:$0xff]
    %v227 = vld [vmem:[#allocation3 + $0x4b8] sm:$0xff]
    %v228 = vld [vmem:[#allocation3 + $0x4c0] sm:$0xff]
    %v229 = vld [vmem:[#allocation3 + $0x4c8] sm:$0xff]
    %v230 = vld [vmem:[#allocation3 + $0x4d0] sm:$0xff]
    %v231 = vld [vmem:[#allocation3 + $0x4d8] sm:$0xff]
    %v232 = vld [vmem:[#allocation3 + $0x4e0] sm:$0xff]
    %v233 = vld [vmem:[#allocation3 + $0x4e8] sm:$0xff]
    %v234 = vld [vmem:[#allocation3 + $0x4f0] sm:$0xff]
    %v235 = vld [vmem:[#allocation3 + $0x4f8] sm:$0xff]
    %v236 = vld [vmem:[#allocation3 + $0x500] sm:$0xff]
    %v237 = vld [vmem:[#allocation3 + $0x508] sm:$0xff]
    %v238 = vld [vmem:[#allocation3 + $0x510] sm:$0xff]
    %v239 = vld [vmem:[#allocation3 + $0x518] sm:$0xff]
    %v240 = vld [vmem:[#allocation3 + $0x520] sm:$0xff]
    %v241 = vld [vmem:[#allocation3 + $0x528] sm:$0xff]
    %v242 = vld [vmem:[#allocation3 + $0x530] sm:$0xff]
    %v243 = vld [vmem:[#allocation3 + $0x538] sm:$0xff]
    %v244 = vld [vmem:[#allocation3 + $0x540] sm:$0xff]
    %v245 = vld [vmem:[#allocation3 + $0x548] sm:$0xff]
    %v246 = vld [vmem:[#allocation3 + $0x550] sm:$0xff]
    %v247 = vld [vmem:[#allocation3 + $0x558] sm:$0xff]
    %v248 = vld [vmem:[#allocation3 + $0x560] sm:$0xff]
    %v249 = vld [vmem:[#allocation3 + $0x568] sm:$0xff]
    %v250 = vld [vmem:[#allocation3 + $0x570] sm:$0xff]
    %v251 = vld [vmem:[#allocation3 + $0x578] sm:$0xff]
    %v252 = vld [vmem:[#allocation3 + $0x580] sm:$0xff]
    %v253 = vld [vmem:[#allocation3 + $0x588] sm:$0xff]
    %v254 = vld [vmem:[#allocation3 + $0x590] sm:$0xff]
    %v255 = vld [vmem:[#allocation3 + $0x598] sm:$0xff]
    %v256 = vld [vmem:[#allocation3 + $0x5a0] sm:$0xff]
    %v257 = vld [vmem:[#allocation3 + $0x5a8] sm:$0xff]
    %v258 = vld [vmem:[#allocation3 + $0x5b0] sm:$0xff]
    %v259 = vld [vmem:[#allocation3 + $0x5b8] sm:$0xff]
    %v260 = vld [vmem:[#allocation3 + $0x5c0] sm:$0xff]
    %v261 = vld [vmem:[#allocation3 + $0x5c8] sm:$0xff]
    %v262 = vld [vmem:[#allocation3 + $0x5d0] sm:$0xff]
    %v263 = vld [vmem:[#allocation3 + $0x5d8] sm:$0xff]
    %v264 = vld [vmem:[#allocation3 + $0x5e0] sm:$0xff]
    %v265 = vld [vmem:[#allocation3 + $0x5e8] sm:$0xff]
    %v266 = vld [vmem:[#allocation3 + $0x5f0] sm:$0xff]
    %v267 = vld [vmem:[#allocation3 + $0x5f8] sm:$0xff]
    %v268 = vld [vmem:[#allocation3 + $0x600] sm:$0xff]
    %v269 = vld [vmem:[#allocation3 + $0x608] sm:$0xff]
    %v270 = vld [vmem:[#allocation3 + $0x610] sm:$0xff]
    %v271 = vld [vmem:[#allocation3 + $0x618] sm:$0xff]
    %v272 = vld [vmem:[#allocation3 + $0x620] sm:$0xff]
    %v273 = vld [vmem:[#allocation3 + $0x628] sm:$0xff]
    %v274 = vld [vmem:[#allocation3 + $0x630] sm:$0xff]
    %v275 = vld [vmem:[#allocation3 + $0x638] sm:$0xff]
    %v276 = vld [vmem:[#allocation3 + $0x640] sm:$0xff]
    %v277 = vld [vmem:[#allocation3 + $0x648] sm:$0xff]
    %v278 = vld [vmem:[#allocation3 + $0x650] sm:$0xff]
    %v279 = vld [vmem:[#allocation3 + $0x658] sm:$0xff]
    %v280 = vld [vmem:[#allocation3 + $0x660] sm:$0xff]
    %v281 = vld [vmem:[#allocation3 + $0x668] sm:$0xff]
    %v282 = vld [vmem:[#allocation3 + $0x670] sm:$0xff]
    %v283 = vld [vmem:[#allocation3 + $0x678] sm:$0xff]
    %v284 = vld [vmem:[#allocation3 + $0x680] sm:$0xff]
    %v285 = vld [vmem:[#allocation3 + $0x688] sm:$0xff]
    %v286 = vld [vmem:[#allocation3 + $0x690] sm:$0xff]
    %v287 = vld [vmem:[#allocation3 + $0x698] sm:$0xff]
    %v288 = vld [vmem:[#allocation3 + $0x6a0] sm:$0xff]
    %v289 = vld [vmem:[#allocation3 + $0x6a8] sm:$0xff]
    %v290 = vld [vmem:[#allocation3 + $0x6b0] sm:$0xff]
    %v291 = vld [vmem:[#allocation3 + $0x6b8] sm:$0xff]
    %v292 = vld [vmem:[#allocation3 + $0x6c0] sm:$0xff]
    %v293 = vld [vmem:[#allocation3 + $0x6c8] sm:$0xff]
    %v294 = vld [vmem:[#allocation3 + $0x6d0] sm:$0xff]
    %v295 = vld [vmem:[#allocation3 + $0x6d8] sm:$0xff]
    %v296 = vld [vmem:[#allocation3 + $0x6e0] sm:$0xff]
    %v297 = vld [vmem:[#allocation3 + $0x6e8] sm:$0xff]
    %v298 = vld [vmem:[#allocation3 + $0x6f0] sm:$0xff]
    %v299 = vld [vmem:[#allocation3 + $0x6f8] sm:$0xff]
    %v300 = vld [vmem:[#allocation3 + $0x700] sm:$0xff]
    %v301 = vld [vmem:[#allocation3 + $0x708] sm:$0xff]
    %v302 = vld [vmem:[#allocation3 + $0x710] sm:$0xff]
    %v303 = vld [vmem:[#allocation3 + $0x718] sm:$0xff]
    %v304 = vld [vmem:[#allocation3 + $0x720] sm:$0xff]
    %v305 = vld [vmem:[#allocation3 + $0x728] sm:$0xff]
    %v306 = vld [vmem:[#allocation3 + $0x730] sm:$0xff]
    %v307 = vld [vmem:[#allocation3 + $0x738] sm:$0xff]
    %v308 = vld [vmem:[#allocation3 + $0x740] sm:$0xff]
    %v309 = vld [vmem:[#allocation3 + $0x748] sm:$0xff]
    %v310 = vld [vmem:[#allocation3 + $0x750] sm:$0xff]
    %v311 = vld [vmem:[#allocation3 + $0x758] sm:$0xff]
    %v312 = vld [vmem:[#allocation3 + $0x760] sm:$0xff]
    %v313 = vld [vmem:[#allocation3 + $0x768] sm:$0xff]
    %v314 = vld [vmem:[#allocation3 + $0x770] sm:$0xff]
    %v315 = vld [vmem:[#allocation3 + $0x778] sm:$0xff]
    %v316 = vld [vmem:[#allocation3 + $0x780] sm:$0xff]
    %v317 = vld [vmem:[#allocation3 + $0x788] sm:$0xff]
    %v318 = vld [vmem:[#allocation3 + $0x790] sm:$0xff]
    %v319 = vld [vmem:[#allocation3 + $0x798] sm:$0xff]
    %v320 = vld [vmem:[#allocation3 + $0x7a0] sm:$0xff]
    %v321 = vld [vmem:[#allocation3 + $0x7a8] sm:$0xff]
    %v322 = vld [vmem:[#allocation3 + $0x7b0] sm:$0xff]
    %v323 = vld [vmem:[#allocation3 + $0x7b8] sm:$0xff]
    %v324 = vld [vmem:[#allocation3 + $0x7c0] sm:$0xff]
    %v325 = vld [vmem:[#allocation3 + $0x7c8] sm:$0xff]
    %v326 = vld [vmem:[#allocation3 + $0x7d0] sm:$0xff]
    %v327 = vld [vmem:[#allocation3 + $0x7d8] sm:$0xff]
    %v328 = vld [vmem:[#allocation3 + $0x7e0] sm:$0xff]
    %v329 = vld [vmem:[#allocation3 + $0x7e8] sm:$0xff]
    %v330 = vld [vmem:[#allocation3 + $0x7f0] sm:$0xff]
    %v331 = vld [vmem:[#allocation3 + $0x7f8] sm:$0xff]
    %v332 = vld [vmem:[#allocation3 + $0x800] sm:$0xff]
    %v333 = vld [vmem:[#allocation3 + $0x808] sm:$0xff]
    %v334 = vld [vmem:[#allocation3 + $0x810] sm:$0xff]
    %v335 = vld [vmem:[#allocation3 + $0x818] sm:$0xff]
    %v336 = vld [vmem:[#allocation3 + $0x820] sm:$0xff]
    %v337 = vld [vmem:[#allocation3 + $0x828] sm:$0xff]
    %v338 = vld [vmem:[#allocation3 + $0x830] sm:$0xff]
    %v339 = vld [vmem:[#allocation3 + $0x838] sm:$0xff]
    %v340 = vld [vmem:[#allocation3 + $0x840] sm:$0xff]
    %v341 = vld [vmem:[#allocation3 + $0x848] sm:$0xff]
    %v342 = vld [vmem:[#allocation3 + $0x850] sm:$0xff]
    %v343 = vld [vmem:[#allocation3 + $0x858] sm:$0xff]
    %v344 = vld [vmem:[#allocation3 + $0x860] sm:$0xff]
    %v345 = vld [vmem:[#allocation3 + $0x868] sm:$0xff]
    %v346 = vld [vmem:[#allocation3 + $0x870] sm:$0xff]
    %v347 = vld [vmem:[#allocation3 + $0x878] sm:$0xff]
    %v348 = vld [vmem:[#allocation3 + $0x880] sm:$0xff]
    %v349 = vld [vmem:[#allocation3 + $0x888] sm:$0xff]
    %v350 = vld [vmem:[#allocation3 + $0x890] sm:$0xff]
    %v351 = vld [vmem:[#allocation3 + $0x898] sm:$0xff]
    %v352 = vld [vmem:[#allocation3 + $0x8a0] sm:$0xff]
    %v353 = vld [vmem:[#allocation3 + $0x8a8] sm:$0xff]
    %v354 = vld [vmem:[#allocation3 + $0x8b0] sm:$0xff]
    %v355 = vld [vmem:[#allocation3 + $0x8b8] sm:$0xff]
    %v356 = vld [vmem:[#allocation3 + $0x8c0] sm:$0xff]
    %v357 = vld [vmem:[#allocation3 + $0x8c8] sm:$0xff]
    %v358 = vld [vmem:[#allocation3 + $0x8d0] sm:$0xff]
    %v359 = vld [vmem:[#allocation3 + $0x8d8] sm:$0xff]
    %v360 = vld [vmem:[#allocation3 + $0x8e0] sm:$0xff]
    %v361 = vld [vmem:[#allocation3 + $0x8e8] sm:$0xff]
    %v362 = vld [vmem:[#allocation3 + $0x8f0] sm:$0xff]
    %v363 = vld [vmem:[#allocation3 + $0x8f8] sm:$0xff]
    %v364 = vld [vmem:[#allocation3 + $0x900] sm:$0xff]
    %v365 = vld [vmem:[#allocation3 + $0x908] sm:$0xff]
    %v366 = vld [vmem:[#allocation3 + $0x910] sm:$0xff]
    %v367 = vld [vmem:[#allocation3 + $0x918] sm:$0xff]
    %v368 = vld [vmem:[#allocation3 + $0x920] sm:$0xff]
    %v369 = vld [vmem:[#allocation3 + $0x928] sm:$0xff]
    %v370 = vld [vmem:[#allocation3 + $0x930] sm:$0xff]
    %v371 = vld [vmem:[#allocation3 + $0x938] sm:$0xff]
    %v372 = vld [vmem:[#allocation3 + $0x940] sm:$0xff]
    %v373 = vld [vmem:[#allocation3 + $0x948] sm:$0xff]
    %v374 = vld [vmem:[#allocation3 + $0x950] sm:$0xff]
    %v375 = vld [vmem:[#allocation3 + $0x958] sm:$0xff]
    %v376 = vld [vmem:[#allocation3 + $0x960] sm:$0xff]
    %v377 = vld [vmem:[#allocation3 + $0x968] sm:$0xff]
    %v378 = vld [vmem:[#allocation3 + $0x970] sm:$0xff]
    %v379 = vld [vmem:[#allocation3 + $0x978] sm:$0xff]
    %v380 = vld [vmem:[#allocation3 + $0x980] sm:$0xff]
    %v381 = vld [vmem:[#allocation3 + $0x988] sm:$0xff]
    %v382 = vld [vmem:[#allocation3 + $0x990] sm:$0xff]
    %v383 = vld [vmem:[#allocation3 + $0x998] sm:$0xff]
    %v384 = vld [vmem:[#allocation3 + $0x9a0] sm:$0xff]
    %v385 = vld [vmem:[#allocation3 + $0x9a8] sm:$0xff]
    %v386 = vld [vmem:[#allocation3 + $0x9b0] sm:$0xff]
    %v387 = vld [vmem:[#allocation3 + $0x9b8] sm:$0xff]
    %v388 = vld [vmem:[#allocation3 + $0x9c0] sm:$0xff]
    %v389 = vld [vmem:[#allocation3 + $0x9c8] sm:$0xff]
    %v390 = vld [vmem:[#allocation3 + $0x9d0] sm:$0xff]
    %v391 = vld [vmem:[#allocation3 + $0x9d8] sm:$0xff]
    %v392 = vld [vmem:[#allocation3 + $0x9e0] sm:$0xff]
    %v393 = vld [vmem:[#allocation3 + $0x9e8] sm:$0xff]
    %v394 = vld [vmem:[#allocation3 + $0x9f0] sm:$0xff]
    %v395 = vld [vmem:[#allocation3 + $0x9f8] sm:$0xff]
    %v396 = vld [vmem:[#allocation3 + $0xa00] sm:$0xff]
    %v397 = vld [vmem:[#allocation3 + $0xa08] sm:$0xff]
    %v398 = vld [vmem:[#allocation3 + $0xa10] sm:$0xff]
    %v399 = vld [vmem:[#allocation3 + $0xa18] sm:$0xff]
    %v400 = vld [vmem:[#allocation3 + $0xa20] sm:$0xff]
    %v401 = vld [vmem:[#allocation3 + $0xa28] sm:$0xff]
    %v402 = vld [vmem:[#allocation3 + $0xa30] sm:$0xff]
    %v403 = vld [vmem:[#allocation3 + $0xa38] sm:$0xff]
    %v404 = vld [vmem:[#allocation3 + $0xa40] sm:$0xff]
    %v405 = vld [vmem:[#allocation3 + $0xa48] sm:$0xff]
    %v406 = vld [vmem:[#allocation3 + $0xa50] sm:$0xff]
    %v407 = vld [vmem:[#allocation3 + $0xa58] sm:$0xff]
    %v408 = vld [vmem:[#allocation3 + $0xa60] sm:$0xff]
    %v409 = vld [vmem:[#allocation3 + $0xa68] sm:$0xff]
    %v410 = vld [vmem:[#allocation3 + $0xa70] sm:$0xff]
    %v411 = vld [vmem:[#allocation3 + $0xa78] sm:$0xff]
    %v412 = vld [vmem:[#allocation3 + $0xa80] sm:$0xff]
    %v413 = vld [vmem:[#allocation3 + $0xa88] sm:$0xff]
    %v414 = vld [vmem:[#allocation3 + $0xa90] sm:$0xff]
    %v415 = vld [vmem:[#allocation3 + $0xa98] sm:$0xff]
    %v416 = vld [vmem:[#allocation3 + $0xaa0] sm:$0xff]
    %v417 = vld [vmem:[#allocation3 + $0xaa8] sm:$0xff]
    %v418 = vld [vmem:[#allocation3 + $0xab0] sm:$0xff]
    %v419 = vld [vmem:[#allocation3 + $0xab8] sm:$0xff]
    %v420 = vld [vmem:[#allocation3 + $0xac0] sm:$0xff]
    %v421 = vld [vmem:[#allocation3 + $0xac8] sm:$0xff]
    %v422 = vld [vmem:[#allocation3 + $0xad0] sm:$0xff]
    %v423 = vld [vmem:[#allocation3 + $0xad8] sm:$0xff]
    %v424 = vld [vmem:[#allocation3 + $0xae0] sm:$0xff]
    %v425 = vld [vmem:[#allocation3 + $0xae8] sm:$0xff]
    %v426 = vld [vmem:[#allocation3 + $0xaf0] sm:$0xff]
    %v427 = vld [vmem:[#allocation3 + $0xaf8] sm:$0xff]
    %v428 = vld [vmem:[#allocation3 + $0xb00] sm:$0xff]
    %v429 = vld [vmem:[#allocation3 + $0xb08] sm:$0xff]
    %v430 = vld [vmem:[#allocation3 + $0xb10] sm:$0xff]
    %v431 = vld [vmem:[#allocation3 + $0xb18] sm:$0xff]
    %v432 = vld [vmem:[#allocation3 + $0xb20] sm:$0xff]
    %v433 = vld [vmem:[#allocation3 + $0xb28] sm:$0xff]
    %v434 = vld [vmem:[#allocation3 + $0xb30] sm:$0xff]
    %v435 = vld [vmem:[#allocation3 + $0xb38] sm:$0xff]
    %v436 = vld [vmem:[#allocation3 + $0xb40] sm:$0xff]
    %v437 = vld [vmem:[#allocation3 + $0xb48] sm:$0xff]
    %v438 = vld [vmem:[#allocation3 + $0xb50] sm:$0xff]
    %v439 = vld [vmem:[#allocation3 + $0xb58] sm:$0xff]
    %v440 = vld [vmem:[#allocation3 + $0xb60] sm:$0xff]
    %v441 = vld [vmem:[#allocation3 + $0xb68] sm:$0xff]
    %v442 = vld [vmem:[#allocation3 + $0xb70] sm:$0xff]
    %v443 = vld [vmem:[#allocation3 + $0xb78] sm:$0xff]
    %v444 = vld [vmem:[#allocation3 + $0xb80] sm:$0xff]
    %v445 = vld [vmem:[#allocation3 + $0xb88] sm:$0xff]
    %v446 = vld [vmem:[#allocation3 + $0xb90] sm:$0xff]
    %v447 = vld [vmem:[#allocation3 + $0xb98] sm:$0xff]
    %v448 = vld [vmem:[#allocation3 + $0xba0] sm:$0xff]
    %v449 = vld [vmem:[#allocation3 + $0xba8] sm:$0xff]
    %v450 = vld [vmem:[#allocation3 + $0xbb0] sm:$0xff]
    %v451 = vld [vmem:[#allocation3 + $0xbb8] sm:$0xff]
    %v452 = vld [vmem:[#allocation3 + $0xbc0] sm:$0xff]
    %v453 = vld [vmem:[#allocation3 + $0xbc8] sm:$0xff]
    %v454 = vld [vmem:[#allocation3 + $0xbd0] sm:$0xff]
    %v455 = vld [vmem:[#allocation3 + $0xbd8] sm:$0xff]
    %v456 = vld [vmem:[#allocation3 + $0xbe0] sm:$0xff]
    %v457 = vld [vmem:[#allocation3 + $0xbe8] sm:$0xff]
    %v458 = vld [vmem:[#allocation3 + $0xbf0] sm:$0xff]
    %v459 = vld [vmem:[#allocation3 + $0xbf8] sm:$0xff]
    %v460 = vld [vmem:[#allocation3 + $0xc00] sm:$0xff]
    %v461 = vld [vmem:[#allocation3 + $0xc08] sm:$0xff]
    %v462 = vld [vmem:[#allocation3 + $0xc10] sm:$0xff]
    %v463 = vld [vmem:[#allocation3 + $0xc18] sm:$0xff]
    %v464 = vld [vmem:[#allocation3 + $0xc20] sm:$0xff]
    %v465 = vld [vmem:[#allocation3 + $0xc28] sm:$0xff]
    %v466 = vld [vmem:[#allocation3 + $0xc30] sm:$0xff]
    %v467 = vld [vmem:[#allocation3 + $0xc38] sm:$0xff]
    %v468 = vld [vmem:[#allocation3 + $0xc40] sm:$0xff]
    %v469 = vld [vmem:[#allocation3 + $0xc48] sm:$0xff]
    %v470 = vld [vmem:[#allocation3 + $0xc50] sm:$0xff]
    %v471 = vld [vmem:[#allocation3 + $0xc58] sm:$0xff]
    %v472 = vld [vmem:[#allocation3 + $0xc60] sm:$0xff]
    %v473 = vld [vmem:[#allocation3 + $0xc68] sm:$0xff]
    %v474 = vld [vmem:[#allocation3 + $0xc70] sm:$0xff]
    %v475 = vld [vmem:[#allocation3 + $0xc78] sm:$0xff]
    %v476 = vld [vmem:[#allocation3 + $0xc80] sm:$0xff]
    %v477 = vld [vmem:[#allocation3 + $0xc88] sm:$0xff]
    %v478 = vld [vmem:[#allocation3 + $0xc90] sm:$0xff]
    %v479 = vld [vmem:[#allocation3 + $0xc98] sm:$0xff]
    %v480 = vld [vmem:[#allocation3 + $0xca0] sm:$0xff]
    %v481 = vld [vmem:[#allocation3 + $0xca8] sm:$0xff]
    %v482 = vld [vmem:[#allocation3 + $0xcb0] sm:$0xff]
    %v483 = vld [vmem:[#allocation3 + $0xcb8] sm:$0xff]
    %v484 = vld [vmem:[#allocation3 + $0xcc0] sm:$0xff]
    %v485 = vld [vmem:[#allocation3 + $0xcc8] sm:$0xff]
    %v486 = vld [vmem:[#allocation3 + $0xcd0] sm:$0xff]
    %v487 = vld [vmem:[#allocation3 + $0xcd8] sm:$0xff]
    %v488 = vld [vmem:[#allocation3 + $0xce0] sm:$0xff]
    %v489 = vld [vmem:[#allocation3 + $0xce8] sm:$0xff]
    %v490 = vld [vmem:[#allocation3 + $0xcf0] sm:$0xff]
    %v491 = vld [vmem:[#allocation3 + $0xcf8] sm:$0xff]
    %v492 = vld [vmem:[#allocation3 + $0xd00] sm:$0xff]
    %v493 = vld [vmem:[#allocation3 + $0xd08] sm:$0xff]
    %v494 = vld [vmem:[#allocation3 + $0xd10] sm:$0xff]
    %v495 = vld [vmem:[#allocation3 + $0xd18] sm:$0xff]
    %v496 = vld [vmem:[#allocation3 + $0xd20] sm:$0xff]
    %v497 = vld [vmem:[#allocation3 + $0xd28] sm:$0xff]
    %v498 = vld [vmem:[#allocation3 + $0xd30] sm:$0xff]
    %v499 = vld [vmem:[#allocation3 + $0xd38] sm:$0xff]
    %v500 = vld [vmem:[#allocation3 + $0xd40] sm:$0xff]
    %v501 = vld [vmem:[#allocation3 + $0xd48] sm:$0xff]
    %v502 = vld [vmem:[#allocation3 + $0xd50] sm:$0xff]
    %v503 = vld [vmem:[#allocation3 + $0xd58] sm:$0xff]
    %v504 = vld [vmem:[#allocation3 + $0xd60] sm:$0xff]
    %v505 = vld [vmem:[#allocation3 + $0xd68] sm:$0xff]
    %v506 = vld [vmem:[#allocation3 + $0xd70] sm:$0xff]
    %v507 = vld [vmem:[#allocation3 + $0xd78] sm:$0xff]
    %v508 = vld [vmem:[#allocation3 + $0xd80] sm:$0xff]
    %v509 = vld [vmem:[#allocation3 + $0xd88] sm:$0xff]
    %v510 = vld [vmem:[#allocation3 + $0xd90] sm:$0xff]
    %v511 = vld [vmem:[#allocation3 + $0xd98] sm:$0xff]
    %v512 = vld [vmem:[#allocation3 + $0xda0] sm:$0xff]
    %v513 = vld [vmem:[#allocation3 + $0xda8] sm:$0xff]
    %v514 = vld [vmem:[#allocation3 + $0xdb0] sm:$0xff]
    %v515 = vld [vmem:[#allocation3 + $0xdb8] sm:$0xff]
    %v516 = vld [vmem:[#allocation3 + $0xdc0] sm:$0xff]
    %v517 = vld [vmem:[#allocation3 + $0xdc8] sm:$0xff]
    %v518 = vld [vmem:[#allocation3 + $0xdd0] sm:$0xff]
    %v519 = vld [vmem:[#allocation3 + $0xdd8] sm:$0xff]
    %v520 = vld [vmem:[#allocation3 + $0xde0] sm:$0xff]
    %v521 = vld [vmem:[#allocation3 + $0xde8] sm:$0xff]
    %v522 = vld [vmem:[#allocation3 + $0xdf0] sm:$0xff]
    %v523 = vld [vmem:[#allocation3 + $0xdf8] sm:$0xff]
    %v524 = vld [vmem:[#allocation3 + $0xe00] sm:$0xff]
    %v525 = vld [vmem:[#allocation3 + $0xe08] sm:$0xff]
    %v526 = vld [vmem:[#allocation3 + $0xe10] sm:$0xff]
    %v527 = vld [vmem:[#allocation3 + $0xe18] sm:$0xff]
    %v528 = vld [vmem:[#allocation3 + $0xe20] sm:$0xff]
    %v529 = vld [vmem:[#allocation3 + $0xe28] sm:$0xff]
    %v530 = vld [vmem:[#allocation3 + $0xe30] sm:$0xff]
    %v531 = vld [vmem:[#allocation3 + $0xe38] sm:$0xff]
    %v532 = vld [vmem:[#allocation3 + $0xe40] sm:$0xff]
    %v533 = vld [vmem:[#allocation3 + $0xe48] sm:$0xff]
    %v534 = vld [vmem:[#allocation3 + $0xe50] sm:$0xff]
    %v535 = vld [vmem:[#allocation3 + $0xe58] sm:$0xff]
    %v536 = vld [vmem:[#allocation3 + $0xe60] sm:$0xff]
    %v537 = vld [vmem:[#allocation3 + $0xe68] sm:$0xff]
    %v538 = vld [vmem:[#allocation3 + $0xe70] sm:$0xff]
    %v539 = vld [vmem:[#allocation3 + $0xe78] sm:$0xff]
    %v540 = vld [vmem:[#allocation3 + $0xe80] sm:$0xff]
    %v541 = vld [vmem:[#allocation3 + $0xe88] sm:$0xff]
    %v542 = vld [vmem:[#allocation3 + $0xe90] sm:$0xff]
    %v543 = vld [vmem:[#allocation3 + $0xe98] sm:$0xff]
    %v544 = vld [vmem:[#allocation3 + $0xea0] sm:$0xff]
    %v545 = vld [vmem:[#allocation3 + $0xea8] sm:$0xff]
    %v546 = vld [vmem:[#allocation3 + $0xeb0] sm:$0xff]
    %v547 = vld [vmem:[#allocation3 + $0xeb8] sm:$0xff]
    %v548 = vld [vmem:[#allocation3 + $0xec0] sm:$0xff]
    %v549 = vld [vmem:[#allocation3 + $0xec8] sm:$0xff]
    %v550 = vld [vmem:[#allocation3 + $0xed0] sm:$0xff]
    %v551 = vld [vmem:[#allocation3 + $0xed8] sm:$0xff]
    %v552 = vld [vmem:[#allocation3 + $0xee0] sm:$0xff]
    %v553 = vld [vmem:[#allocation3 + $0xee8] sm:$0xff]
    %v554 = vld [vmem:[#allocation3 + $0xef0] sm:$0xff]
    %v555 = vld [vmem:[#allocation3 + $0xef8] sm:$0xff]
    %v556 = vld [vmem:[#allocation3 + $0xf00] sm:$0xff]
    %v557 = vld [vmem:[#allocation3 + $0xf08] sm:$0xff]
    %v558 = vld [vmem:[#allocation3 + $0xf10] sm:$0xff]
    %v559 = vld [vmem:[#allocation3 + $0xf18] sm:$0xff]
    %v560 = vld [vmem:[#allocation3 + $0xf20] sm:$0xff]
    %v561 = vld [vmem:[#allocation3 + $0xf28] sm:$0xff]
    %v562 = vld [vmem:[#allocation3 + $0xf30] sm:$0xff]
    %v563 = vld [vmem:[#allocation3 + $0xf38] sm:$0xff]
    %v564 = vld [vmem:[#allocation3 + $0xf40] sm:$0xff]
    %v565 = vld [vmem:[#allocation3 + $0xf48] sm:$0xff]
    %v566 = vld [vmem:[#allocation3 + $0xf50] sm:$0xff]
    %v567 = vld [vmem:[#allocation3 + $0xf58] sm:$0xff]
    %v568 = vld [vmem:[#allocation3 + $0xf60] sm:$0xff]
    %v569 = vld [vmem:[#allocation3 + $0xf68] sm:$0xff]
    %v570 = vld [vmem:[#allocation3 + $0xf70] sm:$0xff]
    %v571 = vld [vmem:[#allocation3 + $0xf78] sm:$0xff]
    %v572 = vld [vmem:[#allocation3 + $0xf80] sm:$0xff]
    %v573 = vld [vmem:[#allocation3 + $0xf88] sm:$0xff]
    %v574 = vld [vmem:[#allocation3 + $0xf90] sm:$0xff]
    %v575 = vld [vmem:[#allocation3 + $0xf98] sm:$0xff]
    %v576 = vld [vmem:[#allocation3 + $0xfa0] sm:$0xff]
    %v577 = vld [vmem:[#allocation3 + $0xfa8] sm:$0xff]
    %v578 = vld [vmem:[#allocation3 + $0xfb0] sm:$0xff]
    %v579 = vld [vmem:[#allocation3 + $0xfb8] sm:$0xff]
    %v580 = vld [vmem:[#allocation3 + $0xfc0] sm:$0xff]
    %v581 = vld [vmem:[#allocation3 + $0xfc8] sm:$0xff]
    %v582 = vld [vmem:[#allocation3 + $0xfd0] sm:$0xff]
    %v583 = vld [vmem:[#allocation3 + $0xfd8] sm:$0xff]
    %v584 = vld [vmem:[#allocation3 + $0xfe0] sm:$0xff]
    %v585 = vld [vmem:[#allocation3 + $0xfe8] sm:$0xff]
    %v586 = vld [vmem:[#allocation3 + $0xff0] sm:$0xff]
    %v587 = vld [vmem:[#allocation3 + $0xff8] sm:$0xff]
    %v1100 = vunpack.c.l.b16 %v76
    %v1101 = vunpack.c.h.b16 %v76
    %v1102 = vunpack.c.l.b16 %v77
    %v1103 = vunpack.c.h.b16 %v77
    %v1104 = vunpack.c.l.b16 %v78
    %v1105 = vunpack.c.h.b16 %v78
    %v1106 = vunpack.c.l.b16 %v79
    %v1107 = vunpack.c.h.b16 %v79
    %v1108 = vunpack.c.l.b16 %v80
    %v1109 = vunpack.c.h.b16 %v80
    %v1110 = vunpack.c.l.b16 %v81
    %v1111 = vunpack.c.h.b16 %v81
    %v1112 = vunpack.c.l.b16 %v82
    %v1113 = vunpack.c.h.b16 %v82
    %v1114 = vunpack.c.l.b16 %v83
    %v1115 = vunpack.c.h.b16 %v83
    %v1116 = vunpack.c.l.b16 %v84
    %v1117 = vunpack.c.h.b16 %v84
    %v1118 = vunpack.c.l.b16 %v85
    %v1119 = vunpack.c.h.b16 %v85
    %v1120 = vunpack.c.l.b16 %v86
    %v1121 = vunpack.c.h.b16 %v86
    %v1122 = vunpack.c.l.b16 %v87
    %v1123 = vunpack.c.h.b16 %v87
    %v1124 = vunpack.c.l.b16 %v88
    %v1125 = vunpack.c.h.b16 %v88
    %v1126 = vunpack.c.l.b16 %v89
    %v1127 = vunpack.c.h.b16 %v89
    %v1128 = vunpack.c.l.b16 %v90
    %v1129 = vunpack.c.h.b16 %v90
    %v1130 = vunpack.c.l.b16 %v91
    %v1131 = vunpack.c.h.b16 %v91
    %v1132 = vunpack.c.l.b16 %v92
    %v1133 = vunpack.c.h.b16 %v92
    %v1134 = vunpack.c.l.b16 %v93
    %v1135 = vunpack.c.h.b16 %v93
    %v1136 = vunpack.c.l.b16 %v94
    %v1137 = vunpack.c.h.b16 %v94
    %v1138 = vunpack.c.l.b16 %v95
    %v1139 = vunpack.c.h.b16 %v95
    %v1140 = vunpack.c.l.b16 %v96
    %v1141 = vunpack.c.h.b16 %v96
    %v1142 = vunpack.c.l.b16 %v97
    %v1143 = vunpack.c.h.b16 %v97
    %v1144 = vunpack.c.l.b16 %v98
    %v1145 = vunpack.c.h.b16 %v98
    %v1146 = vunpack.c.l.b16 %v99
    %v1147 = vunpack.c.h.b16 %v99
    %v1148 = vunpack.c.l.b16 %v100
    %v1149 = vunpack.c.h.b16 %v100
    %v1150 = vunpack.c.l.b16 %v101
    %v1151 = vunpack.c.h.b16 %v101
    %v1152 = vunpack.c.l.b16 %v102
    %v1153 = vunpack.c.h.b16 %v102
    %v1154 = vunpack.c.l.b16 %v103
    %v1155 = vunpack.c.h.b16 %v103
    %v1156 = vunpack.c.l.b16 %v104
    %v1157 = vunpack.c.h.b16 %v104
    %v1158 = vunpack.c.l.b16 %v105
    %v1159 = vunpack.c.h.b16 %v105
    %v1160 = vunpack.c.l.b16 %v106
    %v1161 = vunpack.c.h.b16 %v106
    %v1162 = vunpack.c.l.b16 %v107
    %v1163 = vunpack.c.h.b16 %v107
    %v1164 = vunpack.c.l.b16 %v108
    %v1165 = vunpack.c.h.b16 %v108
    %v1166 = vunpack.c.l.b16 %v109
    %v1167 = vunpack.c.h.b16 %v109
    %v1168 = vunpack.c.l.b16 %v110
    %v1169 = vunpack.c.h.b16 %v110
    %v1170 = vunpack.c.l.b16 %v111
    %v1171 = vunpack.c.h.b16 %v111
    %v1172 = vunpack.c.l.b16 %v112
    %v1173 = vunpack.c.h.b16 %v112
    %v1174 = vunpack.c.l.b16 %v113
    %v1175 = vunpack.c.h.b16 %v113
    %v1176 = vunpack.c.l.b16 %v114
    %v1177 = vunpack.c.h.b16 %v114
    %v1178 = vunpack.c.l.b16 %v115
    %v1179 = vunpack.c.h.b16 %v115
    %v1180 = vunpack.c.l.b16 %v116
    %v1181 = vunpack.c.h.b16 %v116
    %v1182 = vunpack.c.l.b16 %v117
    %v1183 = vunpack.c.h.b16 %v117
    %v1184 = vunpack.c.l.b16 %v118
    %v1185 = vunpack.c.h.b16 %v118
    %v1186 = vunpack.c.l.b16 %v119
    %v1187 = vunpack.c.h.b16 %v119
    %v1188 = vunpack.c.l.b16 %v120
    %v1189 = vunpack.c.h.b16 %v120
    %v1190 = vunpack.c.l.b16 %v121
    %v1191 = vunpack.c.h.b16 %v121
    %v1192 = vunpack.c.l.b16 %v122
    %v1193 = vunpack.c.h.b16 %v122
    %v1194 = vunpack.c.l.b16 %v123
    %v1195 = vunpack.c.h.b16 %v123
    %v1196 = vunpack.c.l.b16 %v124
    %v1197 = vunpack.c.h.b16 %v124
    %v1198 = vunpack.c.l.b16 %v125
    %v1199 = vunpack.c.h.b16 %v125
    %v1200 = vunpack.c.l.b16 %v126
    %v1201 = vunpack.c.h.b16 %v126
    %v1202 = vunpack.c.l.b16 %v127
    %v1203 = vunpack.c.h.b16 %v127
    %v1204 = vunpack.c.l.b16 %v128
    %v1205 = vunpack.c.h.b16 %v128
    %v1206 = vunpack.c.l.b16 %v129
    %v1207 = vunpack.c.h.b16 %v129
    %v1208 = vunpack.c.l.b16 %v130
    %v1209 = vunpack.c.h.b16 %v130
    %v1210 = vunpack.c.l.b16 %v131
    %v1211 = vunpack.c.h.b16 %v131
    %v1212 = vunpack.c.l.b16 %v132
    %v1213 = vunpack.c.h.b16 %v132
    %v1214 = vunpack.c.l.b16 %v133
    %v1215 = vunpack.c.h.b16 %v133
    %v1216 = vunpack.c.l.b16 %v134
    %v1217 = vunpack.c.h.b16 %v134
    %v1218 = vunpack.c.l.b16 %v135
    %v1219 = vunpack.c.h.b16 %v135
    %v1220 = vunpack.c.l.b16 %v136
    %v1221 = vunpack.c.h.b16 %v136
    %v1222 = vunpack.c.l.b16 %v137
    %v1223 = vunpack.c.h.b16 %v137
    %v1224 = vunpack.c.l.b16 %v138
    %v1225 = vunpack.c.h.b16 %v138
    %v1226 = vunpack.c.l.b16 %v139
    %v1227 = vunpack.c.h.b16 %v139
    %v1228 = vunpack.c.l.b16 %v140
    %v1229 = vunpack.c.h.b16 %v140
    %v1230 = vunpack.c.l.b16 %v141
    %v1231 = vunpack.c.h.b16 %v141
    %v1232 = vunpack.c.l.b16 %v142
    %v1233 = vunpack.c.h.b16 %v142
    %v1234 = vunpack.c.l.b16 %v143
    %v1235 = vunpack.c.h.b16 %v143
    %v1236 = vunpack.c.l.b16 %v144
    %v1237 = vunpack.c.h.b16 %v144
    %v1238 = vunpack.c.l.b16 %v145
    %v1239 = vunpack.c.h.b16 %v145
    %v1240 = vunpack.c.l.b16 %v146
    %v1241 = vunpack.c.h.b16 %v146
    %v1242 = vunpack.c.l.b16 %v147
    %v1243 = vunpack.c.h.b16 %v147
    %v1244 = vunpack.c.l.b16 %v148
    %v1245 = vunpack.c.h.b16 %v148
    %v1246 = vunpack.c.l.b16 %v149
    %v1247 = vunpack.c.h.b16 %v149
    %v1248 = vunpack.c.l.b16 %v150
    %v1249 = vunpack.c.h.b16 %v150
    %v1250 = vunpack.c.l.b16 %v151
    %v1251 = vunpack.c.h.b16 %v151
    %v1252 = vunpack.c.l.b16 %v152
    %v1253 = vunpack.c.h.b16 %v152
    %v1254 = vunpack.c.l.b16 %v153
    %v1255 = vunpack.c.h.b16 %v153
    %v1256 = vunpack.c.l.b16 %v154
    %v1257 = vunpack.c.h.b16 %v154
    %v1258 = vunpack.c.l.b16 %v155
    %v1259 = vunpack.c.h.b16 %v155
    %v1260 = vunpack.c.l.b16 %v156
    %v1261 = vunpack.c.h.b16 %v156
    %v1262 = vunpack.c.l.b16 %v157
    %v1263 = vunpack.c.h.b16 %v157
    %v1264 = vunpack.c.l.b16 %v158
    %v1265 = vunpack.c.h.b16 %v158
    %v1266 = vunpack.c.l.b16 %v159
    %v1267 = vunpack.c.h.b16 %v159
    %v1268 = vunpack.c.l.b16 %v160
    %v1269 = vunpack.c.h.b16 %v160
    %v1270 = vunpack.c.l.b16 %v161
    %v1271 = vunpack.c.h.b16 %v161
    %v1272 = vunpack.c.l.b16 %v162
    %v1273 = vunpack.c.h.b16 %v162
    %v1274 = vunpack.c.l.b16 %v163
    %v1275 = vunpack.c.h.b16 %v163
    %v1276 = vunpack.c.l.b16 %v164
    %v1277 = vunpack.c.h.b16 %v164
    %v1278 = vunpack.c.l.b16 %v165
    %v1279 = vunpack.c.h.b16 %v165
    %v1280 = vunpack.c.l.b16 %v166
    %v1281 = vunpack.c.h.b16 %v166
    %v1282 = vunpack.c.l.b16 %v167
    %v1283 = vunpack.c.h.b16 %v167
    %v1284 = vunpack.c.l.b16 %v168
    %v1285 = vunpack.c.h.b16 %v168
    %v1286 = vunpack.c.l.b16 %v169
    %v1287 = vunpack.c.h.b16 %v169
    %v1288 = vunpack.c.l.b16 %v170
    %v1289 = vunpack.c.h.b16 %v170
    %v1290 = vunpack.c.l.b16 %v171
    %v1291 = vunpack.c.h.b16 %v171
    %v1292 = vunpack.c.l.b16 %v172
    %v1293 = vunpack.c.h.b16 %v172
    %v1294 = vunpack.c.l.b16 %v173
    %v1295 = vunpack.c.h.b16 %v173
    %v1296 = vunpack.c.l.b16 %v174
    %v1297 = vunpack.c.h.b16 %v174
    %v1298 = vunpack.c.l.b16 %v175
    %v1299 = vunpack.c.h.b16 %v175
    %v1300 = vunpack.c.l.b16 %v176
    %v1301 = vunpack.c.h.b16 %v176
    %v1302 = vunpack.c.l.b16 %v177
    %v1303 = vunpack.c.h.b16 %v177
    %v1304 = vunpack.c.l.b16 %v178
    %v1305 = vunpack.c.h.b16 %v178
    %v1306 = vunpack.c.l.b16 %v179
    %v1307 = vunpack.c.h.b16 %v179
    %v1308 = vunpack.c.l.b16 %v180
    %v1309 = vunpack.c.h.b16 %v180
    %v1310 = vunpack.c.l.b16 %v181
    %v1311 = vunpack.c.h.b16 %v181
    %v1312 = vunpack.c.l.b16 %v182
    %v1313 = vunpack.c.h.b16 %v182
    %v1314 = vunpack.c.l.b16 %v183
    %v1315 = vunpack.c.h.b16 %v183
    %v1316 = vunpack.c.l.b16 %v184
    %v1317 = vunpack.c.h.b16 %v184
    %v1318 = vunpack.c.l.b16 %v185
    %v1319 = vunpack.c.h.b16 %v185
    %v1320 = vunpack.c.l.b16 %v186
    %v1321 = vunpack.c.h.b16 %v186
    %v1322 = vunpack.c.l.b16 %v187
    %v1323 = vunpack.c.h.b16 %v187
    %v1324 = vunpack.c.l.b16 %v188
    %v1325 = vunpack.c.h.b16 %v188
    %v1326 = vunpack.c.l.b16 %v189
    %v1327 = vunpack.c.h.b16 %v189
    %v1328 = vunpack.c.l.b16 %v190
    %v1329 = vunpack.c.h.b16 %v190
    %v1330 = vunpack.c.l.b16 %v191
    %v1331 = vunpack.c.h.b16 %v191
    %v1332 = vunpack.c.l.b16 %v192
    %v1333 = vunpack.c.h.b16 %v192
    %v1334 = vunpack.c.l.b16 %v193
    %v1335 = vunpack.c.h.b16 %v193
    %v1336 = vunpack.c.l.b16 %v194
    %v1337 = vunpack.c.h.b16 %v194
    %v1338 = vunpack.c.l.b16 %v195
    %v1339 = vunpack.c.h.b16 %v195
    %v1340 = vunpack.c.l.b16 %v196
    %v1341 = vunpack.c.h.b16 %v196
    %v1342 = vunpack.c.l.b16 %v197
    %v1343 = vunpack.c.h.b16 %v197
    %v1344 = vunpack.c.l.b16 %v198
    %v1345 = vunpack.c.h.b16 %v198
    %v1346 = vunpack.c.l.b16 %v199
    %v1347 = vunpack.c.h.b16 %v199
    %v1348 = vunpack.c.l.b16 %v200
    %v1349 = vunpack.c.h.b16 %v200
    %v1350 = vunpack.c.l.b16 %v201
    %v1351 = vunpack.c.h.b16 %v201
    %v1352 = vunpack.c.l.b16 %v202
    %v1353 = vunpack.c.h.b16 %v202
    %v1354 = vunpack.c.l.b16 %v203
    %v1355 = vunpack.c.h.b16 %v203
    %v1356 = vunpack.c.l.b16 %v204
    %v1357 = vunpack.c.h.b16 %v204
    %v1358 = vunpack.c.l.b16 %v205
    %v1359 = vunpack.c.h.b16 %v205
    %v1360 = vunpack.c.l.b16 %v206
    %v1361 = vunpack.c.h.b16 %v206
    %v1362 = vunpack.c.l.b16 %v207
    %v1363 = vunpack.c.h.b16 %v207
    %v1364 = vunpack.c.l.b16 %v208
    %v1365 = vunpack.c.h.b16 %v208
    %v1366 = vunpack.c.l.b16 %v209
    %v1367 = vunpack.c.h.b16 %v209
    %v1368 = vunpack.c.l.b16 %v210
    %v1369 = vunpack.c.h.b16 %v210
    %v1370 = vunpack.c.l.b16 %v211
    %v1371 = vunpack.c.h.b16 %v211
    %v1372 = vunpack.c.l.b16 %v212
    %v1373 = vunpack.c.h.b16 %v212
    %v1374 = vunpack.c.l.b16 %v213
    %v1375 = vunpack.c.h.b16 %v213
    %v1376 = vunpack.c.l.b16 %v214
    %v1377 = vunpack.c.h.b16 %v214
    %v1378 = vunpack.c.l.b16 %v215
    %v1379 = vunpack.c.h.b16 %v215
    %v1380 = vunpack.c.l.b16 %v216
    %v1381 = vunpack.c.h.b16 %v216
    %v1382 = vunpack.c.l.b16 %v217
    %v1383 = vunpack.c.h.b16 %v217
    %v1384 = vunpack.c.l.b16 %v218
    %v1385 = vunpack.c.h.b16 %v218
    %v1386 = vunpack.c.l.b16 %v219
    %v1387 = vunpack.c.h.b16 %v219
    %v1388 = vunpack.c.l.b16 %v220
    %v1389 = vunpack.c.h.b16 %v220
    %v1390 = vunpack.c.l.b16 %v221
    %v1391 = vunpack.c.h.b16 %v221
    %v1392 = vunpack.c.l.b16 %v222
    %v1393 = vunpack.c.h.b16 %v222
    %v1394 = vunpack.c.l.b16 %v223
    %v1395 = vunpack.c.h.b16 %v223
    %v1396 = vunpack.c.l.b16 %v224
    %v1397 = vunpack.c.h.b16 %v224
    %v1398 = vunpack.c.l.b16 %v225
    %v1399 = vunpack.c.h.b16 %v225
    %v1400 = vunpack.c.l.b16 %v226
    %v1401 = vunpack.c.h.b16 %v226
    %v1402 = vunpack.c.l.b16 %v227
    %v1403 = vunpack.c.h.b16 %v227
    %v1404 = vunpack.c.l.b16 %v228
    %v1405 = vunpack.c.h.b16 %v228
    %v1406 = vunpack.c.l.b16 %v229
    %v1407 = vunpack.c.h.b16 %v229
    %v1408 = vunpack.c.l.b16 %v230
    %v1409 = vunpack.c.h.b16 %v230
    %v1410 = vunpack.c.l.b16 %v231
    %v1411 = vunpack.c.h.b16 %v231
    %v1412 = vunpack.c.l.b16 %v232
    %v1413 = vunpack.c.h.b16 %v232
    %v1414 = vunpack.c.l.b16 %v233
    %v1415 = vunpack.c.h.b16 %v233
    %v1416 = vunpack.c.l.b16 %v234
    %v1417 = vunpack.c.h.b16 %v234
    %v1418 = vunpack.c.l.b16 %v235
    %v1419 = vunpack.c.h.b16 %v235
    %v1420 = vunpack.c.l.b16 %v236
    %v1421 = vunpack.c.h.b16 %v236
    %v1422 = vunpack.c.l.b16 %v237
    %v1423 = vunpack.c.h.b16 %v237
    %v1424 = vunpack.c.l.b16 %v238
    %v1425 = vunpack.c.h.b16 %v238
    %v1426 = vunpack.c.l.b16 %v239
    %v1427 = vunpack.c.h.b16 %v239
    %v1428 = vunpack.c.l.b16 %v240
    %v1429 = vunpack.c.h.b16 %v240
    %v1430 = vunpack.c.l.b16 %v241
    %v1431 = vunpack.c.h.b16 %v241
    %v1432 = vunpack.c.l.b16 %v242
    %v1433 = vunpack.c.h.b16 %v242
    %v1434 = vunpack.c.l.b16 %v243
    %v1435 = vunpack.c.h.b16 %v243
    %v1436 = vunpack.c.l.b16 %v244
    %v1437 = vunpack.c.h.b16 %v244
    %v1438 = vunpack.c.l.b16 %v245
    %v1439 = vunpack.c.h.b16 %v245
    %v1440 = vunpack.c.l.b16 %v246
    %v1441 = vunpack.c.h.b16 %v246
    %v1442 = vunpack.c.l.b16 %v247
    %v1443 = vunpack.c.h.b16 %v247
    %v1444 = vunpack.c.l.b16 %v248
    %v1445 = vunpack.c.h.b16 %v248
    %v1446 = vunpack.c.l.b16 %v249
    %v1447 = vunpack.c.h.b16 %v249
    %v1448 = vunpack.c.l.b16 %v250
    %v1449 = vunpack.c.h.b16 %v250
    %v1450 = vunpack.c.l.b16 %v251
    %v1451 = vunpack.c.h.b16 %v251
    %v1452 = vunpack.c.l.b16 %v252
    %v1453 = vunpack.c.h.b16 %v252
    %v1454 = vunpack.c.l.b16 %v253
    %v1455 = vunpack.c.h.b16 %v253
    %v1456 = vunpack.c.l.b16 %v254
    %v1457 = vunpack.c.h.b16 %v254
    %v1458 = vunpack.c.l.b16 %v255
    %v1459 = vunpack.c.h.b16 %v255
    %v1460 = vunpack.c.l.b16 %v256
    %v1461 = vunpack.c.h.b16 %v256
    %v1462 = vunpack.c.l.b16 %v257
    %v1463 = vunpack.c.h.b16 %v257
    %v1464 = vunpack.c.l.b16 %v258
    %v1465 = vunpack.c.h.b16 %v258
    %v1466 = vunpack.c.l.b16 %v259
    %v1467 = vunpack.c.h.b16 %v259
    %v1468 = vunpack.c.l.b16 %v260
    %v1469 = vunpack.c.h.b16 %v260
    %v1470 = vunpack.c.l.b16 %v261
    %v1471 = vunpack.c.h.b16 %v261
    %v1472 = vunpack.c.l.b16 %v262
    %v1473 = vunpack.c.h.b16 %v262
    %v1474 = vunpack.c.l.b16 %v263
    %v1475 = vunpack.c.h.b16 %v263
    %v1476 = vunpack.c.l.b16 %v264
    %v1477 = vunpack.c.h.b16 %v264
    %v1478 = vunpack.c.l.b16 %v265
    %v1479 = vunpack.c.h.b16 %v265
    %v1480 = vunpack.c.l.b16 %v266
    %v1481 = vunpack.c.h.b16 %v266
    %v1482 = vunpack.c.l.b16 %v267
    %v1483 = vunpack.c.h.b16 %v267
    %v1484 = vunpack.c.l.b16 %v268
    %v1485 = vunpack.c.h.b16 %v268
    %v1486 = vunpack.c.l.b16 %v269
    %v1487 = vunpack.c.h.b16 %v269
    %v1488 = vunpack.c.l.b16 %v270
    %v1489 = vunpack.c.h.b16 %v270
    %v1490 = vunpack.c.l.b16 %v271
    %v1491 = vunpack.c.h.b16 %v271
    %v1492 = vunpack.c.l.b16 %v272
    %v1493 = vunpack.c.h.b16 %v272
    %v1494 = vunpack.c.l.b16 %v273
    %v1495 = vunpack.c.h.b16 %v273
    %v1496 = vunpack.c.l.b16 %v274
    %v1497 = vunpack.c.h.b16 %v274
    %v1498 = vunpack.c.l.b16 %v275
    %v1499 = vunpack.c.h.b16 %v275
    %v1500 = vunpack.c.l.b16 %v276
    %v1501 = vunpack.c.h.b16 %v276
    %v1502 = vunpack.c.l.b16 %v277
    %v1503 = vunpack.c.h.b16 %v277
    %v1504 = vunpack.c.l.b16 %v278
    %v1505 = vunpack.c.h.b16 %v278
    %v1506 = vunpack.c.l.b16 %v279
    %v1507 = vunpack.c.h.b16 %v279
    %v1508 = vunpack.c.l.b16 %v280
    %v1509 = vunpack.c.h.b16 %v280
    %v1510 = vunpack.c.l.b16 %v281
    %v1511 = vunpack.c.h.b16 %v281
    %v1512 = vunpack.c.l.b16 %v282
    %v1513 = vunpack.c.h.b16 %v282
    %v1514 = vunpack.c.l.b16 %v283
    %v1515 = vunpack.c.h.b16 %v283
    %v1516 = vunpack.c.l.b16 %v284
    %v1517 = vunpack.c.h.b16 %v284
    %v1518 = vunpack.c.l.b16 %v285
    %v1519 = vunpack.c.h.b16 %v285
    %v1520 = vunpack.c.l.b16 %v286
    %v1521 = vunpack.c.h.b16 %v286
    %v1522 = vunpack.c.l.b16 %v287
    %v1523 = vunpack.c.h.b16 %v287
    %v1524 = vunpack.c.l.b16 %v288
    %v1525 = vunpack.c.h.b16 %v288
    %v1526 = vunpack.c.l.b16 %v289
    %v1527 = vunpack.c.h.b16 %v289
    %v1528 = vunpack.c.l.b16 %v290
    %v1529 = vunpack.c.h.b16 %v290
    %v1530 = vunpack.c.l.b16 %v291
    %v1531 = vunpack.c.h.b16 %v291
    %v1532 = vunpack.c.l.b16 %v292
    %v1533 = vunpack.c.h.b16 %v292
    %v1534 = vunpack.c.l.b16 %v293
    %v1535 = vunpack.c.h.b16 %v293
    %v1536 = vunpack.c.l.b16 %v294
    %v1537 = vunpack.c.h.b16 %v294
    %v1538 = vunpack.c.l.b16 %v295
    %v1539 = vunpack.c.h.b16 %v295
    %v1540 = vunpack.c.l.b16 %v296
    %v1541 = vunpack.c.h.b16 %v296
    %v1542 = vunpack.c.l.b16 %v297
    %v1543 = vunpack.c.h.b16 %v297
    %v1544 = vunpack.c.l.b16 %v298
    %v1545 = vunpack.c.h.b16 %v298
    %v1546 = vunpack.c.l.b16 %v299
    %v1547 = vunpack.c.h.b16 %v299
    %v1548 = vunpack.c.l.b16 %v300
    %v1549 = vunpack.c.h.b16 %v300
    %v1550 = vunpack.c.l.b16 %v301
    %v1551 = vunpack.c.h.b16 %v301
    %v1552 = vunpack.c.l.b16 %v302
    %v1553 = vunpack.c.h.b16 %v302
    %v1554 = vunpack.c.l.b16 %v303
    %v1555 = vunpack.c.h.b16 %v303
    %v1556 = vunpack.c.l.b16 %v304
    %v1557 = vunpack.c.h.b16 %v304
    %v1558 = vunpack.c.l.b16 %v305
    %v1559 = vunpack.c.h.b16 %v305
    %v1560 = vunpack.c.l.b16 %v306
    %v1561 = vunpack.c.h.b16 %v306
    %v1562 = vunpack.c.l.b16 %v307
    %v1563 = vunpack.c.h.b16 %v307
    %v1564 = vunpack.c.l.b16 %v308
    %v1565 = vunpack.c.h.b16 %v308
    %v1566 = vunpack.c.l.b16 %v309
    %v1567 = vunpack.c.h.b16 %v309
    %v1568 = vunpack.c.l.b16 %v310
    %v1569 = vunpack.c.h.b16 %v310
    %v1570 = vunpack.c.l.b16 %v311
    %v1571 = vunpack.c.h.b16 %v311
    %v1572 = vunpack.c.l.b16 %v312
    %v1573 = vunpack.c.h.b16 %v312
    %v1574 = vunpack.c.l.b16 %v313
    %v1575 = vunpack.c.h.b16 %v313
    %v1576 = vunpack.c.l.b16 %v314
    %v1577 = vunpack.c.h.b16 %v314
    %v1578 = vunpack.c.l.b16 %v315
    %v1579 = vunpack.c.h.b16 %v315
    %v1580 = vunpack.c.l.b16 %v316
    %v1581 = vunpack.c.h.b16 %v316
    %v1582 = vunpack.c.l.b16 %v317
    %v1583 = vunpack.c.h.b16 %v317
    %v1584 = vunpack.c.l.b16 %v318
    %v1585 = vunpack.c.h.b16 %v318
    %v1586 = vunpack.c.l.b16 %v319
    %v1587 = vunpack.c.h.b16 %v319
    %v1588 = vunpack.c.l.b16 %v320
    %v1589 = vunpack.c.h.b16 %v320
    %v1590 = vunpack.c.l.b16 %v321
    %v1591 = vunpack.c.h.b16 %v321
    %v1592 = vunpack.c.l.b16 %v322
    %v1593 = vunpack.c.h.b16 %v322
    %v1594 = vunpack.c.l.b16 %v323
    %v1595 = vunpack.c.h.b16 %v323
    %v1596 = vunpack.c.l.b16 %v324
    %v1597 = vunpack.c.h.b16 %v324
    %v1598 = vunpack.c.l.b16 %v325
    %v1599 = vunpack.c.h.b16 %v325
    %v1600 = vunpack.c.l.b16 %v326
    %v1601 = vunpack.c.h.b16 %v326
    %v1602 = vunpack.c.l.b16 %v327
    %v1603 = vunpack.c.h.b16 %v327
    %v1604 = vunpack.c.l.b16 %v328
    %v1605 = vunpack.c.h.b16 %v328
    %v1606 = vunpack.c.l.b16 %v329
    %v1607 = vunpack.c.h.b16 %v329
    %v1608 = vunpack.c.l.b16 %v330
    %v1609 = vunpack.c.h.b16 %v330
    %v1610 = vunpack.c.l.b16 %v331
    %v1611 = vunpack.c.h.b16 %v331
    %v1612 = vunpack.c.l.b16 %v332
    %v1613 = vunpack.c.h.b16 %v332
    %v1614 = vunpack.c.l.b16 %v333
    %v1615 = vunpack.c.h.b16 %v333
    %v1616 = vunpack.c.l.b16 %v334
    %v1617 = vunpack.c.h.b16 %v334
    %v1618 = vunpack.c.l.b16 %v335
    %v1619 = vunpack.c.h.b16 %v335
    %v1620 = vunpack.c.l.b16 %v336
    %v1621 = vunpack.c.h.b16 %v336
    %v1622 = vunpack.c.l.b16 %v337
    %v1623 = vunpack.c.h.b16 %v337
    %v1624 = vunpack.c.l.b16 %v338
    %v1625 = vunpack.c.h.b16 %v338
    %v1626 = vunpack.c.l.b16 %v339
    %v1627 = vunpack.c.h.b16 %v339
    %v1628 = vunpack.c.l.b16 %v340
    %v1629 = vunpack.c.h.b16 %v340
    %v1630 = vunpack.c.l.b16 %v341
    %v1631 = vunpack.c.h.b16 %v341
    %v1632 = vunpack.c.l.b16 %v342
    %v1633 = vunpack.c.h.b16 %v342
    %v1634 = vunpack.c.l.b16 %v343
    %v1635 = vunpack.c.h.b16 %v343
    %v1636 = vunpack.c.l.b16 %v344
    %v1637 = vunpack.c.h.b16 %v344
    %v1638 = vunpack.c.l.b16 %v345
    %v1639 = vunpack.c.h.b16 %v345
    %v1640 = vunpack.c.l.b16 %v346
    %v1641 = vunpack.c.h.b16 %v346
    %v1642 = vunpack.c.l.b16 %v347
    %v1643 = vunpack.c.h.b16 %v347
    %v1644 = vunpack.c.l.b16 %v348
    %v1645 = vunpack.c.h.b16 %v348
    %v1646 = vunpack.c.l.b16 %v349
    %v1647 = vunpack.c.h.b16 %v349
    %v1648 = vunpack.c.l.b16 %v350
    %v1649 = vunpack.c.h.b16 %v350
    %v1650 = vunpack.c.l.b16 %v351
    %v1651 = vunpack.c.h.b16 %v351
    %v1652 = vunpack.c.l.b16 %v352
    %v1653 = vunpack.c.h.b16 %v352
    %v1654 = vunpack.c.l.b16 %v353
    %v1655 = vunpack.c.h.b16 %v353
    %v1656 = vunpack.c.l.b16 %v354
    %v1657 = vunpack.c.h.b16 %v354
    %v1658 = vunpack.c.l.b16 %v355
    %v1659 = vunpack.c.h.b16 %v355
    %v1660 = vunpack.c.l.b16 %v356
    %v1661 = vunpack.c.h.b16 %v356
    %v1662 = vunpack.c.l.b16 %v357
    %v1663 = vunpack.c.h.b16 %v357
    %v1664 = vunpack.c.l.b16 %v358
    %v1665 = vunpack.c.h.b16 %v358
    %v1666 = vunpack.c.l.b16 %v359
    %v1667 = vunpack.c.h.b16 %v359
    %v1668 = vunpack.c.l.b16 %v360
    %v1669 = vunpack.c.h.b16 %v360
    %v1670 = vunpack.c.l.b16 %v361
    %v1671 = vunpack.c.h.b16 %v361
    %v1672 = vunpack.c.l.b16 %v362
    %v1673 = vunpack.c.h.b16 %v362
    %v1674 = vunpack.c.l.b16 %v363
    %v1675 = vunpack.c.h.b16 %v363
    %v1676 = vunpack.c.l.b16 %v364
    %v1677 = vunpack.c.h.b16 %v364
    %v1678 = vunpack.c.l.b16 %v365
    %v1679 = vunpack.c.h.b16 %v365
    %v1680 = vunpack.c.l.b16 %v366
    %v1681 = vunpack.c.h.b16 %v366
    %v1682 = vunpack.c.l.b16 %v367
    %v1683 = vunpack.c.h.b16 %v367
    %v1684 = vunpack.c.l.b16 %v368
    %v1685 = vunpack.c.h.b16 %v368
    %v1686 = vunpack.c.l.b16 %v369
    %v1687 = vunpack.c.h.b16 %v369
    %v1688 = vunpack.c.l.b16 %v370
    %v1689 = vunpack.c.h.b16 %v370
    %v1690 = vunpack.c.l.b16 %v371
    %v1691 = vunpack.c.h.b16 %v371
    %v1692 = vunpack.c.l.b16 %v372
    %v1693 = vunpack.c.h.b16 %v372
    %v1694 = vunpack.c.l.b16 %v373
    %v1695 = vunpack.c.h.b16 %v373
    %v1696 = vunpack.c.l.b16 %v374
    %v1697 = vunpack.c.h.b16 %v374
    %v1698 = vunpack.c.l.b16 %v375
    %v1699 = vunpack.c.h.b16 %v375
    %v1700 = vunpack.c.l.b16 %v376
    %v1701 = vunpack.c.h.b16 %v376
    %v1702 = vunpack.c.l.b16 %v377
    %v1703 = vunpack.c.h.b16 %v377
    %v1704 = vunpack.c.l.b16 %v378
    %v1705 = vunpack.c.h.b16 %v378
    %v1706 = vunpack.c.l.b16 %v379
    %v1707 = vunpack.c.h.b16 %v379
    %v1708 = vunpack.c.l.b16 %v380
    %v1709 = vunpack.c.h.b16 %v380
    %v1710 = vunpack.c.l.b16 %v381
    %v1711 = vunpack.c.h.b16 %v381
    %v1712 = vunpack.c.l.b16 %v382
    %v1713 = vunpack.c.h.b16 %v382
    %v1714 = vunpack.c.l.b16 %v383
    %v1715 = vunpack.c.h.b16 %v383
    %v1716 = vunpack.c.l.b16 %v384
    %v1717 = vunpack.c.h.b16 %v384
    %v1718 = vunpack.c.l.b16 %v385
    %v1719 = vunpack.c.h.b16 %v385
    %v1720 = vunpack.c.l.b16 %v386
    %v1721 = vunpack.c.h.b16 %v386
    %v1722 = vunpack.c.l.b16 %v387
    %v1723 = vunpack.c.h.b16 %v387
    %v1724 = vunpack.c.l.b16 %v388
    %v1725 = vunpack.c.h.b16 %v388
    %v1726 = vunpack.c.l.b16 %v389
    %v1727 = vunpack.c.h.b16 %v389
    %v1728 = vunpack.c.l.b16 %v390
    %v1729 = vunpack.c.h.b16 %v390
    %v1730 = vunpack.c.l.b16 %v391
    %v1731 = vunpack.c.h.b16 %v391
    %v1732 = vunpack.c.l.b16 %v392
    %v1733 = vunpack.c.h.b16 %v392
    %v1734 = vunpack.c.l.b16 %v393
    %v1735 = vunpack.c.h.b16 %v393
    %v1736 = vunpack.c.l.b16 %v394
    %v1737 = vunpack.c.h.b16 %v394
    %v1738 = vunpack.c.l.b16 %v395
    %v1739 = vunpack.c.h.b16 %v395
    %v1740 = vunpack.c.l.b16 %v396
    %v1741 = vunpack.c.h.b16 %v396
    %v1742 = vunpack.c.l.b16 %v397
    %v1743 = vunpack.c.h.b16 %v397
    %v1744 = vunpack.c.l.b16 %v398
    %v1745 = vunpack.c.h.b16 %v398
    %v1746 = vunpack.c.l.b16 %v399
    %v1747 = vunpack.c.h.b16 %v399
    %v1748 = vunpack.c.l.b16 %v400
    %v1749 = vunpack.c.h.b16 %v400
    %v1750 = vunpack.c.l.b16 %v401
    %v1751 = vunpack.c.h.b16 %v401
    %v1752 = vunpack.c.l.b16 %v402
    %v1753 = vunpack.c.h.b16 %v402
    %v1754 = vunpack.c.l.b16 %v403
    %v1755 = vunpack.c.h.b16 %v403
    %v1756 = vunpack.c.l.b16 %v404
    %v1757 = vunpack.c.h.b16 %v404
    %v1758 = vunpack.c.l.b16 %v405
    %v1759 = vunpack.c.h.b16 %v405
    %v1760 = vunpack.c.l.b16 %v406
    %v1761 = vunpack.c.h.b16 %v406
    %v1762 = vunpack.c.l.b16 %v407
    %v1763 = vunpack.c.h.b16 %v407
    %v1764 = vunpack.c.l.b16 %v408
    %v1765 = vunpack.c.h.b16 %v408
    %v1766 = vunpack.c.l.b16 %v409
    %v1767 = vunpack.c.h.b16 %v409
    %v1768 = vunpack.c.l.b16 %v410
    %v1769 = vunpack.c.h.b16 %v410
    %v1770 = vunpack.c.l.b16 %v411
    %v1771 = vunpack.c.h.b16 %v411
    %v1772 = vunpack.c.l.b16 %v412
    %v1773 = vunpack.c.h.b16 %v412
    %v1774 = vunpack.c.l.b16 %v413
    %v1775 = vunpack.c.h.b16 %v413
    %v1776 = vunpack.c.l.b16 %v414
    %v1777 = vunpack.c.h.b16 %v414
    %v1778 = vunpack.c.l.b16 %v415
    %v1779 = vunpack.c.h.b16 %v415
    %v1780 = vunpack.c.l.b16 %v416
    %v1781 = vunpack.c.h.b16 %v416
    %v1782 = vunpack.c.l.b16 %v417
    %v1783 = vunpack.c.h.b16 %v417
    %v1784 = vunpack.c.l.b16 %v418
    %v1785 = vunpack.c.h.b16 %v418
    %v1786 = vunpack.c.l.b16 %v419
    %v1787 = vunpack.c.h.b16 %v419
    %v1788 = vunpack.c.l.b16 %v420
    %v1789 = vunpack.c.h.b16 %v420
    %v1790 = vunpack.c.l.b16 %v421
    %v1791 = vunpack.c.h.b16 %v421
    %v1792 = vunpack.c.l.b16 %v422
    %v1793 = vunpack.c.h.b16 %v422
    %v1794 = vunpack.c.l.b16 %v423
    %v1795 = vunpack.c.h.b16 %v423
    %v1796 = vunpack.c.l.b16 %v424
    %v1797 = vunpack.c.h.b16 %v424
    %v1798 = vunpack.c.l.b16 %v425
    %v1799 = vunpack.c.h.b16 %v425
    %v1800 = vunpack.c.l.b16 %v426
    %v1801 = vunpack.c.h.b16 %v426
    %v1802 = vunpack.c.l.b16 %v427
    %v1803 = vunpack.c.h.b16 %v427
    %v1804 = vunpack.c.l.b16 %v428
    %v1805 = vunpack.c.h.b16 %v428
    %v1806 = vunpack.c.l.b16 %v429
    %v1807 = vunpack.c.h.b16 %v429
    %v1808 = vunpack.c.l.b16 %v430
    %v1809 = vunpack.c.h.b16 %v430
    %v1810 = vunpack.c.l.b16 %v431
    %v1811 = vunpack.c.h.b16 %v431
    %v1812 = vunpack.c.l.b16 %v432
    %v1813 = vunpack.c.h.b16 %v432
    %v1814 = vunpack.c.l.b16 %v433
    %v1815 = vunpack.c.h.b16 %v433
    %v1816 = vunpack.c.l.b16 %v434
    %v1817 = vunpack.c.h.b16 %v434
    %v1818 = vunpack.c.l.b16 %v435
    %v1819 = vunpack.c.h.b16 %v435
    %v1820 = vunpack.c.l.b16 %v436
    %v1821 = vunpack.c.h.b16 %v436
    %v1822 = vunpack.c.l.b16 %v437
    %v1823 = vunpack.c.h.b16 %v437
    %v1824 = vunpack.c.l.b16 %v438
    %v1825 = vunpack.c.h.b16 %v438
    %v1826 = vunpack.c.l.b16 %v439
    %v1827 = vunpack.c.h.b16 %v439
    %v1828 = vunpack.c.l.b16 %v440
    %v1829 = vunpack.c.h.b16 %v440
    %v1830 = vunpack.c.l.b16 %v441
    %v1831 = vunpack.c.h.b16 %v441
    %v1832 = vunpack.c.l.b16 %v442
    %v1833 = vunpack.c.h.b16 %v442
    %v1834 = vunpack.c.l.b16 %v443
    %v1835 = vunpack.c.h.b16 %v443
    %v1836 = vunpack.c.l.b16 %v444
    %v1837 = vunpack.c.h.b16 %v444
    %v1838 = vunpack.c.l.b16 %v445
    %v1839 = vunpack.c.h.b16 %v445
    %v1840 = vunpack.c.l.b16 %v446
    %v1841 = vunpack.c.h.b16 %v446
    %v1842 = vunpack.c.l.b16 %v447
    %v1843 = vunpack.c.h.b16 %v447
    %v1844 = vunpack.c.l.b16 %v448
    %v1845 = vunpack.c.h.b16 %v448
    %v1846 = vunpack.c.l.b16 %v449
    %v1847 = vunpack.c.h.b16 %v449
    %v1848 = vunpack.c.l.b16 %v450
    %v1849 = vunpack.c.h.b16 %v450
    %v1850 = vunpack.c.l.b16 %v451
    %v1851 = vunpack.c.h.b16 %v451
    %v1852 = vunpack.c.l.b16 %v452
    %v1853 = vunpack.c.h.b16 %v452
    %v1854 = vunpack.c.l.b16 %v453
    %v1855 = vunpack.c.h.b16 %v453
    %v1856 = vunpack.c.l.b16 %v454
    %v1857 = vunpack.c.h.b16 %v454
    %v1858 = vunpack.c.l.b16 %v455
    %v1859 = vunpack.c.h.b16 %v455
    %v1860 = vunpack.c.l.b16 %v456
    %v1861 = vunpack.c.h.b16 %v456
    %v1862 = vunpack.c.l.b16 %v457
    %v1863 = vunpack.c.h.b16 %v457
    %v1864 = vunpack.c.l.b16 %v458
    %v1865 = vunpack.c.h.b16 %v458
    %v1866 = vunpack.c.l.b16 %v459
    %v1867 = vunpack.c.h.b16 %v459
    %v1868 = vunpack.c.l.b16 %v460
    %v1869 = vunpack.c.h.b16 %v460
    %v1870 = vunpack.c.l.b16 %v461
    %v1871 = vunpack.c.h.b16 %v461
    %v1872 = vunpack.c.l.b16 %v462
    %v1873 = vunpack.c.h.b16 %v462
    %v1874 = vunpack.c.l.b16 %v463
    %v1875 = vunpack.c.h.b16 %v463
    %v1876 = vunpack.c.l.b16 %v464
    %v1877 = vunpack.c.h.b16 %v464
    %v1878 = vunpack.c.l.b16 %v465
    %v1879 = vunpack.c.h.b16 %v465
    %v1880 = vunpack.c.l.b16 %v466
    %v1881 = vunpack.c.h.b16 %v466
    %v1882 = vunpack.c.l.b16 %v467
    %v1883 = vunpack.c.h.b16 %v467
    %v1884 = vunpack.c.l.b16 %v468
    %v1885 = vunpack.c.h.b16 %v468
    %v1886 = vunpack.c.l.b16 %v469
    %v1887 = vunpack.c.h.b16 %v469
    %v1888 = vunpack.c.l.b16 %v470
    %v1889 = vunpack.c.h.b16 %v470
    %v1890 = vunpack.c.l.b16 %v471
    %v1891 = vunpack.c.h.b16 %v471
    %v1892 = vunpack.c.l.b16 %v472
    %v1893 = vunpack.c.h.b16 %v472
    %v1894 = vunpack.c.l.b16 %v473
    %v1895 = vunpack.c.h.b16 %v473
    %v1896 = vunpack.c.l.b16 %v474
    %v1897 = vunpack.c.h.b16 %v474
    %v1898 = vunpack.c.l.b16 %v475
    %v1899 = vunpack.c.h.b16 %v475
    %v1900 = vunpack.c.l.b16 %v476
    %v1901 = vunpack.c.h.b16 %v476
    %v1902 = vunpack.c.l.b16 %v477
    %v1903 = vunpack.c.h.b16 %v477
    %v1904 = vunpack.c.l.b16 %v478
    %v1905 = vunpack.c.h.b16 %v478
    %v1906 = vunpack.c.l.b16 %v479
    %v1907 = vunpack.c.h.b16 %v479
    %v1908 = vunpack.c.l.b16 %v480
    %v1909 = vunpack.c.h.b16 %v480
    %v1910 = vunpack.c.l.b16 %v481
    %v1911 = vunpack.c.h.b16 %v481
    %v1912 = vunpack.c.l.b16 %v482
    %v1913 = vunpack.c.h.b16 %v482
    %v1914 = vunpack.c.l.b16 %v483
    %v1915 = vunpack.c.h.b16 %v483
    %v1916 = vunpack.c.l.b16 %v484
    %v1917 = vunpack.c.h.b16 %v484
    %v1918 = vunpack.c.l.b16 %v485
    %v1919 = vunpack.c.h.b16 %v485
    %v1920 = vunpack.c.l.b16 %v486
    %v1921 = vunpack.c.h.b16 %v486
    %v1922 = vunpack.c.l.b16 %v487
    %v1923 = vunpack.c.h.b16 %v487
    %v1924 = vunpack.c.l.b16 %v488
    %v1925 = vunpack.c.h.b16 %v488
    %v1926 = vunpack.c.l.b16 %v489
    %v1927 = vunpack.c.h.b16 %v489
    %v1928 = vunpack.c.l.b16 %v490
    %v1929 = vunpack.c.h.b16 %v490
    %v1930 = vunpack.c.l.b16 %v491
    %v1931 = vunpack.c.h.b16 %v491
    %v1932 = vunpack.c.l.b16 %v492
    %v1933 = vunpack.c.h.b16 %v492
    %v1934 = vunpack.c.l.b16 %v493
    %v1935 = vunpack.c.h.b16 %v493
    %v1936 = vunpack.c.l.b16 %v494
    %v1937 = vunpack.c.h.b16 %v494
    %v1938 = vunpack.c.l.b16 %v495
    %v1939 = vunpack.c.h.b16 %v495
    %v1940 = vunpack.c.l.b16 %v496
    %v1941 = vunpack.c.h.b16 %v496
    %v1942 = vunpack.c.l.b16 %v497
    %v1943 = vunpack.c.h.b16 %v497
    %v1944 = vunpack.c.l.b16 %v498
    %v1945 = vunpack.c.h.b16 %v498
    %v1946 = vunpack.c.l.b16 %v499
    %v1947 = vunpack.c.h.b16 %v499
    %v1948 = vunpack.c.l.b16 %v500
    %v1949 = vunpack.c.h.b16 %v500
    %v1950 = vunpack.c.l.b16 %v501
    %v1951 = vunpack.c.h.b16 %v501
    %v1952 = vunpack.c.l.b16 %v502
    %v1953 = vunpack.c.h.b16 %v502
    %v1954 = vunpack.c.l.b16 %v503
    %v1955 = vunpack.c.h.b16 %v503
    %v1956 = vunpack.c.l.b16 %v504
    %v1957 = vunpack.c.h.b16 %v504
    %v1958 = vunpack.c.l.b16 %v505
    %v1959 = vunpack.c.h.b16 %v505
    %v1960 = vunpack.c.l.b16 %v506
    %v1961 = vunpack.c.h.b16 %v506
    %v1962 = vunpack.c.l.b16 %v507
    %v1963 = vunpack.c.h.b16 %v507
    %v1964 = vunpack.c.l.b16 %v508
    %v1965 = vunpack.c.h.b16 %v508
    %v1966 = vunpack.c.l.b16 %v509
    %v1967 = vunpack.c.h.b16 %v509
    %v1968 = vunpack.c.l.b16 %v510
    %v1969 = vunpack.c.h.b16 %v510
    %v1970 = vunpack.c.l.b16 %v511
    %v1971 = vunpack.c.h.b16 %v511
    %v1972 = vunpack.c.l.b16 %v512
    %v1973 = vunpack.c.h.b16 %v512
    %v1974 = vunpack.c.l.b16 %v513
    %v1975 = vunpack.c.h.b16 %v513
    %v1976 = vunpack.c.l.b16 %v514
    %v1977 = vunpack.c.h.b16 %v514
    %v1978 = vunpack.c.l.b16 %v515
    %v1979 = vunpack.c.h.b16 %v515
    %v1980 = vunpack.c.l.b16 %v516
    %v1981 = vunpack.c.h.b16 %v516
    %v1982 = vunpack.c.l.b16 %v517
    %v1983 = vunpack.c.h.b16 %v517
    %v1984 = vunpack.c.l.b16 %v518
    %v1985 = vunpack.c.h.b16 %v518
    %v1986 = vunpack.c.l.b16 %v519
    %v1987 = vunpack.c.h.b16 %v519
    %v1988 = vunpack.c.l.b16 %v520
    %v1989 = vunpack.c.h.b16 %v520
    %v1990 = vunpack.c.l.b16 %v521
    %v1991 = vunpack.c.h.b16 %v521
    %v1992 = vunpack.c.l.b16 %v522
    %v1993 = vunpack.c.h.b16 %v522
    %v1994 = vunpack.c.l.b16 %v523
    %v1995 = vunpack.c.h.b16 %v523
    %v1996 = vunpack.c.l.b16 %v524
    %v1997 = vunpack.c.h.b16 %v524
    %v1998 = vunpack.c.l.b16 %v525
    %v1999 = vunpack.c.h.b16 %v525
    %v2000 = vunpack.c.l.b16 %v526
    %v2001 = vunpack.c.h.b16 %v526
    %v2002 = vunpack.c.l.b16 %v527
    %v2003 = vunpack.c.h.b16 %v527
    %v2004 = vunpack.c.l.b16 %v528
    %v2005 = vunpack.c.h.b16 %v528
    %v2006 = vunpack.c.l.b16 %v529
    %v2007 = vunpack.c.h.b16 %v529
    %v2008 = vunpack.c.l.b16 %v530
    %v2009 = vunpack.c.h.b16 %v530
    %v2010 = vunpack.c.l.b16 %v531
    %v2011 = vunpack.c.h.b16 %v531
    %v2012 = vunpack.c.l.b16 %v532
    %v2013 = vunpack.c.h.b16 %v532
    %v2014 = vunpack.c.l.b16 %v533
    %v2015 = vunpack.c.h.b16 %v533
    %v2016 = vunpack.c.l.b16 %v534
    %v2017 = vunpack.c.h.b16 %v534
    %v2018 = vunpack.c.l.b16 %v535
    %v2019 = vunpack.c.h.b16 %v535
    %v2020 = vunpack.c.l.b16 %v536
    %v2021 = vunpack.c.h.b16 %v536
    %v2022 = vunpack.c.l.b16 %v537
    %v2023 = vunpack.c.h.b16 %v537
    %v2024 = vunpack.c.l.b16 %v538
    %v2025 = vunpack.c.h.b16 %v538
    %v2026 = vunpack.c.l.b16 %v539
    %v2027 = vunpack.c.h.b16 %v539
    %v2028 = vunpack.c.l.b16 %v540
    %v2029 = vunpack.c.h.b16 %v540
    %v2030 = vunpack.c.l.b16 %v541
    %v2031 = vunpack.c.h.b16 %v541
    %v2032 = vunpack.c.l.b16 %v542
    %v2033 = vunpack.c.h.b16 %v542
    %v2034 = vunpack.c.l.b16 %v543
    %v2035 = vunpack.c.h.b16 %v543
    %v2036 = vunpack.c.l.b16 %v544
    %v2037 = vunpack.c.h.b16 %v544
    %v2038 = vunpack.c.l.b16 %v545
    %v2039 = vunpack.c.h.b16 %v545
    %v2040 = vunpack.c.l.b16 %v546
    %v2041 = vunpack.c.h.b16 %v546
    %v2042 = vunpack.c.l.b16 %v547
    %v2043 = vunpack.c.h.b16 %v547
    %v2044 = vunpack.c.l.b16 %v548
    %v2045 = vunpack.c.h.b16 %v548
    %v2046 = vunpack.c.l.b16 %v549
    %v2047 = vunpack.c.h.b16 %v549
    %v2048 = vunpack.c.l.b16 %v550
    %v2049 = vunpack.c.h.b16 %v550
    %v2050 = vunpack.c.l.b16 %v551
    %v2051 = vunpack.c.h.b16 %v551
    %v2052 = vunpack.c.l.b16 %v552
    %v2053 = vunpack.c.h.b16 %v552
    %v2054 = vunpack.c.l.b16 %v553
    %v2055 = vunpack.c.h.b16 %v553
    %v2056 = vunpack.c.l.b16 %v554
    %v2057 = vunpack.c.h.b16 %v554
    %v2058 = vunpack.c.l.b16 %v555
    %v2059 = vunpack.c.h.b16 %v555
    %v2060 = vunpack.c.l.b16 %v556
    %v2061 = vunpack.c.h.b16 %v556
    %v2062 = vunpack.c.l.b16 %v557
    %v2063 = vunpack.c.h.b16 %v557
    %v2064 = vunpack.c.l.b16 %v558
    %v2065 = vunpack.c.h.b16 %v558
    %v2066 = vunpack.c.l.b16 %v559
    %v2067 = vunpack.c.h.b16 %v559
    %v2068 = vunpack.c.l.b16 %v560
    %v2069 = vunpack.c.h.b16 %v560
    %v2070 = vunpack.c.l.b16 %v561
    %v2071 = vunpack.c.h.b16 %v561
    %v2072 = vunpack.c.l.b16 %v562
    %v2073 = vunpack.c.h.b16 %v562
    %v2074 = vunpack.c.l.b16 %v563
    %v2075 = vunpack.c.h.b16 %v563
    %v2076 = vunpack.c.l.b16 %v564
    %v2077 = vunpack.c.h.b16 %v564
    %v2078 = vunpack.c.l.b16 %v565
    %v2079 = vunpack.c.h.b16 %v565
    %v2080 = vunpack.c.l.b16 %v566
    %v2081 = vunpack.c.h.b16 %v566
    %v2082 = vunpack.c.l.b16 %v567
    %v2083 = vunpack.c.h.b16 %v567
    %v2084 = vunpack.c.l.b16 %v568
    %v2085 = vunpack.c.h.b16 %v568
    %v2086 = vunpack.c.l.b16 %v569
    %v2087 = vunpack.c.h.b16 %v569
    %v2088 = vunpack.c.l.b16 %v570
    %v2089 = vunpack.c.h.b16 %v570
    %v2090 = vunpack.c.l.b16 %v571
    %v2091 = vunpack.c.h.b16 %v571
    %v2092 = vunpack.c.l.b16 %v572
    %v2093 = vunpack.c.h.b16 %v572
    %v2094 = vunpack.c.l.b16 %v573
    %v2095 = vunpack.c.h.b16 %v573
    %v2096 = vunpack.c.l.b16 %v574
    %v2097 = vunpack.c.h.b16 %v574
    %v2098 = vunpack.c.l.b16 %v575
    %v2099 = vunpack.c.h.b16 %v575
    %v2100 = vunpack.c.l.b16 %v576
    %v2101 = vunpack.c.h.b16 %v576
    %v2102 = vunpack.c.l.b16 %v577
    %v2103 = vunpack.c.h.b16 %v577
    %v2104 = vunpack.c.l.b16 %v578
    %v2105 = vunpack.c.h.b16 %v578
    %v2106 = vunpack.c.l.b16 %v579
    %v2107 = vunpack.c.h.b16 %v579
    %v2108 = vunpack.c.l.b16 %v580
    %v2109 = vunpack.c.h.b16 %v580
    %v2110 = vunpack.c.l.b16 %v581
    %v2111 = vunpack.c.h.b16 %v581
    %v2112 = vunpack.c.l.b16 %v582
    %v2113 = vunpack.c.h.b16 %v582
    %v2114 = vunpack.c.l.b16 %v583
    %v2115 = vunpack.c.h.b16 %v583
    %v2116 = vunpack.c.l.b16 %v584
    %v2117 = vunpack.c.h.b16 %v584
    %v2118 = vunpack.c.l.b16 %v585
    %v2119 = vunpack.c.h.b16 %v585
    %v2120 = vunpack.c.l.b16 %v586
    %v2121 = vunpack.c.h.b16 %v586
    %v2122 = vunpack.c.l.b16 %v587
    %v2123 = vunpack.c.h.b16 %v587
    %v2124 = vpack.c.b16 %v1108, %v1100
    %v2125 = vpack.c.b16 %v1109, %v1101
    %v2126 = vpack.c.b16 %v1110, %v1102
    %v2127 = vpack.c.b16 %v1111, %v1103
    %v2128 = vpack.c.b16 %v1112, %v1104
    %v2129 = vpack.c.b16 %v1113, %v1105
    %v2130 = vpack.c.b16 %v1114, %v1106
    %v2131 = vpack.c.b16 %v1115, %v1107
    %v2132 = vpack.c.b16 %v1124, %v1116
    %v2133 = vpack.c.b16 %v1125, %v1117
    %v2134 = vpack.c.b16 %v1126, %v1118
    %v2135 = vpack.c.b16 %v1127, %v1119
    %v2136 = vpack.c.b16 %v1128, %v1120
    %v2137 = vpack.c.b16 %v1129, %v1121
    %v2138 = vpack.c.b16 %v1130, %v1122
    %v2139 = vpack.c.b16 %v1131, %v1123
    %v2140 = vpack.c.b16 %v1140, %v1132
    %v2141 = vpack.c.b16 %v1141, %v1133
    %v2142 = vpack.c.b16 %v1142, %v1134
    %v2143 = vpack.c.b16 %v1143, %v1135
    %v2144 = vpack.c.b16 %v1144, %v1136
    %v2145 = vpack.c.b16 %v1145, %v1137
    %v2146 = vpack.c.b16 %v1146, %v1138
    %v2147 = vpack.c.b16 %v1147, %v1139
    %v2148 = vpack.c.b16 %v1156, %v1148
    %v2149 = vpack.c.b16 %v1157, %v1149
    %v2150 = vpack.c.b16 %v1158, %v1150
    %v2151 = vpack.c.b16 %v1159, %v1151
    %v2152 = vpack.c.b16 %v1160, %v1152
    %v2153 = vpack.c.b16 %v1161, %v1153
    %v2154 = vpack.c.b16 %v1162, %v1154
    %v2155 = vpack.c.b16 %v1163, %v1155
    %v2156 = vpack.c.b16 %v1172, %v1164
    %v2157 = vpack.c.b16 %v1173, %v1165
    %v2158 = vpack.c.b16 %v1174, %v1166
    %v2159 = vpack.c.b16 %v1175, %v1167
    %v2160 = vpack.c.b16 %v1176, %v1168
    %v2161 = vpack.c.b16 %v1177, %v1169
    %v2162 = vpack.c.b16 %v1178, %v1170
    %v2163 = vpack.c.b16 %v1179, %v1171
    %v2164 = vpack.c.b16 %v1188, %v1180
    %v2165 = vpack.c.b16 %v1189, %v1181
    %v2166 = vpack.c.b16 %v1190, %v1182
    %v2167 = vpack.c.b16 %v1191, %v1183
    %v2168 = vpack.c.b16 %v1192, %v1184
    %v2169 = vpack.c.b16 %v1193, %v1185
    %v2170 = vpack.c.b16 %v1194, %v1186
    %v2171 = vpack.c.b16 %v1195, %v1187
    %v2172 = vpack.c.b16 %v1204, %v1196
    %v2173 = vpack.c.b16 %v1205, %v1197
    %v2174 = vpack.c.b16 %v1206, %v1198
    %v2175 = vpack.c.b16 %v1207, %v1199
    %v2176 = vpack.c.b16 %v1208, %v1200
    %v2177 = vpack.c.b16 %v1209, %v1201
    %v2178 = vpack.c.b16 %v1210, %v1202
    %v2179 = vpack.c.b16 %v1211, %v1203
    %v2180 = vpack.c.b16 %v1220, %v1212
    %v2181 = vpack.c.b16 %v1221, %v1213
    %v2182 = vpack.c.b16 %v1222, %v1214
    %v2183 = vpack.c.b16 %v1223, %v1215
    %v2184 = vpack.c.b16 %v1224, %v1216
    %v2185 = vpack.c.b16 %v1225, %v1217
    %v2186 = vpack.c.b16 %v1226, %v1218
    %v2187 = vpack.c.b16 %v1227, %v1219
    %v2188 = vpack.c.b16 %v1236, %v1228
    %v2189 = vpack.c.b16 %v1237, %v1229
    %v2190 = vpack.c.b16 %v1238, %v1230
    %v2191 = vpack.c.b16 %v1239, %v1231
    %v2192 = vpack.c.b16 %v1240, %v1232
    %v2193 = vpack.c.b16 %v1241, %v1233
    %v2194 = vpack.c.b16 %v1242, %v1234
    %v2195 = vpack.c.b16 %v1243, %v1235
    %v2196 = vpack.c.b16 %v1252, %v1244
    %v2197 = vpack.c.b16 %v1253, %v1245
    %v2198 = vpack.c.b16 %v1254, %v1246
    %v2199 = vpack.c.b16 %v1255, %v1247
    %v2200 = vpack.c.b16 %v1256, %v1248
    %v2201 = vpack.c.b16 %v1257, %v1249
    %v2202 = vpack.c.b16 %v1258, %v1250
    %v2203 = vpack.c.b16 %v1259, %v1251
    %v2204 = vpack.c.b16 %v1268, %v1260
    %v2205 = vpack.c.b16 %v1269, %v1261
    %v2206 = vpack.c.b16 %v1270, %v1262
    %v2207 = vpack.c.b16 %v1271, %v1263
    %v2208 = vpack.c.b16 %v1272, %v1264
    %v2209 = vpack.c.b16 %v1273, %v1265
    %v2210 = vpack.c.b16 %v1274, %v1266
    %v2211 = vpack.c.b16 %v1275, %v1267
    %v2212 = vpack.c.b16 %v1284, %v1276
    %v2213 = vpack.c.b16 %v1285, %v1277
    %v2214 = vpack.c.b16 %v1286, %v1278
    %v2215 = vpack.c.b16 %v1287, %v1279
    %v2216 = vpack.c.b16 %v1288, %v1280
    %v2217 = vpack.c.b16 %v1289, %v1281
    %v2218 = vpack.c.b16 %v1290, %v1282
    %v2219 = vpack.c.b16 %v1291, %v1283
    %v2220 = vpack.c.b16 %v1300, %v1292
    %v2221 = vpack.c.b16 %v1301, %v1293
    %v2222 = vpack.c.b16 %v1302, %v1294
    %v2223 = vpack.c.b16 %v1303, %v1295
    %v2224 = vpack.c.b16 %v1304, %v1296
    %v2225 = vpack.c.b16 %v1305, %v1297
    %v2226 = vpack.c.b16 %v1306, %v1298
    %v2227 = vpack.c.b16 %v1307, %v1299
    %v2228 = vpack.c.b16 %v1316, %v1308
    %v2229 = vpack.c.b16 %v1317, %v1309
    %v2230 = vpack.c.b16 %v1318, %v1310
    %v2231 = vpack.c.b16 %v1319, %v1311
    %v2232 = vpack.c.b16 %v1320, %v1312
    %v2233 = vpack.c.b16 %v1321, %v1313
    %v2234 = vpack.c.b16 %v1322, %v1314
    %v2235 = vpack.c.b16 %v1323, %v1315
    %v2236 = vpack.c.b16 %v1332, %v1324
    %v2237 = vpack.c.b16 %v1333, %v1325
    %v2238 = vpack.c.b16 %v1334, %v1326
    %v2239 = vpack.c.b16 %v1335, %v1327
    %v2240 = vpack.c.b16 %v1336, %v1328
    %v2241 = vpack.c.b16 %v1337, %v1329
    %v2242 = vpack.c.b16 %v1338, %v1330
    %v2243 = vpack.c.b16 %v1339, %v1331
    %v2244 = vpack.c.b16 %v1348, %v1340
    %v2245 = vpack.c.b16 %v1349, %v1341
    %v2246 = vpack.c.b16 %v1350, %v1342
    %v2247 = vpack.c.b16 %v1351, %v1343
    %v2248 = vpack.c.b16 %v1352, %v1344
    %v2249 = vpack.c.b16 %v1353, %v1345
    %v2250 = vpack.c.b16 %v1354, %v1346
    %v2251 = vpack.c.b16 %v1355, %v1347
    %v2252 = vpack.c.b16 %v1364, %v1356
    %v2253 = vpack.c.b16 %v1365, %v1357
    %v2254 = vpack.c.b16 %v1366, %v1358
    %v2255 = vpack.c.b16 %v1367, %v1359
    %v2256 = vpack.c.b16 %v1368, %v1360
    %v2257 = vpack.c.b16 %v1369, %v1361
    %v2258 = vpack.c.b16 %v1370, %v1362
    %v2259 = vpack.c.b16 %v1371, %v1363
    %v2260 = vpack.c.b16 %v1380, %v1372
    %v2261 = vpack.c.b16 %v1381, %v1373
    %v2262 = vpack.c.b16 %v1382, %v1374
    %v2263 = vpack.c.b16 %v1383, %v1375
    %v2264 = vpack.c.b16 %v1384, %v1376
    %v2265 = vpack.c.b16 %v1385, %v1377
    %v2266 = vpack.c.b16 %v1386, %v1378
    %v2267 = vpack.c.b16 %v1387, %v1379
    %v2268 = vpack.c.b16 %v1396, %v1388
    %v2269 = vpack.c.b16 %v1397, %v1389
    %v2270 = vpack.c.b16 %v1398, %v1390
    %v2271 = vpack.c.b16 %v1399, %v1391
    %v2272 = vpack.c.b16 %v1400, %v1392
    %v2273 = vpack.c.b16 %v1401, %v1393
    %v2274 = vpack.c.b16 %v1402, %v1394
    %v2275 = vpack.c.b16 %v1403, %v1395
    %v2276 = vpack.c.b16 %v1412, %v1404
    %v2277 = vpack.c.b16 %v1413, %v1405
    %v2278 = vpack.c.b16 %v1414, %v1406
    %v2279 = vpack.c.b16 %v1415, %v1407
    %v2280 = vpack.c.b16 %v1416, %v1408
    %v2281 = vpack.c.b16 %v1417, %v1409
    %v2282 = vpack.c.b16 %v1418, %v1410
    %v2283 = vpack.c.b16 %v1419, %v1411
    %v2284 = vpack.c.b16 %v1428, %v1420
    %v2285 = vpack.c.b16 %v1429, %v1421
    %v2286 = vpack.c.b16 %v1430, %v1422
    %v2287 = vpack.c.b16 %v1431, %v1423
    %v2288 = vpack.c.b16 %v1432, %v1424
    %v2289 = vpack.c.b16 %v1433, %v1425
    %v2290 = vpack.c.b16 %v1434, %v1426
    %v2291 = vpack.c.b16 %v1435, %v1427
    %v2292 = vpack.c.b16 %v1444, %v1436
    %v2293 = vpack.c.b16 %v1445, %v1437
    %v2294 = vpack.c.b16 %v1446, %v1438
    %v2295 = vpack.c.b16 %v1447, %v1439
    %v2296 = vpack.c.b16 %v1448, %v1440
    %v2297 = vpack.c.b16 %v1449, %v1441
    %v2298 = vpack.c.b16 %v1450, %v1442
    %v2299 = vpack.c.b16 %v1451, %v1443
    %v2300 = vpack.c.b16 %v1460, %v1452
    %v2301 = vpack.c.b16 %v1461, %v1453
    %v2302 = vpack.c.b16 %v1462, %v1454
    %v2303 = vpack.c.b16 %v1463, %v1455
    %v2304 = vpack.c.b16 %v1464, %v1456
    %v2305 = vpack.c.b16 %v1465, %v1457
    %v2306 = vpack.c.b16 %v1466, %v1458
    %v2307 = vpack.c.b16 %v1467, %v1459
    %v2308 = vpack.c.b16 %v1476, %v1468
    %v2309 = vpack.c.b16 %v1477, %v1469
    %v2310 = vpack.c.b16 %v1478, %v1470
    %v2311 = vpack.c.b16 %v1479, %v1471
    %v2312 = vpack.c.b16 %v1480, %v1472
    %v2313 = vpack.c.b16 %v1481, %v1473
    %v2314 = vpack.c.b16 %v1482, %v1474
    %v2315 = vpack.c.b16 %v1483, %v1475
    %v2316 = vpack.c.b16 %v1492, %v1484
    %v2317 = vpack.c.b16 %v1493, %v1485
    %v2318 = vpack.c.b16 %v1494, %v1486
    %v2319 = vpack.c.b16 %v1495, %v1487
    %v2320 = vpack.c.b16 %v1496, %v1488
    %v2321 = vpack.c.b16 %v1497, %v1489
    %v2322 = vpack.c.b16 %v1498, %v1490
    %v2323 = vpack.c.b16 %v1499, %v1491
    %v2324 = vpack.c.b16 %v1508, %v1500
    %v2325 = vpack.c.b16 %v1509, %v1501
    %v2326 = vpack.c.b16 %v1510, %v1502
    %v2327 = vpack.c.b16 %v1511, %v1503
    %v2328 = vpack.c.b16 %v1512, %v1504
    %v2329 = vpack.c.b16 %v1513, %v1505
    %v2330 = vpack.c.b16 %v1514, %v1506
    %v2331 = vpack.c.b16 %v1515, %v1507
    %v2332 = vpack.c.b16 %v1524, %v1516
    %v2333 = vpack.c.b16 %v1525, %v1517
    %v2334 = vpack.c.b16 %v1526, %v1518
    %v2335 = vpack.c.b16 %v1527, %v1519
    %v2336 = vpack.c.b16 %v1528, %v1520
    %v2337 = vpack.c.b16 %v1529, %v1521
    %v2338 = vpack.c.b16 %v1530, %v1522
    %v2339 = vpack.c.b16 %v1531, %v1523
    %v2340 = vpack.c.b16 %v1540, %v1532
    %v2341 = vpack.c.b16 %v1541, %v1533
    %v2342 = vpack.c.b16 %v1542, %v1534
    %v2343 = vpack.c.b16 %v1543, %v1535
    %v2344 = vpack.c.b16 %v1544, %v1536
    %v2345 = vpack.c.b16 %v1545, %v1537
    %v2346 = vpack.c.b16 %v1546, %v1538
    %v2347 = vpack.c.b16 %v1547, %v1539
    %v2348 = vpack.c.b16 %v1556, %v1548
    %v2349 = vpack.c.b16 %v1557, %v1549
    %v2350 = vpack.c.b16 %v1558, %v1550
    %v2351 = vpack.c.b16 %v1559, %v1551
    %v2352 = vpack.c.b16 %v1560, %v1552
    %v2353 = vpack.c.b16 %v1561, %v1553
    %v2354 = vpack.c.b16 %v1562, %v1554
    %v2355 = vpack.c.b16 %v1563, %v1555
    %v2356 = vpack.c.b16 %v1572, %v1564
    %v2357 = vpack.c.b16 %v1573, %v1565
    %v2358 = vpack.c.b16 %v1574, %v1566
    %v2359 = vpack.c.b16 %v1575, %v1567
    %v2360 = vpack.c.b16 %v1576, %v1568
    %v2361 = vpack.c.b16 %v1577, %v1569
    %v2362 = vpack.c.b16 %v1578, %v1570
    %v2363 = vpack.c.b16 %v1579, %v1571
    %v2364 = vpack.c.b16 %v1588, %v1580
    %v2365 = vpack.c.b16 %v1589, %v1581
    %v2366 = vpack.c.b16 %v1590, %v1582
    %v2367 = vpack.c.b16 %v1591, %v1583
    %v2368 = vpack.c.b16 %v1592, %v1584
    %v2369 = vpack.c.b16 %v1593, %v1585
    %v2370 = vpack.c.b16 %v1594, %v1586
    %v2371 = vpack.c.b16 %v1595, %v1587
    %v2372 = vpack.c.b16 %v1604, %v1596
    %v2373 = vpack.c.b16 %v1605, %v1597
    %v2374 = vpack.c.b16 %v1606, %v1598
    %v2375 = vpack.c.b16 %v1607, %v1599
    %v2376 = vpack.c.b16 %v1608, %v1600
    %v2377 = vpack.c.b16 %v1609, %v1601
    %v2378 = vpack.c.b16 %v1610, %v1602
    %v2379 = vpack.c.b16 %v1611, %v1603
    %v2380 = vpack.c.b16 %v1620, %v1612
    %v2381 = vpack.c.b16 %v1621, %v1613
    %v2382 = vpack.c.b16 %v1622, %v1614
    %v2383 = vpack.c.b16 %v1623, %v1615
    %v2384 = vpack.c.b16 %v1624, %v1616
    %v2385 = vpack.c.b16 %v1625, %v1617
    %v2386 = vpack.c.b16 %v1626, %v1618
    %v2387 = vpack.c.b16 %v1627, %v1619
    %v2388 = vpack.c.b16 %v1636, %v1628
    %v2389 = vpack.c.b16 %v1637, %v1629
    %v2390 = vpack.c.b16 %v1638, %v1630
    %v2391 = vpack.c.b16 %v1639, %v1631
    %v2392 = vpack.c.b16 %v1640, %v1632
    %v2393 = vpack.c.b16 %v1641, %v1633
    %v2394 = vpack.c.b16 %v1642, %v1634
    %v2395 = vpack.c.b16 %v1643, %v1635
    %v2396 = vpack.c.b16 %v1652, %v1644
    %v2397 = vpack.c.b16 %v1653, %v1645
    %v2398 = vpack.c.b16 %v1654, %v1646
    %v2399 = vpack.c.b16 %v1655, %v1647
    %v2400 = vpack.c.b16 %v1656, %v1648
    %v2401 = vpack.c.b16 %v1657, %v1649
    %v2402 = vpack.c.b16 %v1658, %v1650
    %v2403 = vpack.c.b16 %v1659, %v1651
    %v2404 = vpack.c.b16 %v1668, %v1660
    %v2405 = vpack.c.b16 %v1669, %v1661
    %v2406 = vpack.c.b16 %v1670, %v1662
    %v2407 = vpack.c.b16 %v1671, %v1663
    %v2408 = vpack.c.b16 %v1672, %v1664
    %v2409 = vpack.c.b16 %v1673, %v1665
    %v2410 = vpack.c.b16 %v1674, %v1666
    %v2411 = vpack.c.b16 %v1675, %v1667
    %v2412 = vpack.c.b16 %v1684, %v1676
    %v2413 = vpack.c.b16 %v1685, %v1677
    %v2414 = vpack.c.b16 %v1686, %v1678
    %v2415 = vpack.c.b16 %v1687, %v1679
    %v2416 = vpack.c.b16 %v1688, %v1680
    %v2417 = vpack.c.b16 %v1689, %v1681
    %v2418 = vpack.c.b16 %v1690, %v1682
    %v2419 = vpack.c.b16 %v1691, %v1683
    %v2420 = vpack.c.b16 %v1700, %v1692
    %v2421 = vpack.c.b16 %v1701, %v1693
    %v2422 = vpack.c.b16 %v1702, %v1694
    %v2423 = vpack.c.b16 %v1703, %v1695
    %v2424 = vpack.c.b16 %v1704, %v1696
    %v2425 = vpack.c.b16 %v1705, %v1697
    %v2426 = vpack.c.b16 %v1706, %v1698
    %v2427 = vpack.c.b16 %v1707, %v1699
    %v2428 = vpack.c.b16 %v1716, %v1708
    %v2429 = vpack.c.b16 %v1717, %v1709
    %v2430 = vpack.c.b16 %v1718, %v1710
    %v2431 = vpack.c.b16 %v1719, %v1711
    %v2432 = vpack.c.b16 %v1720, %v1712
    %v2433 = vpack.c.b16 %v1721, %v1713
    %v2434 = vpack.c.b16 %v1722, %v1714
    %v2435 = vpack.c.b16 %v1723, %v1715
    %v2436 = vpack.c.b16 %v1732, %v1724
    %v2437 = vpack.c.b16 %v1733, %v1725
    %v2438 = vpack.c.b16 %v1734, %v1726
    %v2439 = vpack.c.b16 %v1735, %v1727
    %v2440 = vpack.c.b16 %v1736, %v1728
    %v2441 = vpack.c.b16 %v1737, %v1729
    %v2442 = vpack.c.b16 %v1738, %v1730
    %v2443 = vpack.c.b16 %v1739, %v1731
    %v2444 = vpack.c.b16 %v1748, %v1740
    %v2445 = vpack.c.b16 %v1749, %v1741
    %v2446 = vpack.c.b16 %v1750, %v1742
    %v2447 = vpack.c.b16 %v1751, %v1743
    %v2448 = vpack.c.b16 %v1752, %v1744
    %v2449 = vpack.c.b16 %v1753, %v1745
    %v2450 = vpack.c.b16 %v1754, %v1746
    %v2451 = vpack.c.b16 %v1755, %v1747
    %v2452 = vpack.c.b16 %v1764, %v1756
    %v2453 = vpack.c.b16 %v1765, %v1757
    %v2454 = vpack.c.b16 %v1766, %v1758
    %v2455 = vpack.c.b16 %v1767, %v1759
    %v2456 = vpack.c.b16 %v1768, %v1760
    %v2457 = vpack.c.b16 %v1769, %v1761
    %v2458 = vpack.c.b16 %v1770, %v1762
    %v2459 = vpack.c.b16 %v1771, %v1763
    %v2460 = vpack.c.b16 %v1780, %v1772
    %v2461 = vpack.c.b16 %v1781, %v1773
    %v2462 = vpack.c.b16 %v1782, %v1774
    %v2463 = vpack.c.b16 %v1783, %v1775
    %v2464 = vpack.c.b16 %v1784, %v1776
    %v2465 = vpack.c.b16 %v1785, %v1777
    %v2466 = vpack.c.b16 %v1786, %v1778
    %v2467 = vpack.c.b16 %v1787, %v1779
    %v2468 = vpack.c.b16 %v1796, %v1788
    %v2469 = vpack.c.b16 %v1797, %v1789
    %v2470 = vpack.c.b16 %v1798, %v1790
    %v2471 = vpack.c.b16 %v1799, %v1791
    %v2472 = vpack.c.b16 %v1800, %v1792
    %v2473 = vpack.c.b16 %v1801, %v1793
    %v2474 = vpack.c.b16 %v1802, %v1794
    %v2475 = vpack.c.b16 %v1803, %v1795
    %v2476 = vpack.c.b16 %v1812, %v1804
    %v2477 = vpack.c.b16 %v1813, %v1805
    %v2478 = vpack.c.b16 %v1814, %v1806
    %v2479 = vpack.c.b16 %v1815, %v1807
    %v2480 = vpack.c.b16 %v1816, %v1808
    %v2481 = vpack.c.b16 %v1817, %v1809
    %v2482 = vpack.c.b16 %v1818, %v1810
    %v2483 = vpack.c.b16 %v1819, %v1811
    %v2484 = vpack.c.b16 %v1828, %v1820
    %v2485 = vpack.c.b16 %v1829, %v1821
    %v2486 = vpack.c.b16 %v1830, %v1822
    %v2487 = vpack.c.b16 %v1831, %v1823
    %v2488 = vpack.c.b16 %v1832, %v1824
    %v2489 = vpack.c.b16 %v1833, %v1825
    %v2490 = vpack.c.b16 %v1834, %v1826
    %v2491 = vpack.c.b16 %v1835, %v1827
    %v2492 = vpack.c.b16 %v1844, %v1836
    %v2493 = vpack.c.b16 %v1845, %v1837
    %v2494 = vpack.c.b16 %v1846, %v1838
    %v2495 = vpack.c.b16 %v1847, %v1839
    %v2496 = vpack.c.b16 %v1848, %v1840
    %v2497 = vpack.c.b16 %v1849, %v1841
    %v2498 = vpack.c.b16 %v1850, %v1842
    %v2499 = vpack.c.b16 %v1851, %v1843
    %v2500 = vpack.c.b16 %v1860, %v1852
    %v2501 = vpack.c.b16 %v1861, %v1853
    %v2502 = vpack.c.b16 %v1862, %v1854
    %v2503 = vpack.c.b16 %v1863, %v1855
    %v2504 = vpack.c.b16 %v1864, %v1856
    %v2505 = vpack.c.b16 %v1865, %v1857
    %v2506 = vpack.c.b16 %v1866, %v1858
    %v2507 = vpack.c.b16 %v1867, %v1859
    %v2508 = vpack.c.b16 %v1876, %v1868
    %v2509 = vpack.c.b16 %v1877, %v1869
    %v2510 = vpack.c.b16 %v1878, %v1870
    %v2511 = vpack.c.b16 %v1879, %v1871
    %v2512 = vpack.c.b16 %v1880, %v1872
    %v2513 = vpack.c.b16 %v1881, %v1873
    %v2514 = vpack.c.b16 %v1882, %v1874
    %v2515 = vpack.c.b16 %v1883, %v1875
    %v2516 = vpack.c.b16 %v1892, %v1884
    %v2517 = vpack.c.b16 %v1893, %v1885
    %v2518 = vpack.c.b16 %v1894, %v1886
    %v2519 = vpack.c.b16 %v1895, %v1887
    %v2520 = vpack.c.b16 %v1896, %v1888
    %v2521 = vpack.c.b16 %v1897, %v1889
    %v2522 = vpack.c.b16 %v1898, %v1890
    %v2523 = vpack.c.b16 %v1899, %v1891
    %v2524 = vpack.c.b16 %v1908, %v1900
    %v2525 = vpack.c.b16 %v1909, %v1901
    %v2526 = vpack.c.b16 %v1910, %v1902
    %v2527 = vpack.c.b16 %v1911, %v1903
    %v2528 = vpack.c.b16 %v1912, %v1904
    %v2529 = vpack.c.b16 %v1913, %v1905
    %v2530 = vpack.c.b16 %v1914, %v1906
    %v2531 = vpack.c.b16 %v1915, %v1907
    %v2532 = vpack.c.b16 %v1924, %v1916
    %v2533 = vpack.c.b16 %v1925, %v1917
    %v2534 = vpack.c.b16 %v1926, %v1918
    %v2535 = vpack.c.b16 %v1927, %v1919
    %v2536 = vpack.c.b16 %v1928, %v1920
    %v2537 = vpack.c.b16 %v1929, %v1921
    %v2538 = vpack.c.b16 %v1930, %v1922
    %v2539 = vpack.c.b16 %v1931, %v1923
    %v2540 = vpack.c.b16 %v1940, %v1932
    %v2541 = vpack.c.b16 %v1941, %v1933
    %v2542 = vpack.c.b16 %v1942, %v1934
    %v2543 = vpack.c.b16 %v1943, %v1935
    %v2544 = vpack.c.b16 %v1944, %v1936
    %v2545 = vpack.c.b16 %v1945, %v1937
    %v2546 = vpack.c.b16 %v1946, %v1938
    %v2547 = vpack.c.b16 %v1947, %v1939
    %v2548 = vpack.c.b16 %v1956, %v1948
    %v2549 = vpack.c.b16 %v1957, %v1949
    %v2550 = vpack.c.b16 %v1958, %v1950
    %v2551 = vpack.c.b16 %v1959, %v1951
    %v2552 = vpack.c.b16 %v1960, %v1952
    %v2553 = vpack.c.b16 %v1961, %v1953
    %v2554 = vpack.c.b16 %v1962, %v1954
    %v2555 = vpack.c.b16 %v1963, %v1955
    %v2556 = vpack.c.b16 %v1972, %v1964
    %v2557 = vpack.c.b16 %v1973, %v1965
    %v2558 = vpack.c.b16 %v1974, %v1966
    %v2559 = vpack.c.b16 %v1975, %v1967
    %v2560 = vpack.c.b16 %v1976, %v1968
    %v2561 = vpack.c.b16 %v1977, %v1969
    %v2562 = vpack.c.b16 %v1978, %v1970
    %v2563 = vpack.c.b16 %v1979, %v1971
    %v2564 = vpack.c.b16 %v1988, %v1980
    %v2565 = vpack.c.b16 %v1989, %v1981
    %v2566 = vpack.c.b16 %v1990, %v1982
    %v2567 = vpack.c.b16 %v1991, %v1983
    %v2568 = vpack.c.b16 %v1992, %v1984
    %v2569 = vpack.c.b16 %v1993, %v1985
    %v2570 = vpack.c.b16 %v1994, %v1986
    %v2571 = vpack.c.b16 %v1995, %v1987
    %v2572 = vpack.c.b16 %v2004, %v1996
    %v2573 = vpack.c.b16 %v2005, %v1997
    %v2574 = vpack.c.b16 %v2006, %v1998
    %v2575 = vpack.c.b16 %v2007, %v1999
    %v2576 = vpack.c.b16 %v2008, %v2000
    %v2577 = vpack.c.b16 %v2009, %v2001
    %v2578 = vpack.c.b16 %v2010, %v2002
    %v2579 = vpack.c.b16 %v2011, %v2003
    %v2580 = vpack.c.b16 %v2020, %v2012
    %v2581 = vpack.c.b16 %v2021, %v2013
    %v2582 = vpack.c.b16 %v2022, %v2014
    %v2583 = vpack.c.b16 %v2023, %v2015
    %v2584 = vpack.c.b16 %v2024, %v2016
    %v2585 = vpack.c.b16 %v2025, %v2017
    %v2586 = vpack.c.b16 %v2026, %v2018
    %v2587 = vpack.c.b16 %v2027, %v2019
    %v2588 = vpack.c.b16 %v2036, %v2028
    %v2589 = vpack.c.b16 %v2037, %v2029
    %v2590 = vpack.c.b16 %v2038, %v2030
    %v2591 = vpack.c.b16 %v2039, %v2031
    %v2592 = vpack.c.b16 %v2040, %v2032
    %v2593 = vpack.c.b16 %v2041, %v2033
    %v2594 = vpack.c.b16 %v2042, %v2034
    %v2595 = vpack.c.b16 %v2043, %v2035
    %v2596 = vpack.c.b16 %v2052, %v2044
    %v2597 = vpack.c.b16 %v2053, %v2045
    %v2598 = vpack.c.b16 %v2054, %v2046
    %v2599 = vpack.c.b16 %v2055, %v2047
    %v2600 = vpack.c.b16 %v2056, %v2048
    %v2601 = vpack.c.b16 %v2057, %v2049
    %v2602 = vpack.c.b16 %v2058, %v2050
    %v2603 = vpack.c.b16 %v2059, %v2051
    %v2604 = vpack.c.b16 %v2068, %v2060
    %v2605 = vpack.c.b16 %v2069, %v2061
    %v2606 = vpack.c.b16 %v2070, %v2062
    %v2607 = vpack.c.b16 %v2071, %v2063
    %v2608 = vpack.c.b16 %v2072, %v2064
    %v2609 = vpack.c.b16 %v2073, %v2065
    %v2610 = vpack.c.b16 %v2074, %v2066
    %v2611 = vpack.c.b16 %v2075, %v2067
    %v2612 = vpack.c.b16 %v2084, %v2076
    %v2613 = vpack.c.b16 %v2085, %v2077
    %v2614 = vpack.c.b16 %v2086, %v2078
    %v2615 = vpack.c.b16 %v2087, %v2079
    %v2616 = vpack.c.b16 %v2088, %v2080
    %v2617 = vpack.c.b16 %v2089, %v2081
    %v2618 = vpack.c.b16 %v2090, %v2082
    %v2619 = vpack.c.b16 %v2091, %v2083
    %v2620 = vpack.c.b16 %v2100, %v2092
    %v2621 = vpack.c.b16 %v2101, %v2093
    %v2622 = vpack.c.b16 %v2102, %v2094
    %v2623 = vpack.c.b16 %v2103, %v2095
    %v2624 = vpack.c.b16 %v2104, %v2096
    %v2625 = vpack.c.b16 %v2105, %v2097
    %v2626 = vpack.c.b16 %v2106, %v2098
    %v2627 = vpack.c.b16 %v2107, %v2099
    %v2628 = vpack.c.b16 %v2116, %v2108
    %v2629 = vpack.c.b16 %v2117, %v2109
    %v2630 = vpack.c.b16 %v2118, %v2110
    %v2631 = vpack.c.b16 %v2119, %v2111
    %v2632 = vpack.c.b16 %v2120, %v2112
    %v2633 = vpack.c.b16 %v2121, %v2113
    %v2634 = vpack.c.b16 %v2122, %v2114
    %v2635 = vpack.c.b16 %v2123, %v2115
    %3148 = vmatprep.subr.bf16.mxu0 %v2181
    %3149 = vmatpush1.bf16.msra.mxu0 %v2180
    %3150 = vmatprep.subr.bf16.mxu0 %v2173
    %3151 = vmatpush1.bf16.msra.mxu0 %v2172
    %3152 = vmatprep.subr.bf16.mxu0 %v2165
    %3153 = vmatpush1.bf16.msra.mxu0 %v2164
    %3154 = vmatprep.subr.bf16.mxu0 %v2157
    %3155 = vmatpush1.bf16.msra.mxu0 %v2156
    %3156 = vmatprep.subr.bf16.mxu0 %v2149
    %3157 = vmatpush1.bf16.msra.mxu0 %v2148
    %3158 = vmatprep.subr.bf16.mxu0 %v2141
    %3159 = vmatpush1.bf16.msra.mxu0 %v2140
    %3160 = vmatprep.subr.bf16.mxu0 %v2133
    %3161 = vmatpush1.bf16.msra.mxu0 %v2132
    %3162 = vmatprep.subr.bf16.mxu0 %v2125
    %3163 = vmatpush1.bf16.msra.mxu0 %v2124
    %3164 = vmatprep.subr.bf16.mxu0 %v2245
    %3165 = vmatpush2.bf16.msra.mxu0 %v2244
    %3166 = vmatprep.subr.bf16.mxu0 %v2237
    %3167 = vmatpush2.bf16.msra.mxu0 %v2236
    %3168 = vmatprep.subr.bf16.mxu0 %v2229
    %3169 = vmatpush2.bf16.msra.mxu0 %v2228
    %3170 = vmatprep.subr.bf16.mxu0 %v2221
    %3171 = vmatpush2.bf16.msra.mxu0 %v2220
    %3172 = vmatprep.subr.bf16.mxu0 %v2213
    %3173 = vmatpush2.bf16.msra.mxu0 %v2212
    %3174 = vmatprep.subr.bf16.mxu0 %v2205
    %3175 = vmatpush2.bf16.msra.mxu0 %v2204
    %3176 = vmatprep.subr.bf16.mxu0 %v2197
    %3177 = vmatpush2.bf16.msra.mxu0 %v2196
    %3178 = vmatprep.subr.bf16.mxu0 %v2189
    %3179 = vmatpush2.bf16.msra.mxu0 %v2188
    %3180 = vmatprep.mubr.bf16.mxu0 %v69
    %3181 = vmatmul.mubr.bf16.gmra.mxu0 %v68
    %v3182 = vpop.f32.mrf.mxu0
    %v3183 = vadd.f32 0.0, %v3182
    %v3184 = vpop.f32.mrf.mxu0
    %v3185 = vadd.f32 0.0, %v3184
    %v3186 = vpop.f32.mrf.mxu0
    %v3187 = vpop.f32.mrf.mxu0
    %3188 = vdwg.mxu0
    %3189 = vmatprep.subr.bf16.mxu0 %v2309
    %3190 = vmatpush1.bf16.msra.mxu0 %v2308
    %3191 = vmatprep.subr.bf16.mxu0 %v2301
    %3192 = vmatpush1.bf16.msra.mxu0 %v2300
    %3193 = vmatprep.subr.bf16.mxu0 %v2293
    %3194 = vmatpush1.bf16.msra.mxu0 %v2292
    %3195 = vmatprep.subr.bf16.mxu0 %v2285
    %3196 = vmatpush1.bf16.msra.mxu0 %v2284
    %3197 = vmatprep.subr.bf16.mxu0 %v2277
    %3198 = vmatpush1.bf16.msra.mxu0 %v2276
    %3199 = vmatprep.subr.bf16.mxu0 %v2269
    %3200 = vmatpush1.bf16.msra.mxu0 %v2268
    %3201 = vmatprep.subr.bf16.mxu0 %v2261
    %3202 = vmatpush1.bf16.msra.mxu0 %v2260
    %3203 = vmatprep.subr.bf16.mxu0 %v2253
    %3204 = vmatpush1.bf16.msra.mxu0 %v2252
    %3205 = vmatprep.subr.bf16.mxu0 %v2373
    %3206 = vmatpush2.bf16.msra.mxu0 %v2372
    %3207 = vmatprep.subr.bf16.mxu0 %v2365
    %3208 = vmatpush2.bf16.msra.mxu0 %v2364
    %3209 = vmatprep.subr.bf16.mxu0 %v2357
    %3210 = vmatpush2.bf16.msra.mxu0 %v2356
    %3211 = vmatprep.subr.bf16.mxu0 %v2349
    %3212 = vmatpush2.bf16.msra.mxu0 %v2348
    %3213 = vmatprep.subr.bf16.mxu0 %v2341
    %3214 = vmatpush2.bf16.msra.mxu0 %v2340
    %3215 = vmatprep.subr.bf16.mxu0 %v2333
    %3216 = vmatpush2.bf16.msra.mxu0 %v2332
    %3217 = vmatprep.subr.bf16.mxu0 %v2325
    %3218 = vmatpush2.bf16.msra.mxu0 %v2324
    %3219 = vmatprep.subr.bf16.mxu0 %v2317
    %3220 = vmatpush2.bf16.msra.mxu0 %v2316
    %3221 = vmatprep.mubr.bf16.mxu0 %v71
    %3222 = vmatmul.mubr.bf16.gmra.mxu0 %v70
    %v3223 = vpop.f32.mrf.mxu0
    %v3224 = vadd.f32 %v3183, %v3223
    %v3225 = vpop.f32.mrf.mxu0
    %v3226 = vadd.f32 %v3185, %v3225
    %v3227 = vpop.f32.mrf.mxu0
    %v3228 = vpop.f32.mrf.mxu0
    %3229 = vdwg.mxu0
    %3230 = vmatprep.subr.bf16.mxu0 %v2437
    %3231 = vmatpush1.bf16.msra.mxu0 %v2436
    %3232 = vmatprep.subr.bf16.mxu0 %v2429
    %3233 = vmatpush1.bf16.msra.mxu0 %v2428
    %3234 = vmatprep.subr.bf16.mxu0 %v2421
    %3235 = vmatpush1.bf16.msra.mxu0 %v2420
    %3236 = vmatprep.subr.bf16.mxu0 %v2413
    %3237 = vmatpush1.bf16.msra.mxu0 %v2412
    %3238 = vmatprep.subr.bf16.mxu0 %v2405
    %3239 = vmatpush1.bf16.msra.mxu0 %v2404
    %3240 = vmatprep.subr.bf16.mxu0 %v2397
    %3241 = vmatpush1.bf16.msra.mxu0 %v2396
    %3242 = vmatprep.subr.bf16.mxu0 %v2389
    %3243 = vmatpush1.bf16.msra.mxu0 %v2388
    %3244 = vmatprep.subr.bf16.mxu0 %v2381
    %3245 = vmatpush1.bf16.msra.mxu0 %v2380
    %3246 = vmatprep.subr.bf16.mxu0 %v2501
    %3247 = vmatpush2.bf16.msra.mxu0 %v2500
    %3248 = vmatprep.subr.bf16.mxu0 %v2493
    %3249 = vmatpush2.bf16.msra.mxu0 %v2492
    %3250 = vmatprep.subr.bf16.mxu0 %v2485
    %3251 = vmatpush2.bf16.msra.mxu0 %v2484
    %3252 = vmatprep.subr.bf16.mxu0 %v2477
    %3253 = vmatpush2.bf16.msra.mxu0 %v2476
    %3254 = vmatprep.subr.bf16.mxu0 %v2469
    %3255 = vmatpush2.bf16.msra.mxu0 %v2468
    %3256 = vmatprep.subr.bf16.mxu0 %v2461
    %3257 = vmatpush2.bf16.msra.mxu0 %v2460
    %3258 = vmatprep.subr.bf16.mxu0 %v2453
    %3259 = vmatpush2.bf16.msra.mxu0 %v2452
    %3260 = vmatprep.subr.bf16.mxu0 %v2445
    %3261 = vmatpush2.bf16.msra.mxu0 %v2444
    %3262 = vmatprep.mubr.bf16.mxu0 %v73
    %3263 = vmatmul.mubr.bf16.gmra.mxu0 %v72
    %v3264 = vpop.f32.mrf.mxu0
    %v3265 = vadd.f32 %v3224, %v3264
    %v3266 = vpop.f32.mrf.mxu0
    %v3267 = vadd.f32 %v3226, %v3266
    %v3268 = vpop.f32.mrf.mxu0
    %v3269 = vpop.f32.mrf.mxu0
    %3270 = vdwg.mxu0
    %3271 = vmatprep.subr.bf16.mxu0 %v2565
    %3272 = vmatpush1.bf16.msra.mxu0 %v2564
    %3273 = vmatprep.subr.bf16.mxu0 %v2557
    %3274 = vmatpush1.bf16.msra.mxu0 %v2556
    %3275 = vmatprep.subr.bf16.mxu0 %v2549
    %3276 = vmatpush1.bf16.msra.mxu0 %v2548
    %3277 = vmatprep.subr.bf16.mxu0 %v2541
    %3278 = vmatpush1.bf16.msra.mxu0 %v2540
    %3279 = vmatprep.subr.bf16.mxu0 %v2533
    %3280 = vmatpush1.bf16.msra.mxu0 %v2532
    %3281 = vmatprep.subr.bf16.mxu0 %v2525
    %3282 = vmatpush1.bf16.msra.mxu0 %v2524
    %3283 = vmatprep.subr.bf16.mxu0 %v2517
    %3284 = vmatpush1.bf16.msra.mxu0 %v2516
    %3285 = vmatprep.subr.bf16.mxu0 %v2509
    %3286 = vmatpush1.bf16.msra.mxu0 %v2508
    %3287 = vmatprep.subr.bf16.mxu0 %v2629
    %3288 = vmatpush2.bf16.msra.mxu0 %v2628
    %3289 = vmatprep.subr.bf16.mxu0 %v2621
    %3290 = vmatpush2.bf16.msra.mxu0 %v2620
    %3291 = vmatprep.subr.bf16.mxu0 %v2613
    %3292 = vmatpush2.bf16.msra.mxu0 %v2612
    %3293 = vmatprep.subr.bf16.mxu0 %v2605
    %3294 = vmatpush2.bf16.msra.mxu0 %v2604
    %3295 = vmatprep.subr.bf16.mxu0 %v2597
    %3296 = vmatpush2.bf16.msra.mxu0 %v2596
    %3297 = vmatprep.subr.bf16.mxu0 %v2589
    %3298 = vmatpush2.bf16.msra.mxu0 %v2588
    %3299 = vmatprep.subr.bf16.mxu0 %v2581
    %3300 = vmatpush2.bf16.msra.mxu0 %v2580
    %3301 = vmatprep.subr.bf16.mxu0 %v2573
    %3302 = vmatpush2.bf16.msra.mxu0 %v2572
    %3303 = vmatprep.mubr.bf16.mxu0 %v75
    %3304 = vmatmul.mubr.bf16.gmra.mxu0 %v74
    %v3305 = vpop.f32.mrf.mxu0
    %v3306 = vadd.f32 %v3265, %v3305
    %v3307 = vpop.f32.mrf.mxu0
    %v3308 = vadd.f32 %v3267, %v3307
    %v3309 = vpop.f32.mrf.mxu0
    %v3310 = vpop.f32.mrf.mxu0
    %3311 = vdwg.mxu0
    %3312 = vmatprep.subr.bf16.mxu0 %v2183
    %3313 = vmatpush1.bf16.msra.mxu0 %v2182
    %3314 = vmatprep.subr.bf16.mxu0 %v2175
    %3315 = vmatpush1.bf16.msra.mxu0 %v2174
    %3316 = vmatprep.subr.bf16.mxu0 %v2167
    %3317 = vmatpush1.bf16.msra.mxu0 %v2166
    %3318 = vmatprep.subr.bf16.mxu0 %v2159
    %3319 = vmatpush1.bf16.msra.mxu0 %v2158
    %3320 = vmatprep.subr.bf16.mxu0 %v2151
    %3321 = vmatpush1.bf16.msra.mxu0 %v2150
    %3322 = vmatprep.subr.bf16.mxu0 %v2143
    %3323 = vmatpush1.bf16.msra.mxu0 %v2142
    %3324 = vmatprep.subr.bf16.mxu0 %v2135
    %3325 = vmatpush1.bf16.msra.mxu0 %v2134
    %3326 = vmatprep.subr.bf16.mxu0 %v2127
    %3327 = vmatpush1.bf16.msra.mxu0 %v2126
    %3328 = vmatprep.subr.bf16.mxu0 %v2247
    %3329 = vmatpush2.bf16.msra.mxu0 %v2246
    %3330 = vmatprep.subr.bf16.mxu0 %v2239
    %3331 = vmatpush2.bf16.msra.mxu0 %v2238
    %3332 = vmatprep.subr.bf16.mxu0 %v2231
    %3333 = vmatpush2.bf16.msra.mxu0 %v2230
    %3334 = vmatprep.subr.bf16.mxu0 %v2223
    %3335 = vmatpush2.bf16.msra.mxu0 %v2222
    %3336 = vmatprep.subr.bf16.mxu0 %v2215
    %3337 = vmatpush2.bf16.msra.mxu0 %v2214
    %3338 = vmatprep.subr.bf16.mxu0 %v2207
    %3339 = vmatpush2.bf16.msra.mxu0 %v2206
    %3340 = vmatprep.subr.bf16.mxu0 %v2199
    %3341 = vmatpush2.bf16.msra.mxu0 %v2198
    %3342 = vmatprep.subr.bf16.mxu0 %v2191
    %3343 = vmatpush2.bf16.msra.mxu0 %v2190
    %3344 = vmatprep.mubr.bf16.mxu0 %v69
    %3345 = vmatmul.mubr.bf16.gmra.mxu0 %v68
    %v3346 = vpop.f32.mrf.mxu0
    %v3347 = vadd.f32 0.0, %v3346
    %v3348 = vpop.f32.mrf.mxu0
    %v3349 = vadd.f32 0.0, %v3348
    %v3350 = vpop.f32.mrf.mxu0
    %v3351 = vpop.f32.mrf.mxu0
    %3352 = vdwg.mxu0
    %3353 = vmatprep.subr.bf16.mxu0 %v2311
    %3354 = vmatpush1.bf16.msra.mxu0 %v2310
    %3355 = vmatprep.subr.bf16.mxu0 %v2303
    %3356 = vmatpush1.bf16.msra.mxu0 %v2302
    %3357 = vmatprep.subr.bf16.mxu0 %v2295
    %3358 = vmatpush1.bf16.msra.mxu0 %v2294
    %3359 = vmatprep.subr.bf16.mxu0 %v2287
    %3360 = vmatpush1.bf16.msra.mxu0 %v2286
    %3361 = vmatprep.subr.bf16.mxu0 %v2279
    %3362 = vmatpush1.bf16.msra.mxu0 %v2278
    %3363 = vmatprep.subr.bf16.mxu0 %v2271
    %3364 = vmatpush1.bf16.msra.mxu0 %v2270
    %3365 = vmatprep.subr.bf16.mxu0 %v2263
    %3366 = vmatpush1.bf16.msra.mxu0 %v2262
    %3367 = vmatprep.subr.bf16.mxu0 %v2255
    %3368 = vmatpush1.bf16.msra.mxu0 %v2254
    %3369 = vmatprep.subr.bf16.mxu0 %v2375
    %3370 = vmatpush2.bf16.msra.mxu0 %v2374
    %3371 = vmatprep.subr.bf16.mxu0 %v2367
    %3372 = vmatpush2.bf16.msra.mxu0 %v2366
    %3373 = vmatprep.subr.bf16.mxu0 %v2359
    %3374 = vmatpush2.bf16.msra.mxu0 %v2358
    %3375 = vmatprep.subr.bf16.mxu0 %v2351
    %3376 = vmatpush2.bf16.msra.mxu0 %v2350
    %3377 = vmatprep.subr.bf16.mxu0 %v2343
    %3378 = vmatpush2.bf16.msra.mxu0 %v2342
    %3379 = vmatprep.subr.bf16.mxu0 %v2335
    %3380 = vmatpush2.bf16.msra.mxu0 %v2334
    %3381 = vmatprep.subr.bf16.mxu0 %v2327
    %3382 = vmatpush2.bf16.msra.mxu0 %v2326
    %3383 = vmatprep.subr.bf16.mxu0 %v2319
    %3384 = vmatpush2.bf16.msra.mxu0 %v2318
    %3385 = vmatprep.mubr.bf16.mxu0 %v71
    %3386 = vmatmul.mubr.bf16.gmra.mxu0 %v70
    %v3387 = vpop.f32.mrf.mxu0
    %v3388 = vadd.f32 %v3347, %v3387
    %v3389 = vpop.f32.mrf.mxu0
    %v3390 = vadd.f32 %v3349, %v3389
    %v3391 = vpop.f32.mrf.mxu0
    %v3392 = vpop.f32.mrf.mxu0
    %3393 = vdwg.mxu0
    %3394 = vmatprep.subr.bf16.mxu0 %v2439
    %3395 = vmatpush1.bf16.msra.mxu0 %v2438
    %3396 = vmatprep.subr.bf16.mxu0 %v2431
    %3397 = vmatpush1.bf16.msra.mxu0 %v2430
    %3398 = vmatprep.subr.bf16.mxu0 %v2423
    %3399 = vmatpush1.bf16.msra.mxu0 %v2422
    %3400 = vmatprep.subr.bf16.mxu0 %v2415
    %3401 = vmatpush1.bf16.msra.mxu0 %v2414
    %3402 = vmatprep.subr.bf16.mxu0 %v2407
    %3403 = vmatpush1.bf16.msra.mxu0 %v2406
    %3404 = vmatprep.subr.bf16.mxu0 %v2399
    %3405 = vmatpush1.bf16.msra.mxu0 %v2398
    %3406 = vmatprep.subr.bf16.mxu0 %v2391
    %3407 = vmatpush1.bf16.msra.mxu0 %v2390
    %3408 = vmatprep.subr.bf16.mxu0 %v2383
    %3409 = vmatpush1.bf16.msra.mxu0 %v2382
    %3410 = vmatprep.subr.bf16.mxu0 %v2503
    %3411 = vmatpush2.bf16.msra.mxu0 %v2502
    %3412 = vmatprep.subr.bf16.mxu0 %v2495
    %3413 = vmatpush2.bf16.msra.mxu0 %v2494
    %3414 = vmatprep.subr.bf16.mxu0 %v2487
    %3415 = vmatpush2.bf16.msra.mxu0 %v2486
    %3416 = vmatprep.subr.bf16.mxu0 %v2479
    %3417 = vmatpush2.bf16.msra.mxu0 %v2478
    %3418 = vmatprep.subr.bf16.mxu0 %v2471
    %3419 = vmatpush2.bf16.msra.mxu0 %v2470
    %3420 = vmatprep.subr.bf16.mxu0 %v2463
    %3421 = vmatpush2.bf16.msra.mxu0 %v2462
    %3422 = vmatprep.subr.bf16.mxu0 %v2455
    %3423 = vmatpush2.bf16.msra.mxu0 %v2454
    %3424 = vmatprep.subr.bf16.mxu0 %v2447
    %3425 = vmatpush2.bf16.msra.mxu0 %v2446
    %3426 = vmatprep.mubr.bf16.mxu0 %v73
    %3427 = vmatmul.mubr.bf16.gmra.mxu0 %v72
    %v3428 = vpop.f32.mrf.mxu0
    %v3429 = vadd.f32 %v3388, %v3428
    %v3430 = vpop.f32.mrf.mxu0
    %v3431 = vadd.f32 %v3390, %v3430
    %v3432 = vpop.f32.mrf.mxu0
    %v3433 = vpop.f32.mrf.mxu0
    %3434 = vdwg.mxu0
    %3435 = vmatprep.subr.bf16.mxu0 %v2567
    %3436 = vmatpush1.bf16.msra.mxu0 %v2566
    %3437 = vmatprep.subr.bf16.mxu0 %v2559
    %3438 = vmatpush1.bf16.msra.mxu0 %v2558
    %3439 = vmatprep.subr.bf16.mxu0 %v2551
    %3440 = vmatpush1.bf16.msra.mxu0 %v2550
    %3441 = vmatprep.subr.bf16.mxu0 %v2543
    %3442 = vmatpush1.bf16.msra.mxu0 %v2542
    %3443 = vmatprep.subr.bf16.mxu0 %v2535
    %3444 = vmatpush1.bf16.msra.mxu0 %v2534
    %3445 = vmatprep.subr.bf16.mxu0 %v2527
    %3446 = vmatpush1.bf16.msra.mxu0 %v2526
    %3447 = vmatprep.subr.bf16.mxu0 %v2519
    %3448 = vmatpush1.bf16.msra.mxu0 %v2518
    %3449 = vmatprep.subr.bf16.mxu0 %v2511
    %3450 = vmatpush1.bf16.msra.mxu0 %v2510
    %3451 = vmatprep.subr.bf16.mxu0 %v2631
    %3452 = vmatpush2.bf16.msra.mxu0 %v2630
    %3453 = vmatprep.subr.bf16.mxu0 %v2623
    %3454 = vmatpush2.bf16.msra.mxu0 %v2622
    %3455 = vmatprep.subr.bf16.mxu0 %v2615
    %3456 = vmatpush2.bf16.msra.mxu0 %v2614
    %3457 = vmatprep.subr.bf16.mxu0 %v2607
    %3458 = vmatpush2.bf16.msra.mxu0 %v2606
    %3459 = vmatprep.subr.bf16.mxu0 %v2599
    %3460 = vmatpush2.bf16.msra.mxu0 %v2598
    %3461 = vmatprep.subr.bf16.mxu0 %v2591
    %3462 = vmatpush2.bf16.msra.mxu0 %v2590
    %3463 = vmatprep.subr.bf16.mxu0 %v2583
    %3464 = vmatpush2.bf16.msra.mxu0 %v2582
    %3465 = vmatprep.subr.bf16.mxu0 %v2575
    %3466 = vmatpush2.bf16.msra.mxu0 %v2574
    %3467 = vmatprep.mubr.bf16.mxu0 %v75
    %3468 = vmatmul.mubr.bf16.gmra.mxu0 %v74
    %v3469 = vpop.f32.mrf.mxu0
    %v3470 = vadd.f32 %v3429, %v3469
    %v3471 = vpop.f32.mrf.mxu0
    %v3472 = vadd.f32 %v3431, %v3471
    %v3473 = vpop.f32.mrf.mxu0
    %v3474 = vpop.f32.mrf.mxu0
    %3475 = vdwg.mxu0
    %3476 = vmatprep.subr.bf16.mxu0 %v2185
    %3477 = vmatpush1.bf16.msra.mxu0 %v2184
    %3478 = vmatprep.subr.bf16.mxu0 %v2177
    %3479 = vmatpush1.bf16.msra.mxu0 %v2176
    %3480 = vmatprep.subr.bf16.mxu0 %v2169
    %3481 = vmatpush1.bf16.msra.mxu0 %v2168
    %3482 = vmatprep.subr.bf16.mxu0 %v2161
    %3483 = vmatpush1.bf16.msra.mxu0 %v2160
    %3484 = vmatprep.subr.bf16.mxu0 %v2153
    %3485 = vmatpush1.bf16.msra.mxu0 %v2152
    %3486 = vmatprep.subr.bf16.mxu0 %v2145
    %3487 = vmatpush1.bf16.msra.mxu0 %v2144
    %3488 = vmatprep.subr.bf16.mxu0 %v2137
    %3489 = vmatpush1.bf16.msra.mxu0 %v2136
    %3490 = vmatprep.subr.bf16.mxu0 %v2129
    %3491 = vmatpush1.bf16.msra.mxu0 %v2128
    %3492 = vmatprep.subr.bf16.mxu0 %v2249
    %3493 = vmatpush2.bf16.msra.mxu0 %v2248
    %3494 = vmatprep.subr.bf16.mxu0 %v2241
    %3495 = vmatpush2.bf16.msra.mxu0 %v2240
    %3496 = vmatprep.subr.bf16.mxu0 %v2233
    %3497 = vmatpush2.bf16.msra.mxu0 %v2232
    %3498 = vmatprep.subr.bf16.mxu0 %v2225
    %3499 = vmatpush2.bf16.msra.mxu0 %v2224
    %3500 = vmatprep.subr.bf16.mxu0 %v2217
    %3501 = vmatpush2.bf16.msra.mxu0 %v2216
    %3502 = vmatprep.subr.bf16.mxu0 %v2209
    %3503 = vmatpush2.bf16.msra.mxu0 %v2208
    %3504 = vmatprep.subr.bf16.mxu0 %v2201
    %3505 = vmatpush2.bf16.msra.mxu0 %v2200
    %3506 = vmatprep.subr.bf16.mxu0 %v2193
    %3507 = vmatpush2.bf16.msra.mxu0 %v2192
    %3508 = vmatprep.mubr.bf16.mxu0 %v69
    %3509 = vmatmul.mubr.bf16.gmra.mxu0 %v68
    %v3510 = vpop.f32.mrf.mxu0
    %v3511 = vadd.f32 0.0, %v3510
    %v3512 = vpop.f32.mrf.mxu0
    %v3513 = vadd.f32 0.0, %v3512
    %v3514 = vpop.f32.mrf.mxu0
    %v3515 = vpop.f32.mrf.mxu0
    %3516 = vdwg.mxu0
    %3517 = vmatprep.subr.bf16.mxu0 %v2313
    %3518 = vmatpush1.bf16.msra.mxu0 %v2312
    %3519 = vmatprep.subr.bf16.mxu0 %v2305
    %3520 = vmatpush1.bf16.msra.mxu0 %v2304
    %3521 = vmatprep.subr.bf16.mxu0 %v2297
    %3522 = vmatpush1.bf16.msra.mxu0 %v2296
    %3523 = vmatprep.subr.bf16.mxu0 %v2289
    %3524 = vmatpush1.bf16.msra.mxu0 %v2288
    %3525 = vmatprep.subr.bf16.mxu0 %v2281
    %3526 = vmatpush1.bf16.msra.mxu0 %v2280
    %3527 = vmatprep.subr.bf16.mxu0 %v2273
    %3528 = vmatpush1.bf16.msra.mxu0 %v2272
    %3529 = vmatprep.subr.bf16.mxu0 %v2265
    %3530 = vmatpush1.bf16.msra.mxu0 %v2264
    %3531 = vmatprep.subr.bf16.mxu0 %v2257
    %3532 = vmatpush1.bf16.msra.mxu0 %v2256
    %3533 = vmatprep.subr.bf16.mxu0 %v2377
    %3534 = vmatpush2.bf16.msra.mxu0 %v2376
    %3535 = vmatprep.subr.bf16.mxu0 %v2369
    %3536 = vmatpush2.bf16.msra.mxu0 %v2368
    %3537 = vmatprep.subr.bf16.mxu0 %v2361
    %3538 = vmatpush2.bf16.msra.mxu0 %v2360
    %3539 = vmatprep.subr.bf16.mxu0 %v2353
    %3540 = vmatpush2.bf16.msra.mxu0 %v2352
    %3541 = vmatprep.subr.bf16.mxu0 %v2345
    %3542 = vmatpush2.bf16.msra.mxu0 %v2344
    %3543 = vmatprep.subr.bf16.mxu0 %v2337
    %3544 = vmatpush2.bf16.msra.mxu0 %v2336
    %3545 = vmatprep.subr.bf16.mxu0 %v2329
    %3546 = vmatpush2.bf16.msra.mxu0 %v2328
    %3547 = vmatprep.subr.bf16.mxu0 %v2321
    %3548 = vmatpush2.bf16.msra.mxu0 %v2320
    %3549 = vmatprep.mubr.bf16.mxu0 %v71
    %3550 = vmatmul.mubr.bf16.gmra.mxu0 %v70
    %v3551 = vpop.f32.mrf.mxu0
    %v3552 = vadd.f32 %v3511, %v3551
    %v3553 = vpop.f32.mrf.mxu0
    %v3554 = vadd.f32 %v3513, %v3553
    %v3555 = vpop.f32.mrf.mxu0
    %v3556 = vpop.f32.mrf.mxu0
    %3557 = vdwg.mxu0
    %3558 = vmatprep.subr.bf16.mxu0 %v2441
    %3559 = vmatpush1.bf16.msra.mxu0 %v2440
    %3560 = vmatprep.subr.bf16.mxu0 %v2433
    %3561 = vmatpush1.bf16.msra.mxu0 %v2432
    %3562 = vmatprep.subr.bf16.mxu0 %v2425
    %3563 = vmatpush1.bf16.msra.mxu0 %v2424
    %3564 = vmatprep.subr.bf16.mxu0 %v2417
    %3565 = vmatpush1.bf16.msra.mxu0 %v2416
    %3566 = vmatprep.subr.bf16.mxu0 %v2409
    %3567 = vmatpush1.bf16.msra.mxu0 %v2408
    %3568 = vmatprep.subr.bf16.mxu0 %v2401
    %3569 = vmatpush1.bf16.msra.mxu0 %v2400
    %3570 = vmatprep.subr.bf16.mxu0 %v2393
    %3571 = vmatpush1.bf16.msra.mxu0 %v2392
    %3572 = vmatprep.subr.bf16.mxu0 %v2385
    %3573 = vmatpush1.bf16.msra.mxu0 %v2384
    %3574 = vmatprep.subr.bf16.mxu0 %v2505
    %3575 = vmatpush2.bf16.msra.mxu0 %v2504
    %3576 = vmatprep.subr.bf16.mxu0 %v2497
    %3577 = vmatpush2.bf16.msra.mxu0 %v2496
    %3578 = vmatprep.subr.bf16.mxu0 %v2489
    %3579 = vmatpush2.bf16.msra.mxu0 %v2488
    %3580 = vmatprep.subr.bf16.mxu0 %v2481
    %3581 = vmatpush2.bf16.msra.mxu0 %v2480
    %3582 = vmatprep.subr.bf16.mxu0 %v2473
    %3583 = vmatpush2.bf16.msra.mxu0 %v2472
    %3584 = vmatprep.subr.bf16.mxu0 %v2465
    %3585 = vmatpush2.bf16.msra.mxu0 %v2464
    %3586 = vmatprep.subr.bf16.mxu0 %v2457
    %3587 = vmatpush2.bf16.msra.mxu0 %v2456
    %3588 = vmatprep.subr.bf16.mxu0 %v2449
    %3589 = vmatpush2.bf16.msra.mxu0 %v2448
    %3590 = vmatprep.mubr.bf16.mxu0 %v73
    %3591 = vmatmul.mubr.bf16.gmra.mxu0 %v72
    %v3592 = vpop.f32.mrf.mxu0
    %v3593 = vadd.f32 %v3552, %v3592
    %v3594 = vpop.f32.mrf.mxu0
    %v3595 = vadd.f32 %v3554, %v3594
    %v3596 = vpop.f32.mrf.mxu0
    %v3597 = vpop.f32.mrf.mxu0
    %3598 = vdwg.mxu0
    %3599 = vmatprep.subr.bf16.mxu0 %v2569
    %3600 = vmatpush1.bf16.msra.mxu0 %v2568
    %3601 = vmatprep.subr.bf16.mxu0 %v2561
    %3602 = vmatpush1.bf16.msra.mxu0 %v2560
    %3603 = vmatprep.subr.bf16.mxu0 %v2553
    %3604 = vmatpush1.bf16.msra.mxu0 %v2552
    %3605 = vmatprep.subr.bf16.mxu0 %v2545
    %3606 = vmatpush1.bf16.msra.mxu0 %v2544
    %3607 = vmatprep.subr.bf16.mxu0 %v2537
    %3608 = vmatpush1.bf16.msra.mxu0 %v2536
    %3609 = vmatprep.subr.bf16.mxu0 %v2529
    %3610 = vmatpush1.bf16.msra.mxu0 %v2528
    %3611 = vmatprep.subr.bf16.mxu0 %v2521
    %3612 = vmatpush1.bf16.msra.mxu0 %v2520
    %3613 = vmatprep.subr.bf16.mxu0 %v2513
    %3614 = vmatpush1.bf16.msra.mxu0 %v2512
    %3615 = vmatprep.subr.bf16.mxu0 %v2633
    %3616 = vmatpush2.bf16.msra.mxu0 %v2632
    %3617 = vmatprep.subr.bf16.mxu0 %v2625
    %3618 = vmatpush2.bf16.msra.mxu0 %v2624
    %3619 = vmatprep.subr.bf16.mxu0 %v2617
    %3620 = vmatpush2.bf16.msra.mxu0 %v2616
    %3621 = vmatprep.subr.bf16.mxu0 %v2609
    %3622 = vmatpush2.bf16.msra.mxu0 %v2608
    %3623 = vmatprep.subr.bf16.mxu0 %v2601
    %3624 = vmatpush2.bf16.msra.mxu0 %v2600
    %3625 = vmatprep.subr.bf16.mxu0 %v2593
    %3626 = vmatpush2.bf16.msra.mxu0 %v2592
    %3627 = vmatprep.subr.bf16.mxu0 %v2585
    %3628 = vmatpush2.bf16.msra.mxu0 %v2584
    %3629 = vmatprep.subr.bf16.mxu0 %v2577
    %3630 = vmatpush2.bf16.msra.mxu0 %v2576
    %3631 = vmatprep.mubr.bf16.mxu0 %v75
    %3632 = vmatmul.mubr.bf16.gmra.mxu0 %v74
    %v3633 = vpop.f32.mrf.mxu0
    %v3634 = vadd.f32 %v3593, %v3633
    %v3635 = vpop.f32.mrf.mxu0
    %v3636 = vadd.f32 %v3595, %v3635
    %v3637 = vpop.f32.mrf.mxu0
    %v3638 = vpop.f32.mrf.mxu0
    %3639 = vdwg.mxu0
    %3640 = vmatprep.subr.bf16.mxu0 %v2187
    %3641 = vmatpush1.bf16.msra.mxu0 %v2186
    %3642 = vmatprep.subr.bf16.mxu0 %v2179
    %3643 = vmatpush1.bf16.msra.mxu0 %v2178
    %3644 = vmatprep.subr.bf16.mxu0 %v2171
    %3645 = vmatpush1.bf16.msra.mxu0 %v2170
    %3646 = vmatprep.subr.bf16.mxu0 %v2163
    %3647 = vmatpush1.bf16.msra.mxu0 %v2162
    %3648 = vmatprep.subr.bf16.mxu0 %v2155
    %3649 = vmatpush1.bf16.msra.mxu0 %v2154
    %3650 = vmatprep.subr.bf16.mxu0 %v2147
    %3651 = vmatpush1.bf16.msra.mxu0 %v2146
    %3652 = vmatprep.subr.bf16.mxu0 %v2139
    %3653 = vmatpush1.bf16.msra.mxu0 %v2138
    %3654 = vmatprep.subr.bf16.mxu0 %v2131
    %3655 = vmatpush1.bf16.msra.mxu0 %v2130
    %3656 = vmatprep.subr.bf16.mxu0 %v2251
    %3657 = vmatpush2.bf16.msra.mxu0 %v2250
    %3658 = vmatprep.subr.bf16.mxu0 %v2243
    %3659 = vmatpush2.bf16.msra.mxu0 %v2242
    %3660 = vmatprep.subr.bf16.mxu0 %v2235
    %3661 = vmatpush2.bf16.msra.mxu0 %v2234
    %3662 = vmatprep.subr.bf16.mxu0 %v2227
    %3663 = vmatpush2.bf16.msra.mxu0 %v2226
    %3664 = vmatprep.subr.bf16.mxu0 %v2219
    %3665 = vmatpush2.bf16.msra.mxu0 %v2218
    %3666 = vmatprep.subr.bf16.mxu0 %v2211
    %3667 = vmatpush2.bf16.msra.mxu0 %v2210
    %3668 = vmatprep.subr.bf16.mxu0 %v2203
    %3669 = vmatpush2.bf16.msra.mxu0 %v2202
    %3670 = vmatprep.subr.bf16.mxu0 %v2195
    %3671 = vmatpush2.bf16.msra.mxu0 %v2194
    %3672 = vmatprep.mubr.bf16.mxu0 %v69
    %3673 = vmatmul.mubr.bf16.gmra.mxu0 %v68
    %v3674 = vpop.f32.mrf.mxu0
    %v3675 = vadd.f32 0.0, %v3674
    %v3676 = vpop.f32.mrf.mxu0
    %v3677 = vadd.f32 0.0, %v3676
    %v3678 = vpop.f32.mrf.mxu0
    %v3679 = vpop.f32.mrf.mxu0
    %3680 = vdwg.mxu0
    %3681 = vmatprep.subr.bf16.mxu0 %v2315
    %3682 = vmatpush1.bf16.msra.mxu0 %v2314
    %3683 = vmatprep.subr.bf16.mxu0 %v2307
    %3684 = vmatpush1.bf16.msra.mxu0 %v2306
    %3685 = vmatprep.subr.bf16.mxu0 %v2299
    %3686 = vmatpush1.bf16.msra.mxu0 %v2298
    %3687 = vmatprep.subr.bf16.mxu0 %v2291
    %3688 = vmatpush1.bf16.msra.mxu0 %v2290
    %3689 = vmatprep.subr.bf16.mxu0 %v2283
    %3690 = vmatpush1.bf16.msra.mxu0 %v2282
    %3691 = vmatprep.subr.bf16.mxu0 %v2275
    %3692 = vmatpush1.bf16.msra.mxu0 %v2274
    %3693 = vmatprep.subr.bf16.mxu0 %v2267
    %3694 = vmatpush1.bf16.msra.mxu0 %v2266
    %3695 = vmatprep.subr.bf16.mxu0 %v2259
    %3696 = vmatpush1.bf16.msra.mxu0 %v2258
    %3697 = vmatprep.subr.bf16.mxu0 %v2379
    %3698 = vmatpush2.bf16.msra.mxu0 %v2378
    %3699 = vmatprep.subr.bf16.mxu0 %v2371
    %3700 = vmatpush2.bf16.msra.mxu0 %v2370
    %3701 = vmatprep.subr.bf16.mxu0 %v2363
    %3702 = vmatpush2.bf16.msra.mxu0 %v2362
    %3703 = vmatprep.subr.bf16.mxu0 %v2355
    %3704 = vmatpush2.bf16.msra.mxu0 %v2354
    %3705 = vmatprep.subr.bf16.mxu0 %v2347
    %3706 = vmatpush2.bf16.msra.mxu0 %v2346
    %3707 = vmatprep.subr.bf16.mxu0 %v2339
    %3708 = vmatpush2.bf16.msra.mxu0 %v2338
    %3709 = vmatprep.subr.bf16.mxu0 %v2331
    %3710 = vmatpush2.bf16.msra.mxu0 %v2330
    %3711 = vmatprep.subr.bf16.mxu0 %v2323
    %3712 = vmatpush2.bf16.msra.mxu0 %v2322
    %3713 = vmatprep.mubr.bf16.mxu0 %v71
    %3714 = vmatmul.mubr.bf16.gmra.mxu0 %v70
    %v3715 = vpop.f32.mrf.mxu0
    %v3716 = vadd.f32 %v3675, %v3715
    %v3717 = vpop.f32.mrf.mxu0
    %v3718 = vadd.f32 %v3677, %v3717
    %v3719 = vpop.f32.mrf.mxu0
    %v3720 = vpop.f32.mrf.mxu0
    %3721 = vdwg.mxu0
    %3722 = vmatprep.subr.bf16.mxu0 %v2443
    %3723 = vmatpush1.bf16.msra.mxu0 %v2442
    %3724 = vmatprep.subr.bf16.mxu0 %v2435
    %3725 = vmatpush1.bf16.msra.mxu0 %v2434
    %3726 = vmatprep.subr.bf16.mxu0 %v2427
    %3727 = vmatpush1.bf16.msra.mxu0 %v2426
    %3728 = vmatprep.subr.bf16.mxu0 %v2419
    %3729 = vmatpush1.bf16.msra.mxu0 %v2418
    %3730 = vmatprep.subr.bf16.mxu0 %v2411
    %3731 = vmatpush1.bf16.msra.mxu0 %v2410
    %3732 = vmatprep.subr.bf16.mxu0 %v2403
    %3733 = vmatpush1.bf16.msra.mxu0 %v2402
    %3734 = vmatprep.subr.bf16.mxu0 %v2395
    %3735 = vmatpush1.bf16.msra.mxu0 %v2394
    %3736 = vmatprep.subr.bf16.mxu0 %v2387
    %3737 = vmatpush1.bf16.msra.mxu0 %v2386
    %3738 = vmatprep.subr.bf16.mxu0 %v2507
    %3739 = vmatpush2.bf16.msra.mxu0 %v2506
    %3740 = vmatprep.subr.bf16.mxu0 %v2499
    %3741 = vmatpush2.bf16.msra.mxu0 %v2498
    %3742 = vmatprep.subr.bf16.mxu0 %v2491
    %3743 = vmatpush2.bf16.msra.mxu0 %v2490
    %3744 = vmatprep.subr.bf16.mxu0 %v2483
    %3745 = vmatpush2.bf16.msra.mxu0 %v2482
    %3746 = vmatprep.subr.bf16.mxu0 %v2475
    %3747 = vmatpush2.bf16.msra.mxu0 %v2474
    %3748 = vmatprep.subr.bf16.mxu0 %v2467
    %3749 = vmatpush2.bf16.msra.mxu0 %v2466
    %3750 = vmatprep.subr.bf16.mxu0 %v2459
    %3751 = vmatpush2.bf16.msra.mxu0 %v2458
    %3752 = vmatprep.subr.bf16.mxu0 %v2451
    %3753 = vmatpush2.bf16.msra.mxu0 %v2450
    %3754 = vmatprep.mubr.bf16.mxu0 %v73
    %3755 = vmatmul.mubr.bf16.gmra.mxu0 %v72
    %v3756 = vpop.f32.mrf.mxu0
    %v3757 = vadd.f32 %v3716, %v3756
    %v3758 = vpop.f32.mrf.mxu0
    %v3759 = vadd.f32 %v3718, %v3758
    %v3760 = vpop.f32.mrf.mxu0
    %v3761 = vpop.f32.mrf.mxu0
    %3762 = vdwg.mxu0
    %3763 = vmatprep.subr.bf16.mxu0 %v2571
    %3764 = vmatpush1.bf16.msra.mxu0 %v2570
    %3765 = vmatprep.subr.bf16.mxu0 %v2563
    %3766 = vmatpush1.bf16.msra.mxu0 %v2562
    %3767 = vmatprep.subr.bf16.mxu0 %v2555
    %3768 = vmatpush1.bf16.msra.mxu0 %v2554
    %3769 = vmatprep.subr.bf16.mxu0 %v2547
    %3770 = vmatpush1.bf16.msra.mxu0 %v2546
    %3771 = vmatprep.subr.bf16.mxu0 %v2539
    %3772 = vmatpush1.bf16.msra.mxu0 %v2538
    %3773 = vmatprep.subr.bf16.mxu0 %v2531
    %3774 = vmatpush1.bf16.msra.mxu0 %v2530
    %3775 = vmatprep.subr.bf16.mxu0 %v2523
    %3776 = vmatpush1.bf16.msra.mxu0 %v2522
    %3777 = vmatprep.subr.bf16.mxu0 %v2515
    %3778 = vmatpush1.bf16.msra.mxu0 %v2514
    %3779 = vmatprep.subr.bf16.mxu0 %v2635
    %3780 = vmatpush2.bf16.msra.mxu0 %v2634
    %3781 = vmatprep.subr.bf16.mxu0 %v2627
    %3782 = vmatpush2.bf16.msra.mxu0 %v2626
    %3783 = vmatprep.subr.bf16.mxu0 %v2619
    %3784 = vmatpush2.bf16.msra.mxu0 %v2618
    %3785 = vmatprep.subr.bf16.mxu0 %v2611
    %3786 = vmatpush2.bf16.msra.mxu0 %v2610
    %3787 = vmatprep.subr.bf16.mxu0 %v2603
    %3788 = vmatpush2.bf16.msra.mxu0 %v2602
    %3789 = vmatprep.subr.bf16.mxu0 %v2595
    %3790 = vmatpush2.bf16.msra.mxu0 %v2594
    %3791 = vmatprep.subr.bf16.mxu0 %v2587
    %3792 = vmatpush2.bf16.msra.mxu0 %v2586
    %3793 = vmatprep.subr.bf16.mxu0 %v2579
    %3794 = vmatpush2.bf16.msra.mxu0 %v2578
    %3795 = vmatprep.mubr.bf16.mxu0 %v75
    %3796 = vmatmul.mubr.bf16.gmra.mxu0 %v74
    %v3797 = vpop.f32.mrf.mxu0
    %v3798 = vadd.f32 %v3757, %v3797
    %v3799 = vpop.f32.mrf.mxu0
    %v3800 = vadd.f32 %v3759, %v3799
    %v3801 = vpop.f32.mrf.mxu0
    %v3802 = vpop.f32.mrf.mxu0
    %3803 = vdwg.mxu0
    %v3812 = vcombine.low %v3306, %v3308
    %v3813 = vcombine.low %v3470, %v3472
    %v3814 = vcombine.low %v3634, %v3636
    %v3815 = vcombine.low %v3798, %v3800
    %v3820 = vadd.f32 %v48, %v3812
    %v3821 = vadd.f32 %v49, %v3813
    %v3822 = vadd.f32 %v50, %v3814
    %v3823 = vadd.f32 %v51, %v3815
    %3824 = vst [vmem:[#allocation2] sm:$0xff] %v3820
    %3825 = vst [vmem:[#allocation2 + $0x8] sm:$0xff] %v3821
    %3826 = vst [vmem:[#allocation2 + $0x10] sm:$0xff] %v3822
    %3827 = vst [vmem:[#allocation2 + $0x18] sm:$0xff] %v3823
    // Predicated region
    $region26: #{modspace_swap_forward.3} parent=1 // pred_check
      %p3828 = pneg %p40
    $region27: #{modspace_swap_forward.3} parent=1 // pred_check_branch
      %3830 = sbr.rel (%p3828) target = $region29
    $region28: #{modspace_swap_forward.3} parent=1 // pred_region
      %v3831 = vld [vmem:[#allocation2] sm:$0xff]
      %v3832 = vld [vmem:[#allocation2 + $0x8] sm:$0xff]
      %v3833 = vld [vmem:[#allocation2 + $0x10] sm:$0xff]
      %v3834 = vld [vmem:[#allocation2 + $0x18] sm:$0xff]
      %v3835 = vld [vmem:[#allocation5] sm:$0xff]
      %v3837 = vlaneseq
      %v3838 = vshrl.u32 %v3837, 7
      %v3839 = vsub.s32 0, %v3838
      %v3840 = vrot.slane %v3835, %v3839
      %v3841 = vlaneseq
      %v3842 = vshrl.u32 %v3841, 7
      %v3843 = vsub.s32 1, %v3842
      %v3844 = vrot.slane %v3835, %v3843
      %v3845 = vlaneseq
      %v3846 = vshrl.u32 %v3845, 7
      %v3847 = vsub.s32 2, %v3846
      %v3848 = vrot.slane %v3835, %v3847
      %v3849 = vlaneseq
      %v3850 = vshrl.u32 %v3849, 7
      %v3851 = vsub.s32 3, %v3850
      %v3852 = vrot.slane %v3835, %v3851
      %v3853 = vlaneseq
      %v3854 = vshrl.u32 %v3853, 7
      %v3855 = vsub.s32 4, %v3854
      %v3856 = vrot.slane %v3835, %v3855
      %v3857 = vlaneseq
      %v3858 = vshrl.u32 %v3857, 7
      %v3859 = vsub.s32 5, %v3858
      %v3860 = vrot.slane %v3835, %v3859
      %v3861 = vlaneseq
      %v3862 = vshrl.u32 %v3861, 7
      %v3863 = vsub.s32 6, %v3862
      %v3864 = vrot.slane %v3835, %v3863
      %v3865 = vlaneseq
      %v3866 = vshrl.u32 %v3865, 7
      %v3867 = vsub.s32 7, %v3866
      %v3868 = vrot.slane %v3835, %v3867
      %v3869 = vcombine.low %v3840, %v3844
      %v3870 = vcombine.low %v3848, %v3852
      %v3871 = vcombine.low %v3856, %v3860
      %v3872 = vcombine.low %v3864, %v3868
      %v3877 = vadd.f32 %v3831, %v3869
      %v3878 = vadd.f32 %v3832, %v3870
      %v3879 = vadd.f32 %v3833, %v3871
      %v3880 = vadd.f32 %v3834, %v3872
      %3881 = vst [vmem:[%s3] sm:$0xff] %v3877
      %3882 = vst [vmem:[%s3 + $0x8] sm:$0xff] %v3878
      %3883 = vst [vmem:[%s3 + $0x10] sm:$0xff] %v3879
      %3884 = vst [vmem:[%s3 + $0x18] sm:$0xff] %v3880
    $region29: #{modspace_swap_forward.3} parent=1 // pred_fallthru
      _
    // Predicated region
    $region30: #{modspace_swap_forward.3} parent=1 // pred_check
      _
    $region31: #{modspace_swap_forward.3} parent=1 // pred_check_branch
      %3886 = sbr.rel (0) target = $region33
    $region32: #{modspace_swap_forward.3} parent=1 // pred_region
      _
    $region33: #{modspace_swap_forward.3} parent=1 // pred_fallthru
      _
    // Predicated region
    $region34: #{modspace_swap_forward.3} parent=1 // pred_check
      _
    $region35: #{modspace_swap_forward.3} parent=1 // pred_check_branch
      %3888 = sbr.rel (0) target = $region37
    $region36: #{modspace_swap_forward.3} parent=1 // pred_region
      _
    $region37: #{modspace_swap_forward.3} parent=1 // pred_fallthru
      _
    %3889 = vsyncpa [#allocation4], 1
    %3890 = vsyncpa [#allocation6], 1

// kernel: modspace_swap_forward.5
$region0: #{modspace_swap_forward.5}
  #allocation0 [shape = 'u32[]', space=smem, size = 0x4, offset = 0x4, fixed_abs, tag = 'smem constant byte address 0x4 - core index']
  #allocation1 [shape = 'u32[144,128]{1,0:T(1,128)}', space=vmem, size = 0x12000, scoped, tag = 'internal scratch']
  #allocation2 [shape = 'f32[4,1024]{1,0:T(4,128)}', space=vmem, size = 0x4000, scoped, tag = 'scratch operand']
  %s0 = inlined_call_operand.vmem [shape: f32[4,1024], index: 0, kind: input, shape index: {}]
  %s1 = inlined_call_operand.vmem [shape: bf16[1024,1024], index: 1, kind: input, shape index: {}]
  %s2 = inlined_call_operand.vmem [shape: f32[1,1024], index: 2, kind: input, shape index: {}]
  %s3 = inlined_call_operand.vmem [shape: f32[4,1024], index: 3, kind: output, shape index: {}]
  %s4 = sld [smem:[#allocation0]]
  $region30: #{modspace_swap_forward.5} parent=0
    _
  %s6 = ssub.s32 1, %s4
  %s7 = scalar_select 0, %s6, %s4
  // Predicated region
  $region2: #{modspace_swap_forward.5} parent=0 // pred_check
    _
  $region3: #{modspace_swap_forward.5} parent=0 // pred_check_branch
    %9 = sbr.rel (0) target = $region5
  $region4: #{modspace_swap_forward.5} parent=0 // pred_region
    _
  $region5: #{modspace_swap_forward.5} parent=0 // pred_fallthru
    _
  // Predicated region
  $region6: #{modspace_swap_forward.5} parent=0 // pred_check
    _
  $region7: #{modspace_swap_forward.5} parent=0 // pred_check_branch
    %11 = sbr.rel (0) target = $region9
  $region8: #{modspace_swap_forward.5} parent=0 // pred_region
    _
  $region9: #{modspace_swap_forward.5} parent=0 // pred_fallthru
    _
  // Predicated region
  $region10: #{modspace_swap_forward.5} parent=0 // pred_check
    _
  $region11: #{modspace_swap_forward.5} parent=0 // pred_check_branch
    %13 = sbr.rel (0) target = $region13
  $region12: #{modspace_swap_forward.5} parent=0 // pred_region
    _
  $region13: #{modspace_swap_forward.5} parent=0 // pred_fallthru
    _
  %p14 = scmp.eq.s32.totalorder 0, 0
  // Predicated region
  $region14: #{modspace_swap_forward.5} parent=0 // pred_check
    %p15 = pneg %p14
  $region15: #{modspace_swap_forward.5} parent=0 // pred_check_branch
    %17 = sbr.rel (%p15) target = $region17
  $region16: #{modspace_swap_forward.5} parent=0 // pred_region
    %18 = vst [vmem:[#allocation2] sm:$0xff] 0.0
    %19 = vst [vmem:[#allocation2 + $0x8] sm:$0xff] 0.0
    %20 = vst [vmem:[#allocation2 + $0x10] sm:$0xff] 0.0
    %21 = vst [vmem:[#allocation2 + $0x18] sm:$0xff] 0.0
  $region17: #{modspace_swap_forward.5} parent=0 // pred_fallthru
    _
  %v22 = vld [vmem:[#allocation2] sm:$0xff]
  %v23 = vld [vmem:[#allocation2 + $0x8] sm:$0xff]
  %v24 = vld [vmem:[#allocation2 + $0x10] sm:$0xff]
  %v25 = vld [vmem:[#allocation2 + $0x18] sm:$0xff]
  %v26 = vld [vmem:[%s0] sm:$0xff]
  %v27 = vld [vmem:[%s0 + $0x8] sm:$0xff]
  %v28 = vld [vmem:[%s0 + $0x10] sm:$0xff]
  %v29 = vld [vmem:[%s0 + $0x18] sm:$0xff]
  %v34 = vcombine.high %v26, %v26
  %v35 = vcombine.high %v27, %v27
  %v36 = vcombine.high %v28, %v28
  %v37 = vcombine.high %v29, %v29
  %v42 = vpack.c.bf16 %v26, %v26
  %v43 = vpack.c.bf16 %v34, %v34
  %v44 = vpack.c.bf16 %v27, %v27
  %v45 = vpack.c.bf16 %v35, %v35
  %v46 = vpack.c.bf16 %v28, %v28
  %v47 = vpack.c.bf16 %v36, %v36
  %v48 = vpack.c.bf16 %v29, %v29
  %v49 = vpack.c.bf16 %v37, %v37
  %v50 = vld [vmem:[%s1] sm:$0xff]
  %v51 = vld [vmem:[%s1 + $0x8] sm:$0xff]
  %v52 = vld [vmem:[%s1 + $0x10] sm:$0xff]
  %v53 = vld [vmem:[%s1 + $0x18] sm:$0xff]
  %v54 = vld [vmem:[%s1 + $0x20] sm:$0xff]
  %v55 = vld [vmem:[%s1 + $0x28] sm:$0xff]
  %v56 = vld [vmem:[%s1 + $0x30] sm:$0xff]
  %v57 = vld [vmem:[%s1 + $0x38] sm:$0xff]
  %v58 = vld [vmem:[%s1 + $0x40] sm:$0xff]
  %v59 = vld [vmem:[%s1 + $0x48] sm:$0xff]
  %v60 = vld [vmem:[%s1 + $0x50] sm:$0xff]
  %v61 = vld [vmem:[%s1 + $0x58] sm:$0xff]
  %v62 = vld [vmem:[%s1 + $0x60] sm:$0xff]
  %v63 = vld [vmem:[%s1 + $0x68] sm:$0xff]
  %v64 = vld [vmem:[%s1 + $0x70] sm:$0xff]
  %v65 = vld [vmem:[%s1 + $0x78] sm:$0xff]
  %v66 = vld [vmem:[%s1 + $0x80] sm:$0xff]
  %v67 = vld [vmem:[%s1 + $0x88] sm:$0xff]
  %v68 = vld [vmem:[%s1 + $0x90] sm:$0xff]
  %v69 = vld [vmem:[%s1 + $0x98] sm:$0xff]
  %v70 = vld [vmem:[%s1 + $0xa0] sm:$0xff]
  %v71 = vld [vmem:[%s1 + $0xa8] sm:$0xff]
  %v72 = vld [vmem:[%s1 + $0xb0] sm:$0xff]
  %v73 = vld [vmem:[%s1 + $0xb8] sm:$0xff]
  %v74 = vld [vmem:[%s1 + $0xc0] sm:$0xff]
  %v75 = vld [vmem:[%s1 + $0xc8] sm:$0xff]
  %v76 = vld [vmem:[%s1 + $0xd0] sm:$0xff]
  %v77 = vld [vmem:[%s1 + $0xd8] sm:$0xff]
  %v78 = vld [vmem:[%s1 + $0xe0] sm:$0xff]
  %v79 = vld [vmem:[%s1 + $0xe8] sm:$0xff]
  %v80 = vld [vmem:[%s1 + $0xf0] sm:$0xff]
  %v81 = vld [vmem:[%s1 + $0xf8] sm:$0xff]
  %v82 = vld [vmem:[%s1 + $0x100] sm:$0xff]
  %v83 = vld [vmem:[%s1 + $0x108] sm:$0xff]
  %v84 = vld [vmem:[%s1 + $0x110] sm:$0xff]
  %v85 = vld [vmem:[%s1 + $0x118] sm:$0xff]
  %v86 = vld [vmem:[%s1 + $0x120] sm:$0xff]
  %v87 = vld [vmem:[%s1 + $0x128] sm:$0xff]
  %v88 = vld [vmem:[%s1 + $0x130] sm:$0xff]
  %v89 = vld [vmem:[%s1 + $0x138] sm:$0xff]
  %v90 = vld [vmem:[%s1 + $0x140] sm:$0xff]
  %v91 = vld [vmem:[%s1 + $0x148] sm:$0xff]
  %v92 = vld [vmem:[%s1 + $0x150] sm:$0xff]
  %v93 = vld [vmem:[%s1 + $0x158] sm:$0xff]
  %v94 = vld [vmem:[%s1 + $0x160] sm:$0xff]
  %v95 = vld [vmem:[%s1 + $0x168] sm:$0xff]
  %v96 = vld [vmem:[%s1 + $0x170] sm:$0xff]
  %v97 = vld [vmem:[%s1 + $0x178] sm:$0xff]
  %v98 = vld [vmem:[%s1 + $0x180] sm:$0xff]
  %v99 = vld [vmem:[%s1 + $0x188] sm:$0xff]
  %v100 = vld [vmem:[%s1 + $0x190] sm:$0xff]
  %v101 = vld [vmem:[%s1 + $0x198] sm:$0xff]
  %v102 = vld [vmem:[%s1 + $0x1a0] sm:$0xff]
  %v103 = vld [vmem:[%s1 + $0x1a8] sm:$0xff]
  %v104 = vld [vmem:[%s1 + $0x1b0] sm:$0xff]
  %v105 = vld [vmem:[%s1 + $0x1b8] sm:$0xff]
  %v106 = vld [vmem:[%s1 + $0x1c0] sm:$0xff]
  %v107 = vld [vmem:[%s1 + $0x1c8] sm:$0xff]
  %v108 = vld [vmem:[%s1 + $0x1d0] sm:$0xff]
  %v109 = vld [vmem:[%s1 + $0x1d8] sm:$0xff]
  %v110 = vld [vmem:[%s1 + $0x1e0] sm:$0xff]
  %v111 = vld [vmem:[%s1 + $0x1e8] sm:$0xff]
  %v112 = vld [vmem:[%s1 + $0x1f0] sm:$0xff]
  %v113 = vld [vmem:[%s1 + $0x1f8] sm:$0xff]
  %v114 = vld [vmem:[%s1 + $0x200] sm:$0xff]
  %v115 = vld [vmem:[%s1 + $0x208] sm:$0xff]
  %v116 = vld [vmem:[%s1 + $0x210] sm:$0xff]
  %v117 = vld [vmem:[%s1 + $0x218] sm:$0xff]
  %v118 = vld [vmem:[%s1 + $0x220] sm:$0xff]
  %v119 = vld [vmem:[%s1 + $0x228] sm:$0xff]
  %v120 = vld [vmem:[%s1 + $0x230] sm:$0xff]
  %v121 = vld [vmem:[%s1 + $0x238] sm:$0xff]
  %v122 = vld [vmem:[%s1 + $0x240] sm:$0xff]
  %v123 = vld [vmem:[%s1 + $0x248] sm:$0xff]
  %v124 = vld [vmem:[%s1 + $0x250] sm:$0xff]
  %v125 = vld [vmem:[%s1 + $0x258] sm:$0xff]
  %v126 = vld [vmem:[%s1 + $0x260] sm:$0xff]
  %v127 = vld [vmem:[%s1 + $0x268] sm:$0xff]
  %v128 = vld [vmem:[%s1 + $0x270] sm:$0xff]
  %v129 = vld [vmem:[%s1 + $0x278] sm:$0xff]
  %v130 = vld [vmem:[%s1 + $0x280] sm:$0xff]
  %v131 = vld [vmem:[%s1 + $0x288] sm:$0xff]
  %v132 = vld [vmem:[%s1 + $0x290] sm:$0xff]
  %v133 = vld [vmem:[%s1 + $0x298] sm:$0xff]
  %v134 = vld [vmem:[%s1 + $0x2a0] sm:$0xff]
  %v135 = vld [vmem:[%s1 + $0x2a8] sm:$0xff]
  %v136 = vld [vmem:[%s1 + $0x2b0] sm:$0xff]
  %v137 = vld [vmem:[%s1 + $0x2b8] sm:$0xff]
  %v138 = vld [vmem:[%s1 + $0x2c0] sm:$0xff]
  %v139 = vld [vmem:[%s1 + $0x2c8] sm:$0xff]
  %v140 = vld [vmem:[%s1 + $0x2d0] sm:$0xff]
  %v141 = vld [vmem:[%s1 + $0x2d8] sm:$0xff]
  %v142 = vld [vmem:[%s1 + $0x2e0] sm:$0xff]
  %v143 = vld [vmem:[%s1 + $0x2e8] sm:$0xff]
  %v144 = vld [vmem:[%s1 + $0x2f0] sm:$0xff]
  %v145 = vld [vmem:[%s1 + $0x2f8] sm:$0xff]
  %v146 = vld [vmem:[%s1 + $0x300] sm:$0xff]
  %v147 = vld [vmem:[%s1 + $0x308] sm:$0xff]
  %v148 = vld [vmem:[%s1 + $0x310] sm:$0xff]
  %v149 = vld [vmem:[%s1 + $0x318] sm:$0xff]
  %v150 = vld [vmem:[%s1 + $0x320] sm:$0xff]
  %v151 = vld [vmem:[%s1 + $0x328] sm:$0xff]
  %v152 = vld [vmem:[%s1 + $0x330] sm:$0xff]
  %v153 = vld [vmem:[%s1 + $0x338] sm:$0xff]
  %v154 = vld [vmem:[%s1 + $0x340] sm:$0xff]
  %v155 = vld [vmem:[%s1 + $0x348] sm:$0xff]
  %v156 = vld [vmem:[%s1 + $0x350] sm:$0xff]
  %v157 = vld [vmem:[%s1 + $0x358] sm:$0xff]
  %v158 = vld [vmem:[%s1 + $0x360] sm:$0xff]
  %v159 = vld [vmem:[%s1 + $0x368] sm:$0xff]
  %v160 = vld [vmem:[%s1 + $0x370] sm:$0xff]
  %v161 = vld [vmem:[%s1 + $0x378] sm:$0xff]
  %v162 = vld [vmem:[%s1 + $0x380] sm:$0xff]
  %v163 = vld [vmem:[%s1 + $0x388] sm:$0xff]
  %v164 = vld [vmem:[%s1 + $0x390] sm:$0xff]
  %v165 = vld [vmem:[%s1 + $0x398] sm:$0xff]
  %v166 = vld [vmem:[%s1 + $0x3a0] sm:$0xff]
  %v167 = vld [vmem:[%s1 + $0x3a8] sm:$0xff]
  %v168 = vld [vmem:[%s1 + $0x3b0] sm:$0xff]
  %v169 = vld [vmem:[%s1 + $0x3b8] sm:$0xff]
  %v170 = vld [vmem:[%s1 + $0x3c0] sm:$0xff]
  %v171 = vld [vmem:[%s1 + $0x3c8] sm:$0xff]
  %v172 = vld [vmem:[%s1 + $0x3d0] sm:$0xff]
  %v173 = vld [vmem:[%s1 + $0x3d8] sm:$0xff]
  %v174 = vld [vmem:[%s1 + $0x3e0] sm:$0xff]
  %v175 = vld [vmem:[%s1 + $0x3e8] sm:$0xff]
  %v176 = vld [vmem:[%s1 + $0x3f0] sm:$0xff]
  %v177 = vld [vmem:[%s1 + $0x3f8] sm:$0xff]
  %v178 = vld [vmem:[%s1 + $0x400] sm:$0xff]
  %v179 = vld [vmem:[%s1 + $0x408] sm:$0xff]
  %v180 = vld [vmem:[%s1 + $0x410] sm:$0xff]
  %v181 = vld [vmem:[%s1 + $0x418] sm:$0xff]
  %v182 = vld [vmem:[%s1 + $0x420] sm:$0xff]
  %v183 = vld [vmem:[%s1 + $0x428] sm:$0xff]
  %v184 = vld [vmem:[%s1 + $0x430] sm:$0xff]
  %v185 = vld [vmem:[%s1 + $0x438] sm:$0xff]
  %v186 = vld [vmem:[%s1 + $0x440] sm:$0xff]
  %v187 = vld [vmem:[%s1 + $0x448] sm:$0xff]
  %v188 = vld [vmem:[%s1 + $0x450] sm:$0xff]
  %v189 = vld [vmem:[%s1 + $0x458] sm:$0xff]
  %v190 = vld [vmem:[%s1 + $0x460] sm:$0xff]
  %v191 = vld [vmem:[%s1 + $0x468] sm:$0xff]
  %v192 = vld [vmem:[%s1 + $0x470] sm:$0xff]
  %v193 = vld [vmem:[%s1 + $0x478] sm:$0xff]
  %v194 = vld [vmem:[%s1 + $0x480] sm:$0xff]
  %v195 = vld [vmem:[%s1 + $0x488] sm:$0xff]
  %v196 = vld [vmem:[%s1 + $0x490] sm:$0xff]
  %v197 = vld [vmem:[%s1 + $0x498] sm:$0xff]
  %v198 = vld [vmem:[%s1 + $0x4a0] sm:$0xff]
  %v199 = vld [vmem:[%s1 + $0x4a8] sm:$0xff]
  %v200 = vld [vmem:[%s1 + $0x4b0] sm:$0xff]
  %v201 = vld [vmem:[%s1 + $0x4b8] sm:$0xff]
  %v202 = vld [vmem:[%s1 + $0x4c0] sm:$0xff]
  %v203 = vld [vmem:[%s1 + $0x4c8] sm:$0xff]
  %v204 = vld [vmem:[%s1 + $0x4d0] sm:$0xff]
  %v205 = vld [vmem:[%s1 + $0x4d8] sm:$0xff]
  %v206 = vld [vmem:[%s1 + $0x4e0] sm:$0xff]
  %v207 = vld [vmem:[%s1 + $0x4e8] sm:$0xff]
  %v208 = vld [vmem:[%s1 + $0x4f0] sm:$0xff]
  %v209 = vld [vmem:[%s1 + $0x4f8] sm:$0xff]
  %v210 = vld [vmem:[%s1 + $0x500] sm:$0xff]
  %v211 = vld [vmem:[%s1 + $0x508] sm:$0xff]
  %v212 = vld [vmem:[%s1 + $0x510] sm:$0xff]
  %v213 = vld [vmem:[%s1 + $0x518] sm:$0xff]
  %v214 = vld [vmem:[%s1 + $0x520] sm:$0xff]
  %v215 = vld [vmem:[%s1 + $0x528] sm:$0xff]
  %v216 = vld [vmem:[%s1 + $0x530] sm:$0xff]
  %v217 = vld [vmem:[%s1 + $0x538] sm:$0xff]
  %v218 = vld [vmem:[%s1 + $0x540] sm:$0xff]
  %v219 = vld [vmem:[%s1 + $0x548] sm:$0xff]
  %v220 = vld [vmem:[%s1 + $0x550] sm:$0xff]
  %v221 = vld [vmem:[%s1 + $0x558] sm:$0xff]
  %v222 = vld [vmem:[%s1 + $0x560] sm:$0xff]
  %v223 = vld [vmem:[%s1 + $0x568] sm:$0xff]
  %v224 = vld [vmem:[%s1 + $0x570] sm:$0xff]
  %v225 = vld [vmem:[%s1 + $0x578] sm:$0xff]
  %v226 = vld [vmem:[%s1 + $0x580] sm:$0xff]
  %v227 = vld [vmem:[%s1 + $0x588] sm:$0xff]
  %v228 = vld [vmem:[%s1 + $0x590] sm:$0xff]
  %v229 = vld [vmem:[%s1 + $0x598] sm:$0xff]
  %v230 = vld [vmem:[%s1 + $0x5a0] sm:$0xff]
  %v231 = vld [vmem:[%s1 + $0x5a8] sm:$0xff]
  %v232 = vld [vmem:[%s1 + $0x5b0] sm:$0xff]
  %v233 = vld [vmem:[%s1 + $0x5b8] sm:$0xff]
  %v234 = vld [vmem:[%s1 + $0x5c0] sm:$0xff]
  %v235 = vld [vmem:[%s1 + $0x5c8] sm:$0xff]
  %v236 = vld [vmem:[%s1 + $0x5d0] sm:$0xff]
  %v237 = vld [vmem:[%s1 + $0x5d8] sm:$0xff]
  %v238 = vld [vmem:[%s1 + $0x5e0] sm:$0xff]
  %v239 = vld [vmem:[%s1 + $0x5e8] sm:$0xff]
  %v240 = vld [vmem:[%s1 + $0x5f0] sm:$0xff]
  %v241 = vld [vmem:[%s1 + $0x5f8] sm:$0xff]
  %v242 = vld [vmem:[%s1 + $0x600] sm:$0xff]
  %v243 = vld [vmem:[%s1 + $0x608] sm:$0xff]
  %v244 = vld [vmem:[%s1 + $0x610] sm:$0xff]
  %v245 = vld [vmem:[%s1 + $0x618] sm:$0xff]
  %v246 = vld [vmem:[%s1 + $0x620] sm:$0xff]
  %v247 = vld [vmem:[%s1 + $0x628] sm:$0xff]
  %v248 = vld [vmem:[%s1 + $0x630] sm:$0xff]
  %v249 = vld [vmem:[%s1 + $0x638] sm:$0xff]
  %v250 = vld [vmem:[%s1 + $0x640] sm:$0xff]
  %v251 = vld [vmem:[%s1 + $0x648] sm:$0xff]
  %v252 = vld [vmem:[%s1 + $0x650] sm:$0xff]
  %v253 = vld [vmem:[%s1 + $0x658] sm:$0xff]
  %v254 = vld [vmem:[%s1 + $0x660] sm:$0xff]
  %v255 = vld [vmem:[%s1 + $0x668] sm:$0xff]
  %v256 = vld [vmem:[%s1 + $0x670] sm:$0xff]
  %v257 = vld [vmem:[%s1 + $0x678] sm:$0xff]
  %v258 = vld [vmem:[%s1 + $0x680] sm:$0xff]
  %v259 = vld [vmem:[%s1 + $0x688] sm:$0xff]
  %v260 = vld [vmem:[%s1 + $0x690] sm:$0xff]
  %v261 = vld [vmem:[%s1 + $0x698] sm:$0xff]
  %v262 = vld [vmem:[%s1 + $0x6a0] sm:$0xff]
  %v263 = vld [vmem:[%s1 + $0x6a8] sm:$0xff]
  %v264 = vld [vmem:[%s1 + $0x6b0] sm:$0xff]
  %v265 = vld [vmem:[%s1 + $0x6b8] sm:$0xff]
  %v266 = vld [vmem:[%s1 + $0x6c0] sm:$0xff]
  %v267 = vld [vmem:[%s1 + $0x6c8] sm:$0xff]
  %v268 = vld [vmem:[%s1 + $0x6d0] sm:$0xff]
  %v269 = vld [vmem:[%s1 + $0x6d8] sm:$0xff]
  %v270 = vld [vmem:[%s1 + $0x6e0] sm:$0xff]
  %v271 = vld [vmem:[%s1 + $0x6e8] sm:$0xff]
  %v272 = vld [vmem:[%s1 + $0x6f0] sm:$0xff]
  %v273 = vld [vmem:[%s1 + $0x6f8] sm:$0xff]
  %v274 = vld [vmem:[%s1 + $0x700] sm:$0xff]
  %v275 = vld [vmem:[%s1 + $0x708] sm:$0xff]
  %v276 = vld [vmem:[%s1 + $0x710] sm:$0xff]
  %v277 = vld [vmem:[%s1 + $0x718] sm:$0xff]
  %v278 = vld [vmem:[%s1 + $0x720] sm:$0xff]
  %v279 = vld [vmem:[%s1 + $0x728] sm:$0xff]
  %v280 = vld [vmem:[%s1 + $0x730] sm:$0xff]
  %v281 = vld [vmem:[%s1 + $0x738] sm:$0xff]
  %v282 = vld [vmem:[%s1 + $0x740] sm:$0xff]
  %v283 = vld [vmem:[%s1 + $0x748] sm:$0xff]
  %v284 = vld [vmem:[%s1 + $0x750] sm:$0xff]
  %v285 = vld [vmem:[%s1 + $0x758] sm:$0xff]
  %v286 = vld [vmem:[%s1 + $0x760] sm:$0xff]
  %v287 = vld [vmem:[%s1 + $0x768] sm:$0xff]
  %v288 = vld [vmem:[%s1 + $0x770] sm:$0xff]
  %v289 = vld [vmem:[%s1 + $0x778] sm:$0xff]
  %v290 = vld [vmem:[%s1 + $0x780] sm:$0xff]
  %v291 = vld [vmem:[%s1 + $0x788] sm:$0xff]
  %v292 = vld [vmem:[%s1 + $0x790] sm:$0xff]
  %v293 = vld [vmem:[%s1 + $0x798] sm:$0xff]
  %v294 = vld [vmem:[%s1 + $0x7a0] sm:$0xff]
  %v295 = vld [vmem:[%s1 + $0x7a8] sm:$0xff]
  %v296 = vld [vmem:[%s1 + $0x7b0] sm:$0xff]
  %v297 = vld [vmem:[%s1 + $0x7b8] sm:$0xff]
  %v298 = vld [vmem:[%s1 + $0x7c0] sm:$0xff]
  %v299 = vld [vmem:[%s1 + $0x7c8] sm:$0xff]
  %v300 = vld [vmem:[%s1 + $0x7d0] sm:$0xff]
  %v301 = vld [vmem:[%s1 + $0x7d8] sm:$0xff]
  %v302 = vld [vmem:[%s1 + $0x7e0] sm:$0xff]
  %v303 = vld [vmem:[%s1 + $0x7e8] sm:$0xff]
  %v304 = vld [vmem:[%s1 + $0x7f0] sm:$0xff]
  %v305 = vld [vmem:[%s1 + $0x7f8] sm:$0xff]
  %v306 = vld [vmem:[%s1 + $0x800] sm:$0xff]
  %v307 = vld [vmem:[%s1 + $0x808] sm:$0xff]
  %v308 = vld [vmem:[%s1 + $0x810] sm:$0xff]
  %v309 = vld [vmem:[%s1 + $0x818] sm:$0xff]
  %v310 = vld [vmem:[%s1 + $0x820] sm:$0xff]
  %v311 = vld [vmem:[%s1 + $0x828] sm:$0xff]
  %v312 = vld [vmem:[%s1 + $0x830] sm:$0xff]
  %v313 = vld [vmem:[%s1 + $0x838] sm:$0xff]
  %v314 = vld [vmem:[%s1 + $0x840] sm:$0xff]
  %v315 = vld [vmem:[%s1 + $0x848] sm:$0xff]
  %v316 = vld [vmem:[%s1 + $0x850] sm:$0xff]
  %v317 = vld [vmem:[%s1 + $0x858] sm:$0xff]
  %v318 = vld [vmem:[%s1 + $0x860] sm:$0xff]
  %v319 = vld [vmem:[%s1 + $0x868] sm:$0xff]
  %v320 = vld [vmem:[%s1 + $0x870] sm:$0xff]
  %v321 = vld [vmem:[%s1 + $0x878] sm:$0xff]
  %v322 = vld [vmem:[%s1 + $0x880] sm:$0xff]
  %v323 = vld [vmem:[%s1 + $0x888] sm:$0xff]
  %v324 = vld [vmem:[%s1 + $0x890] sm:$0xff]
  %v325 = vld [vmem:[%s1 + $0x898] sm:$0xff]
  %v326 = vld [vmem:[%s1 + $0x8a0] sm:$0xff]
  %v327 = vld [vmem:[%s1 + $0x8a8] sm:$0xff]
  %v328 = vld [vmem:[%s1 + $0x8b0] sm:$0xff]
  %v329 = vld [vmem:[%s1 + $0x8b8] sm:$0xff]
  %v330 = vld [vmem:[%s1 + $0x8c0] sm:$0xff]
  %v331 = vld [vmem:[%s1 + $0x8c8] sm:$0xff]
  %v332 = vld [vmem:[%s1 + $0x8d0] sm:$0xff]
  %v333 = vld [vmem:[%s1 + $0x8d8] sm:$0xff]
  %v334 = vld [vmem:[%s1 + $0x8e0] sm:$0xff]
  %v335 = vld [vmem:[%s1 + $0x8e8] sm:$0xff]
  %v336 = vld [vmem:[%s1 + $0x8f0] sm:$0xff]
  %v337 = vld [vmem:[%s1 + $0x8f8] sm:$0xff]
  %v338 = vld [vmem:[%s1 + $0x900] sm:$0xff]
  %v339 = vld [vmem:[%s1 + $0x908] sm:$0xff]
  %v340 = vld [vmem:[%s1 + $0x910] sm:$0xff]
  %v341 = vld [vmem:[%s1 + $0x918] sm:$0xff]
  %v342 = vld [vmem:[%s1 + $0x920] sm:$0xff]
  %v343 = vld [vmem:[%s1 + $0x928] sm:$0xff]
  %v344 = vld [vmem:[%s1 + $0x930] sm:$0xff]
  %v345 = vld [vmem:[%s1 + $0x938] sm:$0xff]
  %v346 = vld [vmem:[%s1 + $0x940] sm:$0xff]
  %v347 = vld [vmem:[%s1 + $0x948] sm:$0xff]
  %v348 = vld [vmem:[%s1 + $0x950] sm:$0xff]
  %v349 = vld [vmem:[%s1 + $0x958] sm:$0xff]
  %v350 = vld [vmem:[%s1 + $0x960] sm:$0xff]
  %v351 = vld [vmem:[%s1 + $0x968] sm:$0xff]
  %v352 = vld [vmem:[%s1 + $0x970] sm:$0xff]
  %v353 = vld [vmem:[%s1 + $0x978] sm:$0xff]
  %v354 = vld [vmem:[%s1 + $0x980] sm:$0xff]
  %v355 = vld [vmem:[%s1 + $0x988] sm:$0xff]
  %v356 = vld [vmem:[%s1 + $0x990] sm:$0xff]
  %v357 = vld [vmem:[%s1 + $0x998] sm:$0xff]
  %v358 = vld [vmem:[%s1 + $0x9a0] sm:$0xff]
  %v359 = vld [vmem:[%s1 + $0x9a8] sm:$0xff]
  %v360 = vld [vmem:[%s1 + $0x9b0] sm:$0xff]
  %v361 = vld [vmem:[%s1 + $0x9b8] sm:$0xff]
  %v362 = vld [vmem:[%s1 + $0x9c0] sm:$0xff]
  %v363 = vld [vmem:[%s1 + $0x9c8] sm:$0xff]
  %v364 = vld [vmem:[%s1 + $0x9d0] sm:$0xff]
  %v365 = vld [vmem:[%s1 + $0x9d8] sm:$0xff]
  %v366 = vld [vmem:[%s1 + $0x9e0] sm:$0xff]
  %v367 = vld [vmem:[%s1 + $0x9e8] sm:$0xff]
  %v368 = vld [vmem:[%s1 + $0x9f0] sm:$0xff]
  %v369 = vld [vmem:[%s1 + $0x9f8] sm:$0xff]
  %v370 = vld [vmem:[%s1 + $0xa00] sm:$0xff]
  %v371 = vld [vmem:[%s1 + $0xa08] sm:$0xff]
  %v372 = vld [vmem:[%s1 + $0xa10] sm:$0xff]
  %v373 = vld [vmem:[%s1 + $0xa18] sm:$0xff]
  %v374 = vld [vmem:[%s1 + $0xa20] sm:$0xff]
  %v375 = vld [vmem:[%s1 + $0xa28] sm:$0xff]
  %v376 = vld [vmem:[%s1 + $0xa30] sm:$0xff]
  %v377 = vld [vmem:[%s1 + $0xa38] sm:$0xff]
  %v378 = vld [vmem:[%s1 + $0xa40] sm:$0xff]
  %v379 = vld [vmem:[%s1 + $0xa48] sm:$0xff]
  %v380 = vld [vmem:[%s1 + $0xa50] sm:$0xff]
  %v381 = vld [vmem:[%s1 + $0xa58] sm:$0xff]
  %v382 = vld [vmem:[%s1 + $0xa60] sm:$0xff]
  %v383 = vld [vmem:[%s1 + $0xa68] sm:$0xff]
  %v384 = vld [vmem:[%s1 + $0xa70] sm:$0xff]
  %v385 = vld [vmem:[%s1 + $0xa78] sm:$0xff]
  %v386 = vld [vmem:[%s1 + $0xa80] sm:$0xff]
  %v387 = vld [vmem:[%s1 + $0xa88] sm:$0xff]
  %v388 = vld [vmem:[%s1 + $0xa90] sm:$0xff]
  %v389 = vld [vmem:[%s1 + $0xa98] sm:$0xff]
  %v390 = vld [vmem:[%s1 + $0xaa0] sm:$0xff]
  %v391 = vld [vmem:[%s1 + $0xaa8] sm:$0xff]
  %v392 = vld [vmem:[%s1 + $0xab0] sm:$0xff]
  %v393 = vld [vmem:[%s1 + $0xab8] sm:$0xff]
  %v394 = vld [vmem:[%s1 + $0xac0] sm:$0xff]
  %v395 = vld [vmem:[%s1 + $0xac8] sm:$0xff]
  %v396 = vld [vmem:[%s1 + $0xad0] sm:$0xff]
  %v397 = vld [vmem:[%s1 + $0xad8] sm:$0xff]
  %v398 = vld [vmem:[%s1 + $0xae0] sm:$0xff]
  %v399 = vld [vmem:[%s1 + $0xae8] sm:$0xff]
  %v400 = vld [vmem:[%s1 + $0xaf0] sm:$0xff]
  %v401 = vld [vmem:[%s1 + $0xaf8] sm:$0xff]
  %v402 = vld [vmem:[%s1 + $0xb00] sm:$0xff]
  %v403 = vld [vmem:[%s1 + $0xb08] sm:$0xff]
  %v404 = vld [vmem:[%s1 + $0xb10] sm:$0xff]
  %v405 = vld [vmem:[%s1 + $0xb18] sm:$0xff]
  %v406 = vld [vmem:[%s1 + $0xb20] sm:$0xff]
  %v407 = vld [vmem:[%s1 + $0xb28] sm:$0xff]
  %v408 = vld [vmem:[%s1 + $0xb30] sm:$0xff]
  %v409 = vld [vmem:[%s1 + $0xb38] sm:$0xff]
  %v410 = vld [vmem:[%s1 + $0xb40] sm:$0xff]
  %v411 = vld [vmem:[%s1 + $0xb48] sm:$0xff]
  %v412 = vld [vmem:[%s1 + $0xb50] sm:$0xff]
  %v413 = vld [vmem:[%s1 + $0xb58] sm:$0xff]
  %v414 = vld [vmem:[%s1 + $0xb60] sm:$0xff]
  %v415 = vld [vmem:[%s1 + $0xb68] sm:$0xff]
  %v416 = vld [vmem:[%s1 + $0xb70] sm:$0xff]
  %v417 = vld [vmem:[%s1 + $0xb78] sm:$0xff]
  %v418 = vld [vmem:[%s1 + $0xb80] sm:$0xff]
  %v419 = vld [vmem:[%s1 + $0xb88] sm:$0xff]
  %v420 = vld [vmem:[%s1 + $0xb90] sm:$0xff]
  %v421 = vld [vmem:[%s1 + $0xb98] sm:$0xff]
  %v422 = vld [vmem:[%s1 + $0xba0] sm:$0xff]
  %v423 = vld [vmem:[%s1 + $0xba8] sm:$0xff]
  %v424 = vld [vmem:[%s1 + $0xbb0] sm:$0xff]
  %v425 = vld [vmem:[%s1 + $0xbb8] sm:$0xff]
  %v426 = vld [vmem:[%s1 + $0xbc0] sm:$0xff]
  %v427 = vld [vmem:[%s1 + $0xbc8] sm:$0xff]
  %v428 = vld [vmem:[%s1 + $0xbd0] sm:$0xff]
  %v429 = vld [vmem:[%s1 + $0xbd8] sm:$0xff]
  %v430 = vld [vmem:[%s1 + $0xbe0] sm:$0xff]
  %v431 = vld [vmem:[%s1 + $0xbe8] sm:$0xff]
  %v432 = vld [vmem:[%s1 + $0xbf0] sm:$0xff]
  %v433 = vld [vmem:[%s1 + $0xbf8] sm:$0xff]
  %v434 = vld [vmem:[%s1 + $0xc00] sm:$0xff]
  %v435 = vld [vmem:[%s1 + $0xc08] sm:$0xff]
  %v436 = vld [vmem:[%s1 + $0xc10] sm:$0xff]
  %v437 = vld [vmem:[%s1 + $0xc18] sm:$0xff]
  %v438 = vld [vmem:[%s1 + $0xc20] sm:$0xff]
  %v439 = vld [vmem:[%s1 + $0xc28] sm:$0xff]
  %v440 = vld [vmem:[%s1 + $0xc30] sm:$0xff]
  %v441 = vld [vmem:[%s1 + $0xc38] sm:$0xff]
  %v442 = vld [vmem:[%s1 + $0xc40] sm:$0xff]
  %v443 = vld [vmem:[%s1 + $0xc48] sm:$0xff]
  %v444 = vld [vmem:[%s1 + $0xc50] sm:$0xff]
  %v445 = vld [vmem:[%s1 + $0xc58] sm:$0xff]
  %v446 = vld [vmem:[%s1 + $0xc60] sm:$0xff]
  %v447 = vld [vmem:[%s1 + $0xc68] sm:$0xff]
  %v448 = vld [vmem:[%s1 + $0xc70] sm:$0xff]
  %v449 = vld [vmem:[%s1 + $0xc78] sm:$0xff]
  %v450 = vld [vmem:[%s1 + $0xc80] sm:$0xff]
  %v451 = vld [vmem:[%s1 + $0xc88] sm:$0xff]
  %v452 = vld [vmem:[%s1 + $0xc90] sm:$0xff]
  %v453 = vld [vmem:[%s1 + $0xc98] sm:$0xff]
  %v454 = vld [vmem:[%s1 + $0xca0] sm:$0xff]
  %v455 = vld [vmem:[%s1 + $0xca8] sm:$0xff]
  %v456 = vld [vmem:[%s1 + $0xcb0] sm:$0xff]
  %v457 = vld [vmem:[%s1 + $0xcb8] sm:$0xff]
  %v458 = vld [vmem:[%s1 + $0xcc0] sm:$0xff]
  %v459 = vld [vmem:[%s1 + $0xcc8] sm:$0xff]
  %v460 = vld [vmem:[%s1 + $0xcd0] sm:$0xff]
  %v461 = vld [vmem:[%s1 + $0xcd8] sm:$0xff]
  %v462 = vld [vmem:[%s1 + $0xce0] sm:$0xff]
  %v463 = vld [vmem:[%s1 + $0xce8] sm:$0xff]
  %v464 = vld [vmem:[%s1 + $0xcf0] sm:$0xff]
  %v465 = vld [vmem:[%s1 + $0xcf8] sm:$0xff]
  %v466 = vld [vmem:[%s1 + $0xd00] sm:$0xff]
  %v467 = vld [vmem:[%s1 + $0xd08] sm:$0xff]
  %v468 = vld [vmem:[%s1 + $0xd10] sm:$0xff]
  %v469 = vld [vmem:[%s1 + $0xd18] sm:$0xff]
  %v470 = vld [vmem:[%s1 + $0xd20] sm:$0xff]
  %v471 = vld [vmem:[%s1 + $0xd28] sm:$0xff]
  %v472 = vld [vmem:[%s1 + $0xd30] sm:$0xff]
  %v473 = vld [vmem:[%s1 + $0xd38] sm:$0xff]
  %v474 = vld [vmem:[%s1 + $0xd40] sm:$0xff]
  %v475 = vld [vmem:[%s1 + $0xd48] sm:$0xff]
  %v476 = vld [vmem:[%s1 + $0xd50] sm:$0xff]
  %v477 = vld [vmem:[%s1 + $0xd58] sm:$0xff]
  %v478 = vld [vmem:[%s1 + $0xd60] sm:$0xff]
  %v479 = vld [vmem:[%s1 + $0xd68] sm:$0xff]
  %v480 = vld [vmem:[%s1 + $0xd70] sm:$0xff]
  %v481 = vld [vmem:[%s1 + $0xd78] sm:$0xff]
  %v482 = vld [vmem:[%s1 + $0xd80] sm:$0xff]
  %v483 = vld [vmem:[%s1 + $0xd88] sm:$0xff]
  %v484 = vld [vmem:[%s1 + $0xd90] sm:$0xff]
  %v485 = vld [vmem:[%s1 + $0xd98] sm:$0xff]
  %v486 = vld [vmem:[%s1 + $0xda0] sm:$0xff]
  %v487 = vld [vmem:[%s1 + $0xda8] sm:$0xff]
  %v488 = vld [vmem:[%s1 + $0xdb0] sm:$0xff]
  %v489 = vld [vmem:[%s1 + $0xdb8] sm:$0xff]
  %v490 = vld [vmem:[%s1 + $0xdc0] sm:$0xff]
  %v491 = vld [vmem:[%s1 + $0xdc8] sm:$0xff]
  %v492 = vld [vmem:[%s1 + $0xdd0] sm:$0xff]
  %v493 = vld [vmem:[%s1 + $0xdd8] sm:$0xff]
  %v494 = vld [vmem:[%s1 + $0xde0] sm:$0xff]
  %v495 = vld [vmem:[%s1 + $0xde8] sm:$0xff]
  %v496 = vld [vmem:[%s1 + $0xdf0] sm:$0xff]
  %v497 = vld [vmem:[%s1 + $0xdf8] sm:$0xff]
  %v498 = vld [vmem:[%s1 + $0xe00] sm:$0xff]
  %v499 = vld [vmem:[%s1 + $0xe08] sm:$0xff]
  %v500 = vld [vmem:[%s1 + $0xe10] sm:$0xff]
  %v501 = vld [vmem:[%s1 + $0xe18] sm:$0xff]
  %v502 = vld [vmem:[%s1 + $0xe20] sm:$0xff]
  %v503 = vld [vmem:[%s1 + $0xe28] sm:$0xff]
  %v504 = vld [vmem:[%s1 + $0xe30] sm:$0xff]
  %v505 = vld [vmem:[%s1 + $0xe38] sm:$0xff]
  %v506 = vld [vmem:[%s1 + $0xe40] sm:$0xff]
  %v507 = vld [vmem:[%s1 + $0xe48] sm:$0xff]
  %v508 = vld [vmem:[%s1 + $0xe50] sm:$0xff]
  %v509 = vld [vmem:[%s1 + $0xe58] sm:$0xff]
  %v510 = vld [vmem:[%s1 + $0xe60] sm:$0xff]
  %v511 = vld [vmem:[%s1 + $0xe68] sm:$0xff]
  %v512 = vld [vmem:[%s1 + $0xe70] sm:$0xff]
  %v513 = vld [vmem:[%s1 + $0xe78] sm:$0xff]
  %v514 = vld [vmem:[%s1 + $0xe80] sm:$0xff]
  %v515 = vld [vmem:[%s1 + $0xe88] sm:$0xff]
  %v516 = vld [vmem:[%s1 + $0xe90] sm:$0xff]
  %v517 = vld [vmem:[%s1 + $0xe98] sm:$0xff]
  %v518 = vld [vmem:[%s1 + $0xea0] sm:$0xff]
  %v519 = vld [vmem:[%s1 + $0xea8] sm:$0xff]
  %v520 = vld [vmem:[%s1 + $0xeb0] sm:$0xff]
  %v521 = vld [vmem:[%s1 + $0xeb8] sm:$0xff]
  %v522 = vld [vmem:[%s1 + $0xec0] sm:$0xff]
  %v523 = vld [vmem:[%s1 + $0xec8] sm:$0xff]
  %v524 = vld [vmem:[%s1 + $0xed0] sm:$0xff]
  %v525 = vld [vmem:[%s1 + $0xed8] sm:$0xff]
  %v526 = vld [vmem:[%s1 + $0xee0] sm:$0xff]
  %v527 = vld [vmem:[%s1 + $0xee8] sm:$0xff]
  %v528 = vld [vmem:[%s1 + $0xef0] sm:$0xff]
  %v529 = vld [vmem:[%s1 + $0xef8] sm:$0xff]
  %v530 = vld [vmem:[%s1 + $0xf00] sm:$0xff]
  %v531 = vld [vmem:[%s1 + $0xf08] sm:$0xff]
  %v532 = vld [vmem:[%s1 + $0xf10] sm:$0xff]
  %v533 = vld [vmem:[%s1 + $0xf18] sm:$0xff]
  %v534 = vld [vmem:[%s1 + $0xf20] sm:$0xff]
  %v535 = vld [vmem:[%s1 + $0xf28] sm:$0xff]
  %v536 = vld [vmem:[%s1 + $0xf30] sm:$0xff]
  %v537 = vld [vmem:[%s1 + $0xf38] sm:$0xff]
  %v538 = vld [vmem:[%s1 + $0xf40] sm:$0xff]
  %v539 = vld [vmem:[%s1 + $0xf48] sm:$0xff]
  %v540 = vld [vmem:[%s1 + $0xf50] sm:$0xff]
  %v541 = vld [vmem:[%s1 + $0xf58] sm:$0xff]
  %v542 = vld [vmem:[%s1 + $0xf60] sm:$0xff]
  %v543 = vld [vmem:[%s1 + $0xf68] sm:$0xff]
  %v544 = vld [vmem:[%s1 + $0xf70] sm:$0xff]
  %v545 = vld [vmem:[%s1 + $0xf78] sm:$0xff]
  %v546 = vld [vmem:[%s1 + $0xf80] sm:$0xff]
  %v547 = vld [vmem:[%s1 + $0xf88] sm:$0xff]
  %v548 = vld [vmem:[%s1 + $0xf90] sm:$0xff]
  %v549 = vld [vmem:[%s1 + $0xf98] sm:$0xff]
  %v550 = vld [vmem:[%s1 + $0xfa0] sm:$0xff]
  %v551 = vld [vmem:[%s1 + $0xfa8] sm:$0xff]
  %v552 = vld [vmem:[%s1 + $0xfb0] sm:$0xff]
  %v553 = vld [vmem:[%s1 + $0xfb8] sm:$0xff]
  %v554 = vld [vmem:[%s1 + $0xfc0] sm:$0xff]
  %v555 = vld [vmem:[%s1 + $0xfc8] sm:$0xff]
  %v556 = vld [vmem:[%s1 + $0xfd0] sm:$0xff]
  %v557 = vld [vmem:[%s1 + $0xfd8] sm:$0xff]
  %v558 = vld [vmem:[%s1 + $0xfe0] sm:$0xff]
  %v559 = vld [vmem:[%s1 + $0xfe8] sm:$0xff]
  %v560 = vld [vmem:[%s1 + $0xff0] sm:$0xff]
  %v561 = vld [vmem:[%s1 + $0xff8] sm:$0xff]
  %v1074 = vunpack.c.l.b16 %v50
  %v1075 = vunpack.c.h.b16 %v50
  %v1076 = vunpack.c.l.b16 %v51
  %v1077 = vunpack.c.h.b16 %v51
  %v1078 = vunpack.c.l.b16 %v52
  %v1079 = vunpack.c.h.b16 %v52
  %v1080 = vunpack.c.l.b16 %v53
  %v1081 = vunpack.c.h.b16 %v53
  %v1082 = vunpack.c.l.b16 %v54
  %v1083 = vunpack.c.h.b16 %v54
  %v1084 = vunpack.c.l.b16 %v55
  %v1085 = vunpack.c.h.b16 %v55
  %v1086 = vunpack.c.l.b16 %v56
  %v1087 = vunpack.c.h.b16 %v56
  %v1088 = vunpack.c.l.b16 %v57
  %v1089 = vunpack.c.h.b16 %v57
  %v1090 = vunpack.c.l.b16 %v58
  %v1091 = vunpack.c.h.b16 %v58
  %v1092 = vunpack.c.l.b16 %v59
  %v1093 = vunpack.c.h.b16 %v59
  %v1094 = vunpack.c.l.b16 %v60
  %v1095 = vunpack.c.h.b16 %v60
  %v1096 = vunpack.c.l.b16 %v61
  %v1097 = vunpack.c.h.b16 %v61
  %v1098 = vunpack.c.l.b16 %v62
  %v1099 = vunpack.c.h.b16 %v62
  %v1100 = vunpack.c.l.b16 %v63
  %v1101 = vunpack.c.h.b16 %v63
  %v1102 = vunpack.c.l.b16 %v64
  %v1103 = vunpack.c.h.b16 %v64
  %v1104 = vunpack.c.l.b16 %v65
  %v1105 = vunpack.c.h.b16 %v65
  %v1106 = vunpack.c.l.b16 %v66
  %v1107 = vunpack.c.h.b16 %v66
  %v1108 = vunpack.c.l.b16 %v67
  %v1109 = vunpack.c.h.b16 %v67
  %v1110 = vunpack.c.l.b16 %v68
  %v1111 = vunpack.c.h.b16 %v68
  %v1112 = vunpack.c.l.b16 %v69
  %v1113 = vunpack.c.h.b16 %v69
  %v1114 = vunpack.c.l.b16 %v70
  %v1115 = vunpack.c.h.b16 %v70
  %v1116 = vunpack.c.l.b16 %v71
  %v1117 = vunpack.c.h.b16 %v71
  %v1118 = vunpack.c.l.b16 %v72
  %v1119 = vunpack.c.h.b16 %v72
  %v1120 = vunpack.c.l.b16 %v73
  %v1121 = vunpack.c.h.b16 %v73
  %v1122 = vunpack.c.l.b16 %v74
  %v1123 = vunpack.c.h.b16 %v74
  %v1124 = vunpack.c.l.b16 %v75
  %v1125 = vunpack.c.h.b16 %v75
  %v1126 = vunpack.c.l.b16 %v76
  %v1127 = vunpack.c.h.b16 %v76
  %v1128 = vunpack.c.l.b16 %v77
  %v1129 = vunpack.c.h.b16 %v77
  %v1130 = vunpack.c.l.b16 %v78
  %v1131 = vunpack.c.h.b16 %v78
  %v1132 = vunpack.c.l.b16 %v79
  %v1133 = vunpack.c.h.b16 %v79
  %v1134 = vunpack.c.l.b16 %v80
  %v1135 = vunpack.c.h.b16 %v80
  %v1136 = vunpack.c.l.b16 %v81
  %v1137 = vunpack.c.h.b16 %v81
  %v1138 = vunpack.c.l.b16 %v82
  %v1139 = vunpack.c.h.b16 %v82
  %v1140 = vunpack.c.l.b16 %v83
  %v1141 = vunpack.c.h.b16 %v83
  %v1142 = vunpack.c.l.b16 %v84
  %v1143 = vunpack.c.h.b16 %v84
  %v1144 = vunpack.c.l.b16 %v85
  %v1145 = vunpack.c.h.b16 %v85
  %v1146 = vunpack.c.l.b16 %v86
  %v1147 = vunpack.c.h.b16 %v86
  %v1148 = vunpack.c.l.b16 %v87
  %v1149 = vunpack.c.h.b16 %v87
  %v1150 = vunpack.c.l.b16 %v88
  %v1151 = vunpack.c.h.b16 %v88
  %v1152 = vunpack.c.l.b16 %v89
  %v1153 = vunpack.c.h.b16 %v89
  %v1154 = vunpack.c.l.b16 %v90
  %v1155 = vunpack.c.h.b16 %v90
  %v1156 = vunpack.c.l.b16 %v91
  %v1157 = vunpack.c.h.b16 %v91
  %v1158 = vunpack.c.l.b16 %v92
  %v1159 = vunpack.c.h.b16 %v92
  %v1160 = vunpack.c.l.b16 %v93
  %v1161 = vunpack.c.h.b16 %v93
  %v1162 = vunpack.c.l.b16 %v94
  %v1163 = vunpack.c.h.b16 %v94
  %v1164 = vunpack.c.l.b16 %v95
  %v1165 = vunpack.c.h.b16 %v95
  %v1166 = vunpack.c.l.b16 %v96
  %v1167 = vunpack.c.h.b16 %v96
  %v1168 = vunpack.c.l.b16 %v97
  %v1169 = vunpack.c.h.b16 %v97
  %v1170 = vunpack.c.l.b16 %v98
  %v1171 = vunpack.c.h.b16 %v98
  %v1172 = vunpack.c.l.b16 %v99
  %v1173 = vunpack.c.h.b16 %v99
  %v1174 = vunpack.c.l.b16 %v100
  %v1175 = vunpack.c.h.b16 %v100
  %v1176 = vunpack.c.l.b16 %v101
  %v1177 = vunpack.c.h.b16 %v101
  %v1178 = vunpack.c.l.b16 %v102
  %v1179 = vunpack.c.h.b16 %v102
  %v1180 = vunpack.c.l.b16 %v103
  %v1181 = vunpack.c.h.b16 %v103
  %v1182 = vunpack.c.l.b16 %v104
  %v1183 = vunpack.c.h.b16 %v104
  %v1184 = vunpack.c.l.b16 %v105
  %v1185 = vunpack.c.h.b16 %v105
  %v1186 = vunpack.c.l.b16 %v106
  %v1187 = vunpack.c.h.b16 %v106
  %v1188 = vunpack.c.l.b16 %v107
  %v1189 = vunpack.c.h.b16 %v107
  %v1190 = vunpack.c.l.b16 %v108
  %v1191 = vunpack.c.h.b16 %v108
  %v1192 = vunpack.c.l.b16 %v109
  %v1193 = vunpack.c.h.b16 %v109
  %v1194 = vunpack.c.l.b16 %v110
  %v1195 = vunpack.c.h.b16 %v110
  %v1196 = vunpack.c.l.b16 %v111
  %v1197 = vunpack.c.h.b16 %v111
  %v1198 = vunpack.c.l.b16 %v112
  %v1199 = vunpack.c.h.b16 %v112
  %v1200 = vunpack.c.l.b16 %v113
  %v1201 = vunpack.c.h.b16 %v113
  %v1202 = vunpack.c.l.b16 %v114
  %v1203 = vunpack.c.h.b16 %v114
  %v1204 = vunpack.c.l.b16 %v115
  %v1205 = vunpack.c.h.b16 %v115
  %v1206 = vunpack.c.l.b16 %v116
  %v1207 = vunpack.c.h.b16 %v116
  %v1208 = vunpack.c.l.b16 %v117
  %v1209 = vunpack.c.h.b16 %v117
  %v1210 = vunpack.c.l.b16 %v118
  %v1211 = vunpack.c.h.b16 %v118
  %v1212 = vunpack.c.l.b16 %v119
  %v1213 = vunpack.c.h.b16 %v119
  %v1214 = vunpack.c.l.b16 %v120
  %v1215 = vunpack.c.h.b16 %v120
  %v1216 = vunpack.c.l.b16 %v121
  %v1217 = vunpack.c.h.b16 %v121
  %v1218 = vunpack.c.l.b16 %v122
  %v1219 = vunpack.c.h.b16 %v122
  %v1220 = vunpack.c.l.b16 %v123
  %v1221 = vunpack.c.h.b16 %v123
  %v1222 = vunpack.c.l.b16 %v124
  %v1223 = vunpack.c.h.b16 %v124
  %v1224 = vunpack.c.l.b16 %v125
  %v1225 = vunpack.c.h.b16 %v125
  %v1226 = vunpack.c.l.b16 %v126
  %v1227 = vunpack.c.h.b16 %v126
  %v1228 = vunpack.c.l.b16 %v127
  %v1229 = vunpack.c.h.b16 %v127
  %v1230 = vunpack.c.l.b16 %v128
  %v1231 = vunpack.c.h.b16 %v128
  %v1232 = vunpack.c.l.b16 %v129
  %v1233 = vunpack.c.h.b16 %v129
  %v1234 = vunpack.c.l.b16 %v130
  %v1235 = vunpack.c.h.b16 %v130
  %v1236 = vunpack.c.l.b16 %v131
  %v1237 = vunpack.c.h.b16 %v131
  %v1238 = vunpack.c.l.b16 %v132
  %v1239 = vunpack.c.h.b16 %v132
  %v1240 = vunpack.c.l.b16 %v133
  %v1241 = vunpack.c.h.b16 %v133
  %v1242 = vunpack.c.l.b16 %v134
  %v1243 = vunpack.c.h.b16 %v134
  %v1244 = vunpack.c.l.b16 %v135
  %v1245 = vunpack.c.h.b16 %v135
  %v1246 = vunpack.c.l.b16 %v136
  %v1247 = vunpack.c.h.b16 %v136
  %v1248 = vunpack.c.l.b16 %v137
  %v1249 = vunpack.c.h.b16 %v137
  %v1250 = vunpack.c.l.b16 %v138
  %v1251 = vunpack.c.h.b16 %v138
  %v1252 = vunpack.c.l.b16 %v139
  %v1253 = vunpack.c.h.b16 %v139
  %v1254 = vunpack.c.l.b16 %v140
  %v1255 = vunpack.c.h.b16 %v140
  %v1256 = vunpack.c.l.b16 %v141
  %v1257 = vunpack.c.h.b16 %v141
  %v1258 = vunpack.c.l.b16 %v142
  %v1259 = vunpack.c.h.b16 %v142
  %v1260 = vunpack.c.l.b16 %v143
  %v1261 = vunpack.c.h.b16 %v143
  %v1262 = vunpack.c.l.b16 %v144
  %v1263 = vunpack.c.h.b16 %v144
  %v1264 = vunpack.c.l.b16 %v145
  %v1265 = vunpack.c.h.b16 %v145
  %v1266 = vunpack.c.l.b16 %v146
  %v1267 = vunpack.c.h.b16 %v146
  %v1268 = vunpack.c.l.b16 %v147
  %v1269 = vunpack.c.h.b16 %v147
  %v1270 = vunpack.c.l.b16 %v148
  %v1271 = vunpack.c.h.b16 %v148
  %v1272 = vunpack.c.l.b16 %v149
  %v1273 = vunpack.c.h.b16 %v149
  %v1274 = vunpack.c.l.b16 %v150
  %v1275 = vunpack.c.h.b16 %v150
  %v1276 = vunpack.c.l.b16 %v151
  %v1277 = vunpack.c.h.b16 %v151
  %v1278 = vunpack.c.l.b16 %v152
  %v1279 = vunpack.c.h.b16 %v152
  %v1280 = vunpack.c.l.b16 %v153
  %v1281 = vunpack.c.h.b16 %v153
  %v1282 = vunpack.c.l.b16 %v154
  %v1283 = vunpack.c.h.b16 %v154
  %v1284 = vunpack.c.l.b16 %v155
  %v1285 = vunpack.c.h.b16 %v155
  %v1286 = vunpack.c.l.b16 %v156
  %v1287 = vunpack.c.h.b16 %v156
  %v1288 = vunpack.c.l.b16 %v157
  %v1289 = vunpack.c.h.b16 %v157
  %v1290 = vunpack.c.l.b16 %v158
  %v1291 = vunpack.c.h.b16 %v158
  %v1292 = vunpack.c.l.b16 %v159
  %v1293 = vunpack.c.h.b16 %v159
  %v1294 = vunpack.c.l.b16 %v160
  %v1295 = vunpack.c.h.b16 %v160
  %v1296 = vunpack.c.l.b16 %v161
  %v1297 = vunpack.c.h.b16 %v161
  %v1298 = vunpack.c.l.b16 %v162
  %v1299 = vunpack.c.h.b16 %v162
  %v1300 = vunpack.c.l.b16 %v163
  %v1301 = vunpack.c.h.b16 %v163
  %v1302 = vunpack.c.l.b16 %v164
  %v1303 = vunpack.c.h.b16 %v164
  %v1304 = vunpack.c.l.b16 %v165
  %v1305 = vunpack.c.h.b16 %v165
  %v1306 = vunpack.c.l.b16 %v166
  %v1307 = vunpack.c.h.b16 %v166
  %v1308 = vunpack.c.l.b16 %v167
  %v1309 = vunpack.c.h.b16 %v167
  %v1310 = vunpack.c.l.b16 %v168
  %v1311 = vunpack.c.h.b16 %v168
  %v1312 = vunpack.c.l.b16 %v169
  %v1313 = vunpack.c.h.b16 %v169
  %v1314 = vunpack.c.l.b16 %v170
  %v1315 = vunpack.c.h.b16 %v170
  %v1316 = vunpack.c.l.b16 %v171
  %v1317 = vunpack.c.h.b16 %v171
  %v1318 = vunpack.c.l.b16 %v172
  %v1319 = vunpack.c.h.b16 %v172
  %v1320 = vunpack.c.l.b16 %v173
  %v1321 = vunpack.c.h.b16 %v173
  %v1322 = vunpack.c.l.b16 %v174
  %v1323 = vunpack.c.h.b16 %v174
  %v1324 = vunpack.c.l.b16 %v175
  %v1325 = vunpack.c.h.b16 %v175
  %v1326 = vunpack.c.l.b16 %v176
  %v1327 = vunpack.c.h.b16 %v176
  %v1328 = vunpack.c.l.b16 %v177
  %v1329 = vunpack.c.h.b16 %v177
  %v1330 = vunpack.c.l.b16 %v178
  %v1331 = vunpack.c.h.b16 %v178
  %v1332 = vunpack.c.l.b16 %v179
  %v1333 = vunpack.c.h.b16 %v179
  %v1334 = vunpack.c.l.b16 %v180
  %v1335 = vunpack.c.h.b16 %v180
  %v1336 = vunpack.c.l.b16 %v181
  %v1337 = vunpack.c.h.b16 %v181
  %v1338 = vunpack.c.l.b16 %v182
  %v1339 = vunpack.c.h.b16 %v182
  %v1340 = vunpack.c.l.b16 %v183
  %v1341 = vunpack.c.h.b16 %v183
  %v1342 = vunpack.c.l.b16 %v184
  %v1343 = vunpack.c.h.b16 %v184
  %v1344 = vunpack.c.l.b16 %v185
  %v1345 = vunpack.c.h.b16 %v185
  %v1346 = vunpack.c.l.b16 %v186
  %v1347 = vunpack.c.h.b16 %v186
  %v1348 = vunpack.c.l.b16 %v187
  %v1349 = vunpack.c.h.b16 %v187
  %v1350 = vunpack.c.l.b16 %v188
  %v1351 = vunpack.c.h.b16 %v188
  %v1352 = vunpack.c.l.b16 %v189
  %v1353 = vunpack.c.h.b16 %v189
  %v1354 = vunpack.c.l.b16 %v190
  %v1355 = vunpack.c.h.b16 %v190
  %v1356 = vunpack.c.l.b16 %v191
  %v1357 = vunpack.c.h.b16 %v191
  %v1358 = vunpack.c.l.b16 %v192
  %v1359 = vunpack.c.h.b16 %v192
  %v1360 = vunpack.c.l.b16 %v193
  %v1361 = vunpack.c.h.b16 %v193
  %v1362 = vunpack.c.l.b16 %v194
  %v1363 = vunpack.c.h.b16 %v194
  %v1364 = vunpack.c.l.b16 %v195
  %v1365 = vunpack.c.h.b16 %v195
  %v1366 = vunpack.c.l.b16 %v196
  %v1367 = vunpack.c.h.b16 %v196
  %v1368 = vunpack.c.l.b16 %v197
  %v1369 = vunpack.c.h.b16 %v197
  %v1370 = vunpack.c.l.b16 %v198
  %v1371 = vunpack.c.h.b16 %v198
  %v1372 = vunpack.c.l.b16 %v199
  %v1373 = vunpack.c.h.b16 %v199
  %v1374 = vunpack.c.l.b16 %v200
  %v1375 = vunpack.c.h.b16 %v200
  %v1376 = vunpack.c.l.b16 %v201
  %v1377 = vunpack.c.h.b16 %v201
  %v1378 = vunpack.c.l.b16 %v202
  %v1379 = vunpack.c.h.b16 %v202
  %v1380 = vunpack.c.l.b16 %v203
  %v1381 = vunpack.c.h.b16 %v203
  %v1382 = vunpack.c.l.b16 %v204
  %v1383 = vunpack.c.h.b16 %v204
  %v1384 = vunpack.c.l.b16 %v205
  %v1385 = vunpack.c.h.b16 %v205
  %v1386 = vunpack.c.l.b16 %v206
  %v1387 = vunpack.c.h.b16 %v206
  %v1388 = vunpack.c.l.b16 %v207
  %v1389 = vunpack.c.h.b16 %v207
  %v1390 = vunpack.c.l.b16 %v208
  %v1391 = vunpack.c.h.b16 %v208
  %v1392 = vunpack.c.l.b16 %v209
  %v1393 = vunpack.c.h.b16 %v209
  %v1394 = vunpack.c.l.b16 %v210
  %v1395 = vunpack.c.h.b16 %v210
  %v1396 = vunpack.c.l.b16 %v211
  %v1397 = vunpack.c.h.b16 %v211
  %v1398 = vunpack.c.l.b16 %v212
  %v1399 = vunpack.c.h.b16 %v212
  %v1400 = vunpack.c.l.b16 %v213
  %v1401 = vunpack.c.h.b16 %v213
  %v1402 = vunpack.c.l.b16 %v214
  %v1403 = vunpack.c.h.b16 %v214
  %v1404 = vunpack.c.l.b16 %v215
  %v1405 = vunpack.c.h.b16 %v215
  %v1406 = vunpack.c.l.b16 %v216
  %v1407 = vunpack.c.h.b16 %v216
  %v1408 = vunpack.c.l.b16 %v217
  %v1409 = vunpack.c.h.b16 %v217
  %v1410 = vunpack.c.l.b16 %v218
  %v1411 = vunpack.c.h.b16 %v218
  %v1412 = vunpack.c.l.b16 %v219
  %v1413 = vunpack.c.h.b16 %v219
  %v1414 = vunpack.c.l.b16 %v220
  %v1415 = vunpack.c.h.b16 %v220
  %v1416 = vunpack.c.l.b16 %v221
  %v1417 = vunpack.c.h.b16 %v221
  %v1418 = vunpack.c.l.b16 %v222
  %v1419 = vunpack.c.h.b16 %v222
  %v1420 = vunpack.c.l.b16 %v223
  %v1421 = vunpack.c.h.b16 %v223
  %v1422 = vunpack.c.l.b16 %v224
  %v1423 = vunpack.c.h.b16 %v224
  %v1424 = vunpack.c.l.b16 %v225
  %v1425 = vunpack.c.h.b16 %v225
  %v1426 = vunpack.c.l.b16 %v226
  %v1427 = vunpack.c.h.b16 %v226
  %v1428 = vunpack.c.l.b16 %v227
  %v1429 = vunpack.c.h.b16 %v227
  %v1430 = vunpack.c.l.b16 %v228
  %v1431 = vunpack.c.h.b16 %v228
  %v1432 = vunpack.c.l.b16 %v229
  %v1433 = vunpack.c.h.b16 %v229
  %v1434 = vunpack.c.l.b16 %v230
  %v1435 = vunpack.c.h.b16 %v230
  %v1436 = vunpack.c.l.b16 %v231
  %v1437 = vunpack.c.h.b16 %v231
  %v1438 = vunpack.c.l.b16 %v232
  %v1439 = vunpack.c.h.b16 %v232
  %v1440 = vunpack.c.l.b16 %v233
  %v1441 = vunpack.c.h.b16 %v233
  %v1442 = vunpack.c.l.b16 %v234
  %v1443 = vunpack.c.h.b16 %v234
  %v1444 = vunpack.c.l.b16 %v235
  %v1445 = vunpack.c.h.b16 %v235
  %v1446 = vunpack.c.l.b16 %v236
  %v1447 = vunpack.c.h.b16 %v236
  %v1448 = vunpack.c.l.b16 %v237
  %v1449 = vunpack.c.h.b16 %v237
  %v1450 = vunpack.c.l.b16 %v238
  %v1451 = vunpack.c.h.b16 %v238
  %v1452 = vunpack.c.l.b16 %v239
  %v1453 = vunpack.c.h.b16 %v239
  %v1454 = vunpack.c.l.b16 %v240
  %v1455 = vunpack.c.h.b16 %v240
  %v1456 = vunpack.c.l.b16 %v241
  %v1457 = vunpack.c.h.b16 %v241
  %v1458 = vunpack.c.l.b16 %v242
  %v1459 = vunpack.c.h.b16 %v242
  %v1460 = vunpack.c.l.b16 %v243
  %v1461 = vunpack.c.h.b16 %v243
  %v1462 = vunpack.c.l.b16 %v244
  %v1463 = vunpack.c.h.b16 %v244
  %v1464 = vunpack.c.l.b16 %v245
  %v1465 = vunpack.c.h.b16 %v245
  %v1466 = vunpack.c.l.b16 %v246
  %v1467 = vunpack.c.h.b16 %v246
  %v1468 = vunpack.c.l.b16 %v247
  %v1469 = vunpack.c.h.b16 %v247
  %v1470 = vunpack.c.l.b16 %v248
  %v1471 = vunpack.c.h.b16 %v248
  %v1472 = vunpack.c.l.b16 %v249
  %v1473 = vunpack.c.h.b16 %v249
  %v1474 = vunpack.c.l.b16 %v250
  %v1475 = vunpack.c.h.b16 %v250
  %v1476 = vunpack.c.l.b16 %v251
  %v1477 = vunpack.c.h.b16 %v251
  %v1478 = vunpack.c.l.b16 %v252
  %v1479 = vunpack.c.h.b16 %v252
  %v1480 = vunpack.c.l.b16 %v253
  %v1481 = vunpack.c.h.b16 %v253
  %v1482 = vunpack.c.l.b16 %v254
  %v1483 = vunpack.c.h.b16 %v254
  %v1484 = vunpack.c.l.b16 %v255
  %v1485 = vunpack.c.h.b16 %v255
  %v1486 = vunpack.c.l.b16 %v256
  %v1487 = vunpack.c.h.b16 %v256
  %v1488 = vunpack.c.l.b16 %v257
  %v1489 = vunpack.c.h.b16 %v257
  %v1490 = vunpack.c.l.b16 %v258
  %v1491 = vunpack.c.h.b16 %v258
  %v1492 = vunpack.c.l.b16 %v259
  %v1493 = vunpack.c.h.b16 %v259
  %v1494 = vunpack.c.l.b16 %v260
  %v1495 = vunpack.c.h.b16 %v260
  %v1496 = vunpack.c.l.b16 %v261
  %v1497 = vunpack.c.h.b16 %v261
  %v1498 = vunpack.c.l.b16 %v262
  %v1499 = vunpack.c.h.b16 %v262
  %v1500 = vunpack.c.l.b16 %v263
  %v1501 = vunpack.c.h.b16 %v263
  %v1502 = vunpack.c.l.b16 %v264
  %v1503 = vunpack.c.h.b16 %v264
  %v1504 = vunpack.c.l.b16 %v265
  %v1505 = vunpack.c.h.b16 %v265
  %v1506 = vunpack.c.l.b16 %v266
  %v1507 = vunpack.c.h.b16 %v266
  %v1508 = vunpack.c.l.b16 %v267
  %v1509 = vunpack.c.h.b16 %v267
  %v1510 = vunpack.c.l.b16 %v268
  %v1511 = vunpack.c.h.b16 %v268
  %v1512 = vunpack.c.l.b16 %v269
  %v1513 = vunpack.c.h.b16 %v269
  %v1514 = vunpack.c.l.b16 %v270
  %v1515 = vunpack.c.h.b16 %v270
  %v1516 = vunpack.c.l.b16 %v271
  %v1517 = vunpack.c.h.b16 %v271
  %v1518 = vunpack.c.l.b16 %v272
  %v1519 = vunpack.c.h.b16 %v272
  %v1520 = vunpack.c.l.b16 %v273
  %v1521 = vunpack.c.h.b16 %v273
  %v1522 = vunpack.c.l.b16 %v274
  %v1523 = vunpack.c.h.b16 %v274
  %v1524 = vunpack.c.l.b16 %v275
  %v1525 = vunpack.c.h.b16 %v275
  %v1526 = vunpack.c.l.b16 %v276
  %v1527 = vunpack.c.h.b16 %v276
  %v1528 = vunpack.c.l.b16 %v277
  %v1529 = vunpack.c.h.b16 %v277
  %v1530 = vunpack.c.l.b16 %v278
  %v1531 = vunpack.c.h.b16 %v278
  %v1532 = vunpack.c.l.b16 %v279
  %v1533 = vunpack.c.h.b16 %v279
  %v1534 = vunpack.c.l.b16 %v280
  %v1535 = vunpack.c.h.b16 %v280
  %v1536 = vunpack.c.l.b16 %v281
  %v1537 = vunpack.c.h.b16 %v281
  %v1538 = vunpack.c.l.b16 %v282
  %v1539 = vunpack.c.h.b16 %v282
  %v1540 = vunpack.c.l.b16 %v283
  %v1541 = vunpack.c.h.b16 %v283
  %v1542 = vunpack.c.l.b16 %v284
  %v1543 = vunpack.c.h.b16 %v284
  %v1544 = vunpack.c.l.b16 %v285
  %v1545 = vunpack.c.h.b16 %v285
  %v1546 = vunpack.c.l.b16 %v286
  %v1547 = vunpack.c.h.b16 %v286
  %v1548 = vunpack.c.l.b16 %v287
  %v1549 = vunpack.c.h.b16 %v287
  %v1550 = vunpack.c.l.b16 %v288
  %v1551 = vunpack.c.h.b16 %v288
  %v1552 = vunpack.c.l.b16 %v289
  %v1553 = vunpack.c.h.b16 %v289
  %v1554 = vunpack.c.l.b16 %v290
  %v1555 = vunpack.c.h.b16 %v290
  %v1556 = vunpack.c.l.b16 %v291
  %v1557 = vunpack.c.h.b16 %v291
  %v1558 = vunpack.c.l.b16 %v292
  %v1559 = vunpack.c.h.b16 %v292
  %v1560 = vunpack.c.l.b16 %v293
  %v1561 = vunpack.c.h.b16 %v293
  %v1562 = vunpack.c.l.b16 %v294
  %v1563 = vunpack.c.h.b16 %v294
  %v1564 = vunpack.c.l.b16 %v295
  %v1565 = vunpack.c.h.b16 %v295
  %v1566 = vunpack.c.l.b16 %v296
  %v1567 = vunpack.c.h.b16 %v296
  %v1568 = vunpack.c.l.b16 %v297
  %v1569 = vunpack.c.h.b16 %v297
  %v1570 = vunpack.c.l.b16 %v298
  %v1571 = vunpack.c.h.b16 %v298
  %v1572 = vunpack.c.l.b16 %v299
  %v1573 = vunpack.c.h.b16 %v299
  %v1574 = vunpack.c.l.b16 %v300
  %v1575 = vunpack.c.h.b16 %v300
  %v1576 = vunpack.c.l.b16 %v301
  %v1577 = vunpack.c.h.b16 %v301
  %v1578 = vunpack.c.l.b16 %v302
  %v1579 = vunpack.c.h.b16 %v302
  %v1580 = vunpack.c.l.b16 %v303
  %v1581 = vunpack.c.h.b16 %v303
  %v1582 = vunpack.c.l.b16 %v304
  %v1583 = vunpack.c.h.b16 %v304
  %v1584 = vunpack.c.l.b16 %v305
  %v1585 = vunpack.c.h.b16 %v305
  %v1586 = vunpack.c.l.b16 %v306
  %v1587 = vunpack.c.h.b16 %v306
  %v1588 = vunpack.c.l.b16 %v307
  %v1589 = vunpack.c.h.b16 %v307
  %v1590 = vunpack.c.l.b16 %v308
  %v1591 = vunpack.c.h.b16 %v308
  %v1592 = vunpack.c.l.b16 %v309
  %v1593 = vunpack.c.h.b16 %v309
  %v1594 = vunpack.c.l.b16 %v310
  %v1595 = vunpack.c.h.b16 %v310
  %v1596 = vunpack.c.l.b16 %v311
  %v1597 = vunpack.c.h.b16 %v311
  %v1598 = vunpack.c.l.b16 %v312
  %v1599 = vunpack.c.h.b16 %v312
  %v1600 = vunpack.c.l.b16 %v313
  %v1601 = vunpack.c.h.b16 %v313
  %v1602 = vunpack.c.l.b16 %v314
  %v1603 = vunpack.c.h.b16 %v314
  %v1604 = vunpack.c.l.b16 %v315
  %v1605 = vunpack.c.h.b16 %v315
  %v1606 = vunpack.c.l.b16 %v316
  %v1607 = vunpack.c.h.b16 %v316
  %v1608 = vunpack.c.l.b16 %v317
  %v1609 = vunpack.c.h.b16 %v317
  %v1610 = vunpack.c.l.b16 %v318
  %v1611 = vunpack.c.h.b16 %v318
  %v1612 = vunpack.c.l.b16 %v319
  %v1613 = vunpack.c.h.b16 %v319
  %v1614 = vunpack.c.l.b16 %v320
  %v1615 = vunpack.c.h.b16 %v320
  %v1616 = vunpack.c.l.b16 %v321
  %v1617 = vunpack.c.h.b16 %v321
  %v1618 = vunpack.c.l.b16 %v322
  %v1619 = vunpack.c.h.b16 %v322
  %v1620 = vunpack.c.l.b16 %v323
  %v1621 = vunpack.c.h.b16 %v323
  %v1622 = vunpack.c.l.b16 %v324
  %v1623 = vunpack.c.h.b16 %v324
  %v1624 = vunpack.c.l.b16 %v325
  %v1625 = vunpack.c.h.b16 %v325
  %v1626 = vunpack.c.l.b16 %v326
  %v1627 = vunpack.c.h.b16 %v326
  %v1628 = vunpack.c.l.b16 %v327
  %v1629 = vunpack.c.h.b16 %v327
  %v1630 = vunpack.c.l.b16 %v328
  %v1631 = vunpack.c.h.b16 %v328
  %v1632 = vunpack.c.l.b16 %v329
  %v1633 = vunpack.c.h.b16 %v329
  %v1634 = vunpack.c.l.b16 %v330
  %v1635 = vunpack.c.h.b16 %v330
  %v1636 = vunpack.c.l.b16 %v331
  %v1637 = vunpack.c.h.b16 %v331
  %v1638 = vunpack.c.l.b16 %v332
  %v1639 = vunpack.c.h.b16 %v332
  %v1640 = vunpack.c.l.b16 %v333
  %v1641 = vunpack.c.h.b16 %v333
  %v1642 = vunpack.c.l.b16 %v334
  %v1643 = vunpack.c.h.b16 %v334
  %v1644 = vunpack.c.l.b16 %v335
  %v1645 = vunpack.c.h.b16 %v335
  %v1646 = vunpack.c.l.b16 %v336
  %v1647 = vunpack.c.h.b16 %v336
  %v1648 = vunpack.c.l.b16 %v337
  %v1649 = vunpack.c.h.b16 %v337
  %v1650 = vunpack.c.l.b16 %v338
  %v1651 = vunpack.c.h.b16 %v338
  %v1652 = vunpack.c.l.b16 %v339
  %v1653 = vunpack.c.h.b16 %v339
  %v1654 = vunpack.c.l.b16 %v340
  %v1655 = vunpack.c.h.b16 %v340
  %v1656 = vunpack.c.l.b16 %v341
  %v1657 = vunpack.c.h.b16 %v341
  %v1658 = vunpack.c.l.b16 %v342
  %v1659 = vunpack.c.h.b16 %v342
  %v1660 = vunpack.c.l.b16 %v343
  %v1661 = vunpack.c.h.b16 %v343
  %v1662 = vunpack.c.l.b16 %v344
  %v1663 = vunpack.c.h.b16 %v344
  %v1664 = vunpack.c.l.b16 %v345
  %v1665 = vunpack.c.h.b16 %v345
  %v1666 = vunpack.c.l.b16 %v346
  %v1667 = vunpack.c.h.b16 %v346
  %v1668 = vunpack.c.l.b16 %v347
  %v1669 = vunpack.c.h.b16 %v347
  %v1670 = vunpack.c.l.b16 %v348
  %v1671 = vunpack.c.h.b16 %v348
  %v1672 = vunpack.c.l.b16 %v349
  %v1673 = vunpack.c.h.b16 %v349
  %v1674 = vunpack.c.l.b16 %v350
  %v1675 = vunpack.c.h.b16 %v350
  %v1676 = vunpack.c.l.b16 %v351
  %v1677 = vunpack.c.h.b16 %v351
  %v1678 = vunpack.c.l.b16 %v352
  %v1679 = vunpack.c.h.b16 %v352
  %v1680 = vunpack.c.l.b16 %v353
  %v1681 = vunpack.c.h.b16 %v353
  %v1682 = vunpack.c.l.b16 %v354
  %v1683 = vunpack.c.h.b16 %v354
  %v1684 = vunpack.c.l.b16 %v355
  %v1685 = vunpack.c.h.b16 %v355
  %v1686 = vunpack.c.l.b16 %v356
  %v1687 = vunpack.c.h.b16 %v356
  %v1688 = vunpack.c.l.b16 %v357
  %v1689 = vunpack.c.h.b16 %v357
  %v1690 = vunpack.c.l.b16 %v358
  %v1691 = vunpack.c.h.b16 %v358
  %v1692 = vunpack.c.l.b16 %v359
  %v1693 = vunpack.c.h.b16 %v359
  %v1694 = vunpack.c.l.b16 %v360
  %v1695 = vunpack.c.h.b16 %v360
  %v1696 = vunpack.c.l.b16 %v361
  %v1697 = vunpack.c.h.b16 %v361
  %v1698 = vunpack.c.l.b16 %v362
  %v1699 = vunpack.c.h.b16 %v362
  %v1700 = vunpack.c.l.b16 %v363
  %v1701 = vunpack.c.h.b16 %v363
  %v1702 = vunpack.c.l.b16 %v364
  %v1703 = vunpack.c.h.b16 %v364
  %v1704 = vunpack.c.l.b16 %v365
  %v1705 = vunpack.c.h.b16 %v365
  %v1706 = vunpack.c.l.b16 %v366
  %v1707 = vunpack.c.h.b16 %v366
  %v1708 = vunpack.c.l.b16 %v367
  %v1709 = vunpack.c.h.b16 %v367
  %v1710 = vunpack.c.l.b16 %v368
  %v1711 = vunpack.c.h.b16 %v368
  %v1712 = vunpack.c.l.b16 %v369
  %v1713 = vunpack.c.h.b16 %v369
  %v1714 = vunpack.c.l.b16 %v370
  %v1715 = vunpack.c.h.b16 %v370
  %v1716 = vunpack.c.l.b16 %v371
  %v1717 = vunpack.c.h.b16 %v371
  %v1718 = vunpack.c.l.b16 %v372
  %v1719 = vunpack.c.h.b16 %v372
  %v1720 = vunpack.c.l.b16 %v373
  %v1721 = vunpack.c.h.b16 %v373
  %v1722 = vunpack.c.l.b16 %v374
  %v1723 = vunpack.c.h.b16 %v374
  %v1724 = vunpack.c.l.b16 %v375
  %v1725 = vunpack.c.h.b16 %v375
  %v1726 = vunpack.c.l.b16 %v376
  %v1727 = vunpack.c.h.b16 %v376
  %v1728 = vunpack.c.l.b16 %v377
  %v1729 = vunpack.c.h.b16 %v377
  %v1730 = vunpack.c.l.b16 %v378
  %v1731 = vunpack.c.h.b16 %v378
  %v1732 = vunpack.c.l.b16 %v379
  %v1733 = vunpack.c.h.b16 %v379
  %v1734 = vunpack.c.l.b16 %v380
  %v1735 = vunpack.c.h.b16 %v380
  %v1736 = vunpack.c.l.b16 %v381
  %v1737 = vunpack.c.h.b16 %v381
  %v1738 = vunpack.c.l.b16 %v382
  %v1739 = vunpack.c.h.b16 %v382
  %v1740 = vunpack.c.l.b16 %v383
  %v1741 = vunpack.c.h.b16 %v383
  %v1742 = vunpack.c.l.b16 %v384
  %v1743 = vunpack.c.h.b16 %v384
  %v1744 = vunpack.c.l.b16 %v385
  %v1745 = vunpack.c.h.b16 %v385
  %v1746 = vunpack.c.l.b16 %v386
  %v1747 = vunpack.c.h.b16 %v386
  %v1748 = vunpack.c.l.b16 %v387
  %v1749 = vunpack.c.h.b16 %v387
  %v1750 = vunpack.c.l.b16 %v388
  %v1751 = vunpack.c.h.b16 %v388
  %v1752 = vunpack.c.l.b16 %v389
  %v1753 = vunpack.c.h.b16 %v389
  %v1754 = vunpack.c.l.b16 %v390
  %v1755 = vunpack.c.h.b16 %v390
  %v1756 = vunpack.c.l.b16 %v391
  %v1757 = vunpack.c.h.b16 %v391
  %v1758 = vunpack.c.l.b16 %v392
  %v1759 = vunpack.c.h.b16 %v392
  %v1760 = vunpack.c.l.b16 %v393
  %v1761 = vunpack.c.h.b16 %v393
  %v1762 = vunpack.c.l.b16 %v394
  %v1763 = vunpack.c.h.b16 %v394
  %v1764 = vunpack.c.l.b16 %v395
  %v1765 = vunpack.c.h.b16 %v395
  %v1766 = vunpack.c.l.b16 %v396
  %v1767 = vunpack.c.h.b16 %v396
  %v1768 = vunpack.c.l.b16 %v397
  %v1769 = vunpack.c.h.b16 %v397
  %v1770 = vunpack.c.l.b16 %v398
  %v1771 = vunpack.c.h.b16 %v398
  %v1772 = vunpack.c.l.b16 %v399
  %v1773 = vunpack.c.h.b16 %v399
  %v1774 = vunpack.c.l.b16 %v400
  %v1775 = vunpack.c.h.b16 %v400
  %v1776 = vunpack.c.l.b16 %v401
  %v1777 = vunpack.c.h.b16 %v401
  %v1778 = vunpack.c.l.b16 %v402
  %v1779 = vunpack.c.h.b16 %v402
  %v1780 = vunpack.c.l.b16 %v403
  %v1781 = vunpack.c.h.b16 %v403
  %v1782 = vunpack.c.l.b16 %v404
  %v1783 = vunpack.c.h.b16 %v404
  %v1784 = vunpack.c.l.b16 %v405
  %v1785 = vunpack.c.h.b16 %v405
  %v1786 = vunpack.c.l.b16 %v406
  %v1787 = vunpack.c.h.b16 %v406
  %v1788 = vunpack.c.l.b16 %v407
  %v1789 = vunpack.c.h.b16 %v407
  %v1790 = vunpack.c.l.b16 %v408
  %v1791 = vunpack.c.h.b16 %v408
  %v1792 = vunpack.c.l.b16 %v409
  %v1793 = vunpack.c.h.b16 %v409
  %v1794 = vunpack.c.l.b16 %v410
  %v1795 = vunpack.c.h.b16 %v410
  %v1796 = vunpack.c.l.b16 %v411
  %v1797 = vunpack.c.h.b16 %v411
  %v1798 = vunpack.c.l.b16 %v412
  %v1799 = vunpack.c.h.b16 %v412
  %v1800 = vunpack.c.l.b16 %v413
  %v1801 = vunpack.c.h.b16 %v413
  %v1802 = vunpack.c.l.b16 %v414
  %v1803 = vunpack.c.h.b16 %v414
  %v1804 = vunpack.c.l.b16 %v415
  %v1805 = vunpack.c.h.b16 %v415
  %v1806 = vunpack.c.l.b16 %v416
  %v1807 = vunpack.c.h.b16 %v416
  %v1808 = vunpack.c.l.b16 %v417
  %v1809 = vunpack.c.h.b16 %v417
  %v1810 = vunpack.c.l.b16 %v418
  %v1811 = vunpack.c.h.b16 %v418
  %v1812 = vunpack.c.l.b16 %v419
  %v1813 = vunpack.c.h.b16 %v419
  %v1814 = vunpack.c.l.b16 %v420
  %v1815 = vunpack.c.h.b16 %v420
  %v1816 = vunpack.c.l.b16 %v421
  %v1817 = vunpack.c.h.b16 %v421
  %v1818 = vunpack.c.l.b16 %v422
  %v1819 = vunpack.c.h.b16 %v422
  %v1820 = vunpack.c.l.b16 %v423
  %v1821 = vunpack.c.h.b16 %v423
  %v1822 = vunpack.c.l.b16 %v424
  %v1823 = vunpack.c.h.b16 %v424
  %v1824 = vunpack.c.l.b16 %v425
  %v1825 = vunpack.c.h.b16 %v425
  %v1826 = vunpack.c.l.b16 %v426
  %v1827 = vunpack.c.h.b16 %v426
  %v1828 = vunpack.c.l.b16 %v427
  %v1829 = vunpack.c.h.b16 %v427
  %v1830 = vunpack.c.l.b16 %v428
  %v1831 = vunpack.c.h.b16 %v428
  %v1832 = vunpack.c.l.b16 %v429
  %v1833 = vunpack.c.h.b16 %v429
  %v1834 = vunpack.c.l.b16 %v430
  %v1835 = vunpack.c.h.b16 %v430
  %v1836 = vunpack.c.l.b16 %v431
  %v1837 = vunpack.c.h.b16 %v431
  %v1838 = vunpack.c.l.b16 %v432
  %v1839 = vunpack.c.h.b16 %v432
  %v1840 = vunpack.c.l.b16 %v433
  %v1841 = vunpack.c.h.b16 %v433
  %v1842 = vunpack.c.l.b16 %v434
  %v1843 = vunpack.c.h.b16 %v434
  %v1844 = vunpack.c.l.b16 %v435
  %v1845 = vunpack.c.h.b16 %v435
  %v1846 = vunpack.c.l.b16 %v436
  %v1847 = vunpack.c.h.b16 %v436
  %v1848 = vunpack.c.l.b16 %v437
  %v1849 = vunpack.c.h.b16 %v437
  %v1850 = vunpack.c.l.b16 %v438
  %v1851 = vunpack.c.h.b16 %v438
  %v1852 = vunpack.c.l.b16 %v439
  %v1853 = vunpack.c.h.b16 %v439
  %v1854 = vunpack.c.l.b16 %v440
  %v1855 = vunpack.c.h.b16 %v440
  %v1856 = vunpack.c.l.b16 %v441
  %v1857 = vunpack.c.h.b16 %v441
  %v1858 = vunpack.c.l.b16 %v442
  %v1859 = vunpack.c.h.b16 %v442
  %v1860 = vunpack.c.l.b16 %v443
  %v1861 = vunpack.c.h.b16 %v443
  %v1862 = vunpack.c.l.b16 %v444
  %v1863 = vunpack.c.h.b16 %v444
  %v1864 = vunpack.c.l.b16 %v445
  %v1865 = vunpack.c.h.b16 %v445
  %v1866 = vunpack.c.l.b16 %v446
  %v1867 = vunpack.c.h.b16 %v446
  %v1868 = vunpack.c.l.b16 %v447
  %v1869 = vunpack.c.h.b16 %v447
  %v1870 = vunpack.c.l.b16 %v448
  %v1871 = vunpack.c.h.b16 %v448
  %v1872 = vunpack.c.l.b16 %v449
  %v1873 = vunpack.c.h.b16 %v449
  %v1874 = vunpack.c.l.b16 %v450
  %v1875 = vunpack.c.h.b16 %v450
  %v1876 = vunpack.c.l.b16 %v451
  %v1877 = vunpack.c.h.b16 %v451
  %v1878 = vunpack.c.l.b16 %v452
  %v1879 = vunpack.c.h.b16 %v452
  %v1880 = vunpack.c.l.b16 %v453
  %v1881 = vunpack.c.h.b16 %v453
  %v1882 = vunpack.c.l.b16 %v454
  %v1883 = vunpack.c.h.b16 %v454
  %v1884 = vunpack.c.l.b16 %v455
  %v1885 = vunpack.c.h.b16 %v455
  %v1886 = vunpack.c.l.b16 %v456
  %v1887 = vunpack.c.h.b16 %v456
  %v1888 = vunpack.c.l.b16 %v457
  %v1889 = vunpack.c.h.b16 %v457
  %v1890 = vunpack.c.l.b16 %v458
  %v1891 = vunpack.c.h.b16 %v458
  %v1892 = vunpack.c.l.b16 %v459
  %v1893 = vunpack.c.h.b16 %v459
  %v1894 = vunpack.c.l.b16 %v460
  %v1895 = vunpack.c.h.b16 %v460
  %v1896 = vunpack.c.l.b16 %v461
  %v1897 = vunpack.c.h.b16 %v461
  %v1898 = vunpack.c.l.b16 %v462
  %v1899 = vunpack.c.h.b16 %v462
  %v1900 = vunpack.c.l.b16 %v463
  %v1901 = vunpack.c.h.b16 %v463
  %v1902 = vunpack.c.l.b16 %v464
  %v1903 = vunpack.c.h.b16 %v464
  %v1904 = vunpack.c.l.b16 %v465
  %v1905 = vunpack.c.h.b16 %v465
  %v1906 = vunpack.c.l.b16 %v466
  %v1907 = vunpack.c.h.b16 %v466
  %v1908 = vunpack.c.l.b16 %v467
  %v1909 = vunpack.c.h.b16 %v467
  %v1910 = vunpack.c.l.b16 %v468
  %v1911 = vunpack.c.h.b16 %v468
  %v1912 = vunpack.c.l.b16 %v469
  %v1913 = vunpack.c.h.b16 %v469
  %v1914 = vunpack.c.l.b16 %v470
  %v1915 = vunpack.c.h.b16 %v470
  %v1916 = vunpack.c.l.b16 %v471
  %v1917 = vunpack.c.h.b16 %v471
  %v1918 = vunpack.c.l.b16 %v472
  %v1919 = vunpack.c.h.b16 %v472
  %v1920 = vunpack.c.l.b16 %v473
  %v1921 = vunpack.c.h.b16 %v473
  %v1922 = vunpack.c.l.b16 %v474
  %v1923 = vunpack.c.h.b16 %v474
  %v1924 = vunpack.c.l.b16 %v475
  %v1925 = vunpack.c.h.b16 %v475
  %v1926 = vunpack.c.l.b16 %v476
  %v1927 = vunpack.c.h.b16 %v476
  %v1928 = vunpack.c.l.b16 %v477
  %v1929 = vunpack.c.h.b16 %v477
  %v1930 = vunpack.c.l.b16 %v478
  %v1931 = vunpack.c.h.b16 %v478
  %v1932 = vunpack.c.l.b16 %v479
  %v1933 = vunpack.c.h.b16 %v479
  %v1934 = vunpack.c.l.b16 %v480
  %v1935 = vunpack.c.h.b16 %v480
  %v1936 = vunpack.c.l.b16 %v481
  %v1937 = vunpack.c.h.b16 %v481
  %v1938 = vunpack.c.l.b16 %v482
  %v1939 = vunpack.c.h.b16 %v482
  %v1940 = vunpack.c.l.b16 %v483
  %v1941 = vunpack.c.h.b16 %v483
  %v1942 = vunpack.c.l.b16 %v484
  %v1943 = vunpack.c.h.b16 %v484
  %v1944 = vunpack.c.l.b16 %v485
  %v1945 = vunpack.c.h.b16 %v485
  %v1946 = vunpack.c.l.b16 %v486
  %v1947 = vunpack.c.h.b16 %v486
  %v1948 = vunpack.c.l.b16 %v487
  %v1949 = vunpack.c.h.b16 %v487
  %v1950 = vunpack.c.l.b16 %v488
  %v1951 = vunpack.c.h.b16 %v488
  %v1952 = vunpack.c.l.b16 %v489
  %v1953 = vunpack.c.h.b16 %v489
  %v1954 = vunpack.c.l.b16 %v490
  %v1955 = vunpack.c.h.b16 %v490
  %v1956 = vunpack.c.l.b16 %v491
  %v1957 = vunpack.c.h.b16 %v491
  %v1958 = vunpack.c.l.b16 %v492
  %v1959 = vunpack.c.h.b16 %v492
  %v1960 = vunpack.c.l.b16 %v493
  %v1961 = vunpack.c.h.b16 %v493
  %v1962 = vunpack.c.l.b16 %v494
  %v1963 = vunpack.c.h.b16 %v494
  %v1964 = vunpack.c.l.b16 %v495
  %v1965 = vunpack.c.h.b16 %v495
  %v1966 = vunpack.c.l.b16 %v496
  %v1967 = vunpack.c.h.b16 %v496
  %v1968 = vunpack.c.l.b16 %v497
  %v1969 = vunpack.c.h.b16 %v497
  %v1970 = vunpack.c.l.b16 %v498
  %v1971 = vunpack.c.h.b16 %v498
  %v1972 = vunpack.c.l.b16 %v499
  %v1973 = vunpack.c.h.b16 %v499
  %v1974 = vunpack.c.l.b16 %v500
  %v1975 = vunpack.c.h.b16 %v500
  %v1976 = vunpack.c.l.b16 %v501
  %v1977 = vunpack.c.h.b16 %v501
  %v1978 = vunpack.c.l.b16 %v502
  %v1979 = vunpack.c.h.b16 %v502
  %v1980 = vunpack.c.l.b16 %v503
  %v1981 = vunpack.c.h.b16 %v503
  %v1982 = vunpack.c.l.b16 %v504
  %v1983 = vunpack.c.h.b16 %v504
  %v1984 = vunpack.c.l.b16 %v505
  %v1985 = vunpack.c.h.b16 %v505
  %v1986 = vunpack.c.l.b16 %v506
  %v1987 = vunpack.c.h.b16 %v506
  %v1988 = vunpack.c.l.b16 %v507
  %v1989 = vunpack.c.h.b16 %v507
  %v1990 = vunpack.c.l.b16 %v508
  %v1991 = vunpack.c.h.b16 %v508
  %v1992 = vunpack.c.l.b16 %v509
  %v1993 = vunpack.c.h.b16 %v509
  %v1994 = vunpack.c.l.b16 %v510
  %v1995 = vunpack.c.h.b16 %v510
  %v1996 = vunpack.c.l.b16 %v511
  %v1997 = vunpack.c.h.b16 %v511
  %v1998 = vunpack.c.l.b16 %v512
  %v1999 = vunpack.c.h.b16 %v512
  %v2000 = vunpack.c.l.b16 %v513
  %v2001 = vunpack.c.h.b16 %v513
  %v2002 = vunpack.c.l.b16 %v514
  %v2003 = vunpack.c.h.b16 %v514
  %v2004 = vunpack.c.l.b16 %v515
  %v2005 = vunpack.c.h.b16 %v515
  %v2006 = vunpack.c.l.b16 %v516
  %v2007 = vunpack.c.h.b16 %v516
  %v2008 = vunpack.c.l.b16 %v517
  %v2009 = vunpack.c.h.b16 %v517
  %v2010 = vunpack.c.l.b16 %v518
  %v2011 = vunpack.c.h.b16 %v518
  %v2012 = vunpack.c.l.b16 %v519
  %v2013 = vunpack.c.h.b16 %v519
  %v2014 = vunpack.c.l.b16 %v520
  %v2015 = vunpack.c.h.b16 %v520
  %v2016 = vunpack.c.l.b16 %v521
  %v2017 = vunpack.c.h.b16 %v521
  %v2018 = vunpack.c.l.b16 %v522
  %v2019 = vunpack.c.h.b16 %v522
  %v2020 = vunpack.c.l.b16 %v523
  %v2021 = vunpack.c.h.b16 %v523
  %v2022 = vunpack.c.l.b16 %v524
  %v2023 = vunpack.c.h.b16 %v524
  %v2024 = vunpack.c.l.b16 %v525
  %v2025 = vunpack.c.h.b16 %v525
  %v2026 = vunpack.c.l.b16 %v526
  %v2027 = vunpack.c.h.b16 %v526
  %v2028 = vunpack.c.l.b16 %v527
  %v2029 = vunpack.c.h.b16 %v527
  %v2030 = vunpack.c.l.b16 %v528
  %v2031 = vunpack.c.h.b16 %v528
  %v2032 = vunpack.c.l.b16 %v529
  %v2033 = vunpack.c.h.b16 %v529
  %v2034 = vunpack.c.l.b16 %v530
  %v2035 = vunpack.c.h.b16 %v530
  %v2036 = vunpack.c.l.b16 %v531
  %v2037 = vunpack.c.h.b16 %v531
  %v2038 = vunpack.c.l.b16 %v532
  %v2039 = vunpack.c.h.b16 %v532
  %v2040 = vunpack.c.l.b16 %v533
  %v2041 = vunpack.c.h.b16 %v533
  %v2042 = vunpack.c.l.b16 %v534
  %v2043 = vunpack.c.h.b16 %v534
  %v2044 = vunpack.c.l.b16 %v535
  %v2045 = vunpack.c.h.b16 %v535
  %v2046 = vunpack.c.l.b16 %v536
  %v2047 = vunpack.c.h.b16 %v536
  %v2048 = vunpack.c.l.b16 %v537
  %v2049 = vunpack.c.h.b16 %v537
  %v2050 = vunpack.c.l.b16 %v538
  %v2051 = vunpack.c.h.b16 %v538
  %v2052 = vunpack.c.l.b16 %v539
  %v2053 = vunpack.c.h.b16 %v539
  %v2054 = vunpack.c.l.b16 %v540
  %v2055 = vunpack.c.h.b16 %v540
  %v2056 = vunpack.c.l.b16 %v541
  %v2057 = vunpack.c.h.b16 %v541
  %v2058 = vunpack.c.l.b16 %v542
  %v2059 = vunpack.c.h.b16 %v542
  %v2060 = vunpack.c.l.b16 %v543
  %v2061 = vunpack.c.h.b16 %v543
  %v2062 = vunpack.c.l.b16 %v544
  %v2063 = vunpack.c.h.b16 %v544
  %v2064 = vunpack.c.l.b16 %v545
  %v2065 = vunpack.c.h.b16 %v545
  %v2066 = vunpack.c.l.b16 %v546
  %v2067 = vunpack.c.h.b16 %v546
  %v2068 = vunpack.c.l.b16 %v547
  %v2069 = vunpack.c.h.b16 %v547
  %v2070 = vunpack.c.l.b16 %v548
  %v2071 = vunpack.c.h.b16 %v548
  %v2072 = vunpack.c.l.b16 %v549
  %v2073 = vunpack.c.h.b16 %v549
  %v2074 = vunpack.c.l.b16 %v550
  %v2075 = vunpack.c.h.b16 %v550
  %v2076 = vunpack.c.l.b16 %v551
  %v2077 = vunpack.c.h.b16 %v551
  %v2078 = vunpack.c.l.b16 %v552
  %v2079 = vunpack.c.h.b16 %v552
  %v2080 = vunpack.c.l.b16 %v553
  %v2081 = vunpack.c.h.b16 %v553
  %v2082 = vunpack.c.l.b16 %v554
  %v2083 = vunpack.c.h.b16 %v554
  %v2084 = vunpack.c.l.b16 %v555
  %v2085 = vunpack.c.h.b16 %v555
  %v2086 = vunpack.c.l.b16 %v556
  %v2087 = vunpack.c.h.b16 %v556
  %v2088 = vunpack.c.l.b16 %v557
  %v2089 = vunpack.c.h.b16 %v557
  %v2090 = vunpack.c.l.b16 %v558
  %v2091 = vunpack.c.h.b16 %v558
  %v2092 = vunpack.c.l.b16 %v559
  %v2093 = vunpack.c.h.b16 %v559
  %v2094 = vunpack.c.l.b16 %v560
  %v2095 = vunpack.c.h.b16 %v560
  %v2096 = vunpack.c.l.b16 %v561
  %v2097 = vunpack.c.h.b16 %v561
  %v2098 = vpack.c.b16 %v1082, %v1074
  %v2099 = vpack.c.b16 %v1083, %v1075
  %v2100 = vpack.c.b16 %v1084, %v1076
  %v2101 = vpack.c.b16 %v1085, %v1077
  %v2102 = vpack.c.b16 %v1086, %v1078
  %v2103 = vpack.c.b16 %v1087, %v1079
  %v2104 = vpack.c.b16 %v1088, %v1080
  %v2105 = vpack.c.b16 %v1089, %v1081
  %v2106 = vpack.c.b16 %v1098, %v1090
  %v2107 = vpack.c.b16 %v1099, %v1091
  %v2108 = vpack.c.b16 %v1100, %v1092
  %v2109 = vpack.c.b16 %v1101, %v1093
  %v2110 = vpack.c.b16 %v1102, %v1094
  %v2111 = vpack.c.b16 %v1103, %v1095
  %v2112 = vpack.c.b16 %v1104, %v1096
  %v2113 = vpack.c.b16 %v1105, %v1097
  %v2114 = vpack.c.b16 %v1114, %v1106
  %v2115 = vpack.c.b16 %v1115, %v1107
  %v2116 = vpack.c.b16 %v1116, %v1108
  %v2117 = vpack.c.b16 %v1117, %v1109
  %v2118 = vpack.c.b16 %v1118, %v1110
  %v2119 = vpack.c.b16 %v1119, %v1111
  %v2120 = vpack.c.b16 %v1120, %v1112
  %v2121 = vpack.c.b16 %v1121, %v1113
  %v2122 = vpack.c.b16 %v1130, %v1122
  %v2123 = vpack.c.b16 %v1131, %v1123
  %v2124 = vpack.c.b16 %v1132, %v1124
  %v2125 = vpack.c.b16 %v1133, %v1125
  %v2126 = vpack.c.b16 %v1134, %v1126
  %v2127 = vpack.c.b16 %v1135, %v1127
  %v2128 = vpack.c.b16 %v1136, %v1128
  %v2129 = vpack.c.b16 %v1137, %v1129
  %v2130 = vpack.c.b16 %v1146, %v1138
  %v2131 = vpack.c.b16 %v1147, %v1139
  %v2132 = vpack.c.b16 %v1148, %v1140
  %v2133 = vpack.c.b16 %v1149, %v1141
  %v2134 = vpack.c.b16 %v1150, %v1142
  %v2135 = vpack.c.b16 %v1151, %v1143
  %v2136 = vpack.c.b16 %v1152, %v1144
  %v2137 = vpack.c.b16 %v1153, %v1145
  %v2138 = vpack.c.b16 %v1162, %v1154
  %v2139 = vpack.c.b16 %v1163, %v1155
  %v2140 = vpack.c.b16 %v1164, %v1156
  %v2141 = vpack.c.b16 %v1165, %v1157
  %v2142 = vpack.c.b16 %v1166, %v1158
  %v2143 = vpack.c.b16 %v1167, %v1159
  %v2144 = vpack.c.b16 %v1168, %v1160
  %v2145 = vpack.c.b16 %v1169, %v1161
  %v2146 = vpack.c.b16 %v1178, %v1170
  %v2147 = vpack.c.b16 %v1179, %v1171
  %v2148 = vpack.c.b16 %v1180, %v1172
  %v2149 = vpack.c.b16 %v1181, %v1173
  %v2150 = vpack.c.b16 %v1182, %v1174
  %v2151 = vpack.c.b16 %v1183, %v1175
  %v2152 = vpack.c.b16 %v1184, %v1176
  %v2153 = vpack.c.b16 %v1185, %v1177
  %v2154 = vpack.c.b16 %v1194, %v1186
  %v2155 = vpack.c.b16 %v1195, %v1187
  %v2156 = vpack.c.b16 %v1196, %v1188
  %v2157 = vpack.c.b16 %v1197, %v1189
  %v2158 = vpack.c.b16 %v1198, %v1190
  %v2159 = vpack.c.b16 %v1199, %v1191
  %v2160 = vpack.c.b16 %v1200, %v1192
  %v2161 = vpack.c.b16 %v1201, %v1193
  %v2162 = vpack.c.b16 %v1210, %v1202
  %v2163 = vpack.c.b16 %v1211, %v1203
  %v2164 = vpack.c.b16 %v1212, %v1204
  %v2165 = vpack.c.b16 %v1213, %v1205
  %v2166 = vpack.c.b16 %v1214, %v1206
  %v2167 = vpack.c.b16 %v1215, %v1207
  %v2168 = vpack.c.b16 %v1216, %v1208
  %v2169 = vpack.c.b16 %v1217, %v1209
  %v2170 = vpack.c.b16 %v1226, %v1218
  %v2171 = vpack.c.b16 %v1227, %v1219
  %v2172 = vpack.c.b16 %v1228, %v1220
  %v2173 = vpack.c.b16 %v1229, %v1221
  %v2174 = vpack.c.b16 %v1230, %v1222
  %v2175 = vpack.c.b16 %v1231, %v1223
  %v2176 = vpack.c.b16 %v1232, %v1224
  %v2177 = vpack.c.b16 %v1233, %v1225
  %v2178 = vpack.c.b16 %v1242, %v1234
  %v2179 = vpack.c.b16 %v1243, %v1235
  %v2180 = vpack.c.b16 %v1244, %v1236
  %v2181 = vpack.c.b16 %v1245, %v1237
  %v2182 = vpack.c.b16 %v1246, %v1238
  %v2183 = vpack.c.b16 %v1247, %v1239
  %v2184 = vpack.c.b16 %v1248, %v1240
  %v2185 = vpack.c.b16 %v1249, %v1241
  %v2186 = vpack.c.b16 %v1258, %v1250
  %v2187 = vpack.c.b16 %v1259, %v1251
  %v2188 = vpack.c.b16 %v1260, %v1252
  %v2189 = vpack.c.b16 %v1261, %v1253
  %v2190 = vpack.c.b16 %v1262, %v1254
  %v2191 = vpack.c.b16 %v1263, %v1255
  %v2192 = vpack.c.b16 %v1264, %v1256
  %v2193 = vpack.c.b16 %v1265, %v1257
  %v2194 = vpack.c.b16 %v1274, %v1266
  %v2195 = vpack.c.b16 %v1275, %v1267
  %v2196 = vpack.c.b16 %v1276, %v1268
  %v2197 = vpack.c.b16 %v1277, %v1269
  %v2198 = vpack.c.b16 %v1278, %v1270
  %v2199 = vpack.c.b16 %v1279, %v1271
  %v2200 = vpack.c.b16 %v1280, %v1272
  %v2201 = vpack.c.b16 %v1281, %v1273
  %v2202 = vpack.c.b16 %v1290, %v1282
  %v2203 = vpack.c.b16 %v1291, %v1283
  %v2204 = vpack.c.b16 %v1292, %v1284
  %v2205 = vpack.c.b16 %v1293, %v1285
  %v2206 = vpack.c.b16 %v1294, %v1286
  %v2207 = vpack.c.b16 %v1295, %v1287
  %v2208 = vpack.c.b16 %v1296, %v1288
  %v2209 = vpack.c.b16 %v1297, %v1289
  %v2210 = vpack.c.b16 %v1306, %v1298
  %v2211 = vpack.c.b16 %v1307, %v1299
  %v2212 = vpack.c.b16 %v1308, %v1300
  %v2213 = vpack.c.b16 %v1309, %v1301
  %v2214 = vpack.c.b16 %v1310, %v1302
  %v2215 = vpack.c.b16 %v1311, %v1303
  %v2216 = vpack.c.b16 %v1312, %v1304
  %v2217 = vpack.c.b16 %v1313, %v1305
  %v2218 = vpack.c.b16 %v1322, %v1314
  %v2219 = vpack.c.b16 %v1323, %v1315
  %v2220 = vpack.c.b16 %v1324, %v1316
  %v2221 = vpack.c.b16 %v1325, %v1317
  %v2222 = vpack.c.b16 %v1326, %v1318
  %v2223 = vpack.c.b16 %v1327, %v1319
  %v2224 = vpack.c.b16 %v1328, %v1320
  %v2225 = vpack.c.b16 %v1329, %v1321
  %v2226 = vpack.c.b16 %v1338, %v1330
  %v2227 = vpack.c.b16 %v1339, %v1331
  %v2228 = vpack.c.b16 %v1340, %v1332
  %v2229 = vpack.c.b16 %v1341, %v1333
  %v2230 = vpack.c.b16 %v1342, %v1334
  %v2231 = vpack.c.b16 %v1343, %v1335
  %v2232 = vpack.c.b16 %v1344, %v1336
  %v2233 = vpack.c.b16 %v1345, %v1337
  %v2234 = vpack.c.b16 %v1354, %v1346
  %v2235 = vpack.c.b16 %v1355, %v1347
  %v2236 = vpack.c.b16 %v1356, %v1348
  %v2237 = vpack.c.b16 %v1357, %v1349
  %v2238 = vpack.c.b16 %v1358, %v1350
  %v2239 = vpack.c.b16 %v1359, %v1351
  %v2240 = vpack.c.b16 %v1360, %v1352
  %v2241 = vpack.c.b16 %v1361, %v1353
  %v2242 = vpack.c.b16 %v1370, %v1362
  %v2243 = vpack.c.b16 %v1371, %v1363
  %v2244 = vpack.c.b16 %v1372, %v1364
  %v2245 = vpack.c.b16 %v1373, %v1365
  %v2246 = vpack.c.b16 %v1374, %v1366
  %v2247 = vpack.c.b16 %v1375, %v1367
  %v2248 = vpack.c.b16 %v1376, %v1368
  %v2249 = vpack.c.b16 %v1377, %v1369
  %v2250 = vpack.c.b16 %v1386, %v1378
  %v2251 = vpack.c.b16 %v1387, %v1379
  %v2252 = vpack.c.b16 %v1388, %v1380
  %v2253 = vpack.c.b16 %v1389, %v1381
  %v2254 = vpack.c.b16 %v1390, %v1382
  %v2255 = vpack.c.b16 %v1391, %v1383
  %v2256 = vpack.c.b16 %v1392, %v1384
  %v2257 = vpack.c.b16 %v1393, %v1385
  %v2258 = vpack.c.b16 %v1402, %v1394
  %v2259 = vpack.c.b16 %v1403, %v1395
  %v2260 = vpack.c.b16 %v1404, %v1396
  %v2261 = vpack.c.b16 %v1405, %v1397
  %v2262 = vpack.c.b16 %v1406, %v1398
  %v2263 = vpack.c.b16 %v1407, %v1399
  %v2264 = vpack.c.b16 %v1408, %v1400
  %v2265 = vpack.c.b16 %v1409, %v1401
  %v2266 = vpack.c.b16 %v1418, %v1410
  %v2267 = vpack.c.b16 %v1419, %v1411
  %v2268 = vpack.c.b16 %v1420, %v1412
  %v2269 = vpack.c.b16 %v1421, %v1413
  %v2270 = vpack.c.b16 %v1422, %v1414
  %v2271 = vpack.c.b16 %v1423, %v1415
  %v2272 = vpack.c.b16 %v1424, %v1416
  %v2273 = vpack.c.b16 %v1425, %v1417
  %v2274 = vpack.c.b16 %v1434, %v1426
  %v2275 = vpack.c.b16 %v1435, %v1427
  %v2276 = vpack.c.b16 %v1436, %v1428
  %v2277 = vpack.c.b16 %v1437, %v1429
  %v2278 = vpack.c.b16 %v1438, %v1430
  %v2279 = vpack.c.b16 %v1439, %v1431
  %v2280 = vpack.c.b16 %v1440, %v1432
  %v2281 = vpack.c.b16 %v1441, %v1433
  %v2282 = vpack.c.b16 %v1450, %v1442
  %v2283 = vpack.c.b16 %v1451, %v1443
  %v2284 = vpack.c.b16 %v1452, %v1444
  %v2285 = vpack.c.b16 %v1453, %v1445
  %v2286 = vpack.c.b16 %v1454, %v1446
  %v2287 = vpack.c.b16 %v1455, %v1447
  %v2288 = vpack.c.b16 %v1456, %v1448
  %v2289 = vpack.c.b16 %v1457, %v1449
  %v2290 = vpack.c.b16 %v1466, %v1458
  %v2291 = vpack.c.b16 %v1467, %v1459
  %v2292 = vpack.c.b16 %v1468, %v1460
  %v2293 = vpack.c.b16 %v1469, %v1461
  %v2294 = vpack.c.b16 %v1470, %v1462
  %v2295 = vpack.c.b16 %v1471, %v1463
  %v2296 = vpack.c.b16 %v1472, %v1464
  %v2297 = vpack.c.b16 %v1473, %v1465
  %v2298 = vpack.c.b16 %v1482, %v1474
  %v2299 = vpack.c.b16 %v1483, %v1475
  %v2300 = vpack.c.b16 %v1484, %v1476
  %v2301 = vpack.c.b16 %v1485, %v1477
  %v2302 = vpack.c.b16 %v1486, %v1478
  %v2303 = vpack.c.b16 %v1487, %v1479
  %v2304 = vpack.c.b16 %v1488, %v1480
  %v2305 = vpack.c.b16 %v1489, %v1481
  %v2306 = vpack.c.b16 %v1498, %v1490
  %v2307 = vpack.c.b16 %v1499, %v1491
  %v2308 = vpack.c.b16 %v1500, %v1492
  %v2309 = vpack.c.b16 %v1501, %v1493
  %v2310 = vpack.c.b16 %v1502, %v1494
  %v2311 = vpack.c.b16 %v1503, %v1495
  %v2312 = vpack.c.b16 %v1504, %v1496
  %v2313 = vpack.c.b16 %v1505, %v1497
  %v2314 = vpack.c.b16 %v1514, %v1506
  %v2315 = vpack.c.b16 %v1515, %v1507
  %v2316 = vpack.c.b16 %v1516, %v1508
  %v2317 = vpack.c.b16 %v1517, %v1509
  %v2318 = vpack.c.b16 %v1518, %v1510
  %v2319 = vpack.c.b16 %v1519, %v1511
  %v2320 = vpack.c.b16 %v1520, %v1512
  %v2321 = vpack.c.b16 %v1521, %v1513
  %v2322 = vpack.c.b16 %v1530, %v1522
  %v2323 = vpack.c.b16 %v1531, %v1523
  %v2324 = vpack.c.b16 %v1532, %v1524
  %v2325 = vpack.c.b16 %v1533, %v1525
  %v2326 = vpack.c.b16 %v1534, %v1526
  %v2327 = vpack.c.b16 %v1535, %v1527
  %v2328 = vpack.c.b16 %v1536, %v1528
  %v2329 = vpack.c.b16 %v1537, %v1529
  %v2330 = vpack.c.b16 %v1546, %v1538
  %v2331 = vpack.c.b16 %v1547, %v1539
  %v2332 = vpack.c.b16 %v1548, %v1540
  %v2333 = vpack.c.b16 %v1549, %v1541
  %v2334 = vpack.c.b16 %v1550, %v1542
  %v2335 = vpack.c.b16 %v1551, %v1543
  %v2336 = vpack.c.b16 %v1552, %v1544
  %v2337 = vpack.c.b16 %v1553, %v1545
  %v2338 = vpack.c.b16 %v1562, %v1554
  %v2339 = vpack.c.b16 %v1563, %v1555
  %v2340 = vpack.c.b16 %v1564, %v1556
  %v2341 = vpack.c.b16 %v1565, %v1557
  %v2342 = vpack.c.b16 %v1566, %v1558
  %v2343 = vpack.c.b16 %v1567, %v1559
  %v2344 = vpack.c.b16 %v1568, %v1560
  %v2345 = vpack.c.b16 %v1569, %v1561
  %v2346 = vpack.c.b16 %v1578, %v1570
  %v2347 = vpack.c.b16 %v1579, %v1571
  %v2348 = vpack.c.b16 %v1580, %v1572
  %v2349 = vpack.c.b16 %v1581, %v1573
  %v2350 = vpack.c.b16 %v1582, %v1574
  %v2351 = vpack.c.b16 %v1583, %v1575
  %v2352 = vpack.c.b16 %v1584, %v1576
  %v2353 = vpack.c.b16 %v1585, %v1577
  %v2354 = vpack.c.b16 %v1594, %v1586
  %v2355 = vpack.c.b16 %v1595, %v1587
  %v2356 = vpack.c.b16 %v1596, %v1588
  %v2357 = vpack.c.b16 %v1597, %v1589
  %v2358 = vpack.c.b16 %v1598, %v1590
  %v2359 = vpack.c.b16 %v1599, %v1591
  %v2360 = vpack.c.b16 %v1600, %v1592
  %v2361 = vpack.c.b16 %v1601, %v1593
  %v2362 = vpack.c.b16 %v1610, %v1602
  %v2363 = vpack.c.b16 %v1611, %v1603
  %v2364 = vpack.c.b16 %v1612, %v1604
  %v2365 = vpack.c.b16 %v1613, %v1605
  %v2366 = vpack.c.b16 %v1614, %v1606
  %v2367 = vpack.c.b16 %v1615, %v1607
  %v2368 = vpack.c.b16 %v1616, %v1608
  %v2369 = vpack.c.b16 %v1617, %v1609
  %v2370 = vpack.c.b16 %v1626, %v1618
  %v2371 = vpack.c.b16 %v1627, %v1619
  %v2372 = vpack.c.b16 %v1628, %v1620
  %v2373 = vpack.c.b16 %v1629, %v1621
  %v2374 = vpack.c.b16 %v1630, %v1622
  %v2375 = vpack.c.b16 %v1631, %v1623
  %v2376 = vpack.c.b16 %v1632, %v1624
  %v2377 = vpack.c.b16 %v1633, %v1625
  %v2378 = vpack.c.b16 %v1642, %v1634
  %v2379 = vpack.c.b16 %v1643, %v1635
  %v2380 = vpack.c.b16 %v1644, %v1636
  %v2381 = vpack.c.b16 %v1645, %v1637
  %v2382 = vpack.c.b16 %v1646, %v1638
  %v2383 = vpack.c.b16 %v1647, %v1639
  %v2384 = vpack.c.b16 %v1648, %v1640
  %v2385 = vpack.c.b16 %v1649, %v1641
  %v2386 = vpack.c.b16 %v1658, %v1650
  %v2387 = vpack.c.b16 %v1659, %v1651
  %v2388 = vpack.c.b16 %v1660, %v1652
  %v2389 = vpack.c.b16 %v1661, %v1653
  %v2390 = vpack.c.b16 %v1662, %v1654
  %v2391 = vpack.c.b16 %v1663, %v1655
  %v2392 = vpack.c.b16 %v1664, %v1656
  %v2393 = vpack.c.b16 %v1665, %v1657
  %v2394 = vpack.c.b16 %v1674, %v1666
  %v2395 = vpack.c.b16 %v1675, %v1667
  %v2396 = vpack.c.b16 %v1676, %v1668
  %v2397 = vpack.c.b16 %v1677, %v1669
  %v2398 = vpack.c.b16 %v1678, %v1670
  %v2399 = vpack.c.b16 %v1679, %v1671
  %v2400 = vpack.c.b16 %v1680, %v1672
  %v2401 = vpack.c.b16 %v1681, %v1673
  %v2402 = vpack.c.b16 %v1690, %v1682
  %v2403 = vpack.c.b16 %v1691, %v1683
  %v2404 = vpack.c.b16 %v1692, %v1684
  %v2405 = vpack.c.b16 %v1693, %v1685
  %v2406 = vpack.c.b16 %v1694, %v1686
  %v2407 = vpack.c.b16 %v1695, %v1687
  %v2408 = vpack.c.b16 %v1696, %v1688
  %v2409 = vpack.c.b16 %v1697, %v1689
  %v2410 = vpack.c.b16 %v1706, %v1698
  %v2411 = vpack.c.b16 %v1707, %v1699
  %v2412 = vpack.c.b16 %v1708, %v1700
  %v2413 = vpack.c.b16 %v1709, %v1701
  %v2414 = vpack.c.b16 %v1710, %v1702
  %v2415 = vpack.c.b16 %v1711, %v1703
  %v2416 = vpack.c.b16 %v1712, %v1704
  %v2417 = vpack.c.b16 %v1713, %v1705
  %v2418 = vpack.c.b16 %v1722, %v1714
  %v2419 = vpack.c.b16 %v1723, %v1715
  %v2420 = vpack.c.b16 %v1724, %v1716
  %v2421 = vpack.c.b16 %v1725, %v1717
  %v2422 = vpack.c.b16 %v1726, %v1718
  %v2423 = vpack.c.b16 %v1727, %v1719
  %v2424 = vpack.c.b16 %v1728, %v1720
  %v2425 = vpack.c.b16 %v1729, %v1721
  %v2426 = vpack.c.b16 %v1738, %v1730
  %v2427 = vpack.c.b16 %v1739, %v1731
  %v2428 = vpack.c.b16 %v1740, %v1732
  %v2429 = vpack.c.b16 %v1741, %v1733
  %v2430 = vpack.c.b16 %v1742, %v1734
  %v2431 = vpack.c.b16 %v1743, %v1735
  %v2432 = vpack.c.b16 %v1744, %v1736
  %v2433 = vpack.c.b16 %v1745, %v1737
  %v2434 = vpack.c.b16 %v1754, %v1746
  %v2435 = vpack.c.b16 %v1755, %v1747
  %v2436 = vpack.c.b16 %v1756, %v1748
  %v2437 = vpack.c.b16 %v1757, %v1749
  %v2438 = vpack.c.b16 %v1758, %v1750
  %v2439 = vpack.c.b16 %v1759, %v1751
  %v2440 = vpack.c.b16 %v1760, %v1752
  %v2441 = vpack.c.b16 %v1761, %v1753
  %v2442 = vpack.c.b16 %v1770, %v1762
  %v2443 = vpack.c.b16 %v1771, %v1763
  %v2444 = vpack.c.b16 %v1772, %v1764
  %v2445 = vpack.c.b16 %v1773, %v1765
  %v2446 = vpack.c.b16 %v1774, %v1766
  %v2447 = vpack.c.b16 %v1775, %v1767
  %v2448 = vpack.c.b16 %v1776, %v1768
  %v2449 = vpack.c.b16 %v1777, %v1769
  %v2450 = vpack.c.b16 %v1786, %v1778
  %v2451 = vpack.c.b16 %v1787, %v1779
  %v2452 = vpack.c.b16 %v1788, %v1780
  %v2453 = vpack.c.b16 %v1789, %v1781
  %v2454 = vpack.c.b16 %v1790, %v1782
  %v2455 = vpack.c.b16 %v1791, %v1783
  %v2456 = vpack.c.b16 %v1792, %v1784
  %v2457 = vpack.c.b16 %v1793, %v1785
  %v2458 = vpack.c.b16 %v1802, %v1794
  %v2459 = vpack.c.b16 %v1803, %v1795
  %v2460 = vpack.c.b16 %v1804, %v1796
  %v2461 = vpack.c.b16 %v1805, %v1797
  %v2462 = vpack.c.b16 %v1806, %v1798
  %v2463 = vpack.c.b16 %v1807, %v1799
  %v2464 = vpack.c.b16 %v1808, %v1800
  %v2465 = vpack.c.b16 %v1809, %v1801
  %v2466 = vpack.c.b16 %v1818, %v1810
  %v2467 = vpack.c.b16 %v1819, %v1811
  %v2468 = vpack.c.b16 %v1820, %v1812
  %v2469 = vpack.c.b16 %v1821, %v1813
  %v2470 = vpack.c.b16 %v1822, %v1814
  %v2471 = vpack.c.b16 %v1823, %v1815
  %v2472 = vpack.c.b16 %v1824, %v1816
  %v2473 = vpack.c.b16 %v1825, %v1817
  %v2474 = vpack.c.b16 %v1834, %v1826
  %v2475 = vpack.c.b16 %v1835, %v1827
  %v2476 = vpack.c.b16 %v1836, %v1828
  %v2477 = vpack.c.b16 %v1837, %v1829
  %v2478 = vpack.c.b16 %v1838, %v1830
  %v2479 = vpack.c.b16 %v1839, %v1831
  %v2480 = vpack.c.b16 %v1840, %v1832
  %v2481 = vpack.c.b16 %v1841, %v1833
  %v2482 = vpack.c.b16 %v1850, %v1842
  %v2483 = vpack.c.b16 %v1851, %v1843
  %v2484 = vpack.c.b16 %v1852, %v1844
  %v2485 = vpack.c.b16 %v1853, %v1845
  %v2486 = vpack.c.b16 %v1854, %v1846
  %v2487 = vpack.c.b16 %v1855, %v1847
  %v2488 = vpack.c.b16 %v1856, %v1848
  %v2489 = vpack.c.b16 %v1857, %v1849
  %v2490 = vpack.c.b16 %v1866, %v1858
  %v2491 = vpack.c.b16 %v1867, %v1859
  %v2492 = vpack.c.b16 %v1868, %v1860
  %v2493 = vpack.c.b16 %v1869, %v1861
  %v2494 = vpack.c.b16 %v1870, %v1862
  %v2495 = vpack.c.b16 %v1871, %v1863
  %v2496 = vpack.c.b16 %v1872, %v1864
  %v2497 = vpack.c.b16 %v1873, %v1865
  %v2498 = vpack.c.b16 %v1882, %v1874
  %v2499 = vpack.c.b16 %v1883, %v1875
  %v2500 = vpack.c.b16 %v1884, %v1876
  %v2501 = vpack.c.b16 %v1885, %v1877
  %v2502 = vpack.c.b16 %v1886, %v1878
  %v2503 = vpack.c.b16 %v1887, %v1879
  %v2504 = vpack.c.b16 %v1888, %v1880
  %v2505 = vpack.c.b16 %v1889, %v1881
  %v2506 = vpack.c.b16 %v1898, %v1890
  %v2507 = vpack.c.b16 %v1899, %v1891
  %v2508 = vpack.c.b16 %v1900, %v1892
  %v2509 = vpack.c.b16 %v1901, %v1893
  %v2510 = vpack.c.b16 %v1902, %v1894
  %v2511 = vpack.c.b16 %v1903, %v1895
  %v2512 = vpack.c.b16 %v1904, %v1896
  %v2513 = vpack.c.b16 %v1905, %v1897
  %v2514 = vpack.c.b16 %v1914, %v1906
  %v2515 = vpack.c.b16 %v1915, %v1907
  %v2516 = vpack.c.b16 %v1916, %v1908
  %v2517 = vpack.c.b16 %v1917, %v1909
  %v2518 = vpack.c.b16 %v1918, %v1910
  %v2519 = vpack.c.b16 %v1919, %v1911
  %v2520 = vpack.c.b16 %v1920, %v1912
  %v2521 = vpack.c.b16 %v1921, %v1913
  %v2522 = vpack.c.b16 %v1930, %v1922
  %v2523 = vpack.c.b16 %v1931, %v1923
  %v2524 = vpack.c.b16 %v1932, %v1924
  %v2525 = vpack.c.b16 %v1933, %v1925
  %v2526 = vpack.c.b16 %v1934, %v1926
  %v2527 = vpack.c.b16 %v1935, %v1927
  %v2528 = vpack.c.b16 %v1936, %v1928
  %v2529 = vpack.c.b16 %v1937, %v1929
  %v2530 = vpack.c.b16 %v1946, %v1938
  %v2531 = vpack.c.b16 %v1947, %v1939
  %v2532 = vpack.c.b16 %v1948, %v1940
  %v2533 = vpack.c.b16 %v1949, %v1941
  %v2534 = vpack.c.b16 %v1950, %v1942
  %v2535 = vpack.c.b16 %v1951, %v1943
  %v2536 = vpack.c.b16 %v1952, %v1944
  %v2537 = vpack.c.b16 %v1953, %v1945
  %v2538 = vpack.c.b16 %v1962, %v1954
  %v2539 = vpack.c.b16 %v1963, %v1955
  %v2540 = vpack.c.b16 %v1964, %v1956
  %v2541 = vpack.c.b16 %v1965, %v1957
  %v2542 = vpack.c.b16 %v1966, %v1958
  %v2543 = vpack.c.b16 %v1967, %v1959
  %v2544 = vpack.c.b16 %v1968, %v1960
  %v2545 = vpack.c.b16 %v1969, %v1961
  %v2546 = vpack.c.b16 %v1978, %v1970
  %v2547 = vpack.c.b16 %v1979, %v1971
  %v2548 = vpack.c.b16 %v1980, %v1972
  %v2549 = vpack.c.b16 %v1981, %v1973
  %v2550 = vpack.c.b16 %v1982, %v1974
  %v2551 = vpack.c.b16 %v1983, %v1975
  %v2552 = vpack.c.b16 %v1984, %v1976
  %v2553 = vpack.c.b16 %v1985, %v1977
  %v2554 = vpack.c.b16 %v1994, %v1986
  %v2555 = vpack.c.b16 %v1995, %v1987
  %v2556 = vpack.c.b16 %v1996, %v1988
  %v2557 = vpack.c.b16 %v1997, %v1989
  %v2558 = vpack.c.b16 %v1998, %v1990
  %v2559 = vpack.c.b16 %v1999, %v1991
  %v2560 = vpack.c.b16 %v2000, %v1992
  %v2561 = vpack.c.b16 %v2001, %v1993
  %v2562 = vpack.c.b16 %v2010, %v2002
  %v2563 = vpack.c.b16 %v2011, %v2003
  %v2564 = vpack.c.b16 %v2012, %v2004
  %v2565 = vpack.c.b16 %v2013, %v2005
  %v2566 = vpack.c.b16 %v2014, %v2006
  %v2567 = vpack.c.b16 %v2015, %v2007
  %v2568 = vpack.c.b16 %v2016, %v2008
  %v2569 = vpack.c.b16 %v2017, %v2009
  %v2570 = vpack.c.b16 %v2026, %v2018
  %v2571 = vpack.c.b16 %v2027, %v2019
  %v2572 = vpack.c.b16 %v2028, %v2020
  %v2573 = vpack.c.b16 %v2029, %v2021
  %v2574 = vpack.c.b16 %v2030, %v2022
  %v2575 = vpack.c.b16 %v2031, %v2023
  %v2576 = vpack.c.b16 %v2032, %v2024
  %v2577 = vpack.c.b16 %v2033, %v2025
  %v2578 = vpack.c.b16 %v2042, %v2034
  %v2579 = vpack.c.b16 %v2043, %v2035
  %v2580 = vpack.c.b16 %v2044, %v2036
  %v2581 = vpack.c.b16 %v2045, %v2037
  %v2582 = vpack.c.b16 %v2046, %v2038
  %v2583 = vpack.c.b16 %v2047, %v2039
  %v2584 = vpack.c.b16 %v2048, %v2040
  %v2585 = vpack.c.b16 %v2049, %v2041
  %v2586 = vpack.c.b16 %v2058, %v2050
  %v2587 = vpack.c.b16 %v2059, %v2051
  %v2588 = vpack.c.b16 %v2060, %v2052
  %v2589 = vpack.c.b16 %v2061, %v2053
  %v2590 = vpack.c.b16 %v2062, %v2054
  %v2591 = vpack.c.b16 %v2063, %v2055
  %v2592 = vpack.c.b16 %v2064, %v2056
  %v2593 = vpack.c.b16 %v2065, %v2057
  %v2594 = vpack.c.b16 %v2074, %v2066
  %v2595 = vpack.c.b16 %v2075, %v2067
  %v2596 = vpack.c.b16 %v2076, %v2068
  %v2597 = vpack.c.b16 %v2077, %v2069
  %v2598 = vpack.c.b16 %v2078, %v2070
  %v2599 = vpack.c.b16 %v2079, %v2071
  %v2600 = vpack.c.b16 %v2080, %v2072
  %v2601 = vpack.c.b16 %v2081, %v2073
  %v2602 = vpack.c.b16 %v2090, %v2082
  %v2603 = vpack.c.b16 %v2091, %v2083
  %v2604 = vpack.c.b16 %v2092, %v2084
  %v2605 = vpack.c.b16 %v2093, %v2085
  %v2606 = vpack.c.b16 %v2094, %v2086
  %v2607 = vpack.c.b16 %v2095, %v2087
  %v2608 = vpack.c.b16 %v2096, %v2088
  %v2609 = vpack.c.b16 %v2097, %v2089
  %3122 = vmatprep.subr.bf16.mxu0 %v2155
  %3123 = vmatpush1.bf16.msra.mxu0 %v2154
  %3124 = vmatprep.subr.bf16.mxu0 %v2147
  %3125 = vmatpush1.bf16.msra.mxu0 %v2146
  %3126 = vmatprep.subr.bf16.mxu0 %v2139
  %3127 = vmatpush1.bf16.msra.mxu0 %v2138
  %3128 = vmatprep.subr.bf16.mxu0 %v2131
  %3129 = vmatpush1.bf16.msra.mxu0 %v2130
  %3130 = vmatprep.subr.bf16.mxu0 %v2123
  %3131 = vmatpush1.bf16.msra.mxu0 %v2122
  %3132 = vmatprep.subr.bf16.mxu0 %v2115
  %3133 = vmatpush1.bf16.msra.mxu0 %v2114
  %3134 = vmatprep.subr.bf16.mxu0 %v2107
  %3135 = vmatpush1.bf16.msra.mxu0 %v2106
  %3136 = vmatprep.subr.bf16.mxu0 %v2099
  %3137 = vmatpush1.bf16.msra.mxu0 %v2098
  %3138 = vmatprep.subr.bf16.mxu0 %v2219
  %3139 = vmatpush2.bf16.msra.mxu0 %v2218
  %3140 = vmatprep.subr.bf16.mxu0 %v2211
  %3141 = vmatpush2.bf16.msra.mxu0 %v2210
  %3142 = vmatprep.subr.bf16.mxu0 %v2203
  %3143 = vmatpush2.bf16.msra.mxu0 %v2202
  %3144 = vmatprep.subr.bf16.mxu0 %v2195
  %3145 = vmatpush2.bf16.msra.mxu0 %v2194
  %3146 = vmatprep.subr.bf16.mxu0 %v2187
  %3147 = vmatpush2.bf16.msra.mxu0 %v2186
  %3148 = vmatprep.subr.bf16.mxu0 %v2179
  %3149 = vmatpush2.bf16.msra.mxu0 %v2178
  %3150 = vmatprep.subr.bf16.mxu0 %v2171
  %3151 = vmatpush2.bf16.msra.mxu0 %v2170
  %3152 = vmatprep.subr.bf16.mxu0 %v2163
  %3153 = vmatpush2.bf16.msra.mxu0 %v2162
  %3154 = vmatprep.mubr.bf16.mxu0 %v43
  %3155 = vmatmul.mubr.bf16.gmra.mxu0 %v42
  %v3156 = vpop.f32.mrf.mxu0
  %v3157 = vadd.f32 0.0, %v3156
  %v3158 = vpop.f32.mrf.mxu0
  %v3159 = vadd.f32 0.0, %v3158
  %v3160 = vpop.f32.mrf.mxu0
  %v3161 = vpop.f32.mrf.mxu0
  %3162 = vdwg.mxu0
  %3163 = vmatprep.subr.bf16.mxu0 %v2283
  %3164 = vmatpush1.bf16.msra.mxu0 %v2282
  %3165 = vmatprep.subr.bf16.mxu0 %v2275
  %3166 = vmatpush1.bf16.msra.mxu0 %v2274
  %3167 = vmatprep.subr.bf16.mxu0 %v2267
  %3168 = vmatpush1.bf16.msra.mxu0 %v2266
  %3169 = vmatprep.subr.bf16.mxu0 %v2259
  %3170 = vmatpush1.bf16.msra.mxu0 %v2258
  %3171 = vmatprep.subr.bf16.mxu0 %v2251
  %3172 = vmatpush1.bf16.msra.mxu0 %v2250
  %3173 = vmatprep.subr.bf16.mxu0 %v2243
  %3174 = vmatpush1.bf16.msra.mxu0 %v2242
  %3175 = vmatprep.subr.bf16.mxu0 %v2235
  %3176 = vmatpush1.bf16.msra.mxu0 %v2234
  %3177 = vmatprep.subr.bf16.mxu0 %v2227
  %3178 = vmatpush1.bf16.msra.mxu0 %v2226
  %3179 = vmatprep.subr.bf16.mxu0 %v2347
  %3180 = vmatpush2.bf16.msra.mxu0 %v2346
  %3181 = vmatprep.subr.bf16.mxu0 %v2339
  %3182 = vmatpush2.bf16.msra.mxu0 %v2338
  %3183 = vmatprep.subr.bf16.mxu0 %v2331
  %3184 = vmatpush2.bf16.msra.mxu0 %v2330
  %3185 = vmatprep.subr.bf16.mxu0 %v2323
  %3186 = vmatpush2.bf16.msra.mxu0 %v2322
  %3187 = vmatprep.subr.bf16.mxu0 %v2315
  %3188 = vmatpush2.bf16.msra.mxu0 %v2314
  %3189 = vmatprep.subr.bf16.mxu0 %v2307
  %3190 = vmatpush2.bf16.msra.mxu0 %v2306
  %3191 = vmatprep.subr.bf16.mxu0 %v2299
  %3192 = vmatpush2.bf16.msra.mxu0 %v2298
  %3193 = vmatprep.subr.bf16.mxu0 %v2291
  %3194 = vmatpush2.bf16.msra.mxu0 %v2290
  %3195 = vmatprep.mubr.bf16.mxu0 %v45
  %3196 = vmatmul.mubr.bf16.gmra.mxu0 %v44
  %v3197 = vpop.f32.mrf.mxu0
  %v3198 = vadd.f32 %v3157, %v3197
  %v3199 = vpop.f32.mrf.mxu0
  %v3200 = vadd.f32 %v3159, %v3199
  %v3201 = vpop.f32.mrf.mxu0
  %v3202 = vpop.f32.mrf.mxu0
  %3203 = vdwg.mxu0
  %3204 = vmatprep.subr.bf16.mxu0 %v2411
  %3205 = vmatpush1.bf16.msra.mxu0 %v2410
  %3206 = vmatprep.subr.bf16.mxu0 %v2403
  %3207 = vmatpush1.bf16.msra.mxu0 %v2402
  %3208 = vmatprep.subr.bf16.mxu0 %v2395
  %3209 = vmatpush1.bf16.msra.mxu0 %v2394
  %3210 = vmatprep.subr.bf16.mxu0 %v2387
  %3211 = vmatpush1.bf16.msra.mxu0 %v2386
  %3212 = vmatprep.subr.bf16.mxu0 %v2379
  %3213 = vmatpush1.bf16.msra.mxu0 %v2378
  %3214 = vmatprep.subr.bf16.mxu0 %v2371
  %3215 = vmatpush1.bf16.msra.mxu0 %v2370
  %3216 = vmatprep.subr.bf16.mxu0 %v2363
  %3217 = vmatpush1.bf16.msra.mxu0 %v2362
  %3218 = vmatprep.subr.bf16.mxu0 %v2355
  %3219 = vmatpush1.bf16.msra.mxu0 %v2354
  %3220 = vmatprep.subr.bf16.mxu0 %v2475
  %3221 = vmatpush2.bf16.msra.mxu0 %v2474
  %3222 = vmatprep.subr.bf16.mxu0 %v2467
  %3223 = vmatpush2.bf16.msra.mxu0 %v2466
  %3224 = vmatprep.subr.bf16.mxu0 %v2459
  %3225 = vmatpush2.bf16.msra.mxu0 %v2458
  %3226 = vmatprep.subr.bf16.mxu0 %v2451
  %3227 = vmatpush2.bf16.msra.mxu0 %v2450
  %3228 = vmatprep.subr.bf16.mxu0 %v2443
  %3229 = vmatpush2.bf16.msra.mxu0 %v2442
  %3230 = vmatprep.subr.bf16.mxu0 %v2435
  %3231 = vmatpush2.bf16.msra.mxu0 %v2434
  %3232 = vmatprep.subr.bf16.mxu0 %v2427
  %3233 = vmatpush2.bf16.msra.mxu0 %v2426
  %3234 = vmatprep.subr.bf16.mxu0 %v2419
  %3235 = vmatpush2.bf16.msra.mxu0 %v2418
  %3236 = vmatprep.mubr.bf16.mxu0 %v47
  %3237 = vmatmul.mubr.bf16.gmra.mxu0 %v46
  %v3238 = vpop.f32.mrf.mxu0
  %v3239 = vadd.f32 %v3198, %v3238
  %v3240 = vpop.f32.mrf.mxu0
  %v3241 = vadd.f32 %v3200, %v3240
  %v3242 = vpop.f32.mrf.mxu0
  %v3243 = vpop.f32.mrf.mxu0
  %3244 = vdwg.mxu0
  %3245 = vmatprep.subr.bf16.mxu0 %v2539
  %3246 = vmatpush1.bf16.msra.mxu0 %v2538
  %3247 = vmatprep.subr.bf16.mxu0 %v2531
  %3248 = vmatpush1.bf16.msra.mxu0 %v2530
  %3249 = vmatprep.subr.bf16.mxu0 %v2523
  %3250 = vmatpush1.bf16.msra.mxu0 %v2522
  %3251 = vmatprep.subr.bf16.mxu0 %v2515
  %3252 = vmatpush1.bf16.msra.mxu0 %v2514
  %3253 = vmatprep.subr.bf16.mxu0 %v2507
  %3254 = vmatpush1.bf16.msra.mxu0 %v2506
  %3255 = vmatprep.subr.bf16.mxu0 %v2499
  %3256 = vmatpush1.bf16.msra.mxu0 %v2498
  %3257 = vmatprep.subr.bf16.mxu0 %v2491
  %3258 = vmatpush1.bf16.msra.mxu0 %v2490
  %3259 = vmatprep.subr.bf16.mxu0 %v2483
  %3260 = vmatpush1.bf16.msra.mxu0 %v2482
  %3261 = vmatprep.subr.bf16.mxu0 %v2603
  %3262 = vmatpush2.bf16.msra.mxu0 %v2602
  %3263 = vmatprep.subr.bf16.mxu0 %v2595
  %3264 = vmatpush2.bf16.msra.mxu0 %v2594
  %3265 = vmatprep.subr.bf16.mxu0 %v2587
  %3266 = vmatpush2.bf16.msra.mxu0 %v2586
  %3267 = vmatprep.subr.bf16.mxu0 %v2579
  %3268 = vmatpush2.bf16.msra.mxu0 %v2578
  %3269 = vmatprep.subr.bf16.mxu0 %v2571
  %3270 = vmatpush2.bf16.msra.mxu0 %v2570
  %3271 = vmatprep.subr.bf16.mxu0 %v2563
  %3272 = vmatpush2.bf16.msra.mxu0 %v2562
  %3273 = vmatprep.subr.bf16.mxu0 %v2555
  %3274 = vmatpush2.bf16.msra.mxu0 %v2554
  %3275 = vmatprep.subr.bf16.mxu0 %v2547
  %3276 = vmatpush2.bf16.msra.mxu0 %v2546
  %3277 = vmatprep.mubr.bf16.mxu0 %v49
  %3278 = vmatmul.mubr.bf16.gmra.mxu0 %v48
  %v3279 = vpop.f32.mrf.mxu0
  %v3280 = vadd.f32 %v3239, %v3279
  %v3281 = vpop.f32.mrf.mxu0
  %v3282 = vadd.f32 %v3241, %v3281
  %v3283 = vpop.f32.mrf.mxu0
  %v3284 = vpop.f32.mrf.mxu0
  %3285 = vdwg.mxu0
  %3286 = vmatprep.subr.bf16.mxu0 %v2157
  %3287 = vmatpush1.bf16.msra.mxu0 %v2156
  %3288 = vmatprep.subr.bf16.mxu0 %v2149
  %3289 = vmatpush1.bf16.msra.mxu0 %v2148
  %3290 = vmatprep.subr.bf16.mxu0 %v2141
  %3291 = vmatpush1.bf16.msra.mxu0 %v2140
  %3292 = vmatprep.subr.bf16.mxu0 %v2133
  %3293 = vmatpush1.bf16.msra.mxu0 %v2132
  %3294 = vmatprep.subr.bf16.mxu0 %v2125
  %3295 = vmatpush1.bf16.msra.mxu0 %v2124
  %3296 = vmatprep.subr.bf16.mxu0 %v2117
  %3297 = vmatpush1.bf16.msra.mxu0 %v2116
  %3298 = vmatprep.subr.bf16.mxu0 %v2109
  %3299 = vmatpush1.bf16.msra.mxu0 %v2108
  %3300 = vmatprep.subr.bf16.mxu0 %v2101
  %3301 = vmatpush1.bf16.msra.mxu0 %v2100
  %3302 = vmatprep.subr.bf16.mxu0 %v2221
  %3303 = vmatpush2.bf16.msra.mxu0 %v2220
  %3304 = vmatprep.subr.bf16.mxu0 %v2213
  %3305 = vmatpush2.bf16.msra.mxu0 %v2212
  %3306 = vmatprep.subr.bf16.mxu0 %v2205
  %3307 = vmatpush2.bf16.msra.mxu0 %v2204
  %3308 = vmatprep.subr.bf16.mxu0 %v2197
  %3309 = vmatpush2.bf16.msra.mxu0 %v2196
  %3310 = vmatprep.subr.bf16.mxu0 %v2189
  %3311 = vmatpush2.bf16.msra.mxu0 %v2188
  %3312 = vmatprep.subr.bf16.mxu0 %v2181
  %3313 = vmatpush2.bf16.msra.mxu0 %v2180
  %3314 = vmatprep.subr.bf16.mxu0 %v2173
  %3315 = vmatpush2.bf16.msra.mxu0 %v2172
  %3316 = vmatprep.subr.bf16.mxu0 %v2165
  %3317 = vmatpush2.bf16.msra.mxu0 %v2164
  %3318 = vmatprep.mubr.bf16.mxu0 %v43
  %3319 = vmatmul.mubr.bf16.gmra.mxu0 %v42
  %v3320 = vpop.f32.mrf.mxu0
  %v3321 = vadd.f32 0.0, %v3320
  %v3322 = vpop.f32.mrf.mxu0
  %v3323 = vadd.f32 0.0, %v3322
  %v3324 = vpop.f32.mrf.mxu0
  %v3325 = vpop.f32.mrf.mxu0
  %3326 = vdwg.mxu0
  %3327 = vmatprep.subr.bf16.mxu0 %v2285
  %3328 = vmatpush1.bf16.msra.mxu0 %v2284
  %3329 = vmatprep.subr.bf16.mxu0 %v2277
  %3330 = vmatpush1.bf16.msra.mxu0 %v2276
  %3331 = vmatprep.subr.bf16.mxu0 %v2269
  %3332 = vmatpush1.bf16.msra.mxu0 %v2268
  %3333 = vmatprep.subr.bf16.mxu0 %v2261
  %3334 = vmatpush1.bf16.msra.mxu0 %v2260
  %3335 = vmatprep.subr.bf16.mxu0 %v2253
  %3336 = vmatpush1.bf16.msra.mxu0 %v2252
  %3337 = vmatprep.subr.bf16.mxu0 %v2245
  %3338 = vmatpush1.bf16.msra.mxu0 %v2244
  %3339 = vmatprep.subr.bf16.mxu0 %v2237
  %3340 = vmatpush1.bf16.msra.mxu0 %v2236
  %3341 = vmatprep.subr.bf16.mxu0 %v2229
  %3342 = vmatpush1.bf16.msra.mxu0 %v2228
  %3343 = vmatprep.subr.bf16.mxu0 %v2349
  %3344 = vmatpush2.bf16.msra.mxu0 %v2348
  %3345 = vmatprep.subr.bf16.mxu0 %v2341
  %3346 = vmatpush2.bf16.msra.mxu0 %v2340
  %3347 = vmatprep.subr.bf16.mxu0 %v2333
  %3348 = vmatpush2.bf16.msra.mxu0 %v2332
  %3349 = vmatprep.subr.bf16.mxu0 %v2325
  %3350 = vmatpush2.bf16.msra.mxu0 %v2324
  %3351 = vmatprep.subr.bf16.mxu0 %v2317
  %3352 = vmatpush2.bf16.msra.mxu0 %v2316
  %3353 = vmatprep.subr.bf16.mxu0 %v2309
  %3354 = vmatpush2.bf16.msra.mxu0 %v2308
  %3355 = vmatprep.subr.bf16.mxu0 %v2301
  %3356 = vmatpush2.bf16.msra.mxu0 %v2300
  %3357 = vmatprep.subr.bf16.mxu0 %v2293
  %3358 = vmatpush2.bf16.msra.mxu0 %v2292
  %3359 = vmatprep.mubr.bf16.mxu0 %v45
  %3360 = vmatmul.mubr.bf16.gmra.mxu0 %v44
  %v3361 = vpop.f32.mrf.mxu0
  %v3362 = vadd.f32 %v3321, %v3361
  %v3363 = vpop.f32.mrf.mxu0
  %v3364 = vadd.f32 %v3323, %v3363
  %v3365 = vpop.f32.mrf.mxu0
  %v3366 = vpop.f32.mrf.mxu0
  %3367 = vdwg.mxu0
  %3368 = vmatprep.subr.bf16.mxu0 %v2413
  %3369 = vmatpush1.bf16.msra.mxu0 %v2412
  %3370 = vmatprep.subr.bf16.mxu0 %v2405
  %3371 = vmatpush1.bf16.msra.mxu0 %v2404
  %3372 = vmatprep.subr.bf16.mxu0 %v2397
  %3373 = vmatpush1.bf16.msra.mxu0 %v2396
  %3374 = vmatprep.subr.bf16.mxu0 %v2389
  %3375 = vmatpush1.bf16.msra.mxu0 %v2388
  %3376 = vmatprep.subr.bf16.mxu0 %v2381
  %3377 = vmatpush1.bf16.msra.mxu0 %v2380
  %3378 = vmatprep.subr.bf16.mxu0 %v2373
  %3379 = vmatpush1.bf16.msra.mxu0 %v2372
  %3380 = vmatprep.subr.bf16.mxu0 %v2365
  %3381 = vmatpush1.bf16.msra.mxu0 %v2364
  %3382 = vmatprep.subr.bf16.mxu0 %v2357
  %3383 = vmatpush1.bf16.msra.mxu0 %v2356
  %3384 = vmatprep.subr.bf16.mxu0 %v2477
  %3385 = vmatpush2.bf16.msra.mxu0 %v2476
  %3386 = vmatprep.subr.bf16.mxu0 %v2469
  %3387 = vmatpush2.bf16.msra.mxu0 %v2468
  %3388 = vmatprep.subr.bf16.mxu0 %v2461
  %3389 = vmatpush2.bf16.msra.mxu0 %v2460
  %3390 = vmatprep.subr.bf16.mxu0 %v2453
  %3391 = vmatpush2.bf16.msra.mxu0 %v2452
  %3392 = vmatprep.subr.bf16.mxu0 %v2445
  %3393 = vmatpush2.bf16.msra.mxu0 %v2444
  %3394 = vmatprep.subr.bf16.mxu0 %v2437
  %3395 = vmatpush2.bf16.msra.mxu0 %v2436
  %3396 = vmatprep.subr.bf16.mxu0 %v2429
  %3397 = vmatpush2.bf16.msra.mxu0 %v2428
  %3398 = vmatprep.subr.bf16.mxu0 %v2421
  %3399 = vmatpush2.bf16.msra.mxu0 %v2420
  %3400 = vmatprep.mubr.bf16.mxu0 %v47
  %3401 = vmatmul.mubr.bf16.gmra.mxu0 %v46
  %v3402 = vpop.f32.mrf.mxu0
  %v3403 = vadd.f32 %v3362, %v3402
  %v3404 = vpop.f32.mrf.mxu0
  %v3405 = vadd.f32 %v3364, %v3404
  %v3406 = vpop.f32.mrf.mxu0
  %v3407 = vpop.f32.mrf.mxu0
  %3408 = vdwg.mxu0
  %3409 = vmatprep.subr.bf16.mxu0 %v2541
  %3410 = vmatpush1.bf16.msra.mxu0 %v2540
  %3411 = vmatprep.subr.bf16.mxu0 %v2533
  %3412 = vmatpush1.bf16.msra.mxu0 %v2532
  %3413 = vmatprep.subr.bf16.mxu0 %v2525
  %3414 = vmatpush1.bf16.msra.mxu0 %v2524
  %3415 = vmatprep.subr.bf16.mxu0 %v2517
  %3416 = vmatpush1.bf16.msra.mxu0 %v2516
  %3417 = vmatprep.subr.bf16.mxu0 %v2509
  %3418 = vmatpush1.bf16.msra.mxu0 %v2508
  %3419 = vmatprep.subr.bf16.mxu0 %v2501
  %3420 = vmatpush1.bf16.msra.mxu0 %v2500
  %3421 = vmatprep.subr.bf16.mxu0 %v2493
  %3422 = vmatpush1.bf16.msra.mxu0 %v2492
  %3423 = vmatprep.subr.bf16.mxu0 %v2485
  %3424 = vmatpush1.bf16.msra.mxu0 %v2484
  %3425 = vmatprep.subr.bf16.mxu0 %v2605
  %3426 = vmatpush2.bf16.msra.mxu0 %v2604
  %3427 = vmatprep.subr.bf16.mxu0 %v2597
  %3428 = vmatpush2.bf16.msra.mxu0 %v2596
  %3429 = vmatprep.subr.bf16.mxu0 %v2589
  %3430 = vmatpush2.bf16.msra.mxu0 %v2588
  %3431 = vmatprep.subr.bf16.mxu0 %v2581
  %3432 = vmatpush2.bf16.msra.mxu0 %v2580
  %3433 = vmatprep.subr.bf16.mxu0 %v2573
  %3434 = vmatpush2.bf16.msra.mxu0 %v2572
  %3435 = vmatprep.subr.bf16.mxu0 %v2565
  %3436 = vmatpush2.bf16.msra.mxu0 %v2564
  %3437 = vmatprep.subr.bf16.mxu0 %v2557
  %3438 = vmatpush2.bf16.msra.mxu0 %v2556
  %3439 = vmatprep.subr.bf16.mxu0 %v2549
  %3440 = vmatpush2.bf16.msra.mxu0 %v2548
  %3441 = vmatprep.mubr.bf16.mxu0 %v49
  %3442 = vmatmul.mubr.bf16.gmra.mxu0 %v48
  %v3443 = vpop.f32.mrf.mxu0
  %v3444 = vadd.f32 %v3403, %v3443
  %v3445 = vpop.f32.mrf.mxu0
  %v3446 = vadd.f32 %v3405, %v3445
  %v3447 = vpop.f32.mrf.mxu0
  %v3448 = vpop.f32.mrf.mxu0
  %3449 = vdwg.mxu0
  %3450 = vmatprep.subr.bf16.mxu0 %v2159
  %3451 = vmatpush1.bf16.msra.mxu0 %v2158
  %3452 = vmatprep.subr.bf16.mxu0 %v2151
  %3453 = vmatpush1.bf16.msra.mxu0 %v2150
  %3454 = vmatprep.subr.bf16.mxu0 %v2143
  %3455 = vmatpush1.bf16.msra.mxu0 %v2142
  %3456 = vmatprep.subr.bf16.mxu0 %v2135
  %3457 = vmatpush1.bf16.msra.mxu0 %v2134
  %3458 = vmatprep.subr.bf16.mxu0 %v2127
  %3459 = vmatpush1.bf16.msra.mxu0 %v2126
  %3460 = vmatprep.subr.bf16.mxu0 %v2119
  %3461 = vmatpush1.bf16.msra.mxu0 %v2118
  %3462 = vmatprep.subr.bf16.mxu0 %v2111
  %3463 = vmatpush1.bf16.msra.mxu0 %v2110
  %3464 = vmatprep.subr.bf16.mxu0 %v2103
  %3465 = vmatpush1.bf16.msra.mxu0 %v2102
  %3466 = vmatprep.subr.bf16.mxu0 %v2223
  %3467 = vmatpush2.bf16.msra.mxu0 %v2222
  %3468 = vmatprep.subr.bf16.mxu0 %v2215
  %3469 = vmatpush2.bf16.msra.mxu0 %v2214
  %3470 = vmatprep.subr.bf16.mxu0 %v2207
  %3471 = vmatpush2.bf16.msra.mxu0 %v2206
  %3472 = vmatprep.subr.bf16.mxu0 %v2199
  %3473 = vmatpush2.bf16.msra.mxu0 %v2198
  %3474 = vmatprep.subr.bf16.mxu0 %v2191
  %3475 = vmatpush2.bf16.msra.mxu0 %v2190
  %3476 = vmatprep.subr.bf16.mxu0 %v2183
  %3477 = vmatpush2.bf16.msra.mxu0 %v2182
  %3478 = vmatprep.subr.bf16.mxu0 %v2175
  %3479 = vmatpush2.bf16.msra.mxu0 %v2174
  %3480 = vmatprep.subr.bf16.mxu0 %v2167
  %3481 = vmatpush2.bf16.msra.mxu0 %v2166
  %3482 = vmatprep.mubr.bf16.mxu0 %v43
  %3483 = vmatmul.mubr.bf16.gmra.mxu0 %v42
  %v3484 = vpop.f32.mrf.mxu0
  %v3485 = vadd.f32 0.0, %v3484
  %v3486 = vpop.f32.mrf.mxu0
  %v3487 = vadd.f32 0.0, %v3486
  %v3488 = vpop.f32.mrf.mxu0
  %v3489 = vpop.f32.mrf.mxu0
  %3490 = vdwg.mxu0
  %3491 = vmatprep.subr.bf16.mxu0 %v2287
  %3492 = vmatpush1.bf16.msra.mxu0 %v2286
  %3493 = vmatprep.subr.bf16.mxu0 %v2279
  %3494 = vmatpush1.bf16.msra.mxu0 %v2278
  %3495 = vmatprep.subr.bf16.mxu0 %v2271
  %3496 = vmatpush1.bf16.msra.mxu0 %v2270
  %3497 = vmatprep.subr.bf16.mxu0 %v2263
  %3498 = vmatpush1.bf16.msra.mxu0 %v2262
  %3499 = vmatprep.subr.bf16.mxu0 %v2255
  %3500 = vmatpush1.bf16.msra.mxu0 %v2254
  %3501 = vmatprep.subr.bf16.mxu0 %v2247
  %3502 = vmatpush1.bf16.msra.mxu0 %v2246
  %3503 = vmatprep.subr.bf16.mxu0 %v2239
  %3504 = vmatpush1.bf16.msra.mxu0 %v2238
  %3505 = vmatprep.subr.bf16.mxu0 %v2231
  %3506 = vmatpush1.bf16.msra.mxu0 %v2230
  %3507 = vmatprep.subr.bf16.mxu0 %v2351
  %3508 = vmatpush2.bf16.msra.mxu0 %v2350
  %3509 = vmatprep.subr.bf16.mxu0 %v2343
  %3510 = vmatpush2.bf16.msra.mxu0 %v2342
  %3511 = vmatprep.subr.bf16.mxu0 %v2335
  %3512 = vmatpush2.bf16.msra.mxu0 %v2334
  %3513 = vmatprep.subr.bf16.mxu0 %v2327
  %3514 = vmatpush2.bf16.msra.mxu0 %v2326
  %3515 = vmatprep.subr.bf16.mxu0 %v2319
  %3516 = vmatpush2.bf16.msra.mxu0 %v2318
  %3517 = vmatprep.subr.bf16.mxu0 %v2311
  %3518 = vmatpush2.bf16.msra.mxu0 %v2310
  %3519 = vmatprep.subr.bf16.mxu0 %v2303
  %3520 = vmatpush2.bf16.msra.mxu0 %v2302
  %3521 = vmatprep.subr.bf16.mxu0 %v2295
  %3522 = vmatpush2.bf16.msra.mxu0 %v2294
  %3523 = vmatprep.mubr.bf16.mxu0 %v45
  %3524 = vmatmul.mubr.bf16.gmra.mxu0 %v44
  %v3525 = vpop.f32.mrf.mxu0
  %v3526 = vadd.f32 %v3485, %v3525
  %v3527 = vpop.f32.mrf.mxu0
  %v3528 = vadd.f32 %v3487, %v3527
  %v3529 = vpop.f32.mrf.mxu0
  %v3530 = vpop.f32.mrf.mxu0
  %3531 = vdwg.mxu0
  %3532 = vmatprep.subr.bf16.mxu0 %v2415
  %3533 = vmatpush1.bf16.msra.mxu0 %v2414
  %3534 = vmatprep.subr.bf16.mxu0 %v2407
  %3535 = vmatpush1.bf16.msra.mxu0 %v2406
  %3536 = vmatprep.subr.bf16.mxu0 %v2399
  %3537 = vmatpush1.bf16.msra.mxu0 %v2398
  %3538 = vmatprep.subr.bf16.mxu0 %v2391
  %3539 = vmatpush1.bf16.msra.mxu0 %v2390
  %3540 = vmatprep.subr.bf16.mxu0 %v2383
  %3541 = vmatpush1.bf16.msra.mxu0 %v2382
  %3542 = vmatprep.subr.bf16.mxu0 %v2375
  %3543 = vmatpush1.bf16.msra.mxu0 %v2374
  %3544 = vmatprep.subr.bf16.mxu0 %v2367
  %3545 = vmatpush1.bf16.msra.mxu0 %v2366
  %3546 = vmatprep.subr.bf16.mxu0 %v2359
  %3547 = vmatpush1.bf16.msra.mxu0 %v2358
  %3548 = vmatprep.subr.bf16.mxu0 %v2479
  %3549 = vmatpush2.bf16.msra.mxu0 %v2478
  %3550 = vmatprep.subr.bf16.mxu0 %v2471
  %3551 = vmatpush2.bf16.msra.mxu0 %v2470
  %3552 = vmatprep.subr.bf16.mxu0 %v2463
  %3553 = vmatpush2.bf16.msra.mxu0 %v2462
  %3554 = vmatprep.subr.bf16.mxu0 %v2455
  %3555 = vmatpush2.bf16.msra.mxu0 %v2454
  %3556 = vmatprep.subr.bf16.mxu0 %v2447
  %3557 = vmatpush2.bf16.msra.mxu0 %v2446
  %3558 = vmatprep.subr.bf16.mxu0 %v2439
  %3559 = vmatpush2.bf16.msra.mxu0 %v2438
  %3560 = vmatprep.subr.bf16.mxu0 %v2431
  %3561 = vmatpush2.bf16.msra.mxu0 %v2430
  %3562 = vmatprep.subr.bf16.mxu0 %v2423
  %3563 = vmatpush2.bf16.msra.mxu0 %v2422
  %3564 = vmatprep.mubr.bf16.mxu0 %v47
  %3565 = vmatmul.mubr.bf16.gmra.mxu0 %v46
  %v3566 = vpop.f32.mrf.mxu0
  %v3567 = vadd.f32 %v3526, %v3566
  %v3568 = vpop.f32.mrf.mxu0
  %v3569 = vadd.f32 %v3528, %v3568
  %v3570 = vpop.f32.mrf.mxu0
  %v3571 = vpop.f32.mrf.mxu0
  %3572 = vdwg.mxu0
  %3573 = vmatprep.subr.bf16.mxu0 %v2543
  %3574 = vmatpush1.bf16.msra.mxu0 %v2542
  %3575 = vmatprep.subr.bf16.mxu0 %v2535
  %3576 = vmatpush1.bf16.msra.mxu0 %v2534
  %3577 = vmatprep.subr.bf16.mxu0 %v2527
  %3578 = vmatpush1.bf16.msra.mxu0 %v2526
  %3579 = vmatprep.subr.bf16.mxu0 %v2519
  %3580 = vmatpush1.bf16.msra.mxu0 %v2518
  %3581 = vmatprep.subr.bf16.mxu0 %v2511
  %3582 = vmatpush1.bf16.msra.mxu0 %v2510
  %3583 = vmatprep.subr.bf16.mxu0 %v2503
  %3584 = vmatpush1.bf16.msra.mxu0 %v2502
  %3585 = vmatprep.subr.bf16.mxu0 %v2495
  %3586 = vmatpush1.bf16.msra.mxu0 %v2494
  %3587 = vmatprep.subr.bf16.mxu0 %v2487
  %3588 = vmatpush1.bf16.msra.mxu0 %v2486
  %3589 = vmatprep.subr.bf16.mxu0 %v2607
  %3590 = vmatpush2.bf16.msra.mxu0 %v2606
  %3591 = vmatprep.subr.bf16.mxu0 %v2599
  %3592 = vmatpush2.bf16.msra.mxu0 %v2598
  %3593 = vmatprep.subr.bf16.mxu0 %v2591
  %3594 = vmatpush2.bf16.msra.mxu0 %v2590
  %3595 = vmatprep.subr.bf16.mxu0 %v2583
  %3596 = vmatpush2.bf16.msra.mxu0 %v2582
  %3597 = vmatprep.subr.bf16.mxu0 %v2575
  %3598 = vmatpush2.bf16.msra.mxu0 %v2574
  %3599 = vmatprep.subr.bf16.mxu0 %v2567
  %3600 = vmatpush2.bf16.msra.mxu0 %v2566
  %3601 = vmatprep.subr.bf16.mxu0 %v2559
  %3602 = vmatpush2.bf16.msra.mxu0 %v2558
  %3603 = vmatprep.subr.bf16.mxu0 %v2551
  %3604 = vmatpush2.bf16.msra.mxu0 %v2550
  %3605 = vmatprep.mubr.bf16.mxu0 %v49
  %3606 = vmatmul.mubr.bf16.gmra.mxu0 %v48
  %v3607 = vpop.f32.mrf.mxu0
  %v3608 = vadd.f32 %v3567, %v3607
  %v3609 = vpop.f32.mrf.mxu0
  %v3610 = vadd.f32 %v3569, %v3609
  %v3611 = vpop.f32.mrf.mxu0
  %v3612 = vpop.f32.mrf.mxu0
  %3613 = vdwg.mxu0
  %3614 = vmatprep.subr.bf16.mxu0 %v2161
  %3615 = vmatpush1.bf16.msra.mxu0 %v2160
  %3616 = vmatprep.subr.bf16.mxu0 %v2153
  %3617 = vmatpush1.bf16.msra.mxu0 %v2152
  %3618 = vmatprep.subr.bf16.mxu0 %v2145
  %3619 = vmatpush1.bf16.msra.mxu0 %v2144
  %3620 = vmatprep.subr.bf16.mxu0 %v2137
  %3621 = vmatpush1.bf16.msra.mxu0 %v2136
  %3622 = vmatprep.subr.bf16.mxu0 %v2129
  %3623 = vmatpush1.bf16.msra.mxu0 %v2128
  %3624 = vmatprep.subr.bf16.mxu0 %v2121
  %3625 = vmatpush1.bf16.msra.mxu0 %v2120
  %3626 = vmatprep.subr.bf16.mxu0 %v2113
  %3627 = vmatpush1.bf16.msra.mxu0 %v2112
  %3628 = vmatprep.subr.bf16.mxu0 %v2105
  %3629 = vmatpush1.bf16.msra.mxu0 %v2104
  %3630 = vmatprep.subr.bf16.mxu0 %v2225
  %3631 = vmatpush2.bf16.msra.mxu0 %v2224
  %3632 = vmatprep.subr.bf16.mxu0 %v2217
  %3633 = vmatpush2.bf16.msra.mxu0 %v2216
  %3634 = vmatprep.subr.bf16.mxu0 %v2209
  %3635 = vmatpush2.bf16.msra.mxu0 %v2208
  %3636 = vmatprep.subr.bf16.mxu0 %v2201
  %3637 = vmatpush2.bf16.msra.mxu0 %v2200
  %3638 = vmatprep.subr.bf16.mxu0 %v2193
  %3639 = vmatpush2.bf16.msra.mxu0 %v2192
  %3640 = vmatprep.subr.bf16.mxu0 %v2185
  %3641 = vmatpush2.bf16.msra.mxu0 %v2184
  %3642 = vmatprep.subr.bf16.mxu0 %v2177
  %3643 = vmatpush2.bf16.msra.mxu0 %v2176
  %3644 = vmatprep.subr.bf16.mxu0 %v2169
  %3645 = vmatpush2.bf16.msra.mxu0 %v2168
  %3646 = vmatprep.mubr.bf16.mxu0 %v43
  %3647 = vmatmul.mubr.bf16.gmra.mxu0 %v42
  %v3648 = vpop.f32.mrf.mxu0
  %v3649 = vadd.f32 0.0, %v3648
  %v3650 = vpop.f32.mrf.mxu0
  %v3651 = vadd.f32 0.0, %v3650
  %v3652 = vpop.f32.mrf.mxu0
  %v3653 = vpop.f32.mrf.mxu0
  %3654 = vdwg.mxu0
  %3655 = vmatprep.subr.bf16.mxu0 %v2289
  %3656 = vmatpush1.bf16.msra.mxu0 %v2288
  %3657 = vmatprep.subr.bf16.mxu0 %v2281
  %3658 = vmatpush1.bf16.msra.mxu0 %v2280
  %3659 = vmatprep.subr.bf16.mxu0 %v2273
  %3660 = vmatpush1.bf16.msra.mxu0 %v2272
  %3661 = vmatprep.subr.bf16.mxu0 %v2265
  %3662 = vmatpush1.bf16.msra.mxu0 %v2264
  %3663 = vmatprep.subr.bf16.mxu0 %v2257
  %3664 = vmatpush1.bf16.msra.mxu0 %v2256
  %3665 = vmatprep.subr.bf16.mxu0 %v2249
  %3666 = vmatpush1.bf16.msra.mxu0 %v2248
  %3667 = vmatprep.subr.bf16.mxu0 %v2241
  %3668 = vmatpush1.bf16.msra.mxu0 %v2240
  %3669 = vmatprep.subr.bf16.mxu0 %v2233
  %3670 = vmatpush1.bf16.msra.mxu0 %v2232
  %3671 = vmatprep.subr.bf16.mxu0 %v2353
  %3672 = vmatpush2.bf16.msra.mxu0 %v2352
  %3673 = vmatprep.subr.bf16.mxu0 %v2345
  %3674 = vmatpush2.bf16.msra.mxu0 %v2344
  %3675 = vmatprep.subr.bf16.mxu0 %v2337
  %3676 = vmatpush2.bf16.msra.mxu0 %v2336
  %3677 = vmatprep.subr.bf16.mxu0 %v2329
  %3678 = vmatpush2.bf16.msra.mxu0 %v2328
  %3679 = vmatprep.subr.bf16.mxu0 %v2321
  %3680 = vmatpush2.bf16.msra.mxu0 %v2320
  %3681 = vmatprep.subr.bf16.mxu0 %v2313
  %3682 = vmatpush2.bf16.msra.mxu0 %v2312
  %3683 = vmatprep.subr.bf16.mxu0 %v2305
  %3684 = vmatpush2.bf16.msra.mxu0 %v2304
  %3685 = vmatprep.subr.bf16.mxu0 %v2297
  %3686 = vmatpush2.bf16.msra.mxu0 %v2296
  %3687 = vmatprep.mubr.bf16.mxu0 %v45
  %3688 = vmatmul.mubr.bf16.gmra.mxu0 %v44
  %v3689 = vpop.f32.mrf.mxu0
  %v3690 = vadd.f32 %v3649, %v3689
  %v3691 = vpop.f32.mrf.mxu0
  %v3692 = vadd.f32 %v3651, %v3691
  %v3693 = vpop.f32.mrf.mxu0
  %v3694 = vpop.f32.mrf.mxu0
  %3695 = vdwg.mxu0
  %3696 = vmatprep.subr.bf16.mxu0 %v2417
  %3697 = vmatpush1.bf16.msra.mxu0 %v2416
  %3698 = vmatprep.subr.bf16.mxu0 %v2409
  %3699 = vmatpush1.bf16.msra.mxu0 %v2408
  %3700 = vmatprep.subr.bf16.mxu0 %v2401
  %3701 = vmatpush1.bf16.msra.mxu0 %v2400
  %3702 = vmatprep.subr.bf16.mxu0 %v2393
  %3703 = vmatpush1.bf16.msra.mxu0 %v2392
  %3704 = vmatprep.subr.bf16.mxu0 %v2385
  %3705 = vmatpush1.bf16.msra.mxu0 %v2384
  %3706 = vmatprep.subr.bf16.mxu0 %v2377
  %3707 = vmatpush1.bf16.msra.mxu0 %v2376
  %3708 = vmatprep.subr.bf16.mxu0 %v2369
  %3709 = vmatpush1.bf16.msra.mxu0 %v2368
  %3710 = vmatprep.subr.bf16.mxu0 %v2361
  %3711 = vmatpush1.bf16.msra.mxu0 %v2360
  %3712 = vmatprep.subr.bf16.mxu0 %v2481
  %3713 = vmatpush2.bf16.msra.mxu0 %v2480
  %3714 = vmatprep.subr.bf16.mxu0 %v2473
  %3715 = vmatpush2.bf16.msra.mxu0 %v2472
  %3716 = vmatprep.subr.bf16.mxu0 %v2465
  %3717 = vmatpush2.bf16.msra.mxu0 %v2464
  %3718 = vmatprep.subr.bf16.mxu0 %v2457
  %3719 = vmatpush2.bf16.msra.mxu0 %v2456
  %3720 = vmatprep.subr.bf16.mxu0 %v2449
  %3721 = vmatpush2.bf16.msra.mxu0 %v2448
  %3722 = vmatprep.subr.bf16.mxu0 %v2441
  %3723 = vmatpush2.bf16.msra.mxu0 %v2440
  %3724 = vmatprep.subr.bf16.mxu0 %v2433
  %3725 = vmatpush2.bf16.msra.mxu0 %v2432
  %3726 = vmatprep.subr.bf16.mxu0 %v2425
  %3727 = vmatpush2.bf16.msra.mxu0 %v2424
  %3728 = vmatprep.mubr.bf16.mxu0 %v47
  %3729 = vmatmul.mubr.bf16.gmra.mxu0 %v46
  %v3730 = vpop.f32.mrf.mxu0
  %v3731 = vadd.f32 %v3690, %v3730
  %v3732 = vpop.f32.mrf.mxu0
  %v3733 = vadd.f32 %v3692, %v3732
  %v3734 = vpop.f32.mrf.mxu0
  %v3735 = vpop.f32.mrf.mxu0
  %3736 = vdwg.mxu0
  %3737 = vmatprep.subr.bf16.mxu0 %v2545
  %3738 = vmatpush1.bf16.msra.mxu0 %v2544
  %3739 = vmatprep.subr.bf16.mxu0 %v2537
  %3740 = vmatpush1.bf16.msra.mxu0 %v2536
  %3741 = vmatprep.subr.bf16.mxu0 %v2529
  %3742 = vmatpush1.bf16.msra.mxu0 %v2528
  %3743 = vmatprep.subr.bf16.mxu0 %v2521
  %3744 = vmatpush1.bf16.msra.mxu0 %v2520
  %3745 = vmatprep.subr.bf16.mxu0 %v2513
  %3746 = vmatpush1.bf16.msra.mxu0 %v2512
  %3747 = vmatprep.subr.bf16.mxu0 %v2505
  %3748 = vmatpush1.bf16.msra.mxu0 %v2504
  %3749 = vmatprep.subr.bf16.mxu0 %v2497
  %3750 = vmatpush1.bf16.msra.mxu0 %v2496
  %3751 = vmatprep.subr.bf16.mxu0 %v2489
  %3752 = vmatpush1.bf16.msra.mxu0 %v2488
  %3753 = vmatprep.subr.bf16.mxu0 %v2609
  %3754 = vmatpush2.bf16.msra.mxu0 %v2608
  %3755 = vmatprep.subr.bf16.mxu0 %v2601
  %3756 = vmatpush2.bf16.msra.mxu0 %v2600
  %3757 = vmatprep.subr.bf16.mxu0 %v2593
  %3758 = vmatpush2.bf16.msra.mxu0 %v2592
  %3759 = vmatprep.subr.bf16.mxu0 %v2585
  %3760 = vmatpush2.bf16.msra.mxu0 %v2584
  %3761 = vmatprep.subr.bf16.mxu0 %v2577
  %3762 = vmatpush2.bf16.msra.mxu0 %v2576
  %3763 = vmatprep.subr.bf16.mxu0 %v2569
  %3764 = vmatpush2.bf16.msra.mxu0 %v2568
  %3765 = vmatprep.subr.bf16.mxu0 %v2561
  %3766 = vmatpush2.bf16.msra.mxu0 %v2560
  %3767 = vmatprep.subr.bf16.mxu0 %v2553
  %3768 = vmatpush2.bf16.msra.mxu0 %v2552
  %3769 = vmatprep.mubr.bf16.mxu0 %v49
  %3770 = vmatmul.mubr.bf16.gmra.mxu0 %v48
  %v3771 = vpop.f32.mrf.mxu0
  %v3772 = vadd.f32 %v3731, %v3771
  %v3773 = vpop.f32.mrf.mxu0
  %v3774 = vadd.f32 %v3733, %v3773
  %v3775 = vpop.f32.mrf.mxu0
  %v3776 = vpop.f32.mrf.mxu0
  %3777 = vdwg.mxu0
  %v3786 = vcombine.low %v3280, %v3282
  %v3787 = vcombine.low %v3444, %v3446
  %v3788 = vcombine.low %v3608, %v3610
  %v3789 = vcombine.low %v3772, %v3774
  %v3794 = vadd.f32 %v22, %v3786
  %v3795 = vadd.f32 %v23, %v3787
  %v3796 = vadd.f32 %v24, %v3788
  %v3797 = vadd.f32 %v25, %v3789
  %3798 = vst [vmem:[#allocation2] sm:$0xff] %v3794
  %3799 = vst [vmem:[#allocation2 + $0x8] sm:$0xff] %v3795
  %3800 = vst [vmem:[#allocation2 + $0x10] sm:$0xff] %v3796
  %3801 = vst [vmem:[#allocation2 + $0x18] sm:$0xff] %v3797
  // Predicated region
  $region18: #{modspace_swap_forward.5} parent=0 // pred_check
    %p3802 = pneg %p14
  $region19: #{modspace_swap_forward.5} parent=0 // pred_check_branch
    %3804 = sbr.rel (%p3802) target = $region21
  $region20: #{modspace_swap_forward.5} parent=0 // pred_region
    %v3805 = vld [vmem:[#allocation2] sm:$0xff]
    %v3806 = vld [vmem:[#allocation2 + $0x8] sm:$0xff]
    %v3807 = vld [vmem:[#allocation2 + $0x10] sm:$0xff]
    %v3808 = vld [vmem:[#allocation2 + $0x18] sm:$0xff]
    %v3809 = vld [vmem:[%s2] sm:$0xff]
    %v3811 = vlaneseq
    %v3812 = vshrl.u32 %v3811, 7
    %v3813 = vsub.s32 0, %v3812
    %v3814 = vrot.slane %v3809, %v3813
    %v3815 = vlaneseq
    %v3816 = vshrl.u32 %v3815, 7
    %v3817 = vsub.s32 1, %v3816
    %v3818 = vrot.slane %v3809, %v3817
    %v3819 = vlaneseq
    %v3820 = vshrl.u32 %v3819, 7
    %v3821 = vsub.s32 2, %v3820
    %v3822 = vrot.slane %v3809, %v3821
    %v3823 = vlaneseq
    %v3824 = vshrl.u32 %v3823, 7
    %v3825 = vsub.s32 3, %v3824
    %v3826 = vrot.slane %v3809, %v3825
    %v3827 = vlaneseq
    %v3828 = vshrl.u32 %v3827, 7
    %v3829 = vsub.s32 4, %v3828
    %v3830 = vrot.slane %v3809, %v3829
    %v3831 = vlaneseq
    %v3832 = vshrl.u32 %v3831, 7
    %v3833 = vsub.s32 5, %v3832
    %v3834 = vrot.slane %v3809, %v3833
    %v3835 = vlaneseq
    %v3836 = vshrl.u32 %v3835, 7
    %v3837 = vsub.s32 6, %v3836
    %v3838 = vrot.slane %v3809, %v3837
    %v3839 = vlaneseq
    %v3840 = vshrl.u32 %v3839, 7
    %v3841 = vsub.s32 7, %v3840
    %v3842 = vrot.slane %v3809, %v3841
    %v3843 = vcombine.low %v3814, %v3818
    %v3844 = vcombine.low %v3822, %v3826
    %v3845 = vcombine.low %v3830, %v3834
    %v3846 = vcombine.low %v3838, %v3842
    %v3851 = vadd.f32 %v3805, %v3843
    %v3852 = vadd.f32 %v3806, %v3844
    %v3853 = vadd.f32 %v3807, %v3845
    %v3854 = vadd.f32 %v3808, %v3846
    %3855 = vst [vmem:[%s3] sm:$0xff] %v3851
    %3856 = vst [vmem:[%s3 + $0x8] sm:$0xff] %v3852
    %3857 = vst [vmem:[%s3 + $0x10] sm:$0xff] %v3853
    %3858 = vst [vmem:[%s3 + $0x18] sm:$0xff] %v3854
  $region21: #{modspace_swap_forward.5} parent=0 // pred_fallthru
    _
  // Predicated region
  $region22: #{modspace_swap_forward.5} parent=0 // pred_check
    _
  $region23: #{modspace_swap_forward.5} parent=0 // pred_check_branch
    %3860 = sbr.rel (0) target = $region25
  $region24: #{modspace_swap_forward.5} parent=0 // pred_region
    _
  $region25: #{modspace_swap_forward.5} parent=0 // pred_fallthru
    _
  // Predicated region
  $region26: #{modspace_swap_forward.5} parent=0 // pred_check
    _
  $region27: #{modspace_swap_forward.5} parent=0 // pred_check_branch
    %3862 = sbr.rel (0) target = $region29
  $region28: #{modspace_swap_forward.5} parent=0 // pred_region
    _
  $region29: #{modspace_swap_forward.5} parent=0 // pred_fallthru
    _

</llo_original>
